<compile_context>
chip_gen: v7x
topology: tpu7x:2x2x1
jax: 0.10.0
libtpu: 0.0.40
codegen_flags: <defaults>
</compile_context>

<pallas_src>
import jax
import jax.numpy as jnp
from jax.experimental import pallas as pl
from jax.experimental.pallas import tpu as pltpu

_LANE = 128


def _round_up(x, m):
    return ((x + m - 1) // m) * m


# --------------------------------------------------------------------------
# Fused kernel: one image per grid step.
# --------------------------------------------------------------------------
def _basic_block_kernel(x_ref, w1_ref, b1_ref, w2_ref, b2_ref, out_ref,
                        xpad_ref, mid_ref, acc_ref):
    # x_ref   : (1, H, W, C)      f32   input tile (channel-padded)
    # w1/w2   : (3, 3, C, C)      bf16  HWIO weights, BN scale folded in
    # b1/b2   : (1, C)            f32   folded BN bias
    # out_ref : (1, H, W, C)      f32
    # xpad_ref, mid_ref : (H+2, W+2, C) f32 VMEM halo buffers
    # acc_ref : (H*W, C)          f32   VMEM matmul accumulator
    H = out_ref.shape[1]
    W = out_ref.shape[2]
    C = out_ref.shape[3]

    def zero_halo_border(ref):
        # Only the 1-pixel border needs zeroing; the interior is fully
        # overwritten every grid step.
        zrow = jnp.zeros((1, W + 2, C), dtype=ref.dtype)
        ref[0:1, :, :] = zrow
        ref[H + 1:H + 2, :, :] = zrow
        zcol = jnp.zeros((H + 2, 1, C), dtype=ref.dtype)
        ref[:, 0:1, :] = zcol
        ref[:, W + 1:W + 2, :] = zcol

    zero_halo_border(xpad_ref)
    zero_halo_border(mid_ref)
    # In-kernel zero padding of the input (no jnp.pad HBM round trip).
    xpad_ref[1:H + 1, 1:W + 1, :] = x_ref[0]

    def conv3x3(src_ref, w_ref):
        # 3x3 conv over the zero-padded source as nine lane-dense
        # (H*W, C) @ (C, C) bf16 MXU matmuls, f32-accumulated.  Taps are
        # grouped by dy so the VMEM accumulator is touched only 3 times
        # per conv (first group writes it directly — no memset).
        for dy in range(3):
            group = None
            for dx in range(3):
                patch = src_ref[dy:dy + H, dx:dx + W, :]          # (H, W, C) f32
                patch = patch.reshape(H * W, C).astype(jnp.bfloat16)
                d = jnp.dot(patch, w_ref[dy, dx],
                            preferred_element_type=jnp.float32)
                group = d if group is None else group + d
            if dy == 0:
                acc_ref[...] = group
            else:
                acc_ref[...] += group

    # ---- conv1 -> BN1 (scale pre-folded) -> ReLU ; result stays in VMEM ----
    conv3x3(xpad_ref, w1_ref)
    b1 = b1_ref[...]                                              # (1, C), hoisted
    mid = jnp.maximum(acc_ref[...] + b1, 0.0)                     # (H*W, C) f32
    mid_ref[1:H + 1, 1:W + 1, :] = mid.reshape(H, W, C)

    # ---- conv2 -> BN2 -> + identity -> ReLU -------------------------------
    conv3x3(mid_ref, w2_ref)
    b2 = b2_ref[...]
    identity = x_ref[0].reshape(H * W, C)                         # f32 residual
    out = jnp.maximum(acc_ref[...] + b2 + identity, 0.0)
    out_ref[...] = out.reshape(1, H, W, C).astype(out_ref.dtype)


# --------------------------------------------------------------------------
# Wrapper: NHWC, channel-padded entry point.
# --------------------------------------------------------------------------
def basic_block_forward_nhwc(x_nhwc, params):
    N, H, W, Cp = x_nhwc.shape
    w1, b1, w2, b2 = params["w1"], params["b1"], params["w2"], params["b2"]
    assert w1.shape == (3, 3, Cp, Cp)

    flops = int(2 * 2 * N * H * W * 9 * Cp * Cp)                  # two convs
    bytes_accessed = int(N * H * W * Cp * 4 * 2                   # x + out
                         + 2 * 3 * 3 * Cp * Cp * 2                # bf16 weights
                         + 2 * Cp * 4)                            # biases

    return pl.pallas_call(
        _basic_block_kernel,
        out_shape=jax.ShapeDtypeStruct((N, H, W, Cp), jnp.float32),
        grid_spec=pltpu.PrefetchScalarGridSpec(
            num_scalar_prefetch=0,
            grid=(N,),
            in_specs=[
                pl.BlockSpec((1, H, W, Cp), lambda n: (n, 0, 0, 0)),    # x
                pl.BlockSpec((3, 3, Cp, Cp), lambda n: (0, 0, 0, 0)),   # w1
                pl.BlockSpec((1, Cp), lambda n: (0, 0)),                # b1
                pl.BlockSpec((3, 3, Cp, Cp), lambda n: (0, 0, 0, 0)),   # w2
                pl.BlockSpec((1, Cp), lambda n: (0, 0)),                # b2
            ],
            out_specs=pl.BlockSpec((1, H, W, Cp), lambda n: (n, 0, 0, 0)),
            scratch_shapes=[
                pltpu.VMEM((H + 2, W + 2, Cp), jnp.float32),   # padded input
                pltpu.VMEM((H + 2, W + 2, Cp), jnp.float32),   # padded intermediate
                pltpu.VMEM((H * W, Cp), jnp.float32),          # matmul accumulator
            ],
        ),
        compiler_params=pltpu.CompilerParams(
            dimension_semantics=("parallel",),        # shard batch across TCs (v7x)
            vmem_limit_bytes=32 * 1024 * 1024,
        ),
        cost_estimate=pl.CostEstimate(
            flops=flops, transcendentals=0, bytes_accessed=bytes_accessed),
    )(x_nhwc, w1, b1, w2, b2)


def basic_block_forward(x_nchw, params):
    """PyTorch-layout (NCHW) entry point.

    The NCHW<->NHWC transposes and channel pad are boundary glue for the
    PyTorch API; in a full network keep activations NHWC / channel-padded
    end-to-end so this cost is paid once, not per block.
    """
    N, C, H, W = x_nchw.shape
    Cp = params["w1"].shape[-1]
    x = jnp.transpose(x_nchw, (0, 2, 3, 1))                        # NCHW -> NHWC
    if Cp != C:
        x = jnp.pad(x, ((0, 0), (0, 0), (0, 0), (0, Cp - C)))
    out = basic_block_forward_nhwc(x, params)
    return jnp.transpose(out[..., :C], (0, 3, 1, 2))               # NHWC -> NCHW


# --------------------------------------------------------------------------
# Parameters: PyTorch-style raw params, then a one-time prep that folds BN
# and pads channels to the lane width.
# --------------------------------------------------------------------------
def make_raw_params(key, inplanes, planes):
    ks = jax.random.split(key, 10)
    conv1 = 0.1 * jax.random.normal(ks[0], (planes, inplanes, 3, 3), jnp.float32)  # OIHW
    conv2 = 0.1 * jax.random.normal(ks[1], (planes, planes, 3, 3), jnp.float32)

    def bn(kg, kb, km, kv):
        return dict(
            gamma=1.0 + 0.1 * jax.random.normal(kg, (planes,), jnp.float32),
            beta=0.1 * jax.random.normal(kb, (planes,), jnp.float32),
            mean=0.1 * jax.random.normal(km, (planes,), jnp.float32),
            var=jnp.abs(jax.random.normal(kv, (planes,), jnp.float32)) + 0.5,
        )

    return dict(conv1=conv1, bn1=bn(*ks[2:6]), conv2=conv2, bn2=bn(*ks[6:10]))


def prepare_params(raw, eps=1e-5):
    """One-time transform: fold eval-mode BN scale into conv weights, build the
    per-channel bias, pad channels to a multiple of 128, cast weights to bf16."""
    def fold(w_oihw, bn):
        scale = bn["gamma"] / jnp.sqrt(bn["var"] + eps)            # (cout,)
        bias = bn["beta"] - bn["mean"] * scale                     # (cout,)
        w_hwio = jnp.transpose(w_oihw, (2, 3, 1, 0)) * scale       # fold scale
        return w_hwio, bias

    w1, b1 = fold(raw["conv1"], raw["bn1"])
    w2, b2 = fold(raw["conv2"], raw["bn2"])
    cin, cout = w1.shape[2], w1.shape[3]
    cp = max(_LANE, _round_up(max(cin, cout), _LANE))

    def pad_w(w):
        ci, co = w.shape[2], w.shape[3]
        return jnp.pad(w, ((0, 0), (0, 0), (0, cp - ci), (0, cp - co))
                       ).astype(jnp.bfloat16)

    def pad_b(b):
        return jnp.pad(b, (0, cp - b.shape[0])).reshape(1, cp).astype(jnp.float32)

    return dict(w1=pad_w(w1), b1=pad_b(b1), w2=pad_w(w2), b2=pad_b(b2))


# --------------------------------------------------------------------------
# Pure-JAX f32 reference (PyTorch eval-mode semantics).
# --------------------------------------------------------------------------
def reference_forward(x_nchw, raw, eps=1e-5):
    x = jnp.transpose(x_nchw, (0, 2, 3, 1))
    dn = ("NHWC", "HWIO", "NHWC")

    def conv(a, w_oihw):
        w = jnp.transpose(w_oihw, (2, 3, 1, 0))
        return jax.lax.conv_general_dilated(a, w, (1, 1), "SAME",
                                            dimension_numbers=dn)

    def bn(a, p):
        inv = p["gamma"] / jnp.sqrt(p["var"] + eps)
        return a * inv + (p["beta"] - p["mean"] * inv)

    out = jnp.maximum(bn(conv(x, raw["conv1"]), raw["bn1"]), 0.0)
    out = bn(conv(out, raw["conv2"]), raw["bn2"]) + x
    out = jnp.maximum(out, 0.0)
    return jnp.transpose(out, (0, 3, 1, 2))


if __name__ == "__main__":
    N, C, H, W = 2, 4, 16, 16          # inplanes = planes = 4, stride = 1
    key = jax.random.PRNGKey(0)
    kx, kp = jax.random.split(key)

    x = jax.random.normal(kx, (N, C, H, W), jnp.float32)
    raw = make_raw_params(kp, inplanes=C, planes=C)
    params = prepare_params(raw)

    out = jax.block_until_ready(basic_block_forward(x, params))
    ref = jax.block_until_ready(reference_forward(x, raw))

    assert out.shape == (N, C, H, W)
    assert out.dtype == jnp.float32
    # bf16 matmul inputs (f32 accumulation) => relaxed tolerance vs pure-f32 ref.
    max_err = jnp.max(jnp.abs(out - ref))
    assert jnp.allclose(out, ref, rtol=2e-2, atol=2e-2), f"mismatch: {max_err}"

    print("KERNEL_OK")
</pallas_src>

<mosaic_0001>
module attributes {stable_mosaic.version = 11 : i64} {
  func.func @_basic_block_kernel(%arg0: i32, %arg1: memref<1x16x16x128xf32, #tpu.memory_space<vmem>>, %arg2: memref<3x3x128x128xbf16, #tpu.memory_space<vmem>>, %arg3: memref<1x128xf32, #tpu.memory_space<vmem>>, %arg4: memref<3x3x128x128xbf16, #tpu.memory_space<vmem>>, %arg5: memref<1x128xf32, #tpu.memory_space<vmem>>, %arg6: memref<1x16x16x128xf32, #tpu.memory_space<vmem>>, %arg7: memref<18x18x128xf32, #tpu.memory_space<vmem>>, %arg8: memref<18x18x128xf32, #tpu.memory_space<vmem>>, %arg9: memref<256x128xf32, #tpu.memory_space<vmem>>) attributes {dimension_semantics = [#tpu.dimension_semantics<parallel>], iteration_bounds = array<i64: 2>, scalar_prefetch = 0 : i64, scratch_operands = 3 : i64, tpu.core_type = #tpu.core_type<tc>, window_params = [{transform_indices = @transform_0, window_bounds = array<i64: 1, 16, 16, 128>}, {pipeline_mode = #tpu.pipeline_mode<synchronous>, transform_indices = @transform_1, window_bounds = array<i64: 3, 3, 128, 128>}, {pipeline_mode = #tpu.pipeline_mode<synchronous>, transform_indices = @transform_2, window_bounds = array<i64: 1, 128>}, {pipeline_mode = #tpu.pipeline_mode<synchronous>, transform_indices = @transform_3, window_bounds = array<i64: 3, 3, 128, 128>}, {pipeline_mode = #tpu.pipeline_mode<synchronous>, transform_indices = @transform_4, window_bounds = array<i64: 1, 128>}, {transform_indices = @transform_5, window_bounds = array<i64: 1, 16, 16, 128>}]} {
    %cst = arith.constant 0.000000e+00 : f32
    %0 = vector.broadcast %cst : f32 to vector<1x18x128xf32>
    %c0 = arith.constant 0 : index
    %c0_0 = arith.constant 0 : index
    %c0_1 = arith.constant 0 : index
    %1 = vector.load %arg7[%c0, %c0_0, %c0_1] : memref<18x18x128xf32, #tpu.memory_space<vmem>>, vector<1x18x128xf32>
    tpu.vector_store %arg7[%c0, %c0_0, %c0_1], %0 {strides = array<i32>} : memref<18x18x128xf32, #tpu.memory_space<vmem>>, vector<1x18x128xf32>,
    %c17 = arith.constant 17 : index
    %c0_2 = arith.constant 0 : index
    %c0_3 = arith.constant 0 : index
    %2 = vector.load %arg7[%c17, %c0_2, %c0_3] : memref<18x18x128xf32, #tpu.memory_space<vmem>>, vector<1x18x128xf32>
    tpu.vector_store %arg7[%c17, %c0_2, %c0_3], %0 {strides = array<i32>} : memref<18x18x128xf32, #tpu.memory_space<vmem>>, vector<1x18x128xf32>,
    %cst_4 = arith.constant 0.000000e+00 : f32
    %3 = vector.broadcast %cst_4 : f32 to vector<18x1x128xf32>
    %c0_5 = arith.constant 0 : index
    %c0_6 = arith.constant 0 : index
    %c0_7 = arith.constant 0 : index
    %4 = vector.load %arg7[%c0_5, %c0_6, %c0_7] : memref<18x18x128xf32, #tpu.memory_space<vmem>>, vector<18x1x128xf32>
    tpu.vector_store %arg7[%c0_5, %c0_6, %c0_7], %3 {strides = array<i32>} : memref<18x18x128xf32, #tpu.memory_space<vmem>>, vector<18x1x128xf32>,
    %c0_8 = arith.constant 0 : index
    %c17_9 = arith.constant 17 : index
    %c0_10 = arith.constant 0 : index
    %5 = vector.load %arg7[%c0_8, %c17_9, %c0_10] : memref<18x18x128xf32, #tpu.memory_space<vmem>>, vector<18x1x128xf32>
    tpu.vector_store %arg7[%c0_8, %c17_9, %c0_10], %3 {strides = array<i32>} : memref<18x18x128xf32, #tpu.memory_space<vmem>>, vector<18x1x128xf32>,
    %cst_11 = arith.constant 0.000000e+00 : f32
    %6 = vector.broadcast %cst_11 : f32 to vector<1x18x128xf32>
    %c0_12 = arith.constant 0 : index
    %c0_13 = arith.constant 0 : index
    %c0_14 = arith.constant 0 : index
    %7 = vector.load %arg8[%c0_12, %c0_13, %c0_14] : memref<18x18x128xf32, #tpu.memory_space<vmem>>, vector<1x18x128xf32>
    tpu.vector_store %arg8[%c0_12, %c0_13, %c0_14], %6 {strides = array<i32>} : memref<18x18x128xf32, #tpu.memory_space<vmem>>, vector<1x18x128xf32>,
    %c17_15 = arith.constant 17 : index
    %c0_16 = arith.constant 0 : index
    %c0_17 = arith.constant 0 : index
    %8 = vector.load %arg8[%c17_15, %c0_16, %c0_17] : memref<18x18x128xf32, #tpu.memory_space<vmem>>, vector<1x18x128xf32>
    tpu.vector_store %arg8[%c17_15, %c0_16, %c0_17], %6 {strides = array<i32>} : memref<18x18x128xf32, #tpu.memory_space<vmem>>, vector<1x18x128xf32>,
    %cst_18 = arith.constant 0.000000e+00 : f32
    %9 = vector.broadcast %cst_18 : f32 to vector<18x1x128xf32>
    %c0_19 = arith.constant 0 : index
    %c0_20 = arith.constant 0 : index
    %c0_21 = arith.constant 0 : index
    %10 = vector.load %arg8[%c0_19, %c0_20, %c0_21] : memref<18x18x128xf32, #tpu.memory_space<vmem>>, vector<18x1x128xf32>
    tpu.vector_store %arg8[%c0_19, %c0_20, %c0_21], %9 {strides = array<i32>} : memref<18x18x128xf32, #tpu.memory_space<vmem>>, vector<18x1x128xf32>,
    %c0_22 = arith.constant 0 : index
    %c17_23 = arith.constant 17 : index
    %c0_24 = arith.constant 0 : index
    %11 = vector.load %arg8[%c0_22, %c17_23, %c0_24] : memref<18x18x128xf32, #tpu.memory_space<vmem>>, vector<18x1x128xf32>
    tpu.vector_store %arg8[%c0_22, %c17_23, %c0_24], %9 {strides = array<i32>} : memref<18x18x128xf32, #tpu.memory_space<vmem>>, vector<18x1x128xf32>,
    %c0_25 = arith.constant 0 : index
    %c0_26 = arith.constant 0 : index
    %c0_27 = arith.constant 0 : index
    %c0_28 = arith.constant 0 : index
    %12 = vector.load %arg1[%c0_25, %c0_26, %c0_27, %c0_28] : memref<1x16x16x128xf32, #tpu.memory_space<vmem>>, vector<1x16x16x128xf32>
    %13 = vector.shape_cast %12 : vector<1x16x16x128xf32> to vector<16x16x128xf32>
    %c1 = arith.constant 1 : index
    %c1_29 = arith.constant 1 : index
    %c0_30 = arith.constant 0 : index
    %14 = vector.load %arg7[%c1, %c1_29, %c0_30] : memref<18x18x128xf32, #tpu.memory_space<vmem>>, vector<16x16x128xf32>
    tpu.vector_store %arg7[%c1, %c1_29, %c0_30], %13 {strides = array<i32>} : memref<18x18x128xf32, #tpu.memory_space<vmem>>, vector<16x16x128xf32>,
    %c0_31 = arith.constant 0 : index
    %c0_32 = arith.constant 0 : index
    %c0_33 = arith.constant 0 : index
    %15 = vector.load %arg7[%c0_31, %c0_32, %c0_33] : memref<18x18x128xf32, #tpu.memory_space<vmem>>, vector<16x16x128xf32>
    %16 = vector.shape_cast %15 : vector<16x16x128xf32> to vector<256x128xf32>
    %17 = arith.truncf %16 : vector<256x128xf32> to vector<256x128xbf16>
    %c0_34 = arith.constant 0 : index
    %c0_35 = arith.constant 0 : index
    %c0_36 = arith.constant 0 : index
    %c0_37 = arith.constant 0 : index
    %18 = vector.load %arg2[%c0_34, %c0_35, %c0_36, %c0_37] : memref<3x3x128x128xbf16, #tpu.memory_space<vmem>>, vector<1x1x128x128xbf16>
    %19 = vector.shape_cast %18 : vector<1x1x128x128xbf16> to vector<128x128xbf16>
    %cst_38 = arith.constant dense<0.000000e+00> : vector<256x128xf32>
    %20 = tpu.matmul %17, %19, %cst_38 {dimension_numbers = #tpu.dot_dimension_numbers<[1], [0], [0], [1], [0, 0, 1, 1], [], []>} : vector<256x128xbf16>, vector<128x128xbf16>, vector<256x128xf32> -> vector<256x128xf32>
    %c0_39 = arith.constant 0 : index
    %c1_40 = arith.constant 1 : index
    %c0_41 = arith.constant 0 : index
    %21 = vector.load %arg7[%c0_39, %c1_40, %c0_41] : memref<18x18x128xf32, #tpu.memory_space<vmem>>, vector<16x16x128xf32>
    %22 = vector.shape_cast %21 : vector<16x16x128xf32> to vector<256x128xf32>
    %23 = arith.truncf %22 : vector<256x128xf32> to vector<256x128xbf16>
    %c0_42 = arith.constant 0 : index
    %c1_43 = arith.constant 1 : index
    %c0_44 = arith.constant 0 : index
    %c0_45 = arith.constant 0 : index
    %24 = vector.load %arg2[%c0_42, %c1_43, %c0_44, %c0_45] : memref<3x3x128x128xbf16, #tpu.memory_space<vmem>>, vector<1x1x128x128xbf16>
    %25 = vector.shape_cast %24 : vector<1x1x128x128xbf16> to vector<128x128xbf16>
    %cst_46 = arith.constant dense<0.000000e+00> : vector<256x128xf32>
    %26 = tpu.matmul %23, %25, %cst_46 {dimension_numbers = #tpu.dot_dimension_numbers<[1], [0], [0], [1], [0, 0, 1, 1], [], []>} : vector<256x128xbf16>, vector<128x128xbf16>, vector<256x128xf32> -> vector<256x128xf32>
    %27 = arith.addf %20, %26 : vector<256x128xf32>
    %c0_47 = arith.constant 0 : index
    %c2 = arith.constant 2 : index
    %c0_48 = arith.constant 0 : index
    %28 = vector.load %arg7[%c0_47, %c2, %c0_48] : memref<18x18x128xf32, #tpu.memory_space<vmem>>, vector<16x16x128xf32>
    %29 = vector.shape_cast %28 : vector<16x16x128xf32> to vector<256x128xf32>
    %30 = arith.truncf %29 : vector<256x128xf32> to vector<256x128xbf16>
    %c0_49 = arith.constant 0 : index
    %c2_50 = arith.constant 2 : index
    %c0_51 = arith.constant 0 : index
    %c0_52 = arith.constant 0 : index
    %31 = vector.load %arg2[%c0_49, %c2_50, %c0_51, %c0_52] : memref<3x3x128x128xbf16, #tpu.memory_space<vmem>>, vector<1x1x128x128xbf16>
    %32 = vector.shape_cast %31 : vector<1x1x128x128xbf16> to vector<128x128xbf16>
    %cst_53 = arith.constant dense<0.000000e+00> : vector<256x128xf32>
    %33 = tpu.matmul %30, %32, %cst_53 {dimension_numbers = #tpu.dot_dimension_numbers<[1], [0], [0], [1], [0, 0, 1, 1], [], []>} : vector<256x128xbf16>, vector<128x128xbf16>, vector<256x128xf32> -> vector<256x128xf32>
    %34 = arith.addf %27, %33 : vector<256x128xf32>
    %c0_54 = arith.constant 0 : index
    %c0_55 = arith.constant 0 : index
    %35 = vector.load %arg9[%c0_54, %c0_55] : memref<256x128xf32, #tpu.memory_space<vmem>>, vector<256x128xf32>
    tpu.vector_store %arg9[%c0_54, %c0_55], %34 {strides = array<i32>} : memref<256x128xf32, #tpu.memory_space<vmem>>, vector<256x128xf32>,
    %c1_56 = arith.constant 1 : index
    %c0_57 = arith.constant 0 : index
    %c0_58 = arith.constant 0 : index
    %36 = vector.load %arg7[%c1_56, %c0_57, %c0_58] : memref<18x18x128xf32, #tpu.memory_space<vmem>>, vector<16x16x128xf32>
    %37 = vector.shape_cast %36 : vector<16x16x128xf32> to vector<256x128xf32>
    %38 = arith.truncf %37 : vector<256x128xf32> to vector<256x128xbf16>
    %c1_59 = arith.constant 1 : index
    %c0_60 = arith.constant 0 : index
    %c0_61 = arith.constant 0 : index
    %c0_62 = arith.constant 0 : index
    %39 = vector.load %arg2[%c1_59, %c0_60, %c0_61, %c0_62] : memref<3x3x128x128xbf16, #tpu.memory_space<vmem>>, vector<1x1x128x128xbf16>
    %40 = vector.shape_cast %39 : vector<1x1x128x128xbf16> to vector<128x128xbf16>
    %cst_63 = arith.constant dense<0.000000e+00> : vector<256x128xf32>
    %41 = tpu.matmul %38, %40, %cst_63 {dimension_numbers = #tpu.dot_dimension_numbers<[1], [0], [0], [1], [0, 0, 1, 1], [], []>} : vector<256x128xbf16>, vector<128x128xbf16>, vector<256x128xf32> -> vector<256x128xf32>
    %c1_64 = arith.constant 1 : index
    %c1_65 = arith.constant 1 : index
    %c0_66 = arith.constant 0 : index
    %42 = vector.load %arg7[%c1_64, %c1_65, %c0_66] : memref<18x18x128xf32, #tpu.memory_space<vmem>>, vector<16x16x128xf32>
    %43 = vector.shape_cast %42 : vector<16x16x128xf32> to vector<256x128xf32>
    %44 = arith.truncf %43 : vector<256x128xf32> to vector<256x128xbf16>
    %c1_67 = arith.constant 1 : index
    %c1_68 = arith.constant 1 : index
    %c0_69 = arith.constant 0 : index
    %c0_70 = arith.constant 0 : index
    %45 = vector.load %arg2[%c1_67, %c1_68, %c0_69, %c0_70] : memref<3x3x128x128xbf16, #tpu.memory_space<vmem>>, vector<1x1x128x128xbf16>
    %46 = vector.shape_cast %45 : vector<1x1x128x128xbf16> to vector<128x128xbf16>
    %cst_71 = arith.constant dense<0.000000e+00> : vector<256x128xf32>
    %47 = tpu.matmul %44, %46, %cst_71 {dimension_numbers = #tpu.dot_dimension_numbers<[1], [0], [0], [1], [0, 0, 1, 1], [], []>} : vector<256x128xbf16>, vector<128x128xbf16>, vector<256x128xf32> -> vector<256x128xf32>
    %48 = arith.addf %41, %47 : vector<256x128xf32>
    %c1_72 = arith.constant 1 : index
    %c2_73 = arith.constant 2 : index
    %c0_74 = arith.constant 0 : index
    %49 = vector.load %arg7[%c1_72, %c2_73, %c0_74] : memref<18x18x128xf32, #tpu.memory_space<vmem>>, vector<16x16x128xf32>
    %50 = vector.shape_cast %49 : vector<16x16x128xf32> to vector<256x128xf32>
    %51 = arith.truncf %50 : vector<256x128xf32> to vector<256x128xbf16>
    %c1_75 = arith.constant 1 : index
    %c2_76 = arith.constant 2 : index
    %c0_77 = arith.constant 0 : index
    %c0_78 = arith.constant 0 : index
    %52 = vector.load %arg2[%c1_75, %c2_76, %c0_77, %c0_78] : memref<3x3x128x128xbf16, #tpu.memory_space<vmem>>, vector<1x1x128x128xbf16>
    %53 = vector.shape_cast %52 : vector<1x1x128x128xbf16> to vector<128x128xbf16>
    %cst_79 = arith.constant dense<0.000000e+00> : vector<256x128xf32>
    %54 = tpu.matmul %51, %53, %cst_79 {dimension_numbers = #tpu.dot_dimension_numbers<[1], [0], [0], [1], [0, 0, 1, 1], [], []>} : vector<256x128xbf16>, vector<128x128xbf16>, vector<256x128xf32> -> vector<256x128xf32>
    %55 = arith.addf %48, %54 : vector<256x128xf32>
    %c0_80 = arith.constant 0 : index
    %c0_81 = arith.constant 0 : index
    %56 = vector.load %arg9[%c0_80, %c0_81] : memref<256x128xf32, #tpu.memory_space<vmem>>, vector<256x128xf32>
    %57 = arith.addf %56, %55 : vector<256x128xf32>
    %c0_82 = arith.constant 0 : index
    %c0_83 = arith.constant 0 : index
    %58 = vector.load %arg9[%c0_82, %c0_83] : memref<256x128xf32, #tpu.memory_space<vmem>>, vector<256x128xf32>
    tpu.vector_store %arg9[%c0_82, %c0_83], %57 {strides = array<i32>} : memref<256x128xf32, #tpu.memory_space<vmem>>, vector<256x128xf32>,
    %c2_84 = arith.constant 2 : index
    %c0_85 = arith.constant 0 : index
    %c0_86 = arith.constant 0 : index
    %59 = vector.load %arg7[%c2_84, %c0_85, %c0_86] : memref<18x18x128xf32, #tpu.memory_space<vmem>>, vector<16x16x128xf32>
    %60 = vector.shape_cast %59 : vector<16x16x128xf32> to vector<256x128xf32>
    %61 = arith.truncf %60 : vector<256x128xf32> to vector<256x128xbf16>
    %c2_87 = arith.constant 2 : index
    %c0_88 = arith.constant 0 : index
    %c0_89 = arith.constant 0 : index
    %c0_90 = arith.constant 0 : index
    %62 = vector.load %arg2[%c2_87, %c0_88, %c0_89, %c0_90] : memref<3x3x128x128xbf16, #tpu.memory_space<vmem>>, vector<1x1x128x128xbf16>
    %63 = vector.shape_cast %62 : vector<1x1x128x128xbf16> to vector<128x128xbf16>
    %cst_91 = arith.constant dense<0.000000e+00> : vector<256x128xf32>
    %64 = tpu.matmul %61, %63, %cst_91 {dimension_numbers = #tpu.dot_dimension_numbers<[1], [0], [0], [1], [0, 0, 1, 1], [], []>} : vector<256x128xbf16>, vector<128x128xbf16>, vector<256x128xf32> -> vector<256x128xf32>
    %c2_92 = arith.constant 2 : index
    %c1_93 = arith.constant 1 : index
    %c0_94 = arith.constant 0 : index
    %65 = vector.load %arg7[%c2_92, %c1_93, %c0_94] : memref<18x18x128xf32, #tpu.memory_space<vmem>>, vector<16x16x128xf32>
    %66 = vector.shape_cast %65 : vector<16x16x128xf32> to vector<256x128xf32>
    %67 = arith.truncf %66 : vector<256x128xf32> to vector<256x128xbf16>
    %c2_95 = arith.constant 2 : index
    %c1_96 = arith.constant 1 : index
    %c0_97 = arith.constant 0 : index
    %c0_98 = arith.constant 0 : index
    %68 = vector.load %arg2[%c2_95, %c1_96, %c0_97, %c0_98] : memref<3x3x128x128xbf16, #tpu.memory_space<vmem>>, vector<1x1x128x128xbf16>
    %69 = vector.shape_cast %68 : vector<1x1x128x128xbf16> to vector<128x128xbf16>
    %cst_99 = arith.constant dense<0.000000e+00> : vector<256x128xf32>
    %70 = tpu.matmul %67, %69, %cst_99 {dimension_numbers = #tpu.dot_dimension_numbers<[1], [0], [0], [1], [0, 0, 1, 1], [], []>} : vector<256x128xbf16>, vector<128x128xbf16>, vector<256x128xf32> -> vector<256x128xf32>
    %71 = arith.addf %64, %70 : vector<256x128xf32>
    %c2_100 = arith.constant 2 : index
    %c2_101 = arith.constant 2 : index
    %c0_102 = arith.constant 0 : index
    %72 = vector.load %arg7[%c2_100, %c2_101, %c0_102] : memref<18x18x128xf32, #tpu.memory_space<vmem>>, vector<16x16x128xf32>
    %73 = vector.shape_cast %72 : vector<16x16x128xf32> to vector<256x128xf32>
    %74 = arith.truncf %73 : vector<256x128xf32> to vector<256x128xbf16>
    %c2_103 = arith.constant 2 : index
    %c2_104 = arith.constant 2 : index
    %c0_105 = arith.constant 0 : index
    %c0_106 = arith.constant 0 : index
    %75 = vector.load %arg2[%c2_103, %c2_104, %c0_105, %c0_106] : memref<3x3x128x128xbf16, #tpu.memory_space<vmem>>, vector<1x1x128x128xbf16>
    %76 = vector.shape_cast %75 : vector<1x1x128x128xbf16> to vector<128x128xbf16>
    %cst_107 = arith.constant dense<0.000000e+00> : vector<256x128xf32>
    %77 = tpu.matmul %74, %76, %cst_107 {dimension_numbers = #tpu.dot_dimension_numbers<[1], [0], [0], [1], [0, 0, 1, 1], [], []>} : vector<256x128xbf16>, vector<128x128xbf16>, vector<256x128xf32> -> vector<256x128xf32>
    %78 = arith.addf %71, %77 : vector<256x128xf32>
    %c0_108 = arith.constant 0 : index
    %c0_109 = arith.constant 0 : index
    %79 = vector.load %arg9[%c0_108, %c0_109] : memref<256x128xf32, #tpu.memory_space<vmem>>, vector<256x128xf32>
    %80 = arith.addf %79, %78 : vector<256x128xf32>
    %c0_110 = arith.constant 0 : index
    %c0_111 = arith.constant 0 : index
    %81 = vector.load %arg9[%c0_110, %c0_111] : memref<256x128xf32, #tpu.memory_space<vmem>>, vector<256x128xf32>
    tpu.vector_store %arg9[%c0_110, %c0_111], %80 {strides = array<i32>} : memref<256x128xf32, #tpu.memory_space<vmem>>, vector<256x128xf32>,
    %c0_112 = arith.constant 0 : index
    %c0_113 = arith.constant 0 : index
    %82 = vector.load %arg3[%c0_112, %c0_113] : memref<1x128xf32, #tpu.memory_space<vmem>>, vector<1x128xf32>
    %c0_114 = arith.constant 0 : index
    %c0_115 = arith.constant 0 : index
    %83 = vector.load %arg9[%c0_114, %c0_115] : memref<256x128xf32, #tpu.memory_space<vmem>>, vector<256x128xf32>
    %84 = vector.broadcast %82 : vector<1x128xf32> to vector<256x128xf32>
    %85 = arith.addf %83, %84 : vector<256x128xf32>
    %cst_116 = arith.constant 0.000000e+00 : f32
    %86 = vector.broadcast %cst_116 : f32 to vector<256x128xf32>
    %87 = arith.maximumf %85, %86 : vector<256x128xf32>
    %88 = vector.shape_cast %87 : vector<256x128xf32> to vector<16x16x128xf32>
    %c1_117 = arith.constant 1 : index
    %c1_118 = arith.constant 1 : index
    %c0_119 = arith.constant 0 : index
    %89 = vector.load %arg8[%c1_117, %c1_118, %c0_119] : memref<18x18x128xf32, #tpu.memory_space<vmem>>, vector<16x16x128xf32>
    tpu.vector_store %arg8[%c1_117, %c1_118, %c0_119], %88 {strides = array<i32>} : memref<18x18x128xf32, #tpu.memory_space<vmem>>, vector<16x16x128xf32>,
    %c0_120 = arith.constant 0 : index
    %c0_121 = arith.constant 0 : index
    %c0_122 = arith.constant 0 : index
    %90 = vector.load %arg8[%c0_120, %c0_121, %c0_122] : memref<18x18x128xf32, #tpu.memory_space<vmem>>, vector<16x16x128xf32>
    %91 = vector.shape_cast %90 : vector<16x16x128xf32> to vector<256x128xf32>
    %92 = arith.truncf %91 : vector<256x128xf32> to vector<256x128xbf16>
    %c0_123 = arith.constant 0 : index
    %c0_124 = arith.constant 0 : index
    %c0_125 = arith.constant 0 : index
    %c0_126 = arith.constant 0 : index
    %93 = vector.load %arg4[%c0_123, %c0_124, %c0_125, %c0_126] : memref<3x3x128x128xbf16, #tpu.memory_space<vmem>>, vector<1x1x128x128xbf16>
    %94 = vector.shape_cast %93 : vector<1x1x128x128xbf16> to vector<128x128xbf16>
    %cst_127 = arith.constant dense<0.000000e+00> : vector<256x128xf32>
    %95 = tpu.matmul %92, %94, %cst_127 {dimension_numbers = #tpu.dot_dimension_numbers<[1], [0], [0], [1], [0, 0, 1, 1], [], []>} : vector<256x128xbf16>, vector<128x128xbf16>, vector<256x128xf32> -> vector<256x128xf32>
    %c0_128 = arith.constant 0 : index
    %c1_129 = arith.constant 1 : index
    %c0_130 = arith.constant 0 : index
    %96 = vector.load %arg8[%c0_128, %c1_129, %c0_130] : memref<18x18x128xf32, #tpu.memory_space<vmem>>, vector<16x16x128xf32>
    %97 = vector.shape_cast %96 : vector<16x16x128xf32> to vector<256x128xf32>
    %98 = arith.truncf %97 : vector<256x128xf32> to vector<256x128xbf16>
    %c0_131 = arith.constant 0 : index
    %c1_132 = arith.constant 1 : index
    %c0_133 = arith.constant 0 : index
    %c0_134 = arith.constant 0 : index
    %99 = vector.load %arg4[%c0_131, %c1_132, %c0_133, %c0_134] : memref<3x3x128x128xbf16, #tpu.memory_space<vmem>>, vector<1x1x128x128xbf16>
    %100 = vector.shape_cast %99 : vector<1x1x128x128xbf16> to vector<128x128xbf16>
    %cst_135 = arith.constant dense<0.000000e+00> : vector<256x128xf32>
    %101 = tpu.matmul %98, %100, %cst_135 {dimension_numbers = #tpu.dot_dimension_numbers<[1], [0], [0], [1], [0, 0, 1, 1], [], []>} : vector<256x128xbf16>, vector<128x128xbf16>, vector<256x128xf32> -> vector<256x128xf32>
    %102 = arith.addf %95, %101 : vector<256x128xf32>
    %c0_136 = arith.constant 0 : index
    %c2_137 = arith.constant 2 : index
    %c0_138 = arith.constant 0 : index
    %103 = vector.load %arg8[%c0_136, %c2_137, %c0_138] : memref<18x18x128xf32, #tpu.memory_space<vmem>>, vector<16x16x128xf32>
    %104 = vector.shape_cast %103 : vector<16x16x128xf32> to vector<256x128xf32>
    %105 = arith.truncf %104 : vector<256x128xf32> to vector<256x128xbf16>
    %c0_139 = arith.constant 0 : index
    %c2_140 = arith.constant 2 : index
    %c0_141 = arith.constant 0 : index
    %c0_142 = arith.constant 0 : index
    %106 = vector.load %arg4[%c0_139, %c2_140, %c0_141, %c0_142] : memref<3x3x128x128xbf16, #tpu.memory_space<vmem>>, vector<1x1x128x128xbf16>
    %107 = vector.shape_cast %106 : vector<1x1x128x128xbf16> to vector<128x128xbf16>
    %cst_143 = arith.constant dense<0.000000e+00> : vector<256x128xf32>
    %108 = tpu.matmul %105, %107, %cst_143 {dimension_numbers = #tpu.dot_dimension_numbers<[1], [0], [0], [1], [0, 0, 1, 1], [], []>} : vector<256x128xbf16>, vector<128x128xbf16>, vector<256x128xf32> -> vector<256x128xf32>
    %109 = arith.addf %102, %108 : vector<256x128xf32>
    %c0_144 = arith.constant 0 : index
    %c0_145 = arith.constant 0 : index
    %110 = vector.load %arg9[%c0_144, %c0_145] : memref<256x128xf32, #tpu.memory_space<vmem>>, vector<256x128xf32>
    tpu.vector_store %arg9[%c0_144, %c0_145], %109 {strides = array<i32>} : memref<256x128xf32, #tpu.memory_space<vmem>>, vector<256x128xf32>,
    %c1_146 = arith.constant 1 : index
    %c0_147 = arith.constant 0 : index
    %c0_148 = arith.constant 0 : index
    %111 = vector.load %arg8[%c1_146, %c0_147, %c0_148] : memref<18x18x128xf32, #tpu.memory_space<vmem>>, vector<16x16x128xf32>
    %112 = vector.shape_cast %111 : vector<16x16x128xf32> to vector<256x128xf32>
    %113 = arith.truncf %112 : vector<256x128xf32> to vector<256x128xbf16>
    %c1_149 = arith.constant 1 : index
    %c0_150 = arith.constant 0 : index
    %c0_151 = arith.constant 0 : index
    %c0_152 = arith.constant 0 : index
    %114 = vector.load %arg4[%c1_149, %c0_150, %c0_151, %c0_152] : memref<3x3x128x128xbf16, #tpu.memory_space<vmem>>, vector<1x1x128x128xbf16>
    %115 = vector.shape_cast %114 : vector<1x1x128x128xbf16> to vector<128x128xbf16>
    %cst_153 = arith.constant dense<0.000000e+00> : vector<256x128xf32>
    %116 = tpu.matmul %113, %115, %cst_153 {dimension_numbers = #tpu.dot_dimension_numbers<[1], [0], [0], [1], [0, 0, 1, 1], [], []>} : vector<256x128xbf16>, vector<128x128xbf16>, vector<256x128xf32> -> vector<256x128xf32>
    %c1_154 = arith.constant 1 : index
    %c1_155 = arith.constant 1 : index
    %c0_156 = arith.constant 0 : index
    %117 = vector.load %arg8[%c1_154, %c1_155, %c0_156] : memref<18x18x128xf32, #tpu.memory_space<vmem>>, vector<16x16x128xf32>
    %118 = vector.shape_cast %117 : vector<16x16x128xf32> to vector<256x128xf32>
    %119 = arith.truncf %118 : vector<256x128xf32> to vector<256x128xbf16>
    %c1_157 = arith.constant 1 : index
    %c1_158 = arith.constant 1 : index
    %c0_159 = arith.constant 0 : index
    %c0_160 = arith.constant 0 : index
    %120 = vector.load %arg4[%c1_157, %c1_158, %c0_159, %c0_160] : memref<3x3x128x128xbf16, #tpu.memory_space<vmem>>, vector<1x1x128x128xbf16>
    %121 = vector.shape_cast %120 : vector<1x1x128x128xbf16> to vector<128x128xbf16>
    %cst_161 = arith.constant dense<0.000000e+00> : vector<256x128xf32>
    %122 = tpu.matmul %119, %121, %cst_161 {dimension_numbers = #tpu.dot_dimension_numbers<[1], [0], [0], [1], [0, 0, 1, 1], [], []>} : vector<256x128xbf16>, vector<128x128xbf16>, vector<256x128xf32> -> vector<256x128xf32>
    %123 = arith.addf %116, %122 : vector<256x128xf32>
    %c1_162 = arith.constant 1 : index
    %c2_163 = arith.constant 2 : index
    %c0_164 = arith.constant 0 : index
    %124 = vector.load %arg8[%c1_162, %c2_163, %c0_164] : memref<18x18x128xf32, #tpu.memory_space<vmem>>, vector<16x16x128xf32>
    %125 = vector.shape_cast %124 : vector<16x16x128xf32> to vector<256x128xf32>
    %126 = arith.truncf %125 : vector<256x128xf32> to vector<256x128xbf16>
    %c1_165 = arith.constant 1 : index
    %c2_166 = arith.constant 2 : index
    %c0_167 = arith.constant 0 : index
    %c0_168 = arith.constant 0 : index
    %127 = vector.load %arg4[%c1_165, %c2_166, %c0_167, %c0_168] : memref<3x3x128x128xbf16, #tpu.memory_space<vmem>>, vector<1x1x128x128xbf16>
    %128 = vector.shape_cast %127 : vector<1x1x128x128xbf16> to vector<128x128xbf16>
    %cst_169 = arith.constant dense<0.000000e+00> : vector<256x128xf32>
    %129 = tpu.matmul %126, %128, %cst_169 {dimension_numbers = #tpu.dot_dimension_numbers<[1], [0], [0], [1], [0, 0, 1, 1], [], []>} : vector<256x128xbf16>, vector<128x128xbf16>, vector<256x128xf32> -> vector<256x128xf32>
    %130 = arith.addf %123, %129 : vector<256x128xf32>
    %c0_170 = arith.constant 0 : index
    %c0_171 = arith.constant 0 : index
    %131 = vector.load %arg9[%c0_170, %c0_171] : memref<256x128xf32, #tpu.memory_space<vmem>>, vector<256x128xf32>
    %132 = arith.addf %131, %130 : vector<256x128xf32>
    %c0_172 = arith.constant 0 : index
    %c0_173 = arith.constant 0 : index
    %133 = vector.load %arg9[%c0_172, %c0_173] : memref<256x128xf32, #tpu.memory_space<vmem>>, vector<256x128xf32>
    tpu.vector_store %arg9[%c0_172, %c0_173], %132 {strides = array<i32>} : memref<256x128xf32, #tpu.memory_space<vmem>>, vector<256x128xf32>,
    %c2_174 = arith.constant 2 : index
    %c0_175 = arith.constant 0 : index
    %c0_176 = arith.constant 0 : index
    %134 = vector.load %arg8[%c2_174, %c0_175, %c0_176] : memref<18x18x128xf32, #tpu.memory_space<vmem>>, vector<16x16x128xf32>
    %135 = vector.shape_cast %134 : vector<16x16x128xf32> to vector<256x128xf32>
    %136 = arith.truncf %135 : vector<256x128xf32> to vector<256x128xbf16>
    %c2_177 = arith.constant 2 : index
    %c0_178 = arith.constant 0 : index
    %c0_179 = arith.constant 0 : index
    %c0_180 = arith.constant 0 : index
    %137 = vector.load %arg4[%c2_177, %c0_178, %c0_179, %c0_180] : memref<3x3x128x128xbf16, #tpu.memory_space<vmem>>, vector<1x1x128x128xbf16>
    %138 = vector.shape_cast %137 : vector<1x1x128x128xbf16> to vector<128x128xbf16>
    %cst_181 = arith.constant dense<0.000000e+00> : vector<256x128xf32>
    %139 = tpu.matmul %136, %138, %cst_181 {dimension_numbers = #tpu.dot_dimension_numbers<[1], [0], [0], [1], [0, 0, 1, 1], [], []>} : vector<256x128xbf16>, vector<128x128xbf16>, vector<256x128xf32> -> vector<256x128xf32>
    %c2_182 = arith.constant 2 : index
    %c1_183 = arith.constant 1 : index
    %c0_184 = arith.constant 0 : index
    %140 = vector.load %arg8[%c2_182, %c1_183, %c0_184] : memref<18x18x128xf32, #tpu.memory_space<vmem>>, vector<16x16x128xf32>
    %141 = vector.shape_cast %140 : vector<16x16x128xf32> to vector<256x128xf32>
    %142 = arith.truncf %141 : vector<256x128xf32> to vector<256x128xbf16>
    %c2_185 = arith.constant 2 : index
    %c1_186 = arith.constant 1 : index
    %c0_187 = arith.constant 0 : index
    %c0_188 = arith.constant 0 : index
    %143 = vector.load %arg4[%c2_185, %c1_186, %c0_187, %c0_188] : memref<3x3x128x128xbf16, #tpu.memory_space<vmem>>, vector<1x1x128x128xbf16>
    %144 = vector.shape_cast %143 : vector<1x1x128x128xbf16> to vector<128x128xbf16>
    %cst_189 = arith.constant dense<0.000000e+00> : vector<256x128xf32>
    %145 = tpu.matmul %142, %144, %cst_189 {dimension_numbers = #tpu.dot_dimension_numbers<[1], [0], [0], [1], [0, 0, 1, 1], [], []>} : vector<256x128xbf16>, vector<128x128xbf16>, vector<256x128xf32> -> vector<256x128xf32>
    %146 = arith.addf %139, %145 : vector<256x128xf32>
    %c2_190 = arith.constant 2 : index
    %c2_191 = arith.constant 2 : index
    %c0_192 = arith.constant 0 : index
    %147 = vector.load %arg8[%c2_190, %c2_191, %c0_192] : memref<18x18x128xf32, #tpu.memory_space<vmem>>, vector<16x16x128xf32>
    %148 = vector.shape_cast %147 : vector<16x16x128xf32> to vector<256x128xf32>
    %149 = arith.truncf %148 : vector<256x128xf32> to vector<256x128xbf16>
    %c2_193 = arith.constant 2 : index
    %c2_194 = arith.constant 2 : index
    %c0_195 = arith.constant 0 : index
    %c0_196 = arith.constant 0 : index
    %150 = vector.load %arg4[%c2_193, %c2_194, %c0_195, %c0_196] : memref<3x3x128x128xbf16, #tpu.memory_space<vmem>>, vector<1x1x128x128xbf16>
    %151 = vector.shape_cast %150 : vector<1x1x128x128xbf16> to vector<128x128xbf16>
    %cst_197 = arith.constant dense<0.000000e+00> : vector<256x128xf32>
    %152 = tpu.matmul %149, %151, %cst_197 {dimension_numbers = #tpu.dot_dimension_numbers<[1], [0], [0], [1], [0, 0, 1, 1], [], []>} : vector<256x128xbf16>, vector<128x128xbf16>, vector<256x128xf32> -> vector<256x128xf32>
    %153 = arith.addf %146, %152 : vector<256x128xf32>
    %c0_198 = arith.constant 0 : index
    %c0_199 = arith.constant 0 : index
    %154 = vector.load %arg9[%c0_198, %c0_199] : memref<256x128xf32, #tpu.memory_space<vmem>>, vector<256x128xf32>
    %155 = arith.addf %154, %153 : vector<256x128xf32>
    %c0_200 = arith.constant 0 : index
    %c0_201 = arith.constant 0 : index
    %156 = vector.load %arg9[%c0_200, %c0_201] : memref<256x128xf32, #tpu.memory_space<vmem>>, vector<256x128xf32>
    tpu.vector_store %arg9[%c0_200, %c0_201], %155 {strides = array<i32>} : memref<256x128xf32, #tpu.memory_space<vmem>>, vector<256x128xf32>,
    %c0_202 = arith.constant 0 : index
    %c0_203 = arith.constant 0 : index
    %157 = vector.load %arg5[%c0_202, %c0_203] : memref<1x128xf32, #tpu.memory_space<vmem>>, vector<1x128xf32>
    %c0_204 = arith.constant 0 : index
    %c0_205 = arith.constant 0 : index
    %c0_206 = arith.constant 0 : index
    %c0_207 = arith.constant 0 : index
    %158 = vector.load %arg1[%c0_204, %c0_205, %c0_206, %c0_207] : memref<1x16x16x128xf32, #tpu.memory_space<vmem>>, vector<1x16x16x128xf32>
    %159 = vector.shape_cast %158 : vector<1x16x16x128xf32> to vector<16x16x128xf32>
    %160 = vector.shape_cast %159 : vector<16x16x128xf32> to vector<256x128xf32>
    %c0_208 = arith.constant 0 : index
    %c0_209 = arith.constant 0 : index
    %161 = vector.load %arg9[%c0_208, %c0_209] : memref<256x128xf32, #tpu.memory_space<vmem>>, vector<256x128xf32>
    %162 = vector.broadcast %157 : vector<1x128xf32> to vector<256x128xf32>
    %163 = arith.addf %161, %162 : vector<256x128xf32>
    %164 = arith.addf %163, %160 : vector<256x128xf32>
    %cst_210 = arith.constant 0.000000e+00 : f32
    %165 = vector.broadcast %cst_210 : f32 to vector<256x128xf32>
    %166 = arith.maximumf %164, %165 : vector<256x128xf32>
    %167 = vector.shape_cast %166 : vector<256x128xf32> to vector<1x16x16x128xf32>
    %c0_211 = arith.constant 0 : index
    %c0_212 = arith.constant 0 : index
    %c0_213 = arith.constant 0 : index
    %c0_214 = arith.constant 0 : index
    %168 = vector.load %arg6[%c0_211, %c0_212, %c0_213, %c0_214] : memref<1x16x16x128xf32, #tpu.memory_space<vmem>>, vector<1x16x16x128xf32>
    tpu.vector_store %arg6[%c0_211, %c0_212, %c0_213, %c0_214], %167 {strides = array<i32>} : memref<1x16x16x128xf32, #tpu.memory_space<vmem>>, vector<1x16x16x128xf32>,
    return
  }
  func.func @transform_0(%arg0: i32) -> (i32, i32, i32, i32) {
    %c0_i32 = arith.constant 0 : i32
    %c0_i32_0 = arith.constant 0 : i32
    %c0_i32_1 = arith.constant 0 : i32
    %c0_i32_2 = arith.constant 0 : i32
    return %arg0, %c0_i32, %c0_i32_0, %c0_i32_1 : i32, i32, i32, i32
  }
  func.func @transform_1(%arg0: i32) -> (i32, i32, i32, i32) {
    %c0_i32 = arith.constant 0 : i32
    %c0_i32_0 = arith.constant 0 : i32
    %c0_i32_1 = arith.constant 0 : i32
    %c0_i32_2 = arith.constant 0 : i32
    %c0_i32_3 = arith.constant 0 : i32
    return %c0_i32, %c0_i32_0, %c0_i32_1, %c0_i32_2 : i32, i32, i32, i32
  }
  func.func @transform_2(%arg0: i32) -> (i32, i32) {
    %c0_i32 = arith.constant 0 : i32
    %c0_i32_0 = arith.constant 0 : i32
    %c0_i32_1 = arith.constant 0 : i32
    return %c0_i32, %c0_i32_0 : i32, i32
  }
  func.func @transform_3(%arg0: i32) -> (i32, i32, i32, i32) {
    %c0_i32 = arith.constant 0 : i32
    %c0_i32_0 = arith.constant 0 : i32
    %c0_i32_1 = arith.constant 0 : i32
    %c0_i32_2 = arith.constant 0 : i32
    %c0_i32_3 = arith.constant 0 : i32
    return %c0_i32, %c0_i32_0, %c0_i32_1, %c0_i32_2 : i32, i32, i32, i32
  }
  func.func @transform_4(%arg0: i32) -> (i32, i32) {
    %c0_i32 = arith.constant 0 : i32
    %c0_i32_0 = arith.constant 0 : i32
    %c0_i32_1 = arith.constant 0 : i32
    return %c0_i32, %c0_i32_0 : i32, i32
  }
  func.func @transform_5(%arg0: i32) -> (i32, i32, i32, i32) {
    %c0_i32 = arith.constant 0 : i32
    %c0_i32_0 = arith.constant 0 : i32
    %c0_i32_1 = arith.constant 0 : i32
    %c0_i32_2 = arith.constant 0 : i32
    return %arg0, %c0_i32, %c0_i32_0, %c0_i32_1 : i32, i32, i32, i32
  }
}

</mosaic_0001>

<llo_original>
// kernel: tpu_custom_call.1
$region0: #{tpu_custom_call.1}
  #allocation0 [shape = 'u32[]', space=smem, size = 0x4, offset = 0x4, fixed_abs, tag = 'smem constant byte address 0x4 - core index']
  #allocation1 [shape = 'u32[144,128]{1,0:T(1,128)}', space=vmem, size = 0x12000, scoped, tag = 'internal scratch']
  #allocation2 [shape = 'f32[18,18,128]{2,1,0:T(8,128)}', space=vmem, size = 0x36000, scoped, tag = 'scratch operand']
  #allocation3 [shape = 'f32[18,18,128]{2,1,0:T(8,128)}', space=vmem, size = 0x36000, scoped, tag = 'scratch operand']
  #allocation4 [shape = 'f32[256,128]{1,0:T(8,128)}', space=vmem, size = 0x20000, scoped, tag = 'scratch operand']
  %s0 = inlined_call_operand.hbm [shape: f32[2,16,16,128], index: 0, kind: input, shape index: {}]
  %s1 = inlined_call_operand.hbm [shape: bf16[3,3,128,128], index: 1, kind: input, shape index: {}]
  %s2 = inlined_call_operand.vmem [shape: f32[1,128], index: 2, kind: input, shape index: {}]
  %s3 = inlined_call_operand.hbm [shape: bf16[3,3,128,128], index: 3, kind: input, shape index: {}]
  %s4 = inlined_call_operand.vmem [shape: f32[1,128], index: 4, kind: input, shape index: {}]
  %s5 = inlined_call_operand.hbm [shape: f32[2,16,16,128], index: 5, kind: output, shape index: {}]
  %s6 = sld [smem:[#allocation0]]
  $region65: #{tpu_custom_call.1} parent=0
    _
  %s8 = ssub.s32 1, %s6
  %s9 = scalar_select 0, %s8, %s6
  $region1: #{tpu_custom_call.1} parent=0
    #allocation5 [shape = 'u8[262144]{0}', space=vmem, size = 0x40000, scoped, tag = 'input window, operand 0']
    #allocation6 [shape = 's32[2]{0}', space=sflag, size = 0x8, scoped, tag = 'scoped memory for tpu_custom_call.1']
    #allocation7 [shape = 's32[2]{0}', space=sflag, size = 0x8, scoped, tag = 'scoped memory for tpu_custom_call.1']
    #allocation8 [shape = 'u8[294912]{0}', space=vmem, size = 0x48000, scoped, tag = 'input window, operand 1, single buffered']
    #allocation9 [shape = 's32[1]{0}', space=sflag, size = 0x4, scoped, tag = 'scoped memory for tpu_custom_call.1']
    #allocation10 [shape = 'u8[294912]{0}', space=vmem, size = 0x48000, scoped, tag = 'input window, operand 3, single buffered']
    #allocation11 [shape = 'u8[262144]{0}', space=vmem, size = 0x40000, scoped, tag = 'output window, operand 0']
    %10 = vsyncpa [#allocation6], 0
    %s11 = scalar_lea.sflag [#allocation6], 1
    %12 = vsyncpa %s11, 0
    %13 = vsyncpa [#allocation9], 0
    %14 = vsyncpa [#allocation7], 0
    %s15 = scalar_lea.sflag [#allocation7], 1
    %16 = vsyncpa %s15, 0
    loop: start=0, step=1, limit=4
    $region2: #{tpu_custom_call.1} parent=1 // loop_pre_header
      _
    $region3: #{tpu_custom_call.1} parent=1 // loop_header
      %s18 = sphi 0, %s22
      %p19 = scmp.ge.s32.totalorder %s18, 4
      %s28 = sphi 0, %s30
      %s31 = sphi 0, %s28
      %s32 = sphi 0, %s31
      %s48 = sphi 0, %s32
      %s52 = sphi 0, %s52
      %s54 = sphi 0, %s52
      %s55 = sphi 0, %s54
      %s69 = sphi 0, %s55
      %s73 = sphi 0, %s73
      %s75 = sphi 0, %s73
      %s76 = sphi 0, %s75
      %s90 = sphi 0, %s76
      %s94 = sphi 0, %s94
      %s96 = sphi 0, %s94
      %s97 = sphi 0, %s96
      %s111 = sphi 0, %s97
      %s115 = sphi 0, %s115
      %s117 = sphi 0, %s115
      %s118 = sphi 0, %s117
      %s132 = sphi 0, %s118
      %s138 = sphi 0, %s140
      %s141 = sphi 0, %s138
      %s142 = sphi 0, %s141
      %s158 = sphi 0, %s142
    $region4: #{tpu_custom_call.1} parent=1 // loop_header_branch
      %21 = sbr.rel (%p19) target = $region8
    $region5: #{tpu_custom_call.1} parent=1 // loop_body
      %s23 = ssub.s32 %s18, 1
      %s24 = ssub.s32 %s18, 2
      %s25 = sadd.s32 %s18, 1
      %s26 = ssub.s32 %s18, %s25
      %p27 = scmp.eq.s32.totalorder %s26, 0
      %s29 = sadd.s32 %s28, 1
      %s30 = scalar_select %p27, %s28, %s29
      %p33 = pneg %p27
      %p34 = scmp.eq.s32.totalorder %s18, 1
      %p35 = por %p33, %p34
      %p36 = scmp.ne.s32.totalorder %s28, %s31
      %p37 = scmp.eq.s32.totalorder %s18, 0
      %p38 = por %p36, %p37
      %p39 = scmp.ne.s32.totalorder %s28, %s31
      %p40 = scmp.eq.s32.totalorder %s23, 1
      %p41 = por %p39, %p40
      %p42 = scmp.ne.s32.totalorder %s31, %s32
      %p43 = scmp.eq.s32.totalorder %s23, 0
      %p44 = por %p42, %p43
      %p45 = scmp.ne.s32.totalorder %s31, %s32
      %p46 = scmp.eq.s32.totalorder %s24, 1
      %p47 = por %p45, %p46
      %p49 = scmp.ne.s32.totalorder %s32, %s48
      %p50 = scmp.eq.s32.totalorder %s24, 0
      %p51 = por %p49, %p50
      %s53 = sadd.s32 %s52, 1
      %p56 = scmp.eq.s32.totalorder %s18, 1
      %p57 = scmp.ne.s32.totalorder %s52, %s54
      %p58 = scmp.eq.s32.totalorder %s18, 0
      %p59 = por %p57, %p58
      %p60 = scmp.ne.s32.totalorder %s52, %s54
      %p61 = scmp.eq.s32.totalorder %s23, 1
      %p62 = por %p60, %p61
      %p63 = scmp.ne.s32.totalorder %s54, %s55
      %p64 = scmp.eq.s32.totalorder %s23, 0
      %p65 = por %p63, %p64
      %p66 = scmp.ne.s32.totalorder %s54, %s55
      %p67 = scmp.eq.s32.totalorder %s24, 1
      %p68 = por %p66, %p67
      %p70 = scmp.ne.s32.totalorder %s55, %s69
      %p71 = scmp.eq.s32.totalorder %s24, 0
      %p72 = por %p70, %p71
      %s74 = sadd.s32 %s73, 1
      %p77 = scmp.eq.s32.totalorder %s18, 1
      %p78 = scmp.ne.s32.totalorder %s73, %s75
      %p79 = scmp.eq.s32.totalorder %s18, 0
      %p80 = por %p78, %p79
      %p81 = scmp.ne.s32.totalorder %s73, %s75
      %p82 = scmp.eq.s32.totalorder %s23, 1
      %p83 = por %p81, %p82
      %p84 = scmp.ne.s32.totalorder %s75, %s76
      %p85 = scmp.eq.s32.totalorder %s23, 0
      %p86 = por %p84, %p85
      %p87 = scmp.ne.s32.totalorder %s75, %s76
      %p88 = scmp.eq.s32.totalorder %s24, 1
      %p89 = por %p87, %p88
      %p91 = scmp.ne.s32.totalorder %s76, %s90
      %p92 = scmp.eq.s32.totalorder %s24, 0
      %p93 = por %p91, %p92
      %s95 = sadd.s32 %s94, 1
      %p98 = scmp.eq.s32.totalorder %s18, 1
      %p99 = scmp.ne.s32.totalorder %s94, %s96
      %p100 = scmp.eq.s32.totalorder %s18, 0
      %p101 = por %p99, %p100
      %p102 = scmp.ne.s32.totalorder %s94, %s96
      %p103 = scmp.eq.s32.totalorder %s23, 1
      %p104 = por %p102, %p103
      %p105 = scmp.ne.s32.totalorder %s96, %s97
      %p106 = scmp.eq.s32.totalorder %s23, 0
      %p107 = por %p105, %p106
      %p108 = scmp.ne.s32.totalorder %s96, %s97
      %p109 = scmp.eq.s32.totalorder %s24, 1
      %p110 = por %p108, %p109
      %p112 = scmp.ne.s32.totalorder %s97, %s111
      %p113 = scmp.eq.s32.totalorder %s24, 0
      %p114 = por %p112, %p113
      %s116 = sadd.s32 %s115, 1
      %p119 = scmp.eq.s32.totalorder %s18, 1
      %p120 = scmp.ne.s32.totalorder %s115, %s117
      %p121 = scmp.eq.s32.totalorder %s18, 0
      %p122 = por %p120, %p121
      %p123 = scmp.ne.s32.totalorder %s115, %s117
      %p124 = scmp.eq.s32.totalorder %s23, 1
      %p125 = por %p123, %p124
      %p126 = scmp.ne.s32.totalorder %s117, %s118
      %p127 = scmp.eq.s32.totalorder %s23, 0
      %p128 = por %p126, %p127
      %p129 = scmp.ne.s32.totalorder %s117, %s118
      %p130 = scmp.eq.s32.totalorder %s24, 1
      %p131 = por %p129, %p130
      %p133 = scmp.ne.s32.totalorder %s118, %s132
      %p134 = scmp.eq.s32.totalorder %s24, 0
      %p135 = por %p133, %p134
      %s136 = ssub.s32 %s18, %s25
      %p137 = scmp.eq.s32.totalorder %s136, 0
      %s139 = sadd.s32 %s138, 1
      %s140 = scalar_select %p137, %s138, %s139
      %p143 = pneg %p137
      %p144 = scmp.eq.s32.totalorder %s18, 1
      %p145 = por %p143, %p144
      %p146 = scmp.ne.s32.totalorder %s138, %s141
      %p147 = scmp.eq.s32.totalorder %s18, 0
      %p148 = por %p146, %p147
      %p149 = scmp.ne.s32.totalorder %s138, %s141
      %p150 = scmp.eq.s32.totalorder %s23, 1
      %p151 = por %p149, %p150
      %p152 = scmp.ne.s32.totalorder %s141, %s142
      %p153 = scmp.eq.s32.totalorder %s23, 0
      %p154 = por %p152, %p153
      %p155 = scmp.ne.s32.totalorder %s141, %s142
      %p156 = scmp.eq.s32.totalorder %s24, 1
      %p157 = por %p155, %p156
      %p159 = scmp.ne.s32.totalorder %s142, %s158
      %p160 = scmp.eq.s32.totalorder %s24, 0
      %p161 = por %p159, %p160
      %p162 = scmp.le.s32.totalorder 1, %s18
      %p163 = scmp.lt.s32.totalorder %s18, 3
      %p164 = pnand %p162, %p163
      %p165 = pneg %p164
      // Predicated region
      $region9: #{tpu_custom_call.1} parent=5 // pred_check
        _
      $region10: #{tpu_custom_call.1} parent=5 // pred_check_branch
        %167 = sbr.rel (%p164) target = $region12
      $region11: #{tpu_custom_call.1} parent=5 // pred_region
        %s168 = ssub.s32 %s18, 1
        // Predicated region
        $region13: #{tpu_custom_call.1} parent=11 // pred_check
          %p169 = pneg %p65
        $region14: #{tpu_custom_call.1} parent=11 // pred_check_branch
          %171 = sbr.rel (%p169) target = $region16
        $region15: #{tpu_custom_call.1} parent=11 // pred_region
          %s173 = ssub.s32 9216, 9216
          %174 = vsyncadd [#allocation9], %s173
          %s175 = sshll.u32 [#allocation8], 4
          %s176 = int_to_ptr.vmem [resolvable:$true] %s175
          %181 = dma.hbm_to_vmem [thread:$0]  %s1, 9216, %s176, [#allocation9], 64, 64, 4
        $region16: #{tpu_custom_call.1} parent=11 // pred_fallthru
          _
        // Predicated region
        $region17: #{tpu_custom_call.1} parent=11 // pred_check
          %p182 = pneg %p86
        $region18: #{tpu_custom_call.1} parent=11 // pred_check_branch
          %184 = sbr.rel (%p182) target = $region20
        $region19: #{tpu_custom_call.1} parent=11 // pred_region
          _
        $region20: #{tpu_custom_call.1} parent=11 // pred_fallthru
          _
        // Predicated region
        $region21: #{tpu_custom_call.1} parent=11 // pred_check
          %p185 = pneg %p107
        $region22: #{tpu_custom_call.1} parent=11 // pred_check_branch
          %187 = sbr.rel (%p185) target = $region24
        $region23: #{tpu_custom_call.1} parent=11 // pred_region
          %s189 = ssub.s32 9216, 9216
          %190 = vsyncadd [#allocation9], %s189
          %s191 = sshll.u32 [#allocation10], 4
          %s192 = int_to_ptr.vmem [resolvable:$true] %s191
          %197 = dma.hbm_to_vmem [thread:$0]  %s3, 9216, %s192, [#allocation9], 64, 64, 4
        $region24: #{tpu_custom_call.1} parent=11 // pred_fallthru
          _
        // Predicated region
        $region25: #{tpu_custom_call.1} parent=11 // pred_check
          %p198 = pneg %p128
        $region26: #{tpu_custom_call.1} parent=11 // pred_check_branch
          %200 = sbr.rel (%p198) target = $region28
        $region27: #{tpu_custom_call.1} parent=11 // pred_region
          _
        $region28: #{tpu_custom_call.1} parent=11 // pred_fallthru
          _
      $region12: #{tpu_custom_call.1} parent=5 // pred_fallthru
        _
      %p201 = scmp.lt.s32.totalorder %s18, 2
      // Predicated region
      $region29: #{tpu_custom_call.1} parent=5 // pred_check
        %p202 = pneg %p201
      $region30: #{tpu_custom_call.1} parent=5 // pred_check_branch
        %204 = sbr.rel (%p202) target = $region32
      $region31: #{tpu_custom_call.1} parent=5 // pred_region
        // Predicated region
        $region33: #{tpu_custom_call.1} parent=31 // pred_check
          %p205 = pneg %p38
        $region34: #{tpu_custom_call.1} parent=31 // pred_check_branch
          %207 = sbr.rel (%p205) target = $region36
        $region35: #{tpu_custom_call.1} parent=31 // pred_region
          %s208 = sand.u32 %s28, 1
          %s209 = scalar_lea.sflag [#allocation6], %s208
          %s210 = sand.u32 %s28, 1
          %s211 = smul.addr %s210, 256
          %s212 = scalar_lea.vmem [#allocation5], %s211
          %s214 = ssub.s32 4096, 4096
          %215 = vsyncadd %s209, %s214
          %s216 = smul.addr %s18, 32
          %s217 = smul.addr %s216, 128
          %s218 = scalar_lea.hbm %s0, %s217
          %s219 = sshll.u32 %s212, 4
          %s220 = int_to_ptr.vmem [resolvable:$true] %s219
          %225 = dma.hbm_to_vmem [thread:$0]  %s218, 4096, %s220, %s209, 128, 128, 8
        $region36: #{tpu_custom_call.1} parent=31 // pred_fallthru
          _
      $region32: #{tpu_custom_call.1} parent=5 // pred_fallthru
        _
      %p226 = scmp.le.s32.totalorder 1, %s18
      %p227 = scmp.lt.s32.totalorder %s18, 3
      %p228 = pnand %p226, %p227
      %p229 = pneg %p228
      // Predicated region
      $region37: #{tpu_custom_call.1} parent=5 // pred_check
        _
      $region38: #{tpu_custom_call.1} parent=5 // pred_check_branch
        %231 = sbr.rel (%p228) target = $region40
      $region39: #{tpu_custom_call.1} parent=5 // pred_region
        %s232 = ssub.s32 %s18, 1
        %s233 = sand.u32 %s31, 1
        %s234 = scalar_lea.sflag [#allocation6], %s233
        %s235 = sand.u32 %s31, 1
        %s236 = smul.addr %s235, 256
        %s237 = scalar_lea.vmem [#allocation5], %s236
        // Predicated region
        $region41: #{tpu_custom_call.1} parent=39 // pred_check
          %p238 = pneg %p44
        $region42: #{tpu_custom_call.1} parent=39 // pred_check_branch
          %240 = sbr.rel (%p238) target = $region44
        $region43: #{tpu_custom_call.1} parent=39 // pred_region
          %241 = dma.done %s234, 4096
        $region44: #{tpu_custom_call.1} parent=39 // pred_fallthru
          _
        // Predicated region
        $region45: #{tpu_custom_call.1} parent=39 // pred_check
          %p242 = pneg %p65
        $region46: #{tpu_custom_call.1} parent=39 // pred_check_branch
          %244 = sbr.rel (%p242) target = $region48
        $region47: #{tpu_custom_call.1} parent=39 // pred_region
          %245 = dma.done [#allocation9], 9216
        $region48: #{tpu_custom_call.1} parent=39 // pred_fallthru
          _
        // Predicated region
        $region49: #{tpu_custom_call.1} parent=39 // pred_check
          %p246 = pneg %p107
        $region50: #{tpu_custom_call.1} parent=39 // pred_check_branch
          %248 = sbr.rel (%p246) target = $region52
        $region51: #{tpu_custom_call.1} parent=39 // pred_region
          %249 = dma.done [#allocation9], 9216
        $region52: #{tpu_custom_call.1} parent=39 // pred_fallthru
          _
        %s250 = sand.u32 %s31, 1
        %s251 = scalar_lea.sflag [#allocation6], %s250
        %s252 = sand.u32 %s31, 1
        %s253 = smul.addr %s252, 256
        %s254 = scalar_lea.vmem [#allocation5], %s253
        %p255 = pneg %p44
        %p256 = pneg %p41
        %p257 = pneg %p65
        %p258 = pneg %p62
        %p259 = pneg %p86
        %p260 = pneg %p83
        %p261 = pneg %p107
        %p262 = pneg %p104
        %p263 = pneg %p128
        %p264 = pneg %p125
        %p265 = pneg %p154
        %p266 = pneg %p151
        %s267 = sand.u32 %s141, 1
        %s268 = scalar_lea.sflag [#allocation7], %s267
        %s269 = sand.u32 %s141, 1
        %s270 = smul.addr %s269, 256
        %s271 = scalar_lea.vmem [#allocation11], %s270
        %273 = vst [vmem:[#allocation2] sm:$0xff] 0.0
        %274 = vst [vmem:[#allocation2 + $0x8] sm:$0xff] 0.0
        %275 = vst [vmem:[#allocation2 + $0x10] sm:$0x3] 0.0
        %s276 = scalar_lea.vmem [#allocation2], 408
        %277 = vst [vmem:[%s276] sm:$0xff] 0.0
        %278 = vst [vmem:[%s276 + $0x8] sm:$0xff] 0.0
        %279 = vst [vmem:[%s276 + $0x10] sm:$0x3] 0.0
        %280 = vst [vmem:[#allocation2] sm:$0x1] 0.0
        %281 = vst [vmem:[#allocation2 + $0x18] sm:$0x1] 0.0
        %282 = vst [vmem:[#allocation2 + $0x30] sm:$0x1] 0.0
        %283 = vst [vmem:[#allocation2 + $0x48] sm:$0x1] 0.0
        %284 = vst [vmem:[#allocation2 + $0x60] sm:$0x1] 0.0
        %285 = vst [vmem:[#allocation2 + $0x78] sm:$0x1] 0.0
        %286 = vst [vmem:[#allocation2 + $0x90] sm:$0x1] 0.0
        %287 = vst [vmem:[#allocation2 + $0xa8] sm:$0x1] 0.0
        %288 = vst [vmem:[#allocation2 + $0xc0] sm:$0x1] 0.0
        %289 = vst [vmem:[#allocation2 + $0xd8] sm:$0x1] 0.0
        %290 = vst [vmem:[#allocation2 + $0xf0] sm:$0x1] 0.0
        %291 = vst [vmem:[#allocation2 + $0x108] sm:$0x1] 0.0
        %292 = vst [vmem:[#allocation2 + $0x120] sm:$0x1] 0.0
        %293 = vst [vmem:[#allocation2 + $0x138] sm:$0x1] 0.0
        %294 = vst [vmem:[#allocation2 + $0x150] sm:$0x1] 0.0
        %295 = vst [vmem:[#allocation2 + $0x168] sm:$0x1] 0.0
        %296 = vst [vmem:[#allocation2 + $0x180] sm:$0x1] 0.0
        %297 = vst [vmem:[#allocation2 + $0x198] sm:$0x1] 0.0
        %298 = vst [vmem:[#allocation2 + $0x11] sm:$0x1] 0.0
        %299 = vst [vmem:[#allocation2 + $0x29] sm:$0x1] 0.0
        %300 = vst [vmem:[#allocation2 + $0x41] sm:$0x1] 0.0
        %301 = vst [vmem:[#allocation2 + $0x59] sm:$0x1] 0.0
        %302 = vst [vmem:[#allocation2 + $0x71] sm:$0x1] 0.0
        %303 = vst [vmem:[#allocation2 + $0x89] sm:$0x1] 0.0
        %304 = vst [vmem:[#allocation2 + $0xa1] sm:$0x1] 0.0
        %305 = vst [vmem:[#allocation2 + $0xb9] sm:$0x1] 0.0
        %306 = vst [vmem:[#allocation2 + $0xd1] sm:$0x1] 0.0
        %307 = vst [vmem:[#allocation2 + $0xe9] sm:$0x1] 0.0
        %308 = vst [vmem:[#allocation2 + $0x101] sm:$0x1] 0.0
        %309 = vst [vmem:[#allocation2 + $0x119] sm:$0x1] 0.0
        %310 = vst [vmem:[#allocation2 + $0x131] sm:$0x1] 0.0
        %311 = vst [vmem:[#allocation2 + $0x149] sm:$0x1] 0.0
        %312 = vst [vmem:[#allocation2 + $0x161] sm:$0x1] 0.0
        %313 = vst [vmem:[#allocation2 + $0x179] sm:$0x1] 0.0
        %314 = vst [vmem:[#allocation2 + $0x191] sm:$0x1] 0.0
        %315 = vst [vmem:[#allocation2 + $0x1a9] sm:$0x1] 0.0
        %316 = vst [vmem:[#allocation3] sm:$0xff] 0.0
        %317 = vst [vmem:[#allocation3 + $0x8] sm:$0xff] 0.0
        %318 = vst [vmem:[#allocation3 + $0x10] sm:$0x3] 0.0
        %s319 = scalar_lea.vmem [#allocation3], 408
        %320 = vst [vmem:[%s319] sm:$0xff] 0.0
        %321 = vst [vmem:[%s319 + $0x8] sm:$0xff] 0.0
        %322 = vst [vmem:[%s319 + $0x10] sm:$0x3] 0.0
        %323 = vst [vmem:[#allocation3] sm:$0x1] 0.0
        %324 = vst [vmem:[#allocation3 + $0x18] sm:$0x1] 0.0
        %325 = vst [vmem:[#allocation3 + $0x30] sm:$0x1] 0.0
        %326 = vst [vmem:[#allocation3 + $0x48] sm:$0x1] 0.0
        %327 = vst [vmem:[#allocation3 + $0x60] sm:$0x1] 0.0
        %328 = vst [vmem:[#allocation3 + $0x78] sm:$0x1] 0.0
        %329 = vst [vmem:[#allocation3 + $0x90] sm:$0x1] 0.0
        %330 = vst [vmem:[#allocation3 + $0xa8] sm:$0x1] 0.0
        %331 = vst [vmem:[#allocation3 + $0xc0] sm:$0x1] 0.0
        %332 = vst [vmem:[#allocation3 + $0xd8] sm:$0x1] 0.0
        %333 = vst [vmem:[#allocation3 + $0xf0] sm:$0x1] 0.0
        %334 = vst [vmem:[#allocation3 + $0x108] sm:$0x1] 0.0
        %335 = vst [vmem:[#allocation3 + $0x120] sm:$0x1] 0.0
        %336 = vst [vmem:[#allocation3 + $0x138] sm:$0x1] 0.0
        %337 = vst [vmem:[#allocation3 + $0x150] sm:$0x1] 0.0
        %338 = vst [vmem:[#allocation3 + $0x168] sm:$0x1] 0.0
        %339 = vst [vmem:[#allocation3 + $0x180] sm:$0x1] 0.0
        %340 = vst [vmem:[#allocation3 + $0x198] sm:$0x1] 0.0
        %341 = vst [vmem:[#allocation3 + $0x11] sm:$0x1] 0.0
        %342 = vst [vmem:[#allocation3 + $0x29] sm:$0x1] 0.0
        %343 = vst [vmem:[#allocation3 + $0x41] sm:$0x1] 0.0
        %344 = vst [vmem:[#allocation3 + $0x59] sm:$0x1] 0.0
        %345 = vst [vmem:[#allocation3 + $0x71] sm:$0x1] 0.0
        %346 = vst [vmem:[#allocation3 + $0x89] sm:$0x1] 0.0
        %347 = vst [vmem:[#allocation3 + $0xa1] sm:$0x1] 0.0
        %348 = vst [vmem:[#allocation3 + $0xb9] sm:$0x1] 0.0
        %349 = vst [vmem:[#allocation3 + $0xd1] sm:$0x1] 0.0
        %350 = vst [vmem:[#allocation3 + $0xe9] sm:$0x1] 0.0
        %351 = vst [vmem:[#allocation3 + $0x101] sm:$0x1] 0.0
        %352 = vst [vmem:[#allocation3 + $0x119] sm:$0x1] 0.0
        %353 = vst [vmem:[#allocation3 + $0x131] sm:$0x1] 0.0
        %354 = vst [vmem:[#allocation3 + $0x149] sm:$0x1] 0.0
        %355 = vst [vmem:[#allocation3 + $0x161] sm:$0x1] 0.0
        %356 = vst [vmem:[#allocation3 + $0x179] sm:$0x1] 0.0
        %357 = vst [vmem:[#allocation3 + $0x191] sm:$0x1] 0.0
        %358 = vst [vmem:[#allocation3 + $0x1a9] sm:$0x1] 0.0
        %v359 = vld [vmem:[%s237] sm:$0xff]
        %v360 = vld [vmem:[%s237 + $0x8] sm:$0xff]
        %v361 = vld [vmem:[%s237 + $0x10] sm:$0xff]
        %v362 = vld [vmem:[%s237 + $0x18] sm:$0xff]
        %v363 = vld [vmem:[%s237 + $0x20] sm:$0xff]
        %v364 = vld [vmem:[%s237 + $0x28] sm:$0xff]
        %v365 = vld [vmem:[%s237 + $0x30] sm:$0xff]
        %v366 = vld [vmem:[%s237 + $0x38] sm:$0xff]
        %v367 = vld [vmem:[%s237 + $0x40] sm:$0xff]
        %v368 = vld [vmem:[%s237 + $0x48] sm:$0xff]
        %v369 = vld [vmem:[%s237 + $0x50] sm:$0xff]
        %v370 = vld [vmem:[%s237 + $0x58] sm:$0xff]
        %v371 = vld [vmem:[%s237 + $0x60] sm:$0xff]
        %v372 = vld [vmem:[%s237 + $0x68] sm:$0xff]
        %v373 = vld [vmem:[%s237 + $0x70] sm:$0xff]
        %v374 = vld [vmem:[%s237 + $0x78] sm:$0xff]
        %v375 = vld [vmem:[%s237 + $0x80] sm:$0xff]
        %v376 = vld [vmem:[%s237 + $0x88] sm:$0xff]
        %v377 = vld [vmem:[%s237 + $0x90] sm:$0xff]
        %v378 = vld [vmem:[%s237 + $0x98] sm:$0xff]
        %v379 = vld [vmem:[%s237 + $0xa0] sm:$0xff]
        %v380 = vld [vmem:[%s237 + $0xa8] sm:$0xff]
        %v381 = vld [vmem:[%s237 + $0xb0] sm:$0xff]
        %v382 = vld [vmem:[%s237 + $0xb8] sm:$0xff]
        %v383 = vld [vmem:[%s237 + $0xc0] sm:$0xff]
        %v384 = vld [vmem:[%s237 + $0xc8] sm:$0xff]
        %v385 = vld [vmem:[%s237 + $0xd0] sm:$0xff]
        %v386 = vld [vmem:[%s237 + $0xd8] sm:$0xff]
        %v387 = vld [vmem:[%s237 + $0xe0] sm:$0xff]
        %v388 = vld [vmem:[%s237 + $0xe8] sm:$0xff]
        %v389 = vld [vmem:[%s237 + $0xf0] sm:$0xff]
        %v390 = vld [vmem:[%s237 + $0xf8] sm:$0xff]
        %s391 = scalar_lea.vmem [#allocation2], 24
        %392 = vst [vmem:[%s391 + $0x1] sm:$0xff] %v359
        %393 = vst [vmem:[%s391 + $0x9] sm:$0xff] %v360
        %394 = vst [vmem:[%s391 + $0x19] sm:$0xff] %v361
        %395 = vst [vmem:[%s391 + $0x21] sm:$0xff] %v362
        %396 = vst [vmem:[%s391 + $0x31] sm:$0xff] %v363
        %397 = vst [vmem:[%s391 + $0x39] sm:$0xff] %v364
        %398 = vst [vmem:[%s391 + $0x49] sm:$0xff] %v365
        %399 = vst [vmem:[%s391 + $0x51] sm:$0xff] %v366
        %400 = vst [vmem:[%s391 + $0x61] sm:$0xff] %v367
        %401 = vst [vmem:[%s391 + $0x69] sm:$0xff] %v368
        %402 = vst [vmem:[%s391 + $0x79] sm:$0xff] %v369
        %403 = vst [vmem:[%s391 + $0x81] sm:$0xff] %v370
        %404 = vst [vmem:[%s391 + $0x91] sm:$0xff] %v371
        %405 = vst [vmem:[%s391 + $0x99] sm:$0xff] %v372
        %406 = vst [vmem:[%s391 + $0xa9] sm:$0xff] %v373
        %407 = vst [vmem:[%s391 + $0xb1] sm:$0xff] %v374
        %408 = vst [vmem:[%s391 + $0xc1] sm:$0xff] %v375
        %409 = vst [vmem:[%s391 + $0xc9] sm:$0xff] %v376
        %410 = vst [vmem:[%s391 + $0xd9] sm:$0xff] %v377
        %411 = vst [vmem:[%s391 + $0xe1] sm:$0xff] %v378
        %412 = vst [vmem:[%s391 + $0xf1] sm:$0xff] %v379
        %413 = vst [vmem:[%s391 + $0xf9] sm:$0xff] %v380
        %414 = vst [vmem:[%s391 + $0x109] sm:$0xff] %v381
        %415 = vst [vmem:[%s391 + $0x111] sm:$0xff] %v382
        %416 = vst [vmem:[%s391 + $0x121] sm:$0xff] %v383
        %417 = vst [vmem:[%s391 + $0x129] sm:$0xff] %v384
        %418 = vst [vmem:[%s391 + $0x139] sm:$0xff] %v385
        %419 = vst [vmem:[%s391 + $0x141] sm:$0xff] %v386
        %420 = vst [vmem:[%s391 + $0x151] sm:$0xff] %v387
        %421 = vst [vmem:[%s391 + $0x159] sm:$0xff] %v388
        %422 = vst [vmem:[%s391 + $0x169] sm:$0xff] %v389
        %423 = vst [vmem:[%s391 + $0x171] sm:$0xff] %v390
        %v424 = vld [vmem:[#allocation2] sm:$0xff]
        %v425 = vld [vmem:[#allocation2 + $0x8] sm:$0xff]
        %v426 = vld [vmem:[#allocation2 + $0x18] sm:$0xff]
        %v427 = vld [vmem:[#allocation2 + $0x20] sm:$0xff]
        %v428 = vld [vmem:[#allocation2 + $0x30] sm:$0xff]
        %v429 = vld [vmem:[#allocation2 + $0x38] sm:$0xff]
        %v430 = vld [vmem:[#allocation2 + $0x48] sm:$0xff]
        %v431 = vld [vmem:[#allocation2 + $0x50] sm:$0xff]
        %v432 = vld [vmem:[#allocation2 + $0x60] sm:$0xff]
        %v433 = vld [vmem:[#allocation2 + $0x68] sm:$0xff]
        %v434 = vld [vmem:[#allocation2 + $0x78] sm:$0xff]
        %v435 = vld [vmem:[#allocation2 + $0x80] sm:$0xff]
        %v436 = vld [vmem:[#allocation2 + $0x90] sm:$0xff]
        %v437 = vld [vmem:[#allocation2 + $0x98] sm:$0xff]
        %v438 = vld [vmem:[#allocation2 + $0xa8] sm:$0xff]
        %v439 = vld [vmem:[#allocation2 + $0xb0] sm:$0xff]
        %v440 = vld [vmem:[#allocation2 + $0xc0] sm:$0xff]
        %v441 = vld [vmem:[#allocation2 + $0xc8] sm:$0xff]
        %v442 = vld [vmem:[#allocation2 + $0xd8] sm:$0xff]
        %v443 = vld [vmem:[#allocation2 + $0xe0] sm:$0xff]
        %v444 = vld [vmem:[#allocation2 + $0xf0] sm:$0xff]
        %v445 = vld [vmem:[#allocation2 + $0xf8] sm:$0xff]
        %v446 = vld [vmem:[#allocation2 + $0x108] sm:$0xff]
        %v447 = vld [vmem:[#allocation2 + $0x110] sm:$0xff]
        %v448 = vld [vmem:[#allocation2 + $0x120] sm:$0xff]
        %v449 = vld [vmem:[#allocation2 + $0x128] sm:$0xff]
        %v450 = vld [vmem:[#allocation2 + $0x138] sm:$0xff]
        %v451 = vld [vmem:[#allocation2 + $0x140] sm:$0xff]
        %v452 = vld [vmem:[#allocation2 + $0x150] sm:$0xff]
        %v453 = vld [vmem:[#allocation2 + $0x158] sm:$0xff]
        %v454 = vld [vmem:[#allocation2 + $0x168] sm:$0xff]
        %v455 = vld [vmem:[#allocation2 + $0x170] sm:$0xff]
        %v456 = vpack.c.bf16 %v425, %v424
        %v457 = vpack.c.bf16 %v427, %v426
        %v458 = vpack.c.bf16 %v429, %v428
        %v459 = vpack.c.bf16 %v431, %v430
        %v460 = vpack.c.bf16 %v433, %v432
        %v461 = vpack.c.bf16 %v435, %v434
        %v462 = vpack.c.bf16 %v437, %v436
        %v463 = vpack.c.bf16 %v439, %v438
        %v464 = vpack.c.bf16 %v441, %v440
        %v465 = vpack.c.bf16 %v443, %v442
        %v466 = vpack.c.bf16 %v445, %v444
        %v467 = vpack.c.bf16 %v447, %v446
        %v468 = vpack.c.bf16 %v449, %v448
        %v469 = vpack.c.bf16 %v451, %v450
        %v470 = vpack.c.bf16 %v453, %v452
        %v471 = vpack.c.bf16 %v455, %v454
        %v472 = vld [vmem:[#allocation8] sm:$0xf]
        %v473 = vld [vmem:[#allocation8 + $0x4] sm:$0xf]
        %v474 = vld [vmem:[#allocation8 + $0x8] sm:$0xf]
        %v475 = vld [vmem:[#allocation8 + $0xc] sm:$0xf]
        %v476 = vld [vmem:[#allocation8 + $0x10] sm:$0xf]
        %v477 = vld [vmem:[#allocation8 + $0x14] sm:$0xf]
        %v478 = vld [vmem:[#allocation8 + $0x18] sm:$0xf]
        %v479 = vld [vmem:[#allocation8 + $0x1c] sm:$0xf]
        %v480 = vld [vmem:[#allocation8 + $0x20] sm:$0xf]
        %v481 = vld [vmem:[#allocation8 + $0x24] sm:$0xf]
        %v482 = vld [vmem:[#allocation8 + $0x28] sm:$0xf]
        %v483 = vld [vmem:[#allocation8 + $0x2c] sm:$0xf]
        %v484 = vld [vmem:[#allocation8 + $0x30] sm:$0xf]
        %v485 = vld [vmem:[#allocation8 + $0x34] sm:$0xf]
        %v486 = vld [vmem:[#allocation8 + $0x38] sm:$0xf]
        %v487 = vld [vmem:[#allocation8 + $0x3c] sm:$0xf]
        %v488 = vld [vmem:[#allocation2 + $0x1] sm:$0xff]
        %v489 = vld [vmem:[#allocation2 + $0x9] sm:$0xff]
        %v490 = vld [vmem:[#allocation2 + $0x19] sm:$0xff]
        %v491 = vld [vmem:[#allocation2 + $0x21] sm:$0xff]
        %v492 = vld [vmem:[#allocation2 + $0x31] sm:$0xff]
        %v493 = vld [vmem:[#allocation2 + $0x39] sm:$0xff]
        %v494 = vld [vmem:[#allocation2 + $0x49] sm:$0xff]
        %v495 = vld [vmem:[#allocation2 + $0x51] sm:$0xff]
        %v496 = vld [vmem:[#allocation2 + $0x61] sm:$0xff]
        %v497 = vld [vmem:[#allocation2 + $0x69] sm:$0xff]
        %v498 = vld [vmem:[#allocation2 + $0x79] sm:$0xff]
        %v499 = vld [vmem:[#allocation2 + $0x81] sm:$0xff]
        %v500 = vld [vmem:[#allocation2 + $0x91] sm:$0xff]
        %v501 = vld [vmem:[#allocation2 + $0x99] sm:$0xff]
        %v502 = vld [vmem:[#allocation2 + $0xa9] sm:$0xff]
        %v503 = vld [vmem:[#allocation2 + $0xb1] sm:$0xff]
        %v504 = vld [vmem:[#allocation2 + $0xc1] sm:$0xff]
        %v505 = vld [vmem:[#allocation2 + $0xc9] sm:$0xff]
        %v506 = vld [vmem:[#allocation2 + $0xd9] sm:$0xff]
        %v507 = vld [vmem:[#allocation2 + $0xe1] sm:$0xff]
        %v508 = vld [vmem:[#allocation2 + $0xf1] sm:$0xff]
        %v509 = vld [vmem:[#allocation2 + $0xf9] sm:$0xff]
        %v510 = vld [vmem:[#allocation2 + $0x109] sm:$0xff]
        %v511 = vld [vmem:[#allocation2 + $0x111] sm:$0xff]
        %v512 = vld [vmem:[#allocation2 + $0x121] sm:$0xff]
        %v513 = vld [vmem:[#allocation2 + $0x129] sm:$0xff]
        %v514 = vld [vmem:[#allocation2 + $0x139] sm:$0xff]
        %v515 = vld [vmem:[#allocation2 + $0x141] sm:$0xff]
        %v516 = vld [vmem:[#allocation2 + $0x151] sm:$0xff]
        %v517 = vld [vmem:[#allocation2 + $0x159] sm:$0xff]
        %v518 = vld [vmem:[#allocation2 + $0x169] sm:$0xff]
        %v519 = vld [vmem:[#allocation2 + $0x171] sm:$0xff]
        %v520 = vpack.c.bf16 %v489, %v488
        %v521 = vpack.c.bf16 %v491, %v490
        %v522 = vpack.c.bf16 %v493, %v492
        %v523 = vpack.c.bf16 %v495, %v494
        %v524 = vpack.c.bf16 %v497, %v496
        %v525 = vpack.c.bf16 %v499, %v498
        %v526 = vpack.c.bf16 %v501, %v500
        %v527 = vpack.c.bf16 %v503, %v502
        %v528 = vpack.c.bf16 %v505, %v504
        %v529 = vpack.c.bf16 %v507, %v506
        %v530 = vpack.c.bf16 %v509, %v508
        %v531 = vpack.c.bf16 %v511, %v510
        %v532 = vpack.c.bf16 %v513, %v512
        %v533 = vpack.c.bf16 %v515, %v514
        %v534 = vpack.c.bf16 %v517, %v516
        %v535 = vpack.c.bf16 %v519, %v518
        %s536 = scalar_lea.vmem [#allocation8], 64
        %v537 = vld [vmem:[%s536] sm:$0xf]
        %v538 = vld [vmem:[%s536 + $0x4] sm:$0xf]
        %v539 = vld [vmem:[%s536 + $0x8] sm:$0xf]
        %v540 = vld [vmem:[%s536 + $0xc] sm:$0xf]
        %v541 = vld [vmem:[%s536 + $0x10] sm:$0xf]
        %v542 = vld [vmem:[%s536 + $0x14] sm:$0xf]
        %v543 = vld [vmem:[%s536 + $0x18] sm:$0xf]
        %v544 = vld [vmem:[%s536 + $0x1c] sm:$0xf]
        %v545 = vld [vmem:[%s536 + $0x20] sm:$0xf]
        %v546 = vld [vmem:[%s536 + $0x24] sm:$0xf]
        %v547 = vld [vmem:[%s536 + $0x28] sm:$0xf]
        %v548 = vld [vmem:[%s536 + $0x2c] sm:$0xf]
        %v549 = vld [vmem:[%s536 + $0x30] sm:$0xf]
        %v550 = vld [vmem:[%s536 + $0x34] sm:$0xf]
        %v551 = vld [vmem:[%s536 + $0x38] sm:$0xf]
        %v552 = vld [vmem:[%s536 + $0x3c] sm:$0xf]
        %v569 = vunpack.c.l.b16 %v537
        %v570 = vunpack.c.l.b16 %v538
        %v571 = vunpack.c.l.b16 %v539
        %v572 = vunpack.c.l.b16 %v540
        %v573 = vunpack.c.l.b16 %v541
        %v574 = vunpack.c.l.b16 %v542
        %v575 = vunpack.c.l.b16 %v543
        %v576 = vunpack.c.l.b16 %v544
        %v577 = vunpack.c.l.b16 %v545
        %v578 = vunpack.c.l.b16 %v546
        %v579 = vunpack.c.l.b16 %v547
        %v580 = vunpack.c.l.b16 %v548
        %v581 = vunpack.c.l.b16 %v549
        %v582 = vunpack.c.l.b16 %v550
        %v583 = vunpack.c.l.b16 %v551
        %v584 = vunpack.c.l.b16 %v552
        %v585 = vpack.c.b16 %v570, %v569
        %v586 = vpack.c.b16 %v572, %v571
        %v587 = vpack.c.b16 %v574, %v573
        %v588 = vpack.c.b16 %v576, %v575
        %v589 = vpack.c.b16 %v578, %v577
        %v590 = vpack.c.b16 %v580, %v579
        %v591 = vpack.c.b16 %v582, %v581
        %v592 = vpack.c.b16 %v584, %v583
        %601 = vmatprep.subr.bf16.mxu0 0
        %602 = vmatpush1.bf16.msra.mxu0 %v585
        %603 = vmatprep.subr.bf16.mxu0 0
        %604 = vmatpush1.bf16.msra.mxu0 %v586
        %605 = vmatprep.subr.bf16.mxu0 0
        %606 = vmatpush1.bf16.msra.mxu0 %v587
        %607 = vmatprep.subr.bf16.mxu0 0
        %608 = vmatpush1.bf16.msra.mxu0 %v588
        %609 = vmatprep.subr.bf16.mxu0 0
        %610 = vmatpush1.bf16.msra.mxu0 %v589
        %611 = vmatprep.subr.bf16.mxu0 0
        %612 = vmatpush1.bf16.msra.mxu0 %v590
        %613 = vmatprep.subr.bf16.mxu0 0
        %614 = vmatpush1.bf16.msra.mxu0 %v591
        %615 = vmatprep.subr.bf16.mxu0 0
        %616 = vmatpush1.bf16.msra.mxu0 %v592
        %617 = vmatprep.subr.bf16.mxu0 0
        %618 = vmatpush1.bf16.msra.mxu0 0
        %619 = vmatprep.subr.bf16.mxu0 0
        %620 = vmatpush1.bf16.msra.mxu0 0
        %621 = vmatprep.subr.bf16.mxu0 0
        %622 = vmatpush1.bf16.msra.mxu0 0
        %623 = vmatprep.subr.bf16.mxu0 0
        %624 = vmatpush1.bf16.msra.mxu0 0
        %625 = vmatprep.subr.bf16.mxu0 0
        %626 = vmatpush1.bf16.msra.mxu0 0
        %627 = vmatprep.subr.bf16.mxu0 0
        %628 = vmatpush1.bf16.msra.mxu0 0
        %629 = vmatprep.subr.bf16.mxu0 0
        %630 = vmatpush1.bf16.msra.mxu0 0
        %631 = vmatprep.subr.bf16.mxu0 0
        %632 = vmatpush1.bf16.msra.mxu0 0
        %633 = vmatprep.mubr.bf16.mxu0 0
        %634 = vmatmul.mubr.bf16.gmra.mrb[0].mxu0 %v520
        %v635 = vpop.f32.mrb[0].mxu0
        %v636 = vadd.f32 0.0, %v635
        %v637 = vpop.f32.mrb[0].mxu0
        %v638 = vpop.f32.mrb[0].mxu0
        %v639 = vadd.f32 0.0, %v638
        %v640 = vpop.f32.mrb[0].mxu0
        %641 = vmatprep.mubr.bf16.mxu0 0
        %642 = vmatmul.mubr.bf16.gmra.mrb[0].mxu0 %v521
        %v643 = vpop.f32.mrb[0].mxu0
        %v644 = vadd.f32 0.0, %v643
        %v645 = vpop.f32.mrb[0].mxu0
        %v646 = vpop.f32.mrb[0].mxu0
        %v647 = vadd.f32 0.0, %v646
        %v648 = vpop.f32.mrb[0].mxu0
        %649 = vmatprep.mubr.bf16.mxu0 0
        %650 = vmatmul.mubr.bf16.gmra.mrb[0].mxu0 %v522
        %v651 = vpop.f32.mrb[0].mxu0
        %v652 = vadd.f32 0.0, %v651
        %v653 = vpop.f32.mrb[0].mxu0
        %v654 = vpop.f32.mrb[0].mxu0
        %v655 = vadd.f32 0.0, %v654
        %v656 = vpop.f32.mrb[0].mxu0
        %657 = vmatprep.mubr.bf16.mxu0 0
        %658 = vmatmul.mubr.bf16.gmra.mrb[0].mxu0 %v523
        %v659 = vpop.f32.mrb[0].mxu0
        %v660 = vadd.f32 0.0, %v659
        %v661 = vpop.f32.mrb[0].mxu0
        %v662 = vpop.f32.mrb[0].mxu0
        %v663 = vadd.f32 0.0, %v662
        %v664 = vpop.f32.mrb[0].mxu0
        %665 = vmatprep.mubr.bf16.mxu0 0
        %666 = vmatmul.mubr.bf16.gmra.mrb[0].mxu0 %v524
        %v667 = vpop.f32.mrb[0].mxu0
        %v668 = vadd.f32 0.0, %v667
        %v669 = vpop.f32.mrb[0].mxu0
        %v670 = vpop.f32.mrb[0].mxu0
        %v671 = vadd.f32 0.0, %v670
        %v672 = vpop.f32.mrb[0].mxu0
        %673 = vmatprep.mubr.bf16.mxu0 0
        %674 = vmatmul.mubr.bf16.gmra.mrb[0].mxu0 %v525
        %v675 = vpop.f32.mrb[0].mxu0
        %v676 = vadd.f32 0.0, %v675
        %v677 = vpop.f32.mrb[0].mxu0
        %v678 = vpop.f32.mrb[0].mxu0
        %v679 = vadd.f32 0.0, %v678
        %v680 = vpop.f32.mrb[0].mxu0
        %681 = vmatprep.mubr.bf16.mxu0 0
        %682 = vmatmul.mubr.bf16.gmra.mrb[0].mxu0 %v526
        %v683 = vpop.f32.mrb[0].mxu0
        %v684 = vadd.f32 0.0, %v683
        %v685 = vpop.f32.mrb[0].mxu0
        %v686 = vpop.f32.mrb[0].mxu0
        %v687 = vadd.f32 0.0, %v686
        %v688 = vpop.f32.mrb[0].mxu0
        %689 = vmatprep.mubr.bf16.mxu0 0
        %690 = vmatmul.mubr.bf16.gmra.mrb[0].mxu0 %v527
        %v691 = vpop.f32.mrb[0].mxu0
        %v692 = vadd.f32 0.0, %v691
        %v693 = vpop.f32.mrb[0].mxu0
        %v694 = vpop.f32.mrb[0].mxu0
        %v695 = vadd.f32 0.0, %v694
        %v696 = vpop.f32.mrb[0].mxu0
        %697 = vmatprep.mubr.bf16.mxu0 0
        %698 = vmatmul.mubr.bf16.gmra.mrb[0].mxu0 %v528
        %v699 = vpop.f32.mrb[0].mxu0
        %v700 = vadd.f32 0.0, %v699
        %v701 = vpop.f32.mrb[0].mxu0
        %v702 = vpop.f32.mrb[0].mxu0
        %v703 = vadd.f32 0.0, %v702
        %v704 = vpop.f32.mrb[0].mxu0
        %705 = vmatprep.mubr.bf16.mxu0 0
        %706 = vmatmul.mubr.bf16.gmra.mrb[0].mxu0 %v529
        %v707 = vpop.f32.mrb[0].mxu0
        %v708 = vadd.f32 0.0, %v707
        %v709 = vpop.f32.mrb[0].mxu0
        %v710 = vpop.f32.mrb[0].mxu0
        %v711 = vadd.f32 0.0, %v710
        %v712 = vpop.f32.mrb[0].mxu0
        %713 = vmatprep.mubr.bf16.mxu0 0
        %714 = vmatmul.mubr.bf16.gmra.mrb[0].mxu0 %v530
        %v715 = vpop.f32.mrb[0].mxu0
        %v716 = vadd.f32 0.0, %v715
        %v717 = vpop.f32.mrb[0].mxu0
        %v718 = vpop.f32.mrb[0].mxu0
        %v719 = vadd.f32 0.0, %v718
        %v720 = vpop.f32.mrb[0].mxu0
        %721 = vmatprep.mubr.bf16.mxu0 0
        %722 = vmatmul.mubr.bf16.gmra.mrb[0].mxu0 %v531
        %v723 = vpop.f32.mrb[0].mxu0
        %v724 = vadd.f32 0.0, %v723
        %v725 = vpop.f32.mrb[0].mxu0
        %v726 = vpop.f32.mrb[0].mxu0
        %v727 = vadd.f32 0.0, %v726
        %v728 = vpop.f32.mrb[0].mxu0
        %729 = vmatprep.mubr.bf16.mxu0 0
        %730 = vmatmul.mubr.bf16.gmra.mrb[0].mxu0 %v532
        %v731 = vpop.f32.mrb[0].mxu0
        %v732 = vadd.f32 0.0, %v731
        %v733 = vpop.f32.mrb[0].mxu0
        %v734 = vpop.f32.mrb[0].mxu0
        %v735 = vadd.f32 0.0, %v734
        %v736 = vpop.f32.mrb[0].mxu0
        %737 = vmatprep.mubr.bf16.mxu0 0
        %738 = vmatmul.mubr.bf16.gmra.mrb[0].mxu0 %v533
        %v739 = vpop.f32.mrb[0].mxu0
        %v740 = vadd.f32 0.0, %v739
        %v741 = vpop.f32.mrb[0].mxu0
        %v742 = vpop.f32.mrb[0].mxu0
        %v743 = vadd.f32 0.0, %v742
        %v744 = vpop.f32.mrb[0].mxu0
        %745 = vmatprep.mubr.bf16.mxu0 0
        %746 = vmatmul.mubr.bf16.gmra.mrb[0].mxu0 %v534
        %v747 = vpop.f32.mrb[0].mxu0
        %v748 = vadd.f32 0.0, %v747
        %v749 = vpop.f32.mrb[0].mxu0
        %v750 = vpop.f32.mrb[0].mxu0
        %v751 = vadd.f32 0.0, %v750
        %v752 = vpop.f32.mrb[0].mxu0
        %753 = vmatprep.mubr.bf16.mxu0 0
        %754 = vmatmul.mubr.bf16.gmra.mrb[0].mxu0 %v535
        %v755 = vpop.f32.mrb[0].mxu0
        %v756 = vadd.f32 0.0, %v755
        %v757 = vpop.f32.mrb[0].mxu0
        %v758 = vpop.f32.mrb[0].mxu0
        %v759 = vadd.f32 0.0, %v758
        %v760 = vpop.f32.mrb[0].mxu0
        %761 = vdwg.mxu0
        %v778 = vunpack.c.l.b16 %v472
        %v779 = vunpack.c.l.b16 %v473
        %v780 = vunpack.c.l.b16 %v474
        %v781 = vunpack.c.l.b16 %v475
        %v782 = vunpack.c.l.b16 %v476
        %v783 = vunpack.c.l.b16 %v477
        %v784 = vunpack.c.l.b16 %v478
        %v785 = vunpack.c.l.b16 %v479
        %v786 = vunpack.c.l.b16 %v480
        %v787 = vunpack.c.l.b16 %v481
        %v788 = vunpack.c.l.b16 %v482
        %v789 = vunpack.c.l.b16 %v483
        %v790 = vunpack.c.l.b16 %v484
        %v791 = vunpack.c.l.b16 %v485
        %v792 = vunpack.c.l.b16 %v486
        %v793 = vunpack.c.l.b16 %v487
        %v794 = vpack.c.b16 %v779, %v778
        %v795 = vpack.c.b16 %v781, %v780
        %v796 = vpack.c.b16 %v783, %v782
        %v797 = vpack.c.b16 %v785, %v784
        %v798 = vpack.c.b16 %v787, %v786
        %v799 = vpack.c.b16 %v789, %v788
        %v800 = vpack.c.b16 %v791, %v790
        %v801 = vpack.c.b16 %v793, %v792
        %810 = vmatprep.subr.bf16.mxu0 0
        %811 = vmatpush1.bf16.msra.mxu0 %v794
        %812 = vmatprep.subr.bf16.mxu0 0
        %813 = vmatpush1.bf16.msra.mxu0 %v795
        %814 = vmatprep.subr.bf16.mxu0 0
        %815 = vmatpush1.bf16.msra.mxu0 %v796
        %816 = vmatprep.subr.bf16.mxu0 0
        %817 = vmatpush1.bf16.msra.mxu0 %v797
        %818 = vmatprep.subr.bf16.mxu0 0
        %819 = vmatpush1.bf16.msra.mxu0 %v798
        %820 = vmatprep.subr.bf16.mxu0 0
        %821 = vmatpush1.bf16.msra.mxu0 %v799
        %822 = vmatprep.subr.bf16.mxu0 0
        %823 = vmatpush1.bf16.msra.mxu0 %v800
        %824 = vmatprep.subr.bf16.mxu0 0
        %825 = vmatpush1.bf16.msra.mxu0 %v801
        %826 = vmatprep.subr.bf16.mxu0 0
        %827 = vmatpush1.bf16.msra.mxu0 0
        %828 = vmatprep.subr.bf16.mxu0 0
        %829 = vmatpush1.bf16.msra.mxu0 0
        %830 = vmatprep.subr.bf16.mxu0 0
        %831 = vmatpush1.bf16.msra.mxu0 0
        %832 = vmatprep.subr.bf16.mxu0 0
        %833 = vmatpush1.bf16.msra.mxu0 0
        %834 = vmatprep.subr.bf16.mxu0 0
        %835 = vmatpush1.bf16.msra.mxu0 0
        %836 = vmatprep.subr.bf16.mxu0 0
        %837 = vmatpush1.bf16.msra.mxu0 0
        %838 = vmatprep.subr.bf16.mxu0 0
        %839 = vmatpush1.bf16.msra.mxu0 0
        %840 = vmatprep.subr.bf16.mxu0 0
        %841 = vmatpush1.bf16.msra.mxu0 0
        %842 = vmatprep.mubr.bf16.mxu0 0
        %843 = vmatmul.mubr.bf16.gmra.mrb[0].mxu0 %v456
        %v844 = vpop.f32.mrb[0].mxu0
        %v845 = vadd.f32 %v636, %v844
        %v846 = vpop.f32.mrb[0].mxu0
        %v847 = vpop.f32.mrb[0].mxu0
        %v848 = vadd.f32 %v639, %v847
        %v849 = vpop.f32.mrb[0].mxu0
        %850 = vmatprep.mubr.bf16.mxu0 0
        %851 = vmatmul.mubr.bf16.gmra.mrb[0].mxu0 %v457
        %v852 = vpop.f32.mrb[0].mxu0
        %v853 = vadd.f32 %v644, %v852
        %v854 = vpop.f32.mrb[0].mxu0
        %v855 = vpop.f32.mrb[0].mxu0
        %v856 = vadd.f32 %v647, %v855
        %v857 = vpop.f32.mrb[0].mxu0
        %858 = vmatprep.mubr.bf16.mxu0 0
        %859 = vmatmul.mubr.bf16.gmra.mrb[0].mxu0 %v458
        %v860 = vpop.f32.mrb[0].mxu0
        %v861 = vadd.f32 %v652, %v860
        %v862 = vpop.f32.mrb[0].mxu0
        %v863 = vpop.f32.mrb[0].mxu0
        %v864 = vadd.f32 %v655, %v863
        %v865 = vpop.f32.mrb[0].mxu0
        %866 = vmatprep.mubr.bf16.mxu0 0
        %867 = vmatmul.mubr.bf16.gmra.mrb[0].mxu0 %v459
        %v868 = vpop.f32.mrb[0].mxu0
        %v869 = vadd.f32 %v660, %v868
        %v870 = vpop.f32.mrb[0].mxu0
        %v871 = vpop.f32.mrb[0].mxu0
        %v872 = vadd.f32 %v663, %v871
        %v873 = vpop.f32.mrb[0].mxu0
        %874 = vmatprep.mubr.bf16.mxu0 0
        %875 = vmatmul.mubr.bf16.gmra.mrb[0].mxu0 %v460
        %v876 = vpop.f32.mrb[0].mxu0
        %v877 = vadd.f32 %v668, %v876
        %v878 = vpop.f32.mrb[0].mxu0
        %v879 = vpop.f32.mrb[0].mxu0
        %v880 = vadd.f32 %v671, %v879
        %v881 = vpop.f32.mrb[0].mxu0
        %882 = vmatprep.mubr.bf16.mxu0 0
        %883 = vmatmul.mubr.bf16.gmra.mrb[0].mxu0 %v461
        %v884 = vpop.f32.mrb[0].mxu0
        %v885 = vadd.f32 %v676, %v884
        %v886 = vpop.f32.mrb[0].mxu0
        %v887 = vpop.f32.mrb[0].mxu0
        %v888 = vadd.f32 %v679, %v887
        %v889 = vpop.f32.mrb[0].mxu0
        %890 = vmatprep.mubr.bf16.mxu0 0
        %891 = vmatmul.mubr.bf16.gmra.mrb[0].mxu0 %v462
        %v892 = vpop.f32.mrb[0].mxu0
        %v893 = vadd.f32 %v684, %v892
        %v894 = vpop.f32.mrb[0].mxu0
        %v895 = vpop.f32.mrb[0].mxu0
        %v896 = vadd.f32 %v687, %v895
        %v897 = vpop.f32.mrb[0].mxu0
        %898 = vmatprep.mubr.bf16.mxu0 0
        %899 = vmatmul.mubr.bf16.gmra.mrb[0].mxu0 %v463
        %v900 = vpop.f32.mrb[0].mxu0
        %v901 = vadd.f32 %v692, %v900
        %v902 = vpop.f32.mrb[0].mxu0
        %v903 = vpop.f32.mrb[0].mxu0
        %v904 = vadd.f32 %v695, %v903
        %v905 = vpop.f32.mrb[0].mxu0
        %906 = vmatprep.mubr.bf16.mxu0 0
        %907 = vmatmul.mubr.bf16.gmra.mrb[0].mxu0 %v464
        %v908 = vpop.f32.mrb[0].mxu0
        %v909 = vadd.f32 %v700, %v908
        %v910 = vpop.f32.mrb[0].mxu0
        %v911 = vpop.f32.mrb[0].mxu0
        %v912 = vadd.f32 %v703, %v911
        %v913 = vpop.f32.mrb[0].mxu0
        %914 = vmatprep.mubr.bf16.mxu0 0
        %915 = vmatmul.mubr.bf16.gmra.mrb[0].mxu0 %v465
        %v916 = vpop.f32.mrb[0].mxu0
        %v917 = vadd.f32 %v708, %v916
        %v918 = vpop.f32.mrb[0].mxu0
        %v919 = vpop.f32.mrb[0].mxu0
        %v920 = vadd.f32 %v711, %v919
        %v921 = vpop.f32.mrb[0].mxu0
        %922 = vmatprep.mubr.bf16.mxu0 0
        %923 = vmatmul.mubr.bf16.gmra.mrb[0].mxu0 %v466
        %v924 = vpop.f32.mrb[0].mxu0
        %v925 = vadd.f32 %v716, %v924
        %v926 = vpop.f32.mrb[0].mxu0
        %v927 = vpop.f32.mrb[0].mxu0
        %v928 = vadd.f32 %v719, %v927
        %v929 = vpop.f32.mrb[0].mxu0
        %930 = vmatprep.mubr.bf16.mxu0 0
        %931 = vmatmul.mubr.bf16.gmra.mrb[0].mxu0 %v467
        %v932 = vpop.f32.mrb[0].mxu0
        %v933 = vadd.f32 %v724, %v932
        %v934 = vpop.f32.mrb[0].mxu0
        %v935 = vpop.f32.mrb[0].mxu0
        %v936 = vadd.f32 %v727, %v935
        %v937 = vpop.f32.mrb[0].mxu0
        %938 = vmatprep.mubr.bf16.mxu0 0
        %939 = vmatmul.mubr.bf16.gmra.mrb[0].mxu0 %v468
        %v940 = vpop.f32.mrb[0].mxu0
        %v941 = vadd.f32 %v732, %v940
        %v942 = vpop.f32.mrb[0].mxu0
        %v943 = vpop.f32.mrb[0].mxu0
        %v944 = vadd.f32 %v735, %v943
        %v945 = vpop.f32.mrb[0].mxu0
        %946 = vmatprep.mubr.bf16.mxu0 0
        %947 = vmatmul.mubr.bf16.gmra.mrb[0].mxu0 %v469
        %v948 = vpop.f32.mrb[0].mxu0
        %v949 = vadd.f32 %v740, %v948
        %v950 = vpop.f32.mrb[0].mxu0
        %v951 = vpop.f32.mrb[0].mxu0
        %v952 = vadd.f32 %v743, %v951
        %v953 = vpop.f32.mrb[0].mxu0
        %954 = vmatprep.mubr.bf16.mxu0 0
        %955 = vmatmul.mubr.bf16.gmra.mrb[0].mxu0 %v470
        %v956 = vpop.f32.mrb[0].mxu0
        %v957 = vadd.f32 %v748, %v956
        %v958 = vpop.f32.mrb[0].mxu0
        %v959 = vpop.f32.mrb[0].mxu0
        %v960 = vadd.f32 %v751, %v959
        %v961 = vpop.f32.mrb[0].mxu0
        %962 = vmatprep.mubr.bf16.mxu0 0
        %963 = vmatmul.mubr.bf16.gmra.mrb[0].mxu0 %v471
        %v964 = vpop.f32.mrb[0].mxu0
        %v965 = vadd.f32 %v756, %v964
        %v966 = vpop.f32.mrb[0].mxu0
        %v967 = vpop.f32.mrb[0].mxu0
        %v968 = vadd.f32 %v759, %v967
        %v969 = vpop.f32.mrb[0].mxu0
        %970 = vdwg.mxu0
        %v971 = vld [vmem:[#allocation2 + $0x2] sm:$0xff]
        %v972 = vld [vmem:[#allocation2 + $0xa] sm:$0xff]
        %v973 = vld [vmem:[#allocation2 + $0x1a] sm:$0xff]
        %v974 = vld [vmem:[#allocation2 + $0x22] sm:$0xff]
        %v975 = vld [vmem:[#allocation2 + $0x32] sm:$0xff]
        %v976 = vld [vmem:[#allocation2 + $0x3a] sm:$0xff]
        %v977 = vld [vmem:[#allocation2 + $0x4a] sm:$0xff]
        %v978 = vld [vmem:[#allocation2 + $0x52] sm:$0xff]
        %v979 = vld [vmem:[#allocation2 + $0x62] sm:$0xff]
        %v980 = vld [vmem:[#allocation2 + $0x6a] sm:$0xff]
        %v981 = vld [vmem:[#allocation2 + $0x7a] sm:$0xff]
        %v982 = vld [vmem:[#allocation2 + $0x82] sm:$0xff]
        %v983 = vld [vmem:[#allocation2 + $0x92] sm:$0xff]
        %v984 = vld [vmem:[#allocation2 + $0x9a] sm:$0xff]
        %v985 = vld [vmem:[#allocation2 + $0xaa] sm:$0xff]
        %v986 = vld [vmem:[#allocation2 + $0xb2] sm:$0xff]
        %v987 = vld [vmem:[#allocation2 + $0xc2] sm:$0xff]
        %v988 = vld [vmem:[#allocation2 + $0xca] sm:$0xff]
        %v989 = vld [vmem:[#allocation2 + $0xda] sm:$0xff]
        %v990 = vld [vmem:[#allocation2 + $0xe2] sm:$0xff]
        %v991 = vld [vmem:[#allocation2 + $0xf2] sm:$0xff]
        %v992 = vld [vmem:[#allocation2 + $0xfa] sm:$0xff]
        %v993 = vld [vmem:[#allocation2 + $0x10a] sm:$0xff]
        %v994 = vld [vmem:[#allocation2 + $0x112] sm:$0xff]
        %v995 = vld [vmem:[#allocation2 + $0x122] sm:$0xff]
        %v996 = vld [vmem:[#allocation2 + $0x12a] sm:$0xff]
        %v997 = vld [vmem:[#allocation2 + $0x13a] sm:$0xff]
        %v998 = vld [vmem:[#allocation2 + $0x142] sm:$0xff]
        %v999 = vld [vmem:[#allocation2 + $0x152] sm:$0xff]
        %v1000 = vld [vmem:[#allocation2 + $0x15a] sm:$0xff]
        %v1001 = vld [vmem:[#allocation2 + $0x16a] sm:$0xff]
        %v1002 = vld [vmem:[#allocation2 + $0x172] sm:$0xff]
        %v1003 = vpack.c.bf16 %v972, %v971
        %v1004 = vpack.c.bf16 %v974, %v973
        %v1005 = vpack.c.bf16 %v976, %v975
        %v1006 = vpack.c.bf16 %v978, %v977
        %v1007 = vpack.c.bf16 %v980, %v979
        %v1008 = vpack.c.bf16 %v982, %v981
        %v1009 = vpack.c.bf16 %v984, %v983
        %v1010 = vpack.c.bf16 %v986, %v985
        %v1011 = vpack.c.bf16 %v988, %v987
        %v1012 = vpack.c.bf16 %v990, %v989
        %v1013 = vpack.c.bf16 %v992, %v991
        %v1014 = vpack.c.bf16 %v994, %v993
        %v1015 = vpack.c.bf16 %v996, %v995
        %v1016 = vpack.c.bf16 %v998, %v997
        %v1017 = vpack.c.bf16 %v1000, %v999
        %v1018 = vpack.c.bf16 %v1002, %v1001
        %s1019 = scalar_lea.vmem [#allocation8], 128
        %v1020 = vld [vmem:[%s1019] sm:$0xf]
        %v1021 = vld [vmem:[%s1019 + $0x4] sm:$0xf]
        %v1022 = vld [vmem:[%s1019 + $0x8] sm:$0xf]
        %v1023 = vld [vmem:[%s1019 + $0xc] sm:$0xf]
        %v1024 = vld [vmem:[%s1019 + $0x10] sm:$0xf]
        %v1025 = vld [vmem:[%s1019 + $0x14] sm:$0xf]
        %v1026 = vld [vmem:[%s1019 + $0x18] sm:$0xf]
        %v1027 = vld [vmem:[%s1019 + $0x1c] sm:$0xf]
        %v1028 = vld [vmem:[%s1019 + $0x20] sm:$0xf]
        %v1029 = vld [vmem:[%s1019 + $0x24] sm:$0xf]
        %v1030 = vld [vmem:[%s1019 + $0x28] sm:$0xf]
        %v1031 = vld [vmem:[%s1019 + $0x2c] sm:$0xf]
        %v1032 = vld [vmem:[%s1019 + $0x30] sm:$0xf]
        %v1033 = vld [vmem:[%s1019 + $0x34] sm:$0xf]
        %v1034 = vld [vmem:[%s1019 + $0x38] sm:$0xf]
        %v1035 = vld [vmem:[%s1019 + $0x3c] sm:$0xf]
        %v1052 = vunpack.c.l.b16 %v1020
        %v1053 = vunpack.c.l.b16 %v1021
        %v1054 = vunpack.c.l.b16 %v1022
        %v1055 = vunpack.c.l.b16 %v1023
        %v1056 = vunpack.c.l.b16 %v1024
        %v1057 = vunpack.c.l.b16 %v1025
        %v1058 = vunpack.c.l.b16 %v1026
        %v1059 = vunpack.c.l.b16 %v1027
        %v1060 = vunpack.c.l.b16 %v1028
        %v1061 = vunpack.c.l.b16 %v1029
        %v1062 = vunpack.c.l.b16 %v1030
        %v1063 = vunpack.c.l.b16 %v1031
        %v1064 = vunpack.c.l.b16 %v1032
        %v1065 = vunpack.c.l.b16 %v1033
        %v1066 = vunpack.c.l.b16 %v1034
        %v1067 = vunpack.c.l.b16 %v1035
        %v1068 = vpack.c.b16 %v1053, %v1052
        %v1069 = vpack.c.b16 %v1055, %v1054
        %v1070 = vpack.c.b16 %v1057, %v1056
        %v1071 = vpack.c.b16 %v1059, %v1058
        %v1072 = vpack.c.b16 %v1061, %v1060
        %v1073 = vpack.c.b16 %v1063, %v1062
        %v1074 = vpack.c.b16 %v1065, %v1064
        %v1075 = vpack.c.b16 %v1067, %v1066
        %1084 = vmatprep.subr.bf16.mxu0 0
        %1085 = vmatpush1.bf16.msra.mxu0 %v1068
        %1086 = vmatprep.subr.bf16.mxu0 0
        %1087 = vmatpush1.bf16.msra.mxu0 %v1069
        %1088 = vmatprep.subr.bf16.mxu0 0
        %1089 = vmatpush1.bf16.msra.mxu0 %v1070
        %1090 = vmatprep.subr.bf16.mxu0 0
        %1091 = vmatpush1.bf16.msra.mxu0 %v1071
        %1092 = vmatprep.subr.bf16.mxu0 0
        %1093 = vmatpush1.bf16.msra.mxu0 %v1072
        %1094 = vmatprep.subr.bf16.mxu0 0
        %1095 = vmatpush1.bf16.msra.mxu0 %v1073
        %1096 = vmatprep.subr.bf16.mxu0 0
        %1097 = vmatpush1.bf16.msra.mxu0 %v1074
        %1098 = vmatprep.subr.bf16.mxu0 0
        %1099 = vmatpush1.bf16.msra.mxu0 %v1075
        %1100 = vmatprep.subr.bf16.mxu0 0
        %1101 = vmatpush1.bf16.msra.mxu0 0
        %1102 = vmatprep.subr.bf16.mxu0 0
        %1103 = vmatpush1.bf16.msra.mxu0 0
        %1104 = vmatprep.subr.bf16.mxu0 0
        %1105 = vmatpush1.bf16.msra.mxu0 0
        %1106 = vmatprep.subr.bf16.mxu0 0
        %1107 = vmatpush1.bf16.msra.mxu0 0
        %1108 = vmatprep.subr.bf16.mxu0 0
        %1109 = vmatpush1.bf16.msra.mxu0 0
        %1110 = vmatprep.subr.bf16.mxu0 0
        %1111 = vmatpush1.bf16.msra.mxu0 0
        %1112 = vmatprep.subr.bf16.mxu0 0
        %1113 = vmatpush1.bf16.msra.mxu0 0
        %1114 = vmatprep.subr.bf16.mxu0 0
        %1115 = vmatpush1.bf16.msra.mxu0 0
        %1116 = vmatprep.mubr.bf16.mxu0 0
        %1117 = vmatmul.mubr.bf16.gmra.mrb[0].mxu0 %v1003
        %v1118 = vpop.f32.mrb[0].mxu0
        %v1119 = vadd.f32 0.0, %v1118
        %v1120 = vpop.f32.mrb[0].mxu0
        %v1121 = vpop.f32.mrb[0].mxu0
        %v1122 = vadd.f32 0.0, %v1121
        %v1123 = vpop.f32.mrb[0].mxu0
        %1124 = vmatprep.mubr.bf16.mxu0 0
        %1125 = vmatmul.mubr.bf16.gmra.mrb[0].mxu0 %v1004
        %v1126 = vpop.f32.mrb[0].mxu0
        %v1127 = vadd.f32 0.0, %v1126
        %v1128 = vpop.f32.mrb[0].mxu0
        %v1129 = vpop.f32.mrb[0].mxu0
        %v1130 = vadd.f32 0.0, %v1129
        %v1131 = vpop.f32.mrb[0].mxu0
        %1132 = vmatprep.mubr.bf16.mxu0 0
        %1133 = vmatmul.mubr.bf16.gmra.mrb[0].mxu0 %v1005
        %v1134 = vpop.f32.mrb[0].mxu0
        %v1135 = vadd.f32 0.0, %v1134
        %v1136 = vpop.f32.mrb[0].mxu0
        %v1137 = vpop.f32.mrb[0].mxu0
        %v1138 = vadd.f32 0.0, %v1137
        %v1139 = vpop.f32.mrb[0].mxu0
        %1140 = vmatprep.mubr.bf16.mxu0 0
        %1141 = vmatmul.mubr.bf16.gmra.mrb[0].mxu0 %v1006
        %v1142 = vpop.f32.mrb[0].mxu0
        %v1143 = vadd.f32 0.0, %v1142
        %v1144 = vpop.f32.mrb[0].mxu0
        %v1145 = vpop.f32.mrb[0].mxu0
        %v1146 = vadd.f32 0.0, %v1145
        %v1147 = vpop.f32.mrb[0].mxu0
        %1148 = vmatprep.mubr.bf16.mxu0 0
        %1149 = vmatmul.mubr.bf16.gmra.mrb[0].mxu0 %v1007
        %v1150 = vpop.f32.mrb[0].mxu0
        %v1151 = vadd.f32 0.0, %v1150
        %v1152 = vpop.f32.mrb[0].mxu0
        %v1153 = vpop.f32.mrb[0].mxu0
        %v1154 = vadd.f32 0.0, %v1153
        %v1155 = vpop.f32.mrb[0].mxu0
        %1156 = vmatprep.mubr.bf16.mxu0 0
        %1157 = vmatmul.mubr.bf16.gmra.mrb[0].mxu0 %v1008
        %v1158 = vpop.f32.mrb[0].mxu0
        %v1159 = vadd.f32 0.0, %v1158
        %v1160 = vpop.f32.mrb[0].mxu0
        %v1161 = vpop.f32.mrb[0].mxu0
        %v1162 = vadd.f32 0.0, %v1161
        %v1163 = vpop.f32.mrb[0].mxu0
        %1164 = vmatprep.mubr.bf16.mxu0 0
        %1165 = vmatmul.mubr.bf16.gmra.mrb[0].mxu0 %v1009
        %v1166 = vpop.f32.mrb[0].mxu0
        %v1167 = vadd.f32 0.0, %v1166
        %v1168 = vpop.f32.mrb[0].mxu0
        %v1169 = vpop.f32.mrb[0].mxu0
        %v1170 = vadd.f32 0.0, %v1169
        %v1171 = vpop.f32.mrb[0].mxu0
        %1172 = vmatprep.mubr.bf16.mxu0 0
        %1173 = vmatmul.mubr.bf16.gmra.mrb[0].mxu0 %v1010
        %v1174 = vpop.f32.mrb[0].mxu0
        %v1175 = vadd.f32 0.0, %v1174
        %v1176 = vpop.f32.mrb[0].mxu0
        %v1177 = vpop.f32.mrb[0].mxu0
        %v1178 = vadd.f32 0.0, %v1177
        %v1179 = vpop.f32.mrb[0].mxu0
        %1180 = vmatprep.mubr.bf16.mxu0 0
        %1181 = vmatmul.mubr.bf16.gmra.mrb[0].mxu0 %v1011
        %v1182 = vpop.f32.mrb[0].mxu0
        %v1183 = vadd.f32 0.0, %v1182
        %v1184 = vpop.f32.mrb[0].mxu0
        %v1185 = vpop.f32.mrb[0].mxu0
        %v1186 = vadd.f32 0.0, %v1185
        %v1187 = vpop.f32.mrb[0].mxu0
        %1188 = vmatprep.mubr.bf16.mxu0 0
        %1189 = vmatmul.mubr.bf16.gmra.mrb[0].mxu0 %v1012
        %v1190 = vpop.f32.mrb[0].mxu0
        %v1191 = vadd.f32 0.0, %v1190
        %v1192 = vpop.f32.mrb[0].mxu0
        %v1193 = vpop.f32.mrb[0].mxu0
        %v1194 = vadd.f32 0.0, %v1193
        %v1195 = vpop.f32.mrb[0].mxu0
        %1196 = vmatprep.mubr.bf16.mxu0 0
        %1197 = vmatmul.mubr.bf16.gmra.mrb[0].mxu0 %v1013
        %v1198 = vpop.f32.mrb[0].mxu0
        %v1199 = vadd.f32 0.0, %v1198
        %v1200 = vpop.f32.mrb[0].mxu0
        %v1201 = vpop.f32.mrb[0].mxu0
        %v1202 = vadd.f32 0.0, %v1201
        %v1203 = vpop.f32.mrb[0].mxu0
        %1204 = vmatprep.mubr.bf16.mxu0 0
        %1205 = vmatmul.mubr.bf16.gmra.mrb[0].mxu0 %v1014
        %v1206 = vpop.f32.mrb[0].mxu0
        %v1207 = vadd.f32 0.0, %v1206
        %v1208 = vpop.f32.mrb[0].mxu0
        %v1209 = vpop.f32.mrb[0].mxu0
        %v1210 = vadd.f32 0.0, %v1209
        %v1211 = vpop.f32.mrb[0].mxu0
        %1212 = vmatprep.mubr.bf16.mxu0 0
        %1213 = vmatmul.mubr.bf16.gmra.mrb[0].mxu0 %v1015
        %v1214 = vpop.f32.mrb[0].mxu0
        %v1215 = vadd.f32 0.0, %v1214
        %v1216 = vpop.f32.mrb[0].mxu0
        %v1217 = vpop.f32.mrb[0].mxu0
        %v1218 = vadd.f32 0.0, %v1217
        %v1219 = vpop.f32.mrb[0].mxu0
        %1220 = vmatprep.mubr.bf16.mxu0 0
        %1221 = vmatmul.mubr.bf16.gmra.mrb[0].mxu0 %v1016
        %v1222 = vpop.f32.mrb[0].mxu0
        %v1223 = vadd.f32 0.0, %v1222
        %v1224 = vpop.f32.mrb[0].mxu0
        %v1225 = vpop.f32.mrb[0].mxu0
        %v1226 = vadd.f32 0.0, %v1225
        %v1227 = vpop.f32.mrb[0].mxu0
        %1228 = vmatprep.mubr.bf16.mxu0 0
        %1229 = vmatmul.mubr.bf16.gmra.mrb[0].mxu0 %v1017
        %v1230 = vpop.f32.mrb[0].mxu0
        %v1231 = vadd.f32 0.0, %v1230
        %v1232 = vpop.f32.mrb[0].mxu0
        %v1233 = vpop.f32.mrb[0].mxu0
        %v1234 = vadd.f32 0.0, %v1233
        %v1235 = vpop.f32.mrb[0].mxu0
        %1236 = vmatprep.mubr.bf16.mxu0 0
        %1237 = vmatmul.mubr.bf16.gmra.mrb[0].mxu0 %v1018
        %v1238 = vpop.f32.mrb[0].mxu0
        %v1239 = vadd.f32 0.0, %v1238
        %v1240 = vpop.f32.mrb[0].mxu0
        %v1241 = vpop.f32.mrb[0].mxu0
        %v1242 = vadd.f32 0.0, %v1241
        %v1243 = vpop.f32.mrb[0].mxu0
        %1244 = vdwg.mxu0
        %v1245 = vadd.f32 %v845, %v1119
        %v1246 = vadd.f32 %v848, %v1122
        %v1247 = vadd.f32 %v853, %v1127
        %v1248 = vadd.f32 %v856, %v1130
        %v1249 = vadd.f32 %v861, %v1135
        %v1250 = vadd.f32 %v864, %v1138
        %v1251 = vadd.f32 %v869, %v1143
        %v1252 = vadd.f32 %v872, %v1146
        %v1253 = vadd.f32 %v877, %v1151
        %v1254 = vadd.f32 %v880, %v1154
        %v1255 = vadd.f32 %v885, %v1159
        %v1256 = vadd.f32 %v888, %v1162
        %v1257 = vadd.f32 %v893, %v1167
        %v1258 = vadd.f32 %v896, %v1170
        %v1259 = vadd.f32 %v901, %v1175
        %v1260 = vadd.f32 %v904, %v1178
        %v1261 = vadd.f32 %v909, %v1183
        %v1262 = vadd.f32 %v912, %v1186
        %v1263 = vadd.f32 %v917, %v1191
        %v1264 = vadd.f32 %v920, %v1194
        %v1265 = vadd.f32 %v925, %v1199
        %v1266 = vadd.f32 %v928, %v1202
        %v1267 = vadd.f32 %v933, %v1207
        %v1268 = vadd.f32 %v936, %v1210
        %v1269 = vadd.f32 %v941, %v1215
        %v1270 = vadd.f32 %v944, %v1218
        %v1271 = vadd.f32 %v949, %v1223
        %v1272 = vadd.f32 %v952, %v1226
        %v1273 = vadd.f32 %v957, %v1231
        %v1274 = vadd.f32 %v960, %v1234
        %v1275 = vadd.f32 %v965, %v1239
        %v1276 = vadd.f32 %v968, %v1242
        %1277 = vst [vmem:[#allocation4] sm:$0xff] %v1245
        %1278 = vst [vmem:[#allocation4 + $0x8] sm:$0xff] %v1246
        %1279 = vst [vmem:[#allocation4 + $0x10] sm:$0xff] %v1247
        %1280 = vst [vmem:[#allocation4 + $0x18] sm:$0xff] %v1248
        %1281 = vst [vmem:[#allocation4 + $0x20] sm:$0xff] %v1249
        %1282 = vst [vmem:[#allocation4 + $0x28] sm:$0xff] %v1250
        %1283 = vst [vmem:[#allocation4 + $0x30] sm:$0xff] %v1251
        %1284 = vst [vmem:[#allocation4 + $0x38] sm:$0xff] %v1252
        %1285 = vst [vmem:[#allocation4 + $0x40] sm:$0xff] %v1253
        %1286 = vst [vmem:[#allocation4 + $0x48] sm:$0xff] %v1254
        %1287 = vst [vmem:[#allocation4 + $0x50] sm:$0xff] %v1255
        %1288 = vst [vmem:[#allocation4 + $0x58] sm:$0xff] %v1256
        %1289 = vst [vmem:[#allocation4 + $0x60] sm:$0xff] %v1257
        %1290 = vst [vmem:[#allocation4 + $0x68] sm:$0xff] %v1258
        %1291 = vst [vmem:[#allocation4 + $0x70] sm:$0xff] %v1259
        %1292 = vst [vmem:[#allocation4 + $0x78] sm:$0xff] %v1260
        %1293 = vst [vmem:[#allocation4 + $0x80] sm:$0xff] %v1261
        %1294 = vst [vmem:[#allocation4 + $0x88] sm:$0xff] %v1262
        %1295 = vst [vmem:[#allocation4 + $0x90] sm:$0xff] %v1263
        %1296 = vst [vmem:[#allocation4 + $0x98] sm:$0xff] %v1264
        %1297 = vst [vmem:[#allocation4 + $0xa0] sm:$0xff] %v1265
        %1298 = vst [vmem:[#allocation4 + $0xa8] sm:$0xff] %v1266
        %1299 = vst [vmem:[#allocation4 + $0xb0] sm:$0xff] %v1267
        %1300 = vst [vmem:[#allocation4 + $0xb8] sm:$0xff] %v1268
        %1301 = vst [vmem:[#allocation4 + $0xc0] sm:$0xff] %v1269
        %1302 = vst [vmem:[#allocation4 + $0xc8] sm:$0xff] %v1270
        %1303 = vst [vmem:[#allocation4 + $0xd0] sm:$0xff] %v1271
        %1304 = vst [vmem:[#allocation4 + $0xd8] sm:$0xff] %v1272
        %1305 = vst [vmem:[#allocation4 + $0xe0] sm:$0xff] %v1273
        %1306 = vst [vmem:[#allocation4 + $0xe8] sm:$0xff] %v1274
        %1307 = vst [vmem:[#allocation4 + $0xf0] sm:$0xff] %v1275
        %1308 = vst [vmem:[#allocation4 + $0xf8] sm:$0xff] %v1276
        %v1309 = vld [vmem:[%s391] sm:$0xff]
        %v1310 = vld [vmem:[%s391 + $0x8] sm:$0xff]
        %v1311 = vld [vmem:[%s391 + $0x18] sm:$0xff]
        %v1312 = vld [vmem:[%s391 + $0x20] sm:$0xff]
        %v1313 = vld [vmem:[%s391 + $0x30] sm:$0xff]
        %v1314 = vld [vmem:[%s391 + $0x38] sm:$0xff]
        %v1315 = vld [vmem:[%s391 + $0x48] sm:$0xff]
        %v1316 = vld [vmem:[%s391 + $0x50] sm:$0xff]
        %v1317 = vld [vmem:[%s391 + $0x60] sm:$0xff]
        %v1318 = vld [vmem:[%s391 + $0x68] sm:$0xff]
        %v1319 = vld [vmem:[%s391 + $0x78] sm:$0xff]
        %v1320 = vld [vmem:[%s391 + $0x80] sm:$0xff]
        %v1321 = vld [vmem:[%s391 + $0x90] sm:$0xff]
        %v1322 = vld [vmem:[%s391 + $0x98] sm:$0xff]
        %v1323 = vld [vmem:[%s391 + $0xa8] sm:$0xff]
        %v1324 = vld [vmem:[%s391 + $0xb0] sm:$0xff]
        %v1325 = vld [vmem:[%s391 + $0xc0] sm:$0xff]
        %v1326 = vld [vmem:[%s391 + $0xc8] sm:$0xff]
        %v1327 = vld [vmem:[%s391 + $0xd8] sm:$0xff]
        %v1328 = vld [vmem:[%s391 + $0xe0] sm:$0xff]
        %v1329 = vld [vmem:[%s391 + $0xf0] sm:$0xff]
        %v1330 = vld [vmem:[%s391 + $0xf8] sm:$0xff]
        %v1331 = vld [vmem:[%s391 + $0x108] sm:$0xff]
        %v1332 = vld [vmem:[%s391 + $0x110] sm:$0xff]
        %v1333 = vld [vmem:[%s391 + $0x120] sm:$0xff]
        %v1334 = vld [vmem:[%s391 + $0x128] sm:$0xff]
        %v1335 = vld [vmem:[%s391 + $0x138] sm:$0xff]
        %v1336 = vld [vmem:[%s391 + $0x140] sm:$0xff]
        %v1337 = vld [vmem:[%s391 + $0x150] sm:$0xff]
        %v1338 = vld [vmem:[%s391 + $0x158] sm:$0xff]
        %v1339 = vld [vmem:[%s391 + $0x168] sm:$0xff]
        %v1340 = vld [vmem:[%s391 + $0x170] sm:$0xff]
        %v1341 = vpack.c.bf16 %v1310, %v1309
        %v1342 = vpack.c.bf16 %v1312, %v1311
        %v1343 = vpack.c.bf16 %v1314, %v1313
        %v1344 = vpack.c.bf16 %v1316, %v1315
        %v1345 = vpack.c.bf16 %v1318, %v1317
        %v1346 = vpack.c.bf16 %v1320, %v1319
        %v1347 = vpack.c.bf16 %v1322, %v1321
        %v1348 = vpack.c.bf16 %v1324, %v1323
        %v1349 = vpack.c.bf16 %v1326, %v1325
        %v1350 = vpack.c.bf16 %v1328, %v1327
        %v1351 = vpack.c.bf16 %v1330, %v1329
        %v1352 = vpack.c.bf16 %v1332, %v1331
        %v1353 = vpack.c.bf16 %v1334, %v1333
        %v1354 = vpack.c.bf16 %v1336, %v1335
        %v1355 = vpack.c.bf16 %v1338, %v1337
        %v1356 = vpack.c.bf16 %v1340, %v1339
        %s1357 = scalar_lea.vmem [#allocation8], 192
        %v1358 = vld [vmem:[%s1357] sm:$0xf]
        %v1359 = vld [vmem:[%s1357 + $0x4] sm:$0xf]
        %v1360 = vld [vmem:[%s1357 + $0x8] sm:$0xf]
        %v1361 = vld [vmem:[%s1357 + $0xc] sm:$0xf]
        %v1362 = vld [vmem:[%s1357 + $0x10] sm:$0xf]
        %v1363 = vld [vmem:[%s1357 + $0x14] sm:$0xf]
        %v1364 = vld [vmem:[%s1357 + $0x18] sm:$0xf]
        %v1365 = vld [vmem:[%s1357 + $0x1c] sm:$0xf]
        %v1366 = vld [vmem:[%s1357 + $0x20] sm:$0xf]
        %v1367 = vld [vmem:[%s1357 + $0x24] sm:$0xf]
        %v1368 = vld [vmem:[%s1357 + $0x28] sm:$0xf]
        %v1369 = vld [vmem:[%s1357 + $0x2c] sm:$0xf]
        %v1370 = vld [vmem:[%s1357 + $0x30] sm:$0xf]
        %v1371 = vld [vmem:[%s1357 + $0x34] sm:$0xf]
        %v1372 = vld [vmem:[%s1357 + $0x38] sm:$0xf]
        %v1373 = vld [vmem:[%s1357 + $0x3c] sm:$0xf]
        %v1374 = vld [vmem:[%s391 + $0x1] sm:$0xff]
        %v1375 = vld [vmem:[%s391 + $0x9] sm:$0xff]
        %v1376 = vld [vmem:[%s391 + $0x19] sm:$0xff]
        %v1377 = vld [vmem:[%s391 + $0x21] sm:$0xff]
        %v1378 = vld [vmem:[%s391 + $0x31] sm:$0xff]
        %v1379 = vld [vmem:[%s391 + $0x39] sm:$0xff]
        %v1380 = vld [vmem:[%s391 + $0x49] sm:$0xff]
        %v1381 = vld [vmem:[%s391 + $0x51] sm:$0xff]
        %v1382 = vld [vmem:[%s391 + $0x61] sm:$0xff]
        %v1383 = vld [vmem:[%s391 + $0x69] sm:$0xff]
        %v1384 = vld [vmem:[%s391 + $0x79] sm:$0xff]
        %v1385 = vld [vmem:[%s391 + $0x81] sm:$0xff]
        %v1386 = vld [vmem:[%s391 + $0x91] sm:$0xff]
        %v1387 = vld [vmem:[%s391 + $0x99] sm:$0xff]
        %v1388 = vld [vmem:[%s391 + $0xa9] sm:$0xff]
        %v1389 = vld [vmem:[%s391 + $0xb1] sm:$0xff]
        %v1390 = vld [vmem:[%s391 + $0xc1] sm:$0xff]
        %v1391 = vld [vmem:[%s391 + $0xc9] sm:$0xff]
        %v1392 = vld [vmem:[%s391 + $0xd9] sm:$0xff]
        %v1393 = vld [vmem:[%s391 + $0xe1] sm:$0xff]
        %v1394 = vld [vmem:[%s391 + $0xf1] sm:$0xff]
        %v1395 = vld [vmem:[%s391 + $0xf9] sm:$0xff]
        %v1396 = vld [vmem:[%s391 + $0x109] sm:$0xff]
        %v1397 = vld [vmem:[%s391 + $0x111] sm:$0xff]
        %v1398 = vld [vmem:[%s391 + $0x121] sm:$0xff]
        %v1399 = vld [vmem:[%s391 + $0x129] sm:$0xff]
        %v1400 = vld [vmem:[%s391 + $0x139] sm:$0xff]
        %v1401 = vld [vmem:[%s391 + $0x141] sm:$0xff]
        %v1402 = vld [vmem:[%s391 + $0x151] sm:$0xff]
        %v1403 = vld [vmem:[%s391 + $0x159] sm:$0xff]
        %v1404 = vld [vmem:[%s391 + $0x169] sm:$0xff]
        %v1405 = vld [vmem:[%s391 + $0x171] sm:$0xff]
        %v1406 = vpack.c.bf16 %v1375, %v1374
        %v1407 = vpack.c.bf16 %v1377, %v1376
        %v1408 = vpack.c.bf16 %v1379, %v1378
        %v1409 = vpack.c.bf16 %v1381, %v1380
        %v1410 = vpack.c.bf16 %v1383, %v1382
        %v1411 = vpack.c.bf16 %v1385, %v1384
        %v1412 = vpack.c.bf16 %v1387, %v1386
        %v1413 = vpack.c.bf16 %v1389, %v1388
        %v1414 = vpack.c.bf16 %v1391, %v1390
        %v1415 = vpack.c.bf16 %v1393, %v1392
        %v1416 = vpack.c.bf16 %v1395, %v1394
        %v1417 = vpack.c.bf16 %v1397, %v1396
        %v1418 = vpack.c.bf16 %v1399, %v1398
        %v1419 = vpack.c.bf16 %v1401, %v1400
        %v1420 = vpack.c.bf16 %v1403, %v1402
        %v1421 = vpack.c.bf16 %v1405, %v1404
        %s1422 = scalar_lea.vmem [#allocation8], 256
        %v1423 = vld [vmem:[%s1422] sm:$0xf]
        %v1424 = vld [vmem:[%s1422 + $0x4] sm:$0xf]
        %v1425 = vld [vmem:[%s1422 + $0x8] sm:$0xf]
        %v1426 = vld [vmem:[%s1422 + $0xc] sm:$0xf]
        %v1427 = vld [vmem:[%s1422 + $0x10] sm:$0xf]
        %v1428 = vld [vmem:[%s1422 + $0x14] sm:$0xf]
        %v1429 = vld [vmem:[%s1422 + $0x18] sm:$0xf]
        %v1430 = vld [vmem:[%s1422 + $0x1c] sm:$0xf]
        %v1431 = vld [vmem:[%s1422 + $0x20] sm:$0xf]
        %v1432 = vld [vmem:[%s1422 + $0x24] sm:$0xf]
        %v1433 = vld [vmem:[%s1422 + $0x28] sm:$0xf]
        %v1434 = vld [vmem:[%s1422 + $0x2c] sm:$0xf]
        %v1435 = vld [vmem:[%s1422 + $0x30] sm:$0xf]
        %v1436 = vld [vmem:[%s1422 + $0x34] sm:$0xf]
        %v1437 = vld [vmem:[%s1422 + $0x38] sm:$0xf]
        %v1438 = vld [vmem:[%s1422 + $0x3c] sm:$0xf]
        %v1455 = vunpack.c.l.b16 %v1423
        %v1456 = vunpack.c.l.b16 %v1424
        %v1457 = vunpack.c.l.b16 %v1425
        %v1458 = vunpack.c.l.b16 %v1426
        %v1459 = vunpack.c.l.b16 %v1427
        %v1460 = vunpack.c.l.b16 %v1428
        %v1461 = vunpack.c.l.b16 %v1429
        %v1462 = vunpack.c.l.b16 %v1430
        %v1463 = vunpack.c.l.b16 %v1431
        %v1464 = vunpack.c.l.b16 %v1432
        %v1465 = vunpack.c.l.b16 %v1433
        %v1466 = vunpack.c.l.b16 %v1434
        %v1467 = vunpack.c.l.b16 %v1435
        %v1468 = vunpack.c.l.b16 %v1436
        %v1469 = vunpack.c.l.b16 %v1437
        %v1470 = vunpack.c.l.b16 %v1438
        %v1471 = vpack.c.b16 %v1456, %v1455
        %v1472 = vpack.c.b16 %v1458, %v1457
        %v1473 = vpack.c.b16 %v1460, %v1459
        %v1474 = vpack.c.b16 %v1462, %v1461
        %v1475 = vpack.c.b16 %v1464, %v1463
        %v1476 = vpack.c.b16 %v1466, %v1465
        %v1477 = vpack.c.b16 %v1468, %v1467
        %v1478 = vpack.c.b16 %v1470, %v1469
        %1487 = vmatprep.subr.bf16.mxu0 0
        %1488 = vmatpush1.bf16.msra.mxu0 %v1471
        %1489 = vmatprep.subr.bf16.mxu0 0
        %1490 = vmatpush1.bf16.msra.mxu0 %v1472
        %1491 = vmatprep.subr.bf16.mxu0 0
        %1492 = vmatpush1.bf16.msra.mxu0 %v1473
        %1493 = vmatprep.subr.bf16.mxu0 0
        %1494 = vmatpush1.bf16.msra.mxu0 %v1474
        %1495 = vmatprep.subr.bf16.mxu0 0
        %1496 = vmatpush1.bf16.msra.mxu0 %v1475
        %1497 = vmatprep.subr.bf16.mxu0 0
        %1498 = vmatpush1.bf16.msra.mxu0 %v1476
        %1499 = vmatprep.subr.bf16.mxu0 0
        %1500 = vmatpush1.bf16.msra.mxu0 %v1477
        %1501 = vmatprep.subr.bf16.mxu0 0
        %1502 = vmatpush1.bf16.msra.mxu0 %v1478
        %1503 = vmatprep.subr.bf16.mxu0 0
        %1504 = vmatpush1.bf16.msra.mxu0 0
        %1505 = vmatprep.subr.bf16.mxu0 0
        %1506 = vmatpush1.bf16.msra.mxu0 0
        %1507 = vmatprep.subr.bf16.mxu0 0
        %1508 = vmatpush1.bf16.msra.mxu0 0
        %1509 = vmatprep.subr.bf16.mxu0 0
        %1510 = vmatpush1.bf16.msra.mxu0 0
        %1511 = vmatprep.subr.bf16.mxu0 0
        %1512 = vmatpush1.bf16.msra.mxu0 0
        %1513 = vmatprep.subr.bf16.mxu0 0
        %1514 = vmatpush1.bf16.msra.mxu0 0
        %1515 = vmatprep.subr.bf16.mxu0 0
        %1516 = vmatpush1.bf16.msra.mxu0 0
        %1517 = vmatprep.subr.bf16.mxu0 0
        %1518 = vmatpush1.bf16.msra.mxu0 0
        %1519 = vmatprep.mubr.bf16.mxu0 0
        %1520 = vmatmul.mubr.bf16.gmra.mrb[0].mxu0 %v1406
        %v1521 = vpop.f32.mrb[0].mxu0
        %v1522 = vadd.f32 0.0, %v1521
        %v1523 = vpop.f32.mrb[0].mxu0
        %v1524 = vpop.f32.mrb[0].mxu0
        %v1525 = vadd.f32 0.0, %v1524
        %v1526 = vpop.f32.mrb[0].mxu0
        %1527 = vmatprep.mubr.bf16.mxu0 0
        %1528 = vmatmul.mubr.bf16.gmra.mrb[0].mxu0 %v1407
        %v1529 = vpop.f32.mrb[0].mxu0
        %v1530 = vadd.f32 0.0, %v1529
        %v1531 = vpop.f32.mrb[0].mxu0
        %v1532 = vpop.f32.mrb[0].mxu0
        %v1533 = vadd.f32 0.0, %v1532
        %v1534 = vpop.f32.mrb[0].mxu0
        %1535 = vmatprep.mubr.bf16.mxu0 0
        %1536 = vmatmul.mubr.bf16.gmra.mrb[0].mxu0 %v1408
        %v1537 = vpop.f32.mrb[0].mxu0
        %v1538 = vadd.f32 0.0, %v1537
        %v1539 = vpop.f32.mrb[0].mxu0
        %v1540 = vpop.f32.mrb[0].mxu0
        %v1541 = vadd.f32 0.0, %v1540
        %v1542 = vpop.f32.mrb[0].mxu0
        %1543 = vmatprep.mubr.bf16.mxu0 0
        %1544 = vmatmul.mubr.bf16.gmra.mrb[0].mxu0 %v1409
        %v1545 = vpop.f32.mrb[0].mxu0
        %v1546 = vadd.f32 0.0, %v1545
        %v1547 = vpop.f32.mrb[0].mxu0
        %v1548 = vpop.f32.mrb[0].mxu0
        %v1549 = vadd.f32 0.0, %v1548
        %v1550 = vpop.f32.mrb[0].mxu0
        %1551 = vmatprep.mubr.bf16.mxu0 0
        %1552 = vmatmul.mubr.bf16.gmra.mrb[0].mxu0 %v1410
        %v1553 = vpop.f32.mrb[0].mxu0
        %v1554 = vadd.f32 0.0, %v1553
        %v1555 = vpop.f32.mrb[0].mxu0
        %v1556 = vpop.f32.mrb[0].mxu0
        %v1557 = vadd.f32 0.0, %v1556
        %v1558 = vpop.f32.mrb[0].mxu0
        %1559 = vmatprep.mubr.bf16.mxu0 0
        %1560 = vmatmul.mubr.bf16.gmra.mrb[0].mxu0 %v1411
        %v1561 = vpop.f32.mrb[0].mxu0
        %v1562 = vadd.f32 0.0, %v1561
        %v1563 = vpop.f32.mrb[0].mxu0
        %v1564 = vpop.f32.mrb[0].mxu0
        %v1565 = vadd.f32 0.0, %v1564
        %v1566 = vpop.f32.mrb[0].mxu0
        %1567 = vmatprep.mubr.bf16.mxu0 0
        %1568 = vmatmul.mubr.bf16.gmra.mrb[0].mxu0 %v1412
        %v1569 = vpop.f32.mrb[0].mxu0
        %v1570 = vadd.f32 0.0, %v1569
        %v1571 = vpop.f32.mrb[0].mxu0
        %v1572 = vpop.f32.mrb[0].mxu0
        %v1573 = vadd.f32 0.0, %v1572
        %v1574 = vpop.f32.mrb[0].mxu0
        %1575 = vmatprep.mubr.bf16.mxu0 0
        %1576 = vmatmul.mubr.bf16.gmra.mrb[0].mxu0 %v1413
        %v1577 = vpop.f32.mrb[0].mxu0
        %v1578 = vadd.f32 0.0, %v1577
        %v1579 = vpop.f32.mrb[0].mxu0
        %v1580 = vpop.f32.mrb[0].mxu0
        %v1581 = vadd.f32 0.0, %v1580
        %v1582 = vpop.f32.mrb[0].mxu0
        %1583 = vmatprep.mubr.bf16.mxu0 0
        %1584 = vmatmul.mubr.bf16.gmra.mrb[0].mxu0 %v1414
        %v1585 = vpop.f32.mrb[0].mxu0
        %v1586 = vadd.f32 0.0, %v1585
        %v1587 = vpop.f32.mrb[0].mxu0
        %v1588 = vpop.f32.mrb[0].mxu0
        %v1589 = vadd.f32 0.0, %v1588
        %v1590 = vpop.f32.mrb[0].mxu0
        %1591 = vmatprep.mubr.bf16.mxu0 0
        %1592 = vmatmul.mubr.bf16.gmra.mrb[0].mxu0 %v1415
        %v1593 = vpop.f32.mrb[0].mxu0
        %v1594 = vadd.f32 0.0, %v1593
        %v1595 = vpop.f32.mrb[0].mxu0
        %v1596 = vpop.f32.mrb[0].mxu0
        %v1597 = vadd.f32 0.0, %v1596
        %v1598 = vpop.f32.mrb[0].mxu0
        %1599 = vmatprep.mubr.bf16.mxu0 0
        %1600 = vmatmul.mubr.bf16.gmra.mrb[0].mxu0 %v1416
        %v1601 = vpop.f32.mrb[0].mxu0
        %v1602 = vadd.f32 0.0, %v1601
        %v1603 = vpop.f32.mrb[0].mxu0
        %v1604 = vpop.f32.mrb[0].mxu0
        %v1605 = vadd.f32 0.0, %v1604
        %v1606 = vpop.f32.mrb[0].mxu0
        %1607 = vmatprep.mubr.bf16.mxu0 0
        %1608 = vmatmul.mubr.bf16.gmra.mrb[0].mxu0 %v1417
        %v1609 = vpop.f32.mrb[0].mxu0
        %v1610 = vadd.f32 0.0, %v1609
        %v1611 = vpop.f32.mrb[0].mxu0
        %v1612 = vpop.f32.mrb[0].mxu0
        %v1613 = vadd.f32 0.0, %v1612
        %v1614 = vpop.f32.mrb[0].mxu0
        %1615 = vmatprep.mubr.bf16.mxu0 0
        %1616 = vmatmul.mubr.bf16.gmra.mrb[0].mxu0 %v1418
        %v1617 = vpop.f32.mrb[0].mxu0
        %v1618 = vadd.f32 0.0, %v1617
        %v1619 = vpop.f32.mrb[0].mxu0
        %v1620 = vpop.f32.mrb[0].mxu0
        %v1621 = vadd.f32 0.0, %v1620
        %v1622 = vpop.f32.mrb[0].mxu0
        %1623 = vmatprep.mubr.bf16.mxu0 0
        %1624 = vmatmul.mubr.bf16.gmra.mrb[0].mxu0 %v1419
        %v1625 = vpop.f32.mrb[0].mxu0
        %v1626 = vadd.f32 0.0, %v1625
        %v1627 = vpop.f32.mrb[0].mxu0
        %v1628 = vpop.f32.mrb[0].mxu0
        %v1629 = vadd.f32 0.0, %v1628
        %v1630 = vpop.f32.mrb[0].mxu0
        %1631 = vmatprep.mubr.bf16.mxu0 0
        %1632 = vmatmul.mubr.bf16.gmra.mrb[0].mxu0 %v1420
        %v1633 = vpop.f32.mrb[0].mxu0
        %v1634 = vadd.f32 0.0, %v1633
        %v1635 = vpop.f32.mrb[0].mxu0
        %v1636 = vpop.f32.mrb[0].mxu0
        %v1637 = vadd.f32 0.0, %v1636
        %v1638 = vpop.f32.mrb[0].mxu0
        %1639 = vmatprep.mubr.bf16.mxu0 0
        %1640 = vmatmul.mubr.bf16.gmra.mrb[0].mxu0 %v1421
        %v1641 = vpop.f32.mrb[0].mxu0
        %v1642 = vadd.f32 0.0, %v1641
        %v1643 = vpop.f32.mrb[0].mxu0
        %v1644 = vpop.f32.mrb[0].mxu0
        %v1645 = vadd.f32 0.0, %v1644
        %v1646 = vpop.f32.mrb[0].mxu0
        %1647 = vdwg.mxu0
        %v1664 = vunpack.c.l.b16 %v1358
        %v1665 = vunpack.c.l.b16 %v1359
        %v1666 = vunpack.c.l.b16 %v1360
        %v1667 = vunpack.c.l.b16 %v1361
        %v1668 = vunpack.c.l.b16 %v1362
        %v1669 = vunpack.c.l.b16 %v1363
        %v1670 = vunpack.c.l.b16 %v1364
        %v1671 = vunpack.c.l.b16 %v1365
        %v1672 = vunpack.c.l.b16 %v1366
        %v1673 = vunpack.c.l.b16 %v1367
        %v1674 = vunpack.c.l.b16 %v1368
        %v1675 = vunpack.c.l.b16 %v1369
        %v1676 = vunpack.c.l.b16 %v1370
        %v1677 = vunpack.c.l.b16 %v1371
        %v1678 = vunpack.c.l.b16 %v1372
        %v1679 = vunpack.c.l.b16 %v1373
        %v1680 = vpack.c.b16 %v1665, %v1664
        %v1681 = vpack.c.b16 %v1667, %v1666
        %v1682 = vpack.c.b16 %v1669, %v1668
        %v1683 = vpack.c.b16 %v1671, %v1670
        %v1684 = vpack.c.b16 %v1673, %v1672
        %v1685 = vpack.c.b16 %v1675, %v1674
        %v1686 = vpack.c.b16 %v1677, %v1676
        %v1687 = vpack.c.b16 %v1679, %v1678
        %1696 = vmatprep.subr.bf16.mxu0 0
        %1697 = vmatpush1.bf16.msra.mxu0 %v1680
        %1698 = vmatprep.subr.bf16.mxu0 0
        %1699 = vmatpush1.bf16.msra.mxu0 %v1681
        %1700 = vmatprep.subr.bf16.mxu0 0
        %1701 = vmatpush1.bf16.msra.mxu0 %v1682
        %1702 = vmatprep.subr.bf16.mxu0 0
        %1703 = vmatpush1.bf16.msra.mxu0 %v1683
        %1704 = vmatprep.subr.bf16.mxu0 0
        %1705 = vmatpush1.bf16.msra.mxu0 %v1684
        %1706 = vmatprep.subr.bf16.mxu0 0
        %1707 = vmatpush1.bf16.msra.mxu0 %v1685
        %1708 = vmatprep.subr.bf16.mxu0 0
        %1709 = vmatpush1.bf16.msra.mxu0 %v1686
        %1710 = vmatprep.subr.bf16.mxu0 0
        %1711 = vmatpush1.bf16.msra.mxu0 %v1687
        %1712 = vmatprep.subr.bf16.mxu0 0
        %1713 = vmatpush1.bf16.msra.mxu0 0
        %1714 = vmatprep.subr.bf16.mxu0 0
        %1715 = vmatpush1.bf16.msra.mxu0 0
        %1716 = vmatprep.subr.bf16.mxu0 0
        %1717 = vmatpush1.bf16.msra.mxu0 0
        %1718 = vmatprep.subr.bf16.mxu0 0
        %1719 = vmatpush1.bf16.msra.mxu0 0
        %1720 = vmatprep.subr.bf16.mxu0 0
        %1721 = vmatpush1.bf16.msra.mxu0 0
        %1722 = vmatprep.subr.bf16.mxu0 0
        %1723 = vmatpush1.bf16.msra.mxu0 0
        %1724 = vmatprep.subr.bf16.mxu0 0
        %1725 = vmatpush1.bf16.msra.mxu0 0
        %1726 = vmatprep.subr.bf16.mxu0 0
        %1727 = vmatpush1.bf16.msra.mxu0 0
        %1728 = vmatprep.mubr.bf16.mxu0 0
        %1729 = vmatmul.mubr.bf16.gmra.mrb[0].mxu0 %v1341
        %v1730 = vpop.f32.mrb[0].mxu0
        %v1731 = vadd.f32 %v1522, %v1730
        %v1732 = vpop.f32.mrb[0].mxu0
        %v1733 = vpop.f32.mrb[0].mxu0
        %v1734 = vadd.f32 %v1525, %v1733
        %v1735 = vpop.f32.mrb[0].mxu0
        %1736 = vmatprep.mubr.bf16.mxu0 0
        %1737 = vmatmul.mubr.bf16.gmra.mrb[0].mxu0 %v1342
        %v1738 = vpop.f32.mrb[0].mxu0
        %v1739 = vadd.f32 %v1530, %v1738
        %v1740 = vpop.f32.mrb[0].mxu0
        %v1741 = vpop.f32.mrb[0].mxu0
        %v1742 = vadd.f32 %v1533, %v1741
        %v1743 = vpop.f32.mrb[0].mxu0
        %1744 = vmatprep.mubr.bf16.mxu0 0
        %1745 = vmatmul.mubr.bf16.gmra.mrb[0].mxu0 %v1343
        %v1746 = vpop.f32.mrb[0].mxu0
        %v1747 = vadd.f32 %v1538, %v1746
        %v1748 = vpop.f32.mrb[0].mxu0
        %v1749 = vpop.f32.mrb[0].mxu0
        %v1750 = vadd.f32 %v1541, %v1749
        %v1751 = vpop.f32.mrb[0].mxu0
        %1752 = vmatprep.mubr.bf16.mxu0 0
        %1753 = vmatmul.mubr.bf16.gmra.mrb[0].mxu0 %v1344
        %v1754 = vpop.f32.mrb[0].mxu0
        %v1755 = vadd.f32 %v1546, %v1754
        %v1756 = vpop.f32.mrb[0].mxu0
        %v1757 = vpop.f32.mrb[0].mxu0
        %v1758 = vadd.f32 %v1549, %v1757
        %v1759 = vpop.f32.mrb[0].mxu0
        %1760 = vmatprep.mubr.bf16.mxu0 0
        %1761 = vmatmul.mubr.bf16.gmra.mrb[0].mxu0 %v1345
        %v1762 = vpop.f32.mrb[0].mxu0
        %v1763 = vadd.f32 %v1554, %v1762
        %v1764 = vpop.f32.mrb[0].mxu0
        %v1765 = vpop.f32.mrb[0].mxu0
        %v1766 = vadd.f32 %v1557, %v1765
        %v1767 = vpop.f32.mrb[0].mxu0
        %1768 = vmatprep.mubr.bf16.mxu0 0
        %1769 = vmatmul.mubr.bf16.gmra.mrb[0].mxu0 %v1346
        %v1770 = vpop.f32.mrb[0].mxu0
        %v1771 = vadd.f32 %v1562, %v1770
        %v1772 = vpop.f32.mrb[0].mxu0
        %v1773 = vpop.f32.mrb[0].mxu0
        %v1774 = vadd.f32 %v1565, %v1773
        %v1775 = vpop.f32.mrb[0].mxu0
        %1776 = vmatprep.mubr.bf16.mxu0 0
        %1777 = vmatmul.mubr.bf16.gmra.mrb[0].mxu0 %v1347
        %v1778 = vpop.f32.mrb[0].mxu0
        %v1779 = vadd.f32 %v1570, %v1778
        %v1780 = vpop.f32.mrb[0].mxu0
        %v1781 = vpop.f32.mrb[0].mxu0
        %v1782 = vadd.f32 %v1573, %v1781
        %v1783 = vpop.f32.mrb[0].mxu0
        %1784 = vmatprep.mubr.bf16.mxu0 0
        %1785 = vmatmul.mubr.bf16.gmra.mrb[0].mxu0 %v1348
        %v1786 = vpop.f32.mrb[0].mxu0
        %v1787 = vadd.f32 %v1578, %v1786
        %v1788 = vpop.f32.mrb[0].mxu0
        %v1789 = vpop.f32.mrb[0].mxu0
        %v1790 = vadd.f32 %v1581, %v1789
        %v1791 = vpop.f32.mrb[0].mxu0
        %1792 = vmatprep.mubr.bf16.mxu0 0
        %1793 = vmatmul.mubr.bf16.gmra.mrb[0].mxu0 %v1349
        %v1794 = vpop.f32.mrb[0].mxu0
        %v1795 = vadd.f32 %v1586, %v1794
        %v1796 = vpop.f32.mrb[0].mxu0
        %v1797 = vpop.f32.mrb[0].mxu0
        %v1798 = vadd.f32 %v1589, %v1797
        %v1799 = vpop.f32.mrb[0].mxu0
        %1800 = vmatprep.mubr.bf16.mxu0 0
        %1801 = vmatmul.mubr.bf16.gmra.mrb[0].mxu0 %v1350
        %v1802 = vpop.f32.mrb[0].mxu0
        %v1803 = vadd.f32 %v1594, %v1802
        %v1804 = vpop.f32.mrb[0].mxu0
        %v1805 = vpop.f32.mrb[0].mxu0
        %v1806 = vadd.f32 %v1597, %v1805
        %v1807 = vpop.f32.mrb[0].mxu0
        %1808 = vmatprep.mubr.bf16.mxu0 0
        %1809 = vmatmul.mubr.bf16.gmra.mrb[0].mxu0 %v1351
        %v1810 = vpop.f32.mrb[0].mxu0
        %v1811 = vadd.f32 %v1602, %v1810
        %v1812 = vpop.f32.mrb[0].mxu0
        %v1813 = vpop.f32.mrb[0].mxu0
        %v1814 = vadd.f32 %v1605, %v1813
        %v1815 = vpop.f32.mrb[0].mxu0
        %1816 = vmatprep.mubr.bf16.mxu0 0
        %1817 = vmatmul.mubr.bf16.gmra.mrb[0].mxu0 %v1352
        %v1818 = vpop.f32.mrb[0].mxu0
        %v1819 = vadd.f32 %v1610, %v1818
        %v1820 = vpop.f32.mrb[0].mxu0
        %v1821 = vpop.f32.mrb[0].mxu0
        %v1822 = vadd.f32 %v1613, %v1821
        %v1823 = vpop.f32.mrb[0].mxu0
        %1824 = vmatprep.mubr.bf16.mxu0 0
        %1825 = vmatmul.mubr.bf16.gmra.mrb[0].mxu0 %v1353
        %v1826 = vpop.f32.mrb[0].mxu0
        %v1827 = vadd.f32 %v1618, %v1826
        %v1828 = vpop.f32.mrb[0].mxu0
        %v1829 = vpop.f32.mrb[0].mxu0
        %v1830 = vadd.f32 %v1621, %v1829
        %v1831 = vpop.f32.mrb[0].mxu0
        %1832 = vmatprep.mubr.bf16.mxu0 0
        %1833 = vmatmul.mubr.bf16.gmra.mrb[0].mxu0 %v1354
        %v1834 = vpop.f32.mrb[0].mxu0
        %v1835 = vadd.f32 %v1626, %v1834
        %v1836 = vpop.f32.mrb[0].mxu0
        %v1837 = vpop.f32.mrb[0].mxu0
        %v1838 = vadd.f32 %v1629, %v1837
        %v1839 = vpop.f32.mrb[0].mxu0
        %1840 = vmatprep.mubr.bf16.mxu0 0
        %1841 = vmatmul.mubr.bf16.gmra.mrb[0].mxu0 %v1355
        %v1842 = vpop.f32.mrb[0].mxu0
        %v1843 = vadd.f32 %v1634, %v1842
        %v1844 = vpop.f32.mrb[0].mxu0
        %v1845 = vpop.f32.mrb[0].mxu0
        %v1846 = vadd.f32 %v1637, %v1845
        %v1847 = vpop.f32.mrb[0].mxu0
        %1848 = vmatprep.mubr.bf16.mxu0 0
        %1849 = vmatmul.mubr.bf16.gmra.mrb[0].mxu0 %v1356
        %v1850 = vpop.f32.mrb[0].mxu0
        %v1851 = vadd.f32 %v1642, %v1850
        %v1852 = vpop.f32.mrb[0].mxu0
        %v1853 = vpop.f32.mrb[0].mxu0
        %v1854 = vadd.f32 %v1645, %v1853
        %v1855 = vpop.f32.mrb[0].mxu0
        %1856 = vdwg.mxu0
        %v1857 = vld [vmem:[%s391 + $0x2] sm:$0xff]
        %v1858 = vld [vmem:[%s391 + $0xa] sm:$0xff]
        %v1859 = vld [vmem:[%s391 + $0x1a] sm:$0xff]
        %v1860 = vld [vmem:[%s391 + $0x22] sm:$0xff]
        %v1861 = vld [vmem:[%s391 + $0x32] sm:$0xff]
        %v1862 = vld [vmem:[%s391 + $0x3a] sm:$0xff]
        %v1863 = vld [vmem:[%s391 + $0x4a] sm:$0xff]
        %v1864 = vld [vmem:[%s391 + $0x52] sm:$0xff]
        %v1865 = vld [vmem:[%s391 + $0x62] sm:$0xff]
        %v1866 = vld [vmem:[%s391 + $0x6a] sm:$0xff]
        %v1867 = vld [vmem:[%s391 + $0x7a] sm:$0xff]
        %v1868 = vld [vmem:[%s391 + $0x82] sm:$0xff]
        %v1869 = vld [vmem:[%s391 + $0x92] sm:$0xff]
        %v1870 = vld [vmem:[%s391 + $0x9a] sm:$0xff]
        %v1871 = vld [vmem:[%s391 + $0xaa] sm:$0xff]
        %v1872 = vld [vmem:[%s391 + $0xb2] sm:$0xff]
        %v1873 = vld [vmem:[%s391 + $0xc2] sm:$0xff]
        %v1874 = vld [vmem:[%s391 + $0xca] sm:$0xff]
        %v1875 = vld [vmem:[%s391 + $0xda] sm:$0xff]
        %v1876 = vld [vmem:[%s391 + $0xe2] sm:$0xff]
        %v1877 = vld [vmem:[%s391 + $0xf2] sm:$0xff]
        %v1878 = vld [vmem:[%s391 + $0xfa] sm:$0xff]
        %v1879 = vld [vmem:[%s391 + $0x10a] sm:$0xff]
        %v1880 = vld [vmem:[%s391 + $0x112] sm:$0xff]
        %v1881 = vld [vmem:[%s391 + $0x122] sm:$0xff]
        %v1882 = vld [vmem:[%s391 + $0x12a] sm:$0xff]
        %v1883 = vld [vmem:[%s391 + $0x13a] sm:$0xff]
        %v1884 = vld [vmem:[%s391 + $0x142] sm:$0xff]
        %v1885 = vld [vmem:[%s391 + $0x152] sm:$0xff]
        %v1886 = vld [vmem:[%s391 + $0x15a] sm:$0xff]
        %v1887 = vld [vmem:[%s391 + $0x16a] sm:$0xff]
        %v1888 = vld [vmem:[%s391 + $0x172] sm:$0xff]
        %v1889 = vpack.c.bf16 %v1858, %v1857
        %v1890 = vpack.c.bf16 %v1860, %v1859
        %v1891 = vpack.c.bf16 %v1862, %v1861
        %v1892 = vpack.c.bf16 %v1864, %v1863
        %v1893 = vpack.c.bf16 %v1866, %v1865
        %v1894 = vpack.c.bf16 %v1868, %v1867
        %v1895 = vpack.c.bf16 %v1870, %v1869
        %v1896 = vpack.c.bf16 %v1872, %v1871
        %v1897 = vpack.c.bf16 %v1874, %v1873
        %v1898 = vpack.c.bf16 %v1876, %v1875
        %v1899 = vpack.c.bf16 %v1878, %v1877
        %v1900 = vpack.c.bf16 %v1880, %v1879
        %v1901 = vpack.c.bf16 %v1882, %v1881
        %v1902 = vpack.c.bf16 %v1884, %v1883
        %v1903 = vpack.c.bf16 %v1886, %v1885
        %v1904 = vpack.c.bf16 %v1888, %v1887
        %s1905 = scalar_lea.vmem [#allocation8], 320
        %v1906 = vld [vmem:[%s1905] sm:$0xf]
        %v1907 = vld [vmem:[%s1905 + $0x4] sm:$0xf]
        %v1908 = vld [vmem:[%s1905 + $0x8] sm:$0xf]
        %v1909 = vld [vmem:[%s1905 + $0xc] sm:$0xf]
        %v1910 = vld [vmem:[%s1905 + $0x10] sm:$0xf]
        %v1911 = vld [vmem:[%s1905 + $0x14] sm:$0xf]
        %v1912 = vld [vmem:[%s1905 + $0x18] sm:$0xf]
        %v1913 = vld [vmem:[%s1905 + $0x1c] sm:$0xf]
        %v1914 = vld [vmem:[%s1905 + $0x20] sm:$0xf]
        %v1915 = vld [vmem:[%s1905 + $0x24] sm:$0xf]
        %v1916 = vld [vmem:[%s1905 + $0x28] sm:$0xf]
        %v1917 = vld [vmem:[%s1905 + $0x2c] sm:$0xf]
        %v1918 = vld [vmem:[%s1905 + $0x30] sm:$0xf]
        %v1919 = vld [vmem:[%s1905 + $0x34] sm:$0xf]
        %v1920 = vld [vmem:[%s1905 + $0x38] sm:$0xf]
        %v1921 = vld [vmem:[%s1905 + $0x3c] sm:$0xf]
        %v1938 = vunpack.c.l.b16 %v1906
        %v1939 = vunpack.c.l.b16 %v1907
        %v1940 = vunpack.c.l.b16 %v1908
        %v1941 = vunpack.c.l.b16 %v1909
        %v1942 = vunpack.c.l.b16 %v1910
        %v1943 = vunpack.c.l.b16 %v1911
        %v1944 = vunpack.c.l.b16 %v1912
        %v1945 = vunpack.c.l.b16 %v1913
        %v1946 = vunpack.c.l.b16 %v1914
        %v1947 = vunpack.c.l.b16 %v1915
        %v1948 = vunpack.c.l.b16 %v1916
        %v1949 = vunpack.c.l.b16 %v1917
        %v1950 = vunpack.c.l.b16 %v1918
        %v1951 = vunpack.c.l.b16 %v1919
        %v1952 = vunpack.c.l.b16 %v1920
        %v1953 = vunpack.c.l.b16 %v1921
        %v1954 = vpack.c.b16 %v1939, %v1938
        %v1955 = vpack.c.b16 %v1941, %v1940
        %v1956 = vpack.c.b16 %v1943, %v1942
        %v1957 = vpack.c.b16 %v1945, %v1944
        %v1958 = vpack.c.b16 %v1947, %v1946
        %v1959 = vpack.c.b16 %v1949, %v1948
        %v1960 = vpack.c.b16 %v1951, %v1950
        %v1961 = vpack.c.b16 %v1953, %v1952
        %1970 = vmatprep.subr.bf16.mxu0 0
        %1971 = vmatpush1.bf16.msra.mxu0 %v1954
        %1972 = vmatprep.subr.bf16.mxu0 0
        %1973 = vmatpush1.bf16.msra.mxu0 %v1955
        %1974 = vmatprep.subr.bf16.mxu0 0
        %1975 = vmatpush1.bf16.msra.mxu0 %v1956
        %1976 = vmatprep.subr.bf16.mxu0 0
        %1977 = vmatpush1.bf16.msra.mxu0 %v1957
        %1978 = vmatprep.subr.bf16.mxu0 0
        %1979 = vmatpush1.bf16.msra.mxu0 %v1958
        %1980 = vmatprep.subr.bf16.mxu0 0
        %1981 = vmatpush1.bf16.msra.mxu0 %v1959
        %1982 = vmatprep.subr.bf16.mxu0 0
        %1983 = vmatpush1.bf16.msra.mxu0 %v1960
        %1984 = vmatprep.subr.bf16.mxu0 0
        %1985 = vmatpush1.bf16.msra.mxu0 %v1961
        %1986 = vmatprep.subr.bf16.mxu0 0
        %1987 = vmatpush1.bf16.msra.mxu0 0
        %1988 = vmatprep.subr.bf16.mxu0 0
        %1989 = vmatpush1.bf16.msra.mxu0 0
        %1990 = vmatprep.subr.bf16.mxu0 0
        %1991 = vmatpush1.bf16.msra.mxu0 0
        %1992 = vmatprep.subr.bf16.mxu0 0
        %1993 = vmatpush1.bf16.msra.mxu0 0
        %1994 = vmatprep.subr.bf16.mxu0 0
        %1995 = vmatpush1.bf16.msra.mxu0 0
        %1996 = vmatprep.subr.bf16.mxu0 0
        %1997 = vmatpush1.bf16.msra.mxu0 0
        %1998 = vmatprep.subr.bf16.mxu0 0
        %1999 = vmatpush1.bf16.msra.mxu0 0
        %2000 = vmatprep.subr.bf16.mxu0 0
        %2001 = vmatpush1.bf16.msra.mxu0 0
        %2002 = vmatprep.mubr.bf16.mxu0 0
        %2003 = vmatmul.mubr.bf16.gmra.mrb[0].mxu0 %v1889
        %v2004 = vpop.f32.mrb[0].mxu0
        %v2005 = vadd.f32 0.0, %v2004
        %v2006 = vpop.f32.mrb[0].mxu0
        %v2007 = vpop.f32.mrb[0].mxu0
        %v2008 = vadd.f32 0.0, %v2007
        %v2009 = vpop.f32.mrb[0].mxu0
        %2010 = vmatprep.mubr.bf16.mxu0 0
        %2011 = vmatmul.mubr.bf16.gmra.mrb[0].mxu0 %v1890
        %v2012 = vpop.f32.mrb[0].mxu0
        %v2013 = vadd.f32 0.0, %v2012
        %v2014 = vpop.f32.mrb[0].mxu0
        %v2015 = vpop.f32.mrb[0].mxu0
        %v2016 = vadd.f32 0.0, %v2015
        %v2017 = vpop.f32.mrb[0].mxu0
        %2018 = vmatprep.mubr.bf16.mxu0 0
        %2019 = vmatmul.mubr.bf16.gmra.mrb[0].mxu0 %v1891
        %v2020 = vpop.f32.mrb[0].mxu0
        %v2021 = vadd.f32 0.0, %v2020
        %v2022 = vpop.f32.mrb[0].mxu0
        %v2023 = vpop.f32.mrb[0].mxu0
        %v2024 = vadd.f32 0.0, %v2023
        %v2025 = vpop.f32.mrb[0].mxu0
        %2026 = vmatprep.mubr.bf16.mxu0 0
        %2027 = vmatmul.mubr.bf16.gmra.mrb[0].mxu0 %v1892
        %v2028 = vpop.f32.mrb[0].mxu0
        %v2029 = vadd.f32 0.0, %v2028
        %v2030 = vpop.f32.mrb[0].mxu0
        %v2031 = vpop.f32.mrb[0].mxu0
        %v2032 = vadd.f32 0.0, %v2031
        %v2033 = vpop.f32.mrb[0].mxu0
        %2034 = vmatprep.mubr.bf16.mxu0 0
        %2035 = vmatmul.mubr.bf16.gmra.mrb[0].mxu0 %v1893
        %v2036 = vpop.f32.mrb[0].mxu0
        %v2037 = vadd.f32 0.0, %v2036
        %v2038 = vpop.f32.mrb[0].mxu0
        %v2039 = vpop.f32.mrb[0].mxu0
        %v2040 = vadd.f32 0.0, %v2039
        %v2041 = vpop.f32.mrb[0].mxu0
        %2042 = vmatprep.mubr.bf16.mxu0 0
        %2043 = vmatmul.mubr.bf16.gmra.mrb[0].mxu0 %v1894
        %v2044 = vpop.f32.mrb[0].mxu0
        %v2045 = vadd.f32 0.0, %v2044
        %v2046 = vpop.f32.mrb[0].mxu0
        %v2047 = vpop.f32.mrb[0].mxu0
        %v2048 = vadd.f32 0.0, %v2047
        %v2049 = vpop.f32.mrb[0].mxu0
        %2050 = vmatprep.mubr.bf16.mxu0 0
        %2051 = vmatmul.mubr.bf16.gmra.mrb[0].mxu0 %v1895
        %v2052 = vpop.f32.mrb[0].mxu0
        %v2053 = vadd.f32 0.0, %v2052
        %v2054 = vpop.f32.mrb[0].mxu0
        %v2055 = vpop.f32.mrb[0].mxu0
        %v2056 = vadd.f32 0.0, %v2055
        %v2057 = vpop.f32.mrb[0].mxu0
        %2058 = vmatprep.mubr.bf16.mxu0 0
        %2059 = vmatmul.mubr.bf16.gmra.mrb[0].mxu0 %v1896
        %v2060 = vpop.f32.mrb[0].mxu0
        %v2061 = vadd.f32 0.0, %v2060
        %v2062 = vpop.f32.mrb[0].mxu0
        %v2063 = vpop.f32.mrb[0].mxu0
        %v2064 = vadd.f32 0.0, %v2063
        %v2065 = vpop.f32.mrb[0].mxu0
        %2066 = vmatprep.mubr.bf16.mxu0 0
        %2067 = vmatmul.mubr.bf16.gmra.mrb[0].mxu0 %v1897
        %v2068 = vpop.f32.mrb[0].mxu0
        %v2069 = vadd.f32 0.0, %v2068
        %v2070 = vpop.f32.mrb[0].mxu0
        %v2071 = vpop.f32.mrb[0].mxu0
        %v2072 = vadd.f32 0.0, %v2071
        %v2073 = vpop.f32.mrb[0].mxu0
        %2074 = vmatprep.mubr.bf16.mxu0 0
        %2075 = vmatmul.mubr.bf16.gmra.mrb[0].mxu0 %v1898
        %v2076 = vpop.f32.mrb[0].mxu0
        %v2077 = vadd.f32 0.0, %v2076
        %v2078 = vpop.f32.mrb[0].mxu0
        %v2079 = vpop.f32.mrb[0].mxu0
        %v2080 = vadd.f32 0.0, %v2079
        %v2081 = vpop.f32.mrb[0].mxu0
        %2082 = vmatprep.mubr.bf16.mxu0 0
        %2083 = vmatmul.mubr.bf16.gmra.mrb[0].mxu0 %v1899
        %v2084 = vpop.f32.mrb[0].mxu0
        %v2085 = vadd.f32 0.0, %v2084
        %v2086 = vpop.f32.mrb[0].mxu0
        %v2087 = vpop.f32.mrb[0].mxu0
        %v2088 = vadd.f32 0.0, %v2087
        %v2089 = vpop.f32.mrb[0].mxu0
        %2090 = vmatprep.mubr.bf16.mxu0 0
        %2091 = vmatmul.mubr.bf16.gmra.mrb[0].mxu0 %v1900
        %v2092 = vpop.f32.mrb[0].mxu0
        %v2093 = vadd.f32 0.0, %v2092
        %v2094 = vpop.f32.mrb[0].mxu0
        %v2095 = vpop.f32.mrb[0].mxu0
        %v2096 = vadd.f32 0.0, %v2095
        %v2097 = vpop.f32.mrb[0].mxu0
        %2098 = vmatprep.mubr.bf16.mxu0 0
        %2099 = vmatmul.mubr.bf16.gmra.mrb[0].mxu0 %v1901
        %v2100 = vpop.f32.mrb[0].mxu0
        %v2101 = vadd.f32 0.0, %v2100
        %v2102 = vpop.f32.mrb[0].mxu0
        %v2103 = vpop.f32.mrb[0].mxu0
        %v2104 = vadd.f32 0.0, %v2103
        %v2105 = vpop.f32.mrb[0].mxu0
        %2106 = vmatprep.mubr.bf16.mxu0 0
        %2107 = vmatmul.mubr.bf16.gmra.mrb[0].mxu0 %v1902
        %v2108 = vpop.f32.mrb[0].mxu0
        %v2109 = vadd.f32 0.0, %v2108
        %v2110 = vpop.f32.mrb[0].mxu0
        %v2111 = vpop.f32.mrb[0].mxu0
        %v2112 = vadd.f32 0.0, %v2111
        %v2113 = vpop.f32.mrb[0].mxu0
        %2114 = vmatprep.mubr.bf16.mxu0 0
        %2115 = vmatmul.mubr.bf16.gmra.mrb[0].mxu0 %v1903
        %v2116 = vpop.f32.mrb[0].mxu0
        %v2117 = vadd.f32 0.0, %v2116
        %v2118 = vpop.f32.mrb[0].mxu0
        %v2119 = vpop.f32.mrb[0].mxu0
        %v2120 = vadd.f32 0.0, %v2119
        %v2121 = vpop.f32.mrb[0].mxu0
        %2122 = vmatprep.mubr.bf16.mxu0 0
        %2123 = vmatmul.mubr.bf16.gmra.mrb[0].mxu0 %v1904
        %v2124 = vpop.f32.mrb[0].mxu0
        %v2125 = vadd.f32 0.0, %v2124
        %v2126 = vpop.f32.mrb[0].mxu0
        %v2127 = vpop.f32.mrb[0].mxu0
        %v2128 = vadd.f32 0.0, %v2127
        %v2129 = vpop.f32.mrb[0].mxu0
        %2130 = vdwg.mxu0
        %v2131 = vadd.f32 %v1731, %v2005
        %v2132 = vadd.f32 %v1734, %v2008
        %v2133 = vadd.f32 %v1739, %v2013
        %v2134 = vadd.f32 %v1742, %v2016
        %v2135 = vadd.f32 %v1747, %v2021
        %v2136 = vadd.f32 %v1750, %v2024
        %v2137 = vadd.f32 %v1755, %v2029
        %v2138 = vadd.f32 %v1758, %v2032
        %v2139 = vadd.f32 %v1763, %v2037
        %v2140 = vadd.f32 %v1766, %v2040
        %v2141 = vadd.f32 %v1771, %v2045
        %v2142 = vadd.f32 %v1774, %v2048
        %v2143 = vadd.f32 %v1779, %v2053
        %v2144 = vadd.f32 %v1782, %v2056
        %v2145 = vadd.f32 %v1787, %v2061
        %v2146 = vadd.f32 %v1790, %v2064
        %v2147 = vadd.f32 %v1795, %v2069
        %v2148 = vadd.f32 %v1798, %v2072
        %v2149 = vadd.f32 %v1803, %v2077
        %v2150 = vadd.f32 %v1806, %v2080
        %v2151 = vadd.f32 %v1811, %v2085
        %v2152 = vadd.f32 %v1814, %v2088
        %v2153 = vadd.f32 %v1819, %v2093
        %v2154 = vadd.f32 %v1822, %v2096
        %v2155 = vadd.f32 %v1827, %v2101
        %v2156 = vadd.f32 %v1830, %v2104
        %v2157 = vadd.f32 %v1835, %v2109
        %v2158 = vadd.f32 %v1838, %v2112
        %v2159 = vadd.f32 %v1843, %v2117
        %v2160 = vadd.f32 %v1846, %v2120
        %v2161 = vadd.f32 %v1851, %v2125
        %v2162 = vadd.f32 %v1854, %v2128
        %v2163 = vld [vmem:[#allocation4] sm:$0xff]
        %v2164 = vld [vmem:[#allocation4 + $0x8] sm:$0xff]
        %v2165 = vld [vmem:[#allocation4 + $0x10] sm:$0xff]
        %v2166 = vld [vmem:[#allocation4 + $0x18] sm:$0xff]
        %v2167 = vld [vmem:[#allocation4 + $0x20] sm:$0xff]
        %v2168 = vld [vmem:[#allocation4 + $0x28] sm:$0xff]
        %v2169 = vld [vmem:[#allocation4 + $0x30] sm:$0xff]
        %v2170 = vld [vmem:[#allocation4 + $0x38] sm:$0xff]
        %v2171 = vld [vmem:[#allocation4 + $0x40] sm:$0xff]
        %v2172 = vld [vmem:[#allocation4 + $0x48] sm:$0xff]
        %v2173 = vld [vmem:[#allocation4 + $0x50] sm:$0xff]
        %v2174 = vld [vmem:[#allocation4 + $0x58] sm:$0xff]
        %v2175 = vld [vmem:[#allocation4 + $0x60] sm:$0xff]
        %v2176 = vld [vmem:[#allocation4 + $0x68] sm:$0xff]
        %v2177 = vld [vmem:[#allocation4 + $0x70] sm:$0xff]
        %v2178 = vld [vmem:[#allocation4 + $0x78] sm:$0xff]
        %v2179 = vld [vmem:[#allocation4 + $0x80] sm:$0xff]
        %v2180 = vld [vmem:[#allocation4 + $0x88] sm:$0xff]
        %v2181 = vld [vmem:[#allocation4 + $0x90] sm:$0xff]
        %v2182 = vld [vmem:[#allocation4 + $0x98] sm:$0xff]
        %v2183 = vld [vmem:[#allocation4 + $0xa0] sm:$0xff]
        %v2184 = vld [vmem:[#allocation4 + $0xa8] sm:$0xff]
        %v2185 = vld [vmem:[#allocation4 + $0xb0] sm:$0xff]
        %v2186 = vld [vmem:[#allocation4 + $0xb8] sm:$0xff]
        %v2187 = vld [vmem:[#allocation4 + $0xc0] sm:$0xff]
        %v2188 = vld [vmem:[#allocation4 + $0xc8] sm:$0xff]
        %v2189 = vld [vmem:[#allocation4 + $0xd0] sm:$0xff]
        %v2190 = vld [vmem:[#allocation4 + $0xd8] sm:$0xff]
        %v2191 = vld [vmem:[#allocation4 + $0xe0] sm:$0xff]
        %v2192 = vld [vmem:[#allocation4 + $0xe8] sm:$0xff]
        %v2193 = vld [vmem:[#allocation4 + $0xf0] sm:$0xff]
        %v2194 = vld [vmem:[#allocation4 + $0xf8] sm:$0xff]
        %v2195 = vadd.f32 %v2163, %v2131
        %v2196 = vadd.f32 %v2164, %v2132
        %v2197 = vadd.f32 %v2165, %v2133
        %v2198 = vadd.f32 %v2166, %v2134
        %v2199 = vadd.f32 %v2167, %v2135
        %v2200 = vadd.f32 %v2168, %v2136
        %v2201 = vadd.f32 %v2169, %v2137
        %v2202 = vadd.f32 %v2170, %v2138
        %v2203 = vadd.f32 %v2171, %v2139
        %v2204 = vadd.f32 %v2172, %v2140
        %v2205 = vadd.f32 %v2173, %v2141
        %v2206 = vadd.f32 %v2174, %v2142
        %v2207 = vadd.f32 %v2175, %v2143
        %v2208 = vadd.f32 %v2176, %v2144
        %v2209 = vadd.f32 %v2177, %v2145
        %v2210 = vadd.f32 %v2178, %v2146
        %v2211 = vadd.f32 %v2179, %v2147
        %v2212 = vadd.f32 %v2180, %v2148
        %v2213 = vadd.f32 %v2181, %v2149
        %v2214 = vadd.f32 %v2182, %v2150
        %v2215 = vadd.f32 %v2183, %v2151
        %v2216 = vadd.f32 %v2184, %v2152
        %v2217 = vadd.f32 %v2185, %v2153
        %v2218 = vadd.f32 %v2186, %v2154
        %v2219 = vadd.f32 %v2187, %v2155
        %v2220 = vadd.f32 %v2188, %v2156
        %v2221 = vadd.f32 %v2189, %v2157
        %v2222 = vadd.f32 %v2190, %v2158
        %v2223 = vadd.f32 %v2191, %v2159
        %v2224 = vadd.f32 %v2192, %v2160
        %v2225 = vadd.f32 %v2193, %v2161
        %v2226 = vadd.f32 %v2194, %v2162
        %2227 = vst [vmem:[#allocation4] sm:$0xff] %v2195
        %2228 = vst [vmem:[#allocation4 + $0x8] sm:$0xff] %v2196
        %2229 = vst [vmem:[#allocation4 + $0x10] sm:$0xff] %v2197
        %2230 = vst [vmem:[#allocation4 + $0x18] sm:$0xff] %v2198
        %2231 = vst [vmem:[#allocation4 + $0x20] sm:$0xff] %v2199
        %2232 = vst [vmem:[#allocation4 + $0x28] sm:$0xff] %v2200
        %2233 = vst [vmem:[#allocation4 + $0x30] sm:$0xff] %v2201
        %2234 = vst [vmem:[#allocation4 + $0x38] sm:$0xff] %v2202
        %2235 = vst [vmem:[#allocation4 + $0x40] sm:$0xff] %v2203
        %2236 = vst [vmem:[#allocation4 + $0x48] sm:$0xff] %v2204
        %2237 = vst [vmem:[#allocation4 + $0x50] sm:$0xff] %v2205
        %2238 = vst [vmem:[#allocation4 + $0x58] sm:$0xff] %v2206
        %2239 = vst [vmem:[#allocation4 + $0x60] sm:$0xff] %v2207
        %2240 = vst [vmem:[#allocation4 + $0x68] sm:$0xff] %v2208
        %2241 = vst [vmem:[#allocation4 + $0x70] sm:$0xff] %v2209
        %2242 = vst [vmem:[#allocation4 + $0x78] sm:$0xff] %v2210
        %2243 = vst [vmem:[#allocation4 + $0x80] sm:$0xff] %v2211
        %2244 = vst [vmem:[#allocation4 + $0x88] sm:$0xff] %v2212
        %2245 = vst [vmem:[#allocation4 + $0x90] sm:$0xff] %v2213
        %2246 = vst [vmem:[#allocation4 + $0x98] sm:$0xff] %v2214
        %2247 = vst [vmem:[#allocation4 + $0xa0] sm:$0xff] %v2215
        %2248 = vst [vmem:[#allocation4 + $0xa8] sm:$0xff] %v2216
        %2249 = vst [vmem:[#allocation4 + $0xb0] sm:$0xff] %v2217
        %2250 = vst [vmem:[#allocation4 + $0xb8] sm:$0xff] %v2218
        %2251 = vst [vmem:[#allocation4 + $0xc0] sm:$0xff] %v2219
        %2252 = vst [vmem:[#allocation4 + $0xc8] sm:$0xff] %v2220
        %2253 = vst [vmem:[#allocation4 + $0xd0] sm:$0xff] %v2221
        %2254 = vst [vmem:[#allocation4 + $0xd8] sm:$0xff] %v2222
        %2255 = vst [vmem:[#allocation4 + $0xe0] sm:$0xff] %v2223
        %2256 = vst [vmem:[#allocation4 + $0xe8] sm:$0xff] %v2224
        %2257 = vst [vmem:[#allocation4 + $0xf0] sm:$0xff] %v2225
        %2258 = vst [vmem:[#allocation4 + $0xf8] sm:$0xff] %v2226
        %s2259 = scalar_lea.vmem [#allocation2], 48
        %v2260 = vld [vmem:[%s2259] sm:$0xff]
        %v2261 = vld [vmem:[%s2259 + $0x8] sm:$0xff]
        %v2262 = vld [vmem:[%s2259 + $0x18] sm:$0xff]
        %v2263 = vld [vmem:[%s2259 + $0x20] sm:$0xff]
        %v2264 = vld [vmem:[%s2259 + $0x30] sm:$0xff]
        %v2265 = vld [vmem:[%s2259 + $0x38] sm:$0xff]
        %v2266 = vld [vmem:[%s2259 + $0x48] sm:$0xff]
        %v2267 = vld [vmem:[%s2259 + $0x50] sm:$0xff]
        %v2268 = vld [vmem:[%s2259 + $0x60] sm:$0xff]
        %v2269 = vld [vmem:[%s2259 + $0x68] sm:$0xff]
        %v2270 = vld [vmem:[%s2259 + $0x78] sm:$0xff]
        %v2271 = vld [vmem:[%s2259 + $0x80] sm:$0xff]
        %v2272 = vld [vmem:[%s2259 + $0x90] sm:$0xff]
        %v2273 = vld [vmem:[%s2259 + $0x98] sm:$0xff]
        %v2274 = vld [vmem:[%s2259 + $0xa8] sm:$0xff]
        %v2275 = vld [vmem:[%s2259 + $0xb0] sm:$0xff]
        %v2276 = vld [vmem:[%s2259 + $0xc0] sm:$0xff]
        %v2277 = vld [vmem:[%s2259 + $0xc8] sm:$0xff]
        %v2278 = vld [vmem:[%s2259 + $0xd8] sm:$0xff]
        %v2279 = vld [vmem:[%s2259 + $0xe0] sm:$0xff]
        %v2280 = vld [vmem:[%s2259 + $0xf0] sm:$0xff]
        %v2281 = vld [vmem:[%s2259 + $0xf8] sm:$0xff]
        %v2282 = vld [vmem:[%s2259 + $0x108] sm:$0xff]
        %v2283 = vld [vmem:[%s2259 + $0x110] sm:$0xff]
        %v2284 = vld [vmem:[%s2259 + $0x120] sm:$0xff]
        %v2285 = vld [vmem:[%s2259 + $0x128] sm:$0xff]
        %v2286 = vld [vmem:[%s2259 + $0x138] sm:$0xff]
        %v2287 = vld [vmem:[%s2259 + $0x140] sm:$0xff]
        %v2288 = vld [vmem:[%s2259 + $0x150] sm:$0xff]
        %v2289 = vld [vmem:[%s2259 + $0x158] sm:$0xff]
        %v2290 = vld [vmem:[%s2259 + $0x168] sm:$0xff]
        %v2291 = vld [vmem:[%s2259 + $0x170] sm:$0xff]
        %v2292 = vpack.c.bf16 %v2261, %v2260
        %v2293 = vpack.c.bf16 %v2263, %v2262
        %v2294 = vpack.c.bf16 %v2265, %v2264
        %v2295 = vpack.c.bf16 %v2267, %v2266
        %v2296 = vpack.c.bf16 %v2269, %v2268
        %v2297 = vpack.c.bf16 %v2271, %v2270
        %v2298 = vpack.c.bf16 %v2273, %v2272
        %v2299 = vpack.c.bf16 %v2275, %v2274
        %v2300 = vpack.c.bf16 %v2277, %v2276
        %v2301 = vpack.c.bf16 %v2279, %v2278
        %v2302 = vpack.c.bf16 %v2281, %v2280
        %v2303 = vpack.c.bf16 %v2283, %v2282
        %v2304 = vpack.c.bf16 %v2285, %v2284
        %v2305 = vpack.c.bf16 %v2287, %v2286
        %v2306 = vpack.c.bf16 %v2289, %v2288
        %v2307 = vpack.c.bf16 %v2291, %v2290
        %s2308 = scalar_lea.vmem [#allocation8], 384
        %v2309 = vld [vmem:[%s2308] sm:$0xf]
        %v2310 = vld [vmem:[%s2308 + $0x4] sm:$0xf]
        %v2311 = vld [vmem:[%s2308 + $0x8] sm:$0xf]
        %v2312 = vld [vmem:[%s2308 + $0xc] sm:$0xf]
        %v2313 = vld [vmem:[%s2308 + $0x10] sm:$0xf]
        %v2314 = vld [vmem:[%s2308 + $0x14] sm:$0xf]
        %v2315 = vld [vmem:[%s2308 + $0x18] sm:$0xf]
        %v2316 = vld [vmem:[%s2308 + $0x1c] sm:$0xf]
        %v2317 = vld [vmem:[%s2308 + $0x20] sm:$0xf]
        %v2318 = vld [vmem:[%s2308 + $0x24] sm:$0xf]
        %v2319 = vld [vmem:[%s2308 + $0x28] sm:$0xf]
        %v2320 = vld [vmem:[%s2308 + $0x2c] sm:$0xf]
        %v2321 = vld [vmem:[%s2308 + $0x30] sm:$0xf]
        %v2322 = vld [vmem:[%s2308 + $0x34] sm:$0xf]
        %v2323 = vld [vmem:[%s2308 + $0x38] sm:$0xf]
        %v2324 = vld [vmem:[%s2308 + $0x3c] sm:$0xf]
        %v2325 = vld [vmem:[%s2259 + $0x1] sm:$0xff]
        %v2326 = vld [vmem:[%s2259 + $0x9] sm:$0xff]
        %v2327 = vld [vmem:[%s2259 + $0x19] sm:$0xff]
        %v2328 = vld [vmem:[%s2259 + $0x21] sm:$0xff]
        %v2329 = vld [vmem:[%s2259 + $0x31] sm:$0xff]
        %v2330 = vld [vmem:[%s2259 + $0x39] sm:$0xff]
        %v2331 = vld [vmem:[%s2259 + $0x49] sm:$0xff]
        %v2332 = vld [vmem:[%s2259 + $0x51] sm:$0xff]
        %v2333 = vld [vmem:[%s2259 + $0x61] sm:$0xff]
        %v2334 = vld [vmem:[%s2259 + $0x69] sm:$0xff]
        %v2335 = vld [vmem:[%s2259 + $0x79] sm:$0xff]
        %v2336 = vld [vmem:[%s2259 + $0x81] sm:$0xff]
        %v2337 = vld [vmem:[%s2259 + $0x91] sm:$0xff]
        %v2338 = vld [vmem:[%s2259 + $0x99] sm:$0xff]
        %v2339 = vld [vmem:[%s2259 + $0xa9] sm:$0xff]
        %v2340 = vld [vmem:[%s2259 + $0xb1] sm:$0xff]
        %v2341 = vld [vmem:[%s2259 + $0xc1] sm:$0xff]
        %v2342 = vld [vmem:[%s2259 + $0xc9] sm:$0xff]
        %v2343 = vld [vmem:[%s2259 + $0xd9] sm:$0xff]
        %v2344 = vld [vmem:[%s2259 + $0xe1] sm:$0xff]
        %v2345 = vld [vmem:[%s2259 + $0xf1] sm:$0xff]
        %v2346 = vld [vmem:[%s2259 + $0xf9] sm:$0xff]
        %v2347 = vld [vmem:[%s2259 + $0x109] sm:$0xff]
        %v2348 = vld [vmem:[%s2259 + $0x111] sm:$0xff]
        %v2349 = vld [vmem:[%s2259 + $0x121] sm:$0xff]
        %v2350 = vld [vmem:[%s2259 + $0x129] sm:$0xff]
        %v2351 = vld [vmem:[%s2259 + $0x139] sm:$0xff]
        %v2352 = vld [vmem:[%s2259 + $0x141] sm:$0xff]
        %v2353 = vld [vmem:[%s2259 + $0x151] sm:$0xff]
        %v2354 = vld [vmem:[%s2259 + $0x159] sm:$0xff]
        %v2355 = vld [vmem:[%s2259 + $0x169] sm:$0xff]
        %v2356 = vld [vmem:[%s2259 + $0x171] sm:$0xff]
        %v2357 = vpack.c.bf16 %v2326, %v2325
        %v2358 = vpack.c.bf16 %v2328, %v2327
        %v2359 = vpack.c.bf16 %v2330, %v2329
        %v2360 = vpack.c.bf16 %v2332, %v2331
        %v2361 = vpack.c.bf16 %v2334, %v2333
        %v2362 = vpack.c.bf16 %v2336, %v2335
        %v2363 = vpack.c.bf16 %v2338, %v2337
        %v2364 = vpack.c.bf16 %v2340, %v2339
        %v2365 = vpack.c.bf16 %v2342, %v2341
        %v2366 = vpack.c.bf16 %v2344, %v2343
        %v2367 = vpack.c.bf16 %v2346, %v2345
        %v2368 = vpack.c.bf16 %v2348, %v2347
        %v2369 = vpack.c.bf16 %v2350, %v2349
        %v2370 = vpack.c.bf16 %v2352, %v2351
        %v2371 = vpack.c.bf16 %v2354, %v2353
        %v2372 = vpack.c.bf16 %v2356, %v2355
        %s2373 = scalar_lea.vmem [#allocation8], 448
        %v2374 = vld [vmem:[%s2373] sm:$0xf]
        %v2375 = vld [vmem:[%s2373 + $0x4] sm:$0xf]
        %v2376 = vld [vmem:[%s2373 + $0x8] sm:$0xf]
        %v2377 = vld [vmem:[%s2373 + $0xc] sm:$0xf]
        %v2378 = vld [vmem:[%s2373 + $0x10] sm:$0xf]
        %v2379 = vld [vmem:[%s2373 + $0x14] sm:$0xf]
        %v2380 = vld [vmem:[%s2373 + $0x18] sm:$0xf]
        %v2381 = vld [vmem:[%s2373 + $0x1c] sm:$0xf]
        %v2382 = vld [vmem:[%s2373 + $0x20] sm:$0xf]
        %v2383 = vld [vmem:[%s2373 + $0x24] sm:$0xf]
        %v2384 = vld [vmem:[%s2373 + $0x28] sm:$0xf]
        %v2385 = vld [vmem:[%s2373 + $0x2c] sm:$0xf]
        %v2386 = vld [vmem:[%s2373 + $0x30] sm:$0xf]
        %v2387 = vld [vmem:[%s2373 + $0x34] sm:$0xf]
        %v2388 = vld [vmem:[%s2373 + $0x38] sm:$0xf]
        %v2389 = vld [vmem:[%s2373 + $0x3c] sm:$0xf]
        %v2406 = vunpack.c.l.b16 %v2374
        %v2407 = vunpack.c.l.b16 %v2375
        %v2408 = vunpack.c.l.b16 %v2376
        %v2409 = vunpack.c.l.b16 %v2377
        %v2410 = vunpack.c.l.b16 %v2378
        %v2411 = vunpack.c.l.b16 %v2379
        %v2412 = vunpack.c.l.b16 %v2380
        %v2413 = vunpack.c.l.b16 %v2381
        %v2414 = vunpack.c.l.b16 %v2382
        %v2415 = vunpack.c.l.b16 %v2383
        %v2416 = vunpack.c.l.b16 %v2384
        %v2417 = vunpack.c.l.b16 %v2385
        %v2418 = vunpack.c.l.b16 %v2386
        %v2419 = vunpack.c.l.b16 %v2387
        %v2420 = vunpack.c.l.b16 %v2388
        %v2421 = vunpack.c.l.b16 %v2389
        %v2422 = vpack.c.b16 %v2407, %v2406
        %v2423 = vpack.c.b16 %v2409, %v2408
        %v2424 = vpack.c.b16 %v2411, %v2410
        %v2425 = vpack.c.b16 %v2413, %v2412
        %v2426 = vpack.c.b16 %v2415, %v2414
        %v2427 = vpack.c.b16 %v2417, %v2416
        %v2428 = vpack.c.b16 %v2419, %v2418
        %v2429 = vpack.c.b16 %v2421, %v2420
        %2438 = vmatprep.subr.bf16.mxu0 0
        %2439 = vmatpush1.bf16.msra.mxu0 %v2422
        %2440 = vmatprep.subr.bf16.mxu0 0
        %2441 = vmatpush1.bf16.msra.mxu0 %v2423
        %2442 = vmatprep.subr.bf16.mxu0 0
        %2443 = vmatpush1.bf16.msra.mxu0 %v2424
        %2444 = vmatprep.subr.bf16.mxu0 0
        %2445 = vmatpush1.bf16.msra.mxu0 %v2425
        %2446 = vmatprep.subr.bf16.mxu0 0
        %2447 = vmatpush1.bf16.msra.mxu0 %v2426
        %2448 = vmatprep.subr.bf16.mxu0 0
        %2449 = vmatpush1.bf16.msra.mxu0 %v2427
        %2450 = vmatprep.subr.bf16.mxu0 0
        %2451 = vmatpush1.bf16.msra.mxu0 %v2428
        %2452 = vmatprep.subr.bf16.mxu0 0
        %2453 = vmatpush1.bf16.msra.mxu0 %v2429
        %2454 = vmatprep.subr.bf16.mxu0 0
        %2455 = vmatpush1.bf16.msra.mxu0 0
        %2456 = vmatprep.subr.bf16.mxu0 0
        %2457 = vmatpush1.bf16.msra.mxu0 0
        %2458 = vmatprep.subr.bf16.mxu0 0
        %2459 = vmatpush1.bf16.msra.mxu0 0
        %2460 = vmatprep.subr.bf16.mxu0 0
        %2461 = vmatpush1.bf16.msra.mxu0 0
        %2462 = vmatprep.subr.bf16.mxu0 0
        %2463 = vmatpush1.bf16.msra.mxu0 0
        %2464 = vmatprep.subr.bf16.mxu0 0
        %2465 = vmatpush1.bf16.msra.mxu0 0
        %2466 = vmatprep.subr.bf16.mxu0 0
        %2467 = vmatpush1.bf16.msra.mxu0 0
        %2468 = vmatprep.subr.bf16.mxu0 0
        %2469 = vmatpush1.bf16.msra.mxu0 0
        %2470 = vmatprep.mubr.bf16.mxu0 0
        %2471 = vmatmul.mubr.bf16.gmra.mrb[0].mxu0 %v2357
        %v2472 = vpop.f32.mrb[0].mxu0
        %v2473 = vadd.f32 0.0, %v2472
        %v2474 = vpop.f32.mrb[0].mxu0
        %v2475 = vpop.f32.mrb[0].mxu0
        %v2476 = vadd.f32 0.0, %v2475
        %v2477 = vpop.f32.mrb[0].mxu0
        %2478 = vmatprep.mubr.bf16.mxu0 0
        %2479 = vmatmul.mubr.bf16.gmra.mrb[0].mxu0 %v2358
        %v2480 = vpop.f32.mrb[0].mxu0
        %v2481 = vadd.f32 0.0, %v2480
        %v2482 = vpop.f32.mrb[0].mxu0
        %v2483 = vpop.f32.mrb[0].mxu0
        %v2484 = vadd.f32 0.0, %v2483
        %v2485 = vpop.f32.mrb[0].mxu0
        %2486 = vmatprep.mubr.bf16.mxu0 0
        %2487 = vmatmul.mubr.bf16.gmra.mrb[0].mxu0 %v2359
        %v2488 = vpop.f32.mrb[0].mxu0
        %v2489 = vadd.f32 0.0, %v2488
        %v2490 = vpop.f32.mrb[0].mxu0
        %v2491 = vpop.f32.mrb[0].mxu0
        %v2492 = vadd.f32 0.0, %v2491
        %v2493 = vpop.f32.mrb[0].mxu0
        %2494 = vmatprep.mubr.bf16.mxu0 0
        %2495 = vmatmul.mubr.bf16.gmra.mrb[0].mxu0 %v2360
        %v2496 = vpop.f32.mrb[0].mxu0
        %v2497 = vadd.f32 0.0, %v2496
        %v2498 = vpop.f32.mrb[0].mxu0
        %v2499 = vpop.f32.mrb[0].mxu0
        %v2500 = vadd.f32 0.0, %v2499
        %v2501 = vpop.f32.mrb[0].mxu0
        %2502 = vmatprep.mubr.bf16.mxu0 0
        %2503 = vmatmul.mubr.bf16.gmra.mrb[0].mxu0 %v2361
        %v2504 = vpop.f32.mrb[0].mxu0
        %v2505 = vadd.f32 0.0, %v2504
        %v2506 = vpop.f32.mrb[0].mxu0
        %v2507 = vpop.f32.mrb[0].mxu0
        %v2508 = vadd.f32 0.0, %v2507
        %v2509 = vpop.f32.mrb[0].mxu0
        %2510 = vmatprep.mubr.bf16.mxu0 0
        %2511 = vmatmul.mubr.bf16.gmra.mrb[0].mxu0 %v2362
        %v2512 = vpop.f32.mrb[0].mxu0
        %v2513 = vadd.f32 0.0, %v2512
        %v2514 = vpop.f32.mrb[0].mxu0
        %v2515 = vpop.f32.mrb[0].mxu0
        %v2516 = vadd.f32 0.0, %v2515
        %v2517 = vpop.f32.mrb[0].mxu0
        %2518 = vmatprep.mubr.bf16.mxu0 0
        %2519 = vmatmul.mubr.bf16.gmra.mrb[0].mxu0 %v2363
        %v2520 = vpop.f32.mrb[0].mxu0
        %v2521 = vadd.f32 0.0, %v2520
        %v2522 = vpop.f32.mrb[0].mxu0
        %v2523 = vpop.f32.mrb[0].mxu0
        %v2524 = vadd.f32 0.0, %v2523
        %v2525 = vpop.f32.mrb[0].mxu0
        %2526 = vmatprep.mubr.bf16.mxu0 0
        %2527 = vmatmul.mubr.bf16.gmra.mrb[0].mxu0 %v2364
        %v2528 = vpop.f32.mrb[0].mxu0
        %v2529 = vadd.f32 0.0, %v2528
        %v2530 = vpop.f32.mrb[0].mxu0
        %v2531 = vpop.f32.mrb[0].mxu0
        %v2532 = vadd.f32 0.0, %v2531
        %v2533 = vpop.f32.mrb[0].mxu0
        %2534 = vmatprep.mubr.bf16.mxu0 0
        %2535 = vmatmul.mubr.bf16.gmra.mrb[0].mxu0 %v2365
        %v2536 = vpop.f32.mrb[0].mxu0
        %v2537 = vadd.f32 0.0, %v2536
        %v2538 = vpop.f32.mrb[0].mxu0
        %v2539 = vpop.f32.mrb[0].mxu0
        %v2540 = vadd.f32 0.0, %v2539
        %v2541 = vpop.f32.mrb[0].mxu0
        %2542 = vmatprep.mubr.bf16.mxu0 0
        %2543 = vmatmul.mubr.bf16.gmra.mrb[0].mxu0 %v2366
        %v2544 = vpop.f32.mrb[0].mxu0
        %v2545 = vadd.f32 0.0, %v2544
        %v2546 = vpop.f32.mrb[0].mxu0
        %v2547 = vpop.f32.mrb[0].mxu0
        %v2548 = vadd.f32 0.0, %v2547
        %v2549 = vpop.f32.mrb[0].mxu0
        %2550 = vmatprep.mubr.bf16.mxu0 0
        %2551 = vmatmul.mubr.bf16.gmra.mrb[0].mxu0 %v2367
        %v2552 = vpop.f32.mrb[0].mxu0
        %v2553 = vadd.f32 0.0, %v2552
        %v2554 = vpop.f32.mrb[0].mxu0
        %v2555 = vpop.f32.mrb[0].mxu0
        %v2556 = vadd.f32 0.0, %v2555
        %v2557 = vpop.f32.mrb[0].mxu0
        %2558 = vmatprep.mubr.bf16.mxu0 0
        %2559 = vmatmul.mubr.bf16.gmra.mrb[0].mxu0 %v2368
        %v2560 = vpop.f32.mrb[0].mxu0
        %v2561 = vadd.f32 0.0, %v2560
        %v2562 = vpop.f32.mrb[0].mxu0
        %v2563 = vpop.f32.mrb[0].mxu0
        %v2564 = vadd.f32 0.0, %v2563
        %v2565 = vpop.f32.mrb[0].mxu0
        %2566 = vmatprep.mubr.bf16.mxu0 0
        %2567 = vmatmul.mubr.bf16.gmra.mrb[0].mxu0 %v2369
        %v2568 = vpop.f32.mrb[0].mxu0
        %v2569 = vadd.f32 0.0, %v2568
        %v2570 = vpop.f32.mrb[0].mxu0
        %v2571 = vpop.f32.mrb[0].mxu0
        %v2572 = vadd.f32 0.0, %v2571
        %v2573 = vpop.f32.mrb[0].mxu0
        %2574 = vmatprep.mubr.bf16.mxu0 0
        %2575 = vmatmul.mubr.bf16.gmra.mrb[0].mxu0 %v2370
        %v2576 = vpop.f32.mrb[0].mxu0
        %v2577 = vadd.f32 0.0, %v2576
        %v2578 = vpop.f32.mrb[0].mxu0
        %v2579 = vpop.f32.mrb[0].mxu0
        %v2580 = vadd.f32 0.0, %v2579
        %v2581 = vpop.f32.mrb[0].mxu0
        %2582 = vmatprep.mubr.bf16.mxu0 0
        %2583 = vmatmul.mubr.bf16.gmra.mrb[0].mxu0 %v2371
        %v2584 = vpop.f32.mrb[0].mxu0
        %v2585 = vadd.f32 0.0, %v2584
        %v2586 = vpop.f32.mrb[0].mxu0
        %v2587 = vpop.f32.mrb[0].mxu0
        %v2588 = vadd.f32 0.0, %v2587
        %v2589 = vpop.f32.mrb[0].mxu0
        %2590 = vmatprep.mubr.bf16.mxu0 0
        %2591 = vmatmul.mubr.bf16.gmra.mrb[0].mxu0 %v2372
        %v2592 = vpop.f32.mrb[0].mxu0
        %v2593 = vadd.f32 0.0, %v2592
        %v2594 = vpop.f32.mrb[0].mxu0
        %v2595 = vpop.f32.mrb[0].mxu0
        %v2596 = vadd.f32 0.0, %v2595
        %v2597 = vpop.f32.mrb[0].mxu0
        %2598 = vdwg.mxu0
        %v2615 = vunpack.c.l.b16 %v2309
        %v2616 = vunpack.c.l.b16 %v2310
        %v2617 = vunpack.c.l.b16 %v2311
        %v2618 = vunpack.c.l.b16 %v2312
        %v2619 = vunpack.c.l.b16 %v2313
        %v2620 = vunpack.c.l.b16 %v2314
        %v2621 = vunpack.c.l.b16 %v2315
        %v2622 = vunpack.c.l.b16 %v2316
        %v2623 = vunpack.c.l.b16 %v2317
        %v2624 = vunpack.c.l.b16 %v2318
        %v2625 = vunpack.c.l.b16 %v2319
        %v2626 = vunpack.c.l.b16 %v2320
        %v2627 = vunpack.c.l.b16 %v2321
        %v2628 = vunpack.c.l.b16 %v2322
        %v2629 = vunpack.c.l.b16 %v2323
        %v2630 = vunpack.c.l.b16 %v2324
        %v2631 = vpack.c.b16 %v2616, %v2615
        %v2632 = vpack.c.b16 %v2618, %v2617
        %v2633 = vpack.c.b16 %v2620, %v2619
        %v2634 = vpack.c.b16 %v2622, %v2621
        %v2635 = vpack.c.b16 %v2624, %v2623
        %v2636 = vpack.c.b16 %v2626, %v2625
        %v2637 = vpack.c.b16 %v2628, %v2627
        %v2638 = vpack.c.b16 %v2630, %v2629
        %2647 = vmatprep.subr.bf16.mxu0 0
        %2648 = vmatpush1.bf16.msra.mxu0 %v2631
        %2649 = vmatprep.subr.bf16.mxu0 0
        %2650 = vmatpush1.bf16.msra.mxu0 %v2632
        %2651 = vmatprep.subr.bf16.mxu0 0
        %2652 = vmatpush1.bf16.msra.mxu0 %v2633
        %2653 = vmatprep.subr.bf16.mxu0 0
        %2654 = vmatpush1.bf16.msra.mxu0 %v2634
        %2655 = vmatprep.subr.bf16.mxu0 0
        %2656 = vmatpush1.bf16.msra.mxu0 %v2635
        %2657 = vmatprep.subr.bf16.mxu0 0
        %2658 = vmatpush1.bf16.msra.mxu0 %v2636
        %2659 = vmatprep.subr.bf16.mxu0 0
        %2660 = vmatpush1.bf16.msra.mxu0 %v2637
        %2661 = vmatprep.subr.bf16.mxu0 0
        %2662 = vmatpush1.bf16.msra.mxu0 %v2638
        %2663 = vmatprep.subr.bf16.mxu0 0
        %2664 = vmatpush1.bf16.msra.mxu0 0
        %2665 = vmatprep.subr.bf16.mxu0 0
        %2666 = vmatpush1.bf16.msra.mxu0 0
        %2667 = vmatprep.subr.bf16.mxu0 0
        %2668 = vmatpush1.bf16.msra.mxu0 0
        %2669 = vmatprep.subr.bf16.mxu0 0
        %2670 = vmatpush1.bf16.msra.mxu0 0
        %2671 = vmatprep.subr.bf16.mxu0 0
        %2672 = vmatpush1.bf16.msra.mxu0 0
        %2673 = vmatprep.subr.bf16.mxu0 0
        %2674 = vmatpush1.bf16.msra.mxu0 0
        %2675 = vmatprep.subr.bf16.mxu0 0
        %2676 = vmatpush1.bf16.msra.mxu0 0
        %2677 = vmatprep.subr.bf16.mxu0 0
        %2678 = vmatpush1.bf16.msra.mxu0 0
        %2679 = vmatprep.mubr.bf16.mxu0 0
        %2680 = vmatmul.mubr.bf16.gmra.mrb[0].mxu0 %v2292
        %v2681 = vpop.f32.mrb[0].mxu0
        %v2682 = vadd.f32 %v2473, %v2681
        %v2683 = vpop.f32.mrb[0].mxu0
        %v2684 = vpop.f32.mrb[0].mxu0
        %v2685 = vadd.f32 %v2476, %v2684
        %v2686 = vpop.f32.mrb[0].mxu0
        %2687 = vmatprep.mubr.bf16.mxu0 0
        %2688 = vmatmul.mubr.bf16.gmra.mrb[0].mxu0 %v2293
        %v2689 = vpop.f32.mrb[0].mxu0
        %v2690 = vadd.f32 %v2481, %v2689
        %v2691 = vpop.f32.mrb[0].mxu0
        %v2692 = vpop.f32.mrb[0].mxu0
        %v2693 = vadd.f32 %v2484, %v2692
        %v2694 = vpop.f32.mrb[0].mxu0
        %2695 = vmatprep.mubr.bf16.mxu0 0
        %2696 = vmatmul.mubr.bf16.gmra.mrb[0].mxu0 %v2294
        %v2697 = vpop.f32.mrb[0].mxu0
        %v2698 = vadd.f32 %v2489, %v2697
        %v2699 = vpop.f32.mrb[0].mxu0
        %v2700 = vpop.f32.mrb[0].mxu0
        %v2701 = vadd.f32 %v2492, %v2700
        %v2702 = vpop.f32.mrb[0].mxu0
        %2703 = vmatprep.mubr.bf16.mxu0 0
        %2704 = vmatmul.mubr.bf16.gmra.mrb[0].mxu0 %v2295
        %v2705 = vpop.f32.mrb[0].mxu0
        %v2706 = vadd.f32 %v2497, %v2705
        %v2707 = vpop.f32.mrb[0].mxu0
        %v2708 = vpop.f32.mrb[0].mxu0
        %v2709 = vadd.f32 %v2500, %v2708
        %v2710 = vpop.f32.mrb[0].mxu0
        %2711 = vmatprep.mubr.bf16.mxu0 0
        %2712 = vmatmul.mubr.bf16.gmra.mrb[0].mxu0 %v2296
        %v2713 = vpop.f32.mrb[0].mxu0
        %v2714 = vadd.f32 %v2505, %v2713
        %v2715 = vpop.f32.mrb[0].mxu0
        %v2716 = vpop.f32.mrb[0].mxu0
        %v2717 = vadd.f32 %v2508, %v2716
        %v2718 = vpop.f32.mrb[0].mxu0
        %2719 = vmatprep.mubr.bf16.mxu0 0
        %2720 = vmatmul.mubr.bf16.gmra.mrb[0].mxu0 %v2297
        %v2721 = vpop.f32.mrb[0].mxu0
        %v2722 = vadd.f32 %v2513, %v2721
        %v2723 = vpop.f32.mrb[0].mxu0
        %v2724 = vpop.f32.mrb[0].mxu0
        %v2725 = vadd.f32 %v2516, %v2724
        %v2726 = vpop.f32.mrb[0].mxu0
        %2727 = vmatprep.mubr.bf16.mxu0 0
        %2728 = vmatmul.mubr.bf16.gmra.mrb[0].mxu0 %v2298
        %v2729 = vpop.f32.mrb[0].mxu0
        %v2730 = vadd.f32 %v2521, %v2729
        %v2731 = vpop.f32.mrb[0].mxu0
        %v2732 = vpop.f32.mrb[0].mxu0
        %v2733 = vadd.f32 %v2524, %v2732
        %v2734 = vpop.f32.mrb[0].mxu0
        %2735 = vmatprep.mubr.bf16.mxu0 0
        %2736 = vmatmul.mubr.bf16.gmra.mrb[0].mxu0 %v2299
        %v2737 = vpop.f32.mrb[0].mxu0
        %v2738 = vadd.f32 %v2529, %v2737
        %v2739 = vpop.f32.mrb[0].mxu0
        %v2740 = vpop.f32.mrb[0].mxu0
        %v2741 = vadd.f32 %v2532, %v2740
        %v2742 = vpop.f32.mrb[0].mxu0
        %2743 = vmatprep.mubr.bf16.mxu0 0
        %2744 = vmatmul.mubr.bf16.gmra.mrb[0].mxu0 %v2300
        %v2745 = vpop.f32.mrb[0].mxu0
        %v2746 = vadd.f32 %v2537, %v2745
        %v2747 = vpop.f32.mrb[0].mxu0
        %v2748 = vpop.f32.mrb[0].mxu0
        %v2749 = vadd.f32 %v2540, %v2748
        %v2750 = vpop.f32.mrb[0].mxu0
        %2751 = vmatprep.mubr.bf16.mxu0 0
        %2752 = vmatmul.mubr.bf16.gmra.mrb[0].mxu0 %v2301
        %v2753 = vpop.f32.mrb[0].mxu0
        %v2754 = vadd.f32 %v2545, %v2753
        %v2755 = vpop.f32.mrb[0].mxu0
        %v2756 = vpop.f32.mrb[0].mxu0
        %v2757 = vadd.f32 %v2548, %v2756
        %v2758 = vpop.f32.mrb[0].mxu0
        %2759 = vmatprep.mubr.bf16.mxu0 0
        %2760 = vmatmul.mubr.bf16.gmra.mrb[0].mxu0 %v2302
        %v2761 = vpop.f32.mrb[0].mxu0
        %v2762 = vadd.f32 %v2553, %v2761
        %v2763 = vpop.f32.mrb[0].mxu0
        %v2764 = vpop.f32.mrb[0].mxu0
        %v2765 = vadd.f32 %v2556, %v2764
        %v2766 = vpop.f32.mrb[0].mxu0
        %2767 = vmatprep.mubr.bf16.mxu0 0
        %2768 = vmatmul.mubr.bf16.gmra.mrb[0].mxu0 %v2303
        %v2769 = vpop.f32.mrb[0].mxu0
        %v2770 = vadd.f32 %v2561, %v2769
        %v2771 = vpop.f32.mrb[0].mxu0
        %v2772 = vpop.f32.mrb[0].mxu0
        %v2773 = vadd.f32 %v2564, %v2772
        %v2774 = vpop.f32.mrb[0].mxu0
        %2775 = vmatprep.mubr.bf16.mxu0 0
        %2776 = vmatmul.mubr.bf16.gmra.mrb[0].mxu0 %v2304
        %v2777 = vpop.f32.mrb[0].mxu0
        %v2778 = vadd.f32 %v2569, %v2777
        %v2779 = vpop.f32.mrb[0].mxu0
        %v2780 = vpop.f32.mrb[0].mxu0
        %v2781 = vadd.f32 %v2572, %v2780
        %v2782 = vpop.f32.mrb[0].mxu0
        %2783 = vmatprep.mubr.bf16.mxu0 0
        %2784 = vmatmul.mubr.bf16.gmra.mrb[0].mxu0 %v2305
        %v2785 = vpop.f32.mrb[0].mxu0
        %v2786 = vadd.f32 %v2577, %v2785
        %v2787 = vpop.f32.mrb[0].mxu0
        %v2788 = vpop.f32.mrb[0].mxu0
        %v2789 = vadd.f32 %v2580, %v2788
        %v2790 = vpop.f32.mrb[0].mxu0
        %2791 = vmatprep.mubr.bf16.mxu0 0
        %2792 = vmatmul.mubr.bf16.gmra.mrb[0].mxu0 %v2306
        %v2793 = vpop.f32.mrb[0].mxu0
        %v2794 = vadd.f32 %v2585, %v2793
        %v2795 = vpop.f32.mrb[0].mxu0
        %v2796 = vpop.f32.mrb[0].mxu0
        %v2797 = vadd.f32 %v2588, %v2796
        %v2798 = vpop.f32.mrb[0].mxu0
        %2799 = vmatprep.mubr.bf16.mxu0 0
        %2800 = vmatmul.mubr.bf16.gmra.mrb[0].mxu0 %v2307
        %v2801 = vpop.f32.mrb[0].mxu0
        %v2802 = vadd.f32 %v2593, %v2801
        %v2803 = vpop.f32.mrb[0].mxu0
        %v2804 = vpop.f32.mrb[0].mxu0
        %v2805 = vadd.f32 %v2596, %v2804
        %v2806 = vpop.f32.mrb[0].mxu0
        %2807 = vdwg.mxu0
        %v2808 = vld [vmem:[%s2259 + $0x2] sm:$0xff]
        %v2809 = vld [vmem:[%s2259 + $0xa] sm:$0xff]
        %v2810 = vld [vmem:[%s2259 + $0x1a] sm:$0xff]
        %v2811 = vld [vmem:[%s2259 + $0x22] sm:$0xff]
        %v2812 = vld [vmem:[%s2259 + $0x32] sm:$0xff]
        %v2813 = vld [vmem:[%s2259 + $0x3a] sm:$0xff]
        %v2814 = vld [vmem:[%s2259 + $0x4a] sm:$0xff]
        %v2815 = vld [vmem:[%s2259 + $0x52] sm:$0xff]
        %v2816 = vld [vmem:[%s2259 + $0x62] sm:$0xff]
        %v2817 = vld [vmem:[%s2259 + $0x6a] sm:$0xff]
        %v2818 = vld [vmem:[%s2259 + $0x7a] sm:$0xff]
        %v2819 = vld [vmem:[%s2259 + $0x82] sm:$0xff]
        %v2820 = vld [vmem:[%s2259 + $0x92] sm:$0xff]
        %v2821 = vld [vmem:[%s2259 + $0x9a] sm:$0xff]
        %v2822 = vld [vmem:[%s2259 + $0xaa] sm:$0xff]
        %v2823 = vld [vmem:[%s2259 + $0xb2] sm:$0xff]
        %v2824 = vld [vmem:[%s2259 + $0xc2] sm:$0xff]
        %v2825 = vld [vmem:[%s2259 + $0xca] sm:$0xff]
        %v2826 = vld [vmem:[%s2259 + $0xda] sm:$0xff]
        %v2827 = vld [vmem:[%s2259 + $0xe2] sm:$0xff]
        %v2828 = vld [vmem:[%s2259 + $0xf2] sm:$0xff]
        %v2829 = vld [vmem:[%s2259 + $0xfa] sm:$0xff]
        %v2830 = vld [vmem:[%s2259 + $0x10a] sm:$0xff]
        %v2831 = vld [vmem:[%s2259 + $0x112] sm:$0xff]
        %v2832 = vld [vmem:[%s2259 + $0x122] sm:$0xff]
        %v2833 = vld [vmem:[%s2259 + $0x12a] sm:$0xff]
        %v2834 = vld [vmem:[%s2259 + $0x13a] sm:$0xff]
        %v2835 = vld [vmem:[%s2259 + $0x142] sm:$0xff]
        %v2836 = vld [vmem:[%s2259 + $0x152] sm:$0xff]
        %v2837 = vld [vmem:[%s2259 + $0x15a] sm:$0xff]
        %v2838 = vld [vmem:[%s2259 + $0x16a] sm:$0xff]
        %v2839 = vld [vmem:[%s2259 + $0x172] sm:$0xff]
        %v2840 = vpack.c.bf16 %v2809, %v2808
        %v2841 = vpack.c.bf16 %v2811, %v2810
        %v2842 = vpack.c.bf16 %v2813, %v2812
        %v2843 = vpack.c.bf16 %v2815, %v2814
        %v2844 = vpack.c.bf16 %v2817, %v2816
        %v2845 = vpack.c.bf16 %v2819, %v2818
        %v2846 = vpack.c.bf16 %v2821, %v2820
        %v2847 = vpack.c.bf16 %v2823, %v2822
        %v2848 = vpack.c.bf16 %v2825, %v2824
        %v2849 = vpack.c.bf16 %v2827, %v2826
        %v2850 = vpack.c.bf16 %v2829, %v2828
        %v2851 = vpack.c.bf16 %v2831, %v2830
        %v2852 = vpack.c.bf16 %v2833, %v2832
        %v2853 = vpack.c.bf16 %v2835, %v2834
        %v2854 = vpack.c.bf16 %v2837, %v2836
        %v2855 = vpack.c.bf16 %v2839, %v2838
        %s2856 = scalar_lea.vmem [#allocation8], 512
        %v2857 = vld [vmem:[%s2856] sm:$0xf]
        %v2858 = vld [vmem:[%s2856 + $0x4] sm:$0xf]
        %v2859 = vld [vmem:[%s2856 + $0x8] sm:$0xf]
        %v2860 = vld [vmem:[%s2856 + $0xc] sm:$0xf]
        %v2861 = vld [vmem:[%s2856 + $0x10] sm:$0xf]
        %v2862 = vld [vmem:[%s2856 + $0x14] sm:$0xf]
        %v2863 = vld [vmem:[%s2856 + $0x18] sm:$0xf]
        %v2864 = vld [vmem:[%s2856 + $0x1c] sm:$0xf]
        %v2865 = vld [vmem:[%s2856 + $0x20] sm:$0xf]
        %v2866 = vld [vmem:[%s2856 + $0x24] sm:$0xf]
        %v2867 = vld [vmem:[%s2856 + $0x28] sm:$0xf]
        %v2868 = vld [vmem:[%s2856 + $0x2c] sm:$0xf]
        %v2869 = vld [vmem:[%s2856 + $0x30] sm:$0xf]
        %v2870 = vld [vmem:[%s2856 + $0x34] sm:$0xf]
        %v2871 = vld [vmem:[%s2856 + $0x38] sm:$0xf]
        %v2872 = vld [vmem:[%s2856 + $0x3c] sm:$0xf]
        %v2889 = vunpack.c.l.b16 %v2857
        %v2890 = vunpack.c.l.b16 %v2858
        %v2891 = vunpack.c.l.b16 %v2859
        %v2892 = vunpack.c.l.b16 %v2860
        %v2893 = vunpack.c.l.b16 %v2861
        %v2894 = vunpack.c.l.b16 %v2862
        %v2895 = vunpack.c.l.b16 %v2863
        %v2896 = vunpack.c.l.b16 %v2864
        %v2897 = vunpack.c.l.b16 %v2865
        %v2898 = vunpack.c.l.b16 %v2866
        %v2899 = vunpack.c.l.b16 %v2867
        %v2900 = vunpack.c.l.b16 %v2868
        %v2901 = vunpack.c.l.b16 %v2869
        %v2902 = vunpack.c.l.b16 %v2870
        %v2903 = vunpack.c.l.b16 %v2871
        %v2904 = vunpack.c.l.b16 %v2872
        %v2905 = vpack.c.b16 %v2890, %v2889
        %v2906 = vpack.c.b16 %v2892, %v2891
        %v2907 = vpack.c.b16 %v2894, %v2893
        %v2908 = vpack.c.b16 %v2896, %v2895
        %v2909 = vpack.c.b16 %v2898, %v2897
        %v2910 = vpack.c.b16 %v2900, %v2899
        %v2911 = vpack.c.b16 %v2902, %v2901
        %v2912 = vpack.c.b16 %v2904, %v2903
        %2921 = vmatprep.subr.bf16.mxu0 0
        %2922 = vmatpush1.bf16.msra.mxu0 %v2905
        %2923 = vmatprep.subr.bf16.mxu0 0
        %2924 = vmatpush1.bf16.msra.mxu0 %v2906
        %2925 = vmatprep.subr.bf16.mxu0 0
        %2926 = vmatpush1.bf16.msra.mxu0 %v2907
        %2927 = vmatprep.subr.bf16.mxu0 0
        %2928 = vmatpush1.bf16.msra.mxu0 %v2908
        %2929 = vmatprep.subr.bf16.mxu0 0
        %2930 = vmatpush1.bf16.msra.mxu0 %v2909
        %2931 = vmatprep.subr.bf16.mxu0 0
        %2932 = vmatpush1.bf16.msra.mxu0 %v2910
        %2933 = vmatprep.subr.bf16.mxu0 0
        %2934 = vmatpush1.bf16.msra.mxu0 %v2911
        %2935 = vmatprep.subr.bf16.mxu0 0
        %2936 = vmatpush1.bf16.msra.mxu0 %v2912
        %2937 = vmatprep.subr.bf16.mxu0 0
        %2938 = vmatpush1.bf16.msra.mxu0 0
        %2939 = vmatprep.subr.bf16.mxu0 0
        %2940 = vmatpush1.bf16.msra.mxu0 0
        %2941 = vmatprep.subr.bf16.mxu0 0
        %2942 = vmatpush1.bf16.msra.mxu0 0
        %2943 = vmatprep.subr.bf16.mxu0 0
        %2944 = vmatpush1.bf16.msra.mxu0 0
        %2945 = vmatprep.subr.bf16.mxu0 0
        %2946 = vmatpush1.bf16.msra.mxu0 0
        %2947 = vmatprep.subr.bf16.mxu0 0
        %2948 = vmatpush1.bf16.msra.mxu0 0
        %2949 = vmatprep.subr.bf16.mxu0 0
        %2950 = vmatpush1.bf16.msra.mxu0 0
        %2951 = vmatprep.subr.bf16.mxu0 0
        %2952 = vmatpush1.bf16.msra.mxu0 0
        %2953 = vmatprep.mubr.bf16.mxu0 0
        %2954 = vmatmul.mubr.bf16.gmra.mrb[0].mxu0 %v2840
        %v2955 = vpop.f32.mrb[0].mxu0
        %v2956 = vadd.f32 0.0, %v2955
        %v2957 = vpop.f32.mrb[0].mxu0
        %v2958 = vpop.f32.mrb[0].mxu0
        %v2959 = vadd.f32 0.0, %v2958
        %v2960 = vpop.f32.mrb[0].mxu0
        %2961 = vmatprep.mubr.bf16.mxu0 0
        %2962 = vmatmul.mubr.bf16.gmra.mrb[0].mxu0 %v2841
        %v2963 = vpop.f32.mrb[0].mxu0
        %v2964 = vadd.f32 0.0, %v2963
        %v2965 = vpop.f32.mrb[0].mxu0
        %v2966 = vpop.f32.mrb[0].mxu0
        %v2967 = vadd.f32 0.0, %v2966
        %v2968 = vpop.f32.mrb[0].mxu0
        %2969 = vmatprep.mubr.bf16.mxu0 0
        %2970 = vmatmul.mubr.bf16.gmra.mrb[0].mxu0 %v2842
        %v2971 = vpop.f32.mrb[0].mxu0
        %v2972 = vadd.f32 0.0, %v2971
        %v2973 = vpop.f32.mrb[0].mxu0
        %v2974 = vpop.f32.mrb[0].mxu0
        %v2975 = vadd.f32 0.0, %v2974
        %v2976 = vpop.f32.mrb[0].mxu0
        %2977 = vmatprep.mubr.bf16.mxu0 0
        %2978 = vmatmul.mubr.bf16.gmra.mrb[0].mxu0 %v2843
        %v2979 = vpop.f32.mrb[0].mxu0
        %v2980 = vadd.f32 0.0, %v2979
        %v2981 = vpop.f32.mrb[0].mxu0
        %v2982 = vpop.f32.mrb[0].mxu0
        %v2983 = vadd.f32 0.0, %v2982
        %v2984 = vpop.f32.mrb[0].mxu0
        %2985 = vmatprep.mubr.bf16.mxu0 0
        %2986 = vmatmul.mubr.bf16.gmra.mrb[0].mxu0 %v2844
        %v2987 = vpop.f32.mrb[0].mxu0
        %v2988 = vadd.f32 0.0, %v2987
        %v2989 = vpop.f32.mrb[0].mxu0
        %v2990 = vpop.f32.mrb[0].mxu0
        %v2991 = vadd.f32 0.0, %v2990
        %v2992 = vpop.f32.mrb[0].mxu0
        %2993 = vmatprep.mubr.bf16.mxu0 0
        %2994 = vmatmul.mubr.bf16.gmra.mrb[0].mxu0 %v2845
        %v2995 = vpop.f32.mrb[0].mxu0
        %v2996 = vadd.f32 0.0, %v2995
        %v2997 = vpop.f32.mrb[0].mxu0
        %v2998 = vpop.f32.mrb[0].mxu0
        %v2999 = vadd.f32 0.0, %v2998
        %v3000 = vpop.f32.mrb[0].mxu0
        %3001 = vmatprep.mubr.bf16.mxu0 0
        %3002 = vmatmul.mubr.bf16.gmra.mrb[0].mxu0 %v2846
        %v3003 = vpop.f32.mrb[0].mxu0
        %v3004 = vadd.f32 0.0, %v3003
        %v3005 = vpop.f32.mrb[0].mxu0
        %v3006 = vpop.f32.mrb[0].mxu0
        %v3007 = vadd.f32 0.0, %v3006
        %v3008 = vpop.f32.mrb[0].mxu0
        %3009 = vmatprep.mubr.bf16.mxu0 0
        %3010 = vmatmul.mubr.bf16.gmra.mrb[0].mxu0 %v2847
        %v3011 = vpop.f32.mrb[0].mxu0
        %v3012 = vadd.f32 0.0, %v3011
        %v3013 = vpop.f32.mrb[0].mxu0
        %v3014 = vpop.f32.mrb[0].mxu0
        %v3015 = vadd.f32 0.0, %v3014
        %v3016 = vpop.f32.mrb[0].mxu0
        %3017 = vmatprep.mubr.bf16.mxu0 0
        %3018 = vmatmul.mubr.bf16.gmra.mrb[0].mxu0 %v2848
        %v3019 = vpop.f32.mrb[0].mxu0
        %v3020 = vadd.f32 0.0, %v3019
        %v3021 = vpop.f32.mrb[0].mxu0
        %v3022 = vpop.f32.mrb[0].mxu0
        %v3023 = vadd.f32 0.0, %v3022
        %v3024 = vpop.f32.mrb[0].mxu0
        %3025 = vmatprep.mubr.bf16.mxu0 0
        %3026 = vmatmul.mubr.bf16.gmra.mrb[0].mxu0 %v2849
        %v3027 = vpop.f32.mrb[0].mxu0
        %v3028 = vadd.f32 0.0, %v3027
        %v3029 = vpop.f32.mrb[0].mxu0
        %v3030 = vpop.f32.mrb[0].mxu0
        %v3031 = vadd.f32 0.0, %v3030
        %v3032 = vpop.f32.mrb[0].mxu0
        %3033 = vmatprep.mubr.bf16.mxu0 0
        %3034 = vmatmul.mubr.bf16.gmra.mrb[0].mxu0 %v2850
        %v3035 = vpop.f32.mrb[0].mxu0
        %v3036 = vadd.f32 0.0, %v3035
        %v3037 = vpop.f32.mrb[0].mxu0
        %v3038 = vpop.f32.mrb[0].mxu0
        %v3039 = vadd.f32 0.0, %v3038
        %v3040 = vpop.f32.mrb[0].mxu0
        %3041 = vmatprep.mubr.bf16.mxu0 0
        %3042 = vmatmul.mubr.bf16.gmra.mrb[0].mxu0 %v2851
        %v3043 = vpop.f32.mrb[0].mxu0
        %v3044 = vadd.f32 0.0, %v3043
        %v3045 = vpop.f32.mrb[0].mxu0
        %v3046 = vpop.f32.mrb[0].mxu0
        %v3047 = vadd.f32 0.0, %v3046
        %v3048 = vpop.f32.mrb[0].mxu0
        %3049 = vmatprep.mubr.bf16.mxu0 0
        %3050 = vmatmul.mubr.bf16.gmra.mrb[0].mxu0 %v2852
        %v3051 = vpop.f32.mrb[0].mxu0
        %v3052 = vadd.f32 0.0, %v3051
        %v3053 = vpop.f32.mrb[0].mxu0
        %v3054 = vpop.f32.mrb[0].mxu0
        %v3055 = vadd.f32 0.0, %v3054
        %v3056 = vpop.f32.mrb[0].mxu0
        %3057 = vmatprep.mubr.bf16.mxu0 0
        %3058 = vmatmul.mubr.bf16.gmra.mrb[0].mxu0 %v2853
        %v3059 = vpop.f32.mrb[0].mxu0
        %v3060 = vadd.f32 0.0, %v3059
        %v3061 = vpop.f32.mrb[0].mxu0
        %v3062 = vpop.f32.mrb[0].mxu0
        %v3063 = vadd.f32 0.0, %v3062
        %v3064 = vpop.f32.mrb[0].mxu0
        %3065 = vmatprep.mubr.bf16.mxu0 0
        %3066 = vmatmul.mubr.bf16.gmra.mrb[0].mxu0 %v2854
        %v3067 = vpop.f32.mrb[0].mxu0
        %v3068 = vadd.f32 0.0, %v3067
        %v3069 = vpop.f32.mrb[0].mxu0
        %v3070 = vpop.f32.mrb[0].mxu0
        %v3071 = vadd.f32 0.0, %v3070
        %v3072 = vpop.f32.mrb[0].mxu0
        %3073 = vmatprep.mubr.bf16.mxu0 0
        %3074 = vmatmul.mubr.bf16.gmra.mrb[0].mxu0 %v2855
        %v3075 = vpop.f32.mrb[0].mxu0
        %v3076 = vadd.f32 0.0, %v3075
        %v3077 = vpop.f32.mrb[0].mxu0
        %v3078 = vpop.f32.mrb[0].mxu0
        %v3079 = vadd.f32 0.0, %v3078
        %v3080 = vpop.f32.mrb[0].mxu0
        %3081 = vdwg.mxu0
        %v3082 = vadd.f32 %v2682, %v2956
        %v3083 = vadd.f32 %v2685, %v2959
        %v3084 = vadd.f32 %v2690, %v2964
        %v3085 = vadd.f32 %v2693, %v2967
        %v3086 = vadd.f32 %v2698, %v2972
        %v3087 = vadd.f32 %v2701, %v2975
        %v3088 = vadd.f32 %v2706, %v2980
        %v3089 = vadd.f32 %v2709, %v2983
        %v3090 = vadd.f32 %v2714, %v2988
        %v3091 = vadd.f32 %v2717, %v2991
        %v3092 = vadd.f32 %v2722, %v2996
        %v3093 = vadd.f32 %v2725, %v2999
        %v3094 = vadd.f32 %v2730, %v3004
        %v3095 = vadd.f32 %v2733, %v3007
        %v3096 = vadd.f32 %v2738, %v3012
        %v3097 = vadd.f32 %v2741, %v3015
        %v3098 = vadd.f32 %v2746, %v3020
        %v3099 = vadd.f32 %v2749, %v3023
        %v3100 = vadd.f32 %v2754, %v3028
        %v3101 = vadd.f32 %v2757, %v3031
        %v3102 = vadd.f32 %v2762, %v3036
        %v3103 = vadd.f32 %v2765, %v3039
        %v3104 = vadd.f32 %v2770, %v3044
        %v3105 = vadd.f32 %v2773, %v3047
        %v3106 = vadd.f32 %v2778, %v3052
        %v3107 = vadd.f32 %v2781, %v3055
        %v3108 = vadd.f32 %v2786, %v3060
        %v3109 = vadd.f32 %v2789, %v3063
        %v3110 = vadd.f32 %v2794, %v3068
        %v3111 = vadd.f32 %v2797, %v3071
        %v3112 = vadd.f32 %v2802, %v3076
        %v3113 = vadd.f32 %v2805, %v3079
        %v3114 = vld [vmem:[#allocation4] sm:$0xff]
        %v3115 = vld [vmem:[#allocation4 + $0x8] sm:$0xff]
        %v3116 = vld [vmem:[#allocation4 + $0x10] sm:$0xff]
        %v3117 = vld [vmem:[#allocation4 + $0x18] sm:$0xff]
        %v3118 = vld [vmem:[#allocation4 + $0x20] sm:$0xff]
        %v3119 = vld [vmem:[#allocation4 + $0x28] sm:$0xff]
        %v3120 = vld [vmem:[#allocation4 + $0x30] sm:$0xff]
        %v3121 = vld [vmem:[#allocation4 + $0x38] sm:$0xff]
        %v3122 = vld [vmem:[#allocation4 + $0x40] sm:$0xff]
        %v3123 = vld [vmem:[#allocation4 + $0x48] sm:$0xff]
        %v3124 = vld [vmem:[#allocation4 + $0x50] sm:$0xff]
        %v3125 = vld [vmem:[#allocation4 + $0x58] sm:$0xff]
        %v3126 = vld [vmem:[#allocation4 + $0x60] sm:$0xff]
        %v3127 = vld [vmem:[#allocation4 + $0x68] sm:$0xff]
        %v3128 = vld [vmem:[#allocation4 + $0x70] sm:$0xff]
        %v3129 = vld [vmem:[#allocation4 + $0x78] sm:$0xff]
        %v3130 = vld [vmem:[#allocation4 + $0x80] sm:$0xff]
        %v3131 = vld [vmem:[#allocation4 + $0x88] sm:$0xff]
        %v3132 = vld [vmem:[#allocation4 + $0x90] sm:$0xff]
        %v3133 = vld [vmem:[#allocation4 + $0x98] sm:$0xff]
        %v3134 = vld [vmem:[#allocation4 + $0xa0] sm:$0xff]
        %v3135 = vld [vmem:[#allocation4 + $0xa8] sm:$0xff]
        %v3136 = vld [vmem:[#allocation4 + $0xb0] sm:$0xff]
        %v3137 = vld [vmem:[#allocation4 + $0xb8] sm:$0xff]
        %v3138 = vld [vmem:[#allocation4 + $0xc0] sm:$0xff]
        %v3139 = vld [vmem:[#allocation4 + $0xc8] sm:$0xff]
        %v3140 = vld [vmem:[#allocation4 + $0xd0] sm:$0xff]
        %v3141 = vld [vmem:[#allocation4 + $0xd8] sm:$0xff]
        %v3142 = vld [vmem:[#allocation4 + $0xe0] sm:$0xff]
        %v3143 = vld [vmem:[#allocation4 + $0xe8] sm:$0xff]
        %v3144 = vld [vmem:[#allocation4 + $0xf0] sm:$0xff]
        %v3145 = vld [vmem:[#allocation4 + $0xf8] sm:$0xff]
        %v3146 = vadd.f32 %v3114, %v3082
        %v3147 = vadd.f32 %v3115, %v3083
        %v3148 = vadd.f32 %v3116, %v3084
        %v3149 = vadd.f32 %v3117, %v3085
        %v3150 = vadd.f32 %v3118, %v3086
        %v3151 = vadd.f32 %v3119, %v3087
        %v3152 = vadd.f32 %v3120, %v3088
        %v3153 = vadd.f32 %v3121, %v3089
        %v3154 = vadd.f32 %v3122, %v3090
        %v3155 = vadd.f32 %v3123, %v3091
        %v3156 = vadd.f32 %v3124, %v3092
        %v3157 = vadd.f32 %v3125, %v3093
        %v3158 = vadd.f32 %v3126, %v3094
        %v3159 = vadd.f32 %v3127, %v3095
        %v3160 = vadd.f32 %v3128, %v3096
        %v3161 = vadd.f32 %v3129, %v3097
        %v3162 = vadd.f32 %v3130, %v3098
        %v3163 = vadd.f32 %v3131, %v3099
        %v3164 = vadd.f32 %v3132, %v3100
        %v3165 = vadd.f32 %v3133, %v3101
        %v3166 = vadd.f32 %v3134, %v3102
        %v3167 = vadd.f32 %v3135, %v3103
        %v3168 = vadd.f32 %v3136, %v3104
        %v3169 = vadd.f32 %v3137, %v3105
        %v3170 = vadd.f32 %v3138, %v3106
        %v3171 = vadd.f32 %v3139, %v3107
        %v3172 = vadd.f32 %v3140, %v3108
        %v3173 = vadd.f32 %v3141, %v3109
        %v3174 = vadd.f32 %v3142, %v3110
        %v3175 = vadd.f32 %v3143, %v3111
        %v3176 = vadd.f32 %v3144, %v3112
        %v3177 = vadd.f32 %v3145, %v3113
        %3178 = vst [vmem:[#allocation4] sm:$0xff] %v3146
        %3179 = vst [vmem:[#allocation4 + $0x8] sm:$0xff] %v3147
        %3180 = vst [vmem:[#allocation4 + $0x10] sm:$0xff] %v3148
        %3181 = vst [vmem:[#allocation4 + $0x18] sm:$0xff] %v3149
        %3182 = vst [vmem:[#allocation4 + $0x20] sm:$0xff] %v3150
        %3183 = vst [vmem:[#allocation4 + $0x28] sm:$0xff] %v3151
        %3184 = vst [vmem:[#allocation4 + $0x30] sm:$0xff] %v3152
        %3185 = vst [vmem:[#allocation4 + $0x38] sm:$0xff] %v3153
        %3186 = vst [vmem:[#allocation4 + $0x40] sm:$0xff] %v3154
        %3187 = vst [vmem:[#allocation4 + $0x48] sm:$0xff] %v3155
        %3188 = vst [vmem:[#allocation4 + $0x50] sm:$0xff] %v3156
        %3189 = vst [vmem:[#allocation4 + $0x58] sm:$0xff] %v3157
        %3190 = vst [vmem:[#allocation4 + $0x60] sm:$0xff] %v3158
        %3191 = vst [vmem:[#allocation4 + $0x68] sm:$0xff] %v3159
        %3192 = vst [vmem:[#allocation4 + $0x70] sm:$0xff] %v3160
        %3193 = vst [vmem:[#allocation4 + $0x78] sm:$0xff] %v3161
        %3194 = vst [vmem:[#allocation4 + $0x80] sm:$0xff] %v3162
        %3195 = vst [vmem:[#allocation4 + $0x88] sm:$0xff] %v3163
        %3196 = vst [vmem:[#allocation4 + $0x90] sm:$0xff] %v3164
        %3197 = vst [vmem:[#allocation4 + $0x98] sm:$0xff] %v3165
        %3198 = vst [vmem:[#allocation4 + $0xa0] sm:$0xff] %v3166
        %3199 = vst [vmem:[#allocation4 + $0xa8] sm:$0xff] %v3167
        %3200 = vst [vmem:[#allocation4 + $0xb0] sm:$0xff] %v3168
        %3201 = vst [vmem:[#allocation4 + $0xb8] sm:$0xff] %v3169
        %3202 = vst [vmem:[#allocation4 + $0xc0] sm:$0xff] %v3170
        %3203 = vst [vmem:[#allocation4 + $0xc8] sm:$0xff] %v3171
        %3204 = vst [vmem:[#allocation4 + $0xd0] sm:$0xff] %v3172
        %3205 = vst [vmem:[#allocation4 + $0xd8] sm:$0xff] %v3173
        %3206 = vst [vmem:[#allocation4 + $0xe0] sm:$0xff] %v3174
        %3207 = vst [vmem:[#allocation4 + $0xe8] sm:$0xff] %v3175
        %3208 = vst [vmem:[#allocation4 + $0xf0] sm:$0xff] %v3176
        %3209 = vst [vmem:[#allocation4 + $0xf8] sm:$0xff] %v3177
        %v3210 = vld [vmem:[%s2] sm:$0x1]
        %v3211 = vld [vmem:[#allocation4] sm:$0xff]
        %v3212 = vld [vmem:[#allocation4 + $0x8] sm:$0xff]
        %v3213 = vld [vmem:[#allocation4 + $0x10] sm:$0xff]
        %v3214 = vld [vmem:[#allocation4 + $0x18] sm:$0xff]
        %v3215 = vld [vmem:[#allocation4 + $0x20] sm:$0xff]
        %v3216 = vld [vmem:[#allocation4 + $0x28] sm:$0xff]
        %v3217 = vld [vmem:[#allocation4 + $0x30] sm:$0xff]
        %v3218 = vld [vmem:[#allocation4 + $0x38] sm:$0xff]
        %v3219 = vld [vmem:[#allocation4 + $0x40] sm:$0xff]
        %v3220 = vld [vmem:[#allocation4 + $0x48] sm:$0xff]
        %v3221 = vld [vmem:[#allocation4 + $0x50] sm:$0xff]
        %v3222 = vld [vmem:[#allocation4 + $0x58] sm:$0xff]
        %v3223 = vld [vmem:[#allocation4 + $0x60] sm:$0xff]
        %v3224 = vld [vmem:[#allocation4 + $0x68] sm:$0xff]
        %v3225 = vld [vmem:[#allocation4 + $0x70] sm:$0xff]
        %v3226 = vld [vmem:[#allocation4 + $0x78] sm:$0xff]
        %v3227 = vld [vmem:[#allocation4 + $0x80] sm:$0xff]
        %v3228 = vld [vmem:[#allocation4 + $0x88] sm:$0xff]
        %v3229 = vld [vmem:[#allocation4 + $0x90] sm:$0xff]
        %v3230 = vld [vmem:[#allocation4 + $0x98] sm:$0xff]
        %v3231 = vld [vmem:[#allocation4 + $0xa0] sm:$0xff]
        %v3232 = vld [vmem:[#allocation4 + $0xa8] sm:$0xff]
        %v3233 = vld [vmem:[#allocation4 + $0xb0] sm:$0xff]
        %v3234 = vld [vmem:[#allocation4 + $0xb8] sm:$0xff]
        %v3235 = vld [vmem:[#allocation4 + $0xc0] sm:$0xff]
        %v3236 = vld [vmem:[#allocation4 + $0xc8] sm:$0xff]
        %v3237 = vld [vmem:[#allocation4 + $0xd0] sm:$0xff]
        %v3238 = vld [vmem:[#allocation4 + $0xd8] sm:$0xff]
        %v3239 = vld [vmem:[#allocation4 + $0xe0] sm:$0xff]
        %v3240 = vld [vmem:[#allocation4 + $0xe8] sm:$0xff]
        %v3241 = vld [vmem:[#allocation4 + $0xf0] sm:$0xff]
        %v3242 = vld [vmem:[#allocation4 + $0xf8] sm:$0xff]
        %v3244 = vlaneseq
        %v3245 = vshrl.u32 %v3244, 7
        %v3246 = vsub.s32 0, %v3245
        %v3247 = vrot.slane %v3210, %v3246
        %v3249 = vadd.f32 %v3211, %v3247
        %v3250 = vadd.f32 %v3212, %v3247
        %v3251 = vadd.f32 %v3213, %v3247
        %v3252 = vadd.f32 %v3214, %v3247
        %v3253 = vadd.f32 %v3215, %v3247
        %v3254 = vadd.f32 %v3216, %v3247
        %v3255 = vadd.f32 %v3217, %v3247
        %v3256 = vadd.f32 %v3218, %v3247
        %v3257 = vadd.f32 %v3219, %v3247
        %v3258 = vadd.f32 %v3220, %v3247
        %v3259 = vadd.f32 %v3221, %v3247
        %v3260 = vadd.f32 %v3222, %v3247
        %v3261 = vadd.f32 %v3223, %v3247
        %v3262 = vadd.f32 %v3224, %v3247
        %v3263 = vadd.f32 %v3225, %v3247
        %v3264 = vadd.f32 %v3226, %v3247
        %v3265 = vadd.f32 %v3227, %v3247
        %v3266 = vadd.f32 %v3228, %v3247
        %v3267 = vadd.f32 %v3229, %v3247
        %v3268 = vadd.f32 %v3230, %v3247
        %v3269 = vadd.f32 %v3231, %v3247
        %v3270 = vadd.f32 %v3232, %v3247
        %v3271 = vadd.f32 %v3233, %v3247
        %v3272 = vadd.f32 %v3234, %v3247
        %v3273 = vadd.f32 %v3235, %v3247
        %v3274 = vadd.f32 %v3236, %v3247
        %v3275 = vadd.f32 %v3237, %v3247
        %v3276 = vadd.f32 %v3238, %v3247
        %v3277 = vadd.f32 %v3239, %v3247
        %v3278 = vadd.f32 %v3240, %v3247
        %v3279 = vadd.f32 %v3241, %v3247
        %v3280 = vadd.f32 %v3242, %v3247
        %v3281 = vmax.f32 %v3249, 0.0
        %v3282 = vmax.f32 %v3250, 0.0
        %v3283 = vmax.f32 %v3251, 0.0
        %v3284 = vmax.f32 %v3252, 0.0
        %v3285 = vmax.f32 %v3253, 0.0
        %v3286 = vmax.f32 %v3254, 0.0
        %v3287 = vmax.f32 %v3255, 0.0
        %v3288 = vmax.f32 %v3256, 0.0
        %v3289 = vmax.f32 %v3257, 0.0
        %v3290 = vmax.f32 %v3258, 0.0
        %v3291 = vmax.f32 %v3259, 0.0
        %v3292 = vmax.f32 %v3260, 0.0
        %v3293 = vmax.f32 %v3261, 0.0
        %v3294 = vmax.f32 %v3262, 0.0
        %v3295 = vmax.f32 %v3263, 0.0
        %v3296 = vmax.f32 %v3264, 0.0
        %v3297 = vmax.f32 %v3265, 0.0
        %v3298 = vmax.f32 %v3266, 0.0
        %v3299 = vmax.f32 %v3267, 0.0
        %v3300 = vmax.f32 %v3268, 0.0
        %v3301 = vmax.f32 %v3269, 0.0
        %v3302 = vmax.f32 %v3270, 0.0
        %v3303 = vmax.f32 %v3271, 0.0
        %v3304 = vmax.f32 %v3272, 0.0
        %v3305 = vmax.f32 %v3273, 0.0
        %v3306 = vmax.f32 %v3274, 0.0
        %v3307 = vmax.f32 %v3275, 0.0
        %v3308 = vmax.f32 %v3276, 0.0
        %v3309 = vmax.f32 %v3277, 0.0
        %v3310 = vmax.f32 %v3278, 0.0
        %v3311 = vmax.f32 %v3279, 0.0
        %v3312 = vmax.f32 %v3280, 0.0
        %s3313 = scalar_lea.vmem [#allocation3], 24
        %3314 = vst [vmem:[%s3313 + $0x1] sm:$0xff] %v3281
        %3315 = vst [vmem:[%s3313 + $0x9] sm:$0xff] %v3282
        %3316 = vst [vmem:[%s3313 + $0x19] sm:$0xff] %v3283
        %3317 = vst [vmem:[%s3313 + $0x21] sm:$0xff] %v3284
        %3318 = vst [vmem:[%s3313 + $0x31] sm:$0xff] %v3285
        %3319 = vst [vmem:[%s3313 + $0x39] sm:$0xff] %v3286
        %3320 = vst [vmem:[%s3313 + $0x49] sm:$0xff] %v3287
        %3321 = vst [vmem:[%s3313 + $0x51] sm:$0xff] %v3288
        %3322 = vst [vmem:[%s3313 + $0x61] sm:$0xff] %v3289
        %3323 = vst [vmem:[%s3313 + $0x69] sm:$0xff] %v3290
        %3324 = vst [vmem:[%s3313 + $0x79] sm:$0xff] %v3291
        %3325 = vst [vmem:[%s3313 + $0x81] sm:$0xff] %v3292
        %3326 = vst [vmem:[%s3313 + $0x91] sm:$0xff] %v3293
        %3327 = vst [vmem:[%s3313 + $0x99] sm:$0xff] %v3294
        %3328 = vst [vmem:[%s3313 + $0xa9] sm:$0xff] %v3295
        %3329 = vst [vmem:[%s3313 + $0xb1] sm:$0xff] %v3296
        %3330 = vst [vmem:[%s3313 + $0xc1] sm:$0xff] %v3297
        %3331 = vst [vmem:[%s3313 + $0xc9] sm:$0xff] %v3298
        %3332 = vst [vmem:[%s3313 + $0xd9] sm:$0xff] %v3299
        %3333 = vst [vmem:[%s3313 + $0xe1] sm:$0xff] %v3300
        %3334 = vst [vmem:[%s3313 + $0xf1] sm:$0xff] %v3301
        %3335 = vst [vmem:[%s3313 + $0xf9] sm:$0xff] %v3302
        %3336 = vst [vmem:[%s3313 + $0x109] sm:$0xff] %v3303
        %3337 = vst [vmem:[%s3313 + $0x111] sm:$0xff] %v3304
        %3338 = vst [vmem:[%s3313 + $0x121] sm:$0xff] %v3305
        %3339 = vst [vmem:[%s3313 + $0x129] sm:$0xff] %v3306
        %3340 = vst [vmem:[%s3313 + $0x139] sm:$0xff] %v3307
        %3341 = vst [vmem:[%s3313 + $0x141] sm:$0xff] %v3308
        %3342 = vst [vmem:[%s3313 + $0x151] sm:$0xff] %v3309
        %3343 = vst [vmem:[%s3313 + $0x159] sm:$0xff] %v3310
        %3344 = vst [vmem:[%s3313 + $0x169] sm:$0xff] %v3311
        %3345 = vst [vmem:[%s3313 + $0x171] sm:$0xff] %v3312
        %v3346 = vld [vmem:[#allocation3] sm:$0xff]
        %v3347 = vld [vmem:[#allocation3 + $0x8] sm:$0xff]
        %v3348 = vld [vmem:[#allocation3 + $0x18] sm:$0xff]
        %v3349 = vld [vmem:[#allocation3 + $0x20] sm:$0xff]
        %v3350 = vld [vmem:[#allocation3 + $0x30] sm:$0xff]
        %v3351 = vld [vmem:[#allocation3 + $0x38] sm:$0xff]
        %v3352 = vld [vmem:[#allocation3 + $0x48] sm:$0xff]
        %v3353 = vld [vmem:[#allocation3 + $0x50] sm:$0xff]
        %v3354 = vld [vmem:[#allocation3 + $0x60] sm:$0xff]
        %v3355 = vld [vmem:[#allocation3 + $0x68] sm:$0xff]
        %v3356 = vld [vmem:[#allocation3 + $0x78] sm:$0xff]
        %v3357 = vld [vmem:[#allocation3 + $0x80] sm:$0xff]
        %v3358 = vld [vmem:[#allocation3 + $0x90] sm:$0xff]
        %v3359 = vld [vmem:[#allocation3 + $0x98] sm:$0xff]
        %v3360 = vld [vmem:[#allocation3 + $0xa8] sm:$0xff]
        %v3361 = vld [vmem:[#allocation3 + $0xb0] sm:$0xff]
        %v3362 = vld [vmem:[#allocation3 + $0xc0] sm:$0xff]
        %v3363 = vld [vmem:[#allocation3 + $0xc8] sm:$0xff]
        %v3364 = vld [vmem:[#allocation3 + $0xd8] sm:$0xff]
        %v3365 = vld [vmem:[#allocation3 + $0xe0] sm:$0xff]
        %v3366 = vld [vmem:[#allocation3 + $0xf0] sm:$0xff]
        %v3367 = vld [vmem:[#allocation3 + $0xf8] sm:$0xff]
        %v3368 = vld [vmem:[#allocation3 + $0x108] sm:$0xff]
        %v3369 = vld [vmem:[#allocation3 + $0x110] sm:$0xff]
        %v3370 = vld [vmem:[#allocation3 + $0x120] sm:$0xff]
        %v3371 = vld [vmem:[#allocation3 + $0x128] sm:$0xff]
        %v3372 = vld [vmem:[#allocation3 + $0x138] sm:$0xff]
        %v3373 = vld [vmem:[#allocation3 + $0x140] sm:$0xff]
        %v3374 = vld [vmem:[#allocation3 + $0x150] sm:$0xff]
        %v3375 = vld [vmem:[#allocation3 + $0x158] sm:$0xff]
        %v3376 = vld [vmem:[#allocation3 + $0x168] sm:$0xff]
        %v3377 = vld [vmem:[#allocation3 + $0x170] sm:$0xff]
        %v3378 = vpack.c.bf16 %v3347, %v3346
        %v3379 = vpack.c.bf16 %v3349, %v3348
        %v3380 = vpack.c.bf16 %v3351, %v3350
        %v3381 = vpack.c.bf16 %v3353, %v3352
        %v3382 = vpack.c.bf16 %v3355, %v3354
        %v3383 = vpack.c.bf16 %v3357, %v3356
        %v3384 = vpack.c.bf16 %v3359, %v3358
        %v3385 = vpack.c.bf16 %v3361, %v3360
        %v3386 = vpack.c.bf16 %v3363, %v3362
        %v3387 = vpack.c.bf16 %v3365, %v3364
        %v3388 = vpack.c.bf16 %v3367, %v3366
        %v3389 = vpack.c.bf16 %v3369, %v3368
        %v3390 = vpack.c.bf16 %v3371, %v3370
        %v3391 = vpack.c.bf16 %v3373, %v3372
        %v3392 = vpack.c.bf16 %v3375, %v3374
        %v3393 = vpack.c.bf16 %v3377, %v3376
        %v3394 = vld [vmem:[#allocation10] sm:$0xf]
        %v3395 = vld [vmem:[#allocation10 + $0x4] sm:$0xf]
        %v3396 = vld [vmem:[#allocation10 + $0x8] sm:$0xf]
        %v3397 = vld [vmem:[#allocation10 + $0xc] sm:$0xf]
        %v3398 = vld [vmem:[#allocation10 + $0x10] sm:$0xf]
        %v3399 = vld [vmem:[#allocation10 + $0x14] sm:$0xf]
        %v3400 = vld [vmem:[#allocation10 + $0x18] sm:$0xf]
        %v3401 = vld [vmem:[#allocation10 + $0x1c] sm:$0xf]
        %v3402 = vld [vmem:[#allocation10 + $0x20] sm:$0xf]
        %v3403 = vld [vmem:[#allocation10 + $0x24] sm:$0xf]
        %v3404 = vld [vmem:[#allocation10 + $0x28] sm:$0xf]
        %v3405 = vld [vmem:[#allocation10 + $0x2c] sm:$0xf]
        %v3406 = vld [vmem:[#allocation10 + $0x30] sm:$0xf]
        %v3407 = vld [vmem:[#allocation10 + $0x34] sm:$0xf]
        %v3408 = vld [vmem:[#allocation10 + $0x38] sm:$0xf]
        %v3409 = vld [vmem:[#allocation10 + $0x3c] sm:$0xf]
        %v3410 = vld [vmem:[#allocation3 + $0x1] sm:$0xff]
        %v3411 = vld [vmem:[#allocation3 + $0x9] sm:$0xff]
        %v3412 = vld [vmem:[#allocation3 + $0x19] sm:$0xff]
        %v3413 = vld [vmem:[#allocation3 + $0x21] sm:$0xff]
        %v3414 = vld [vmem:[#allocation3 + $0x31] sm:$0xff]
        %v3415 = vld [vmem:[#allocation3 + $0x39] sm:$0xff]
        %v3416 = vld [vmem:[#allocation3 + $0x49] sm:$0xff]
        %v3417 = vld [vmem:[#allocation3 + $0x51] sm:$0xff]
        %v3418 = vld [vmem:[#allocation3 + $0x61] sm:$0xff]
        %v3419 = vld [vmem:[#allocation3 + $0x69] sm:$0xff]
        %v3420 = vld [vmem:[#allocation3 + $0x79] sm:$0xff]
        %v3421 = vld [vmem:[#allocation3 + $0x81] sm:$0xff]
        %v3422 = vld [vmem:[#allocation3 + $0x91] sm:$0xff]
        %v3423 = vld [vmem:[#allocation3 + $0x99] sm:$0xff]
        %v3424 = vld [vmem:[#allocation3 + $0xa9] sm:$0xff]
        %v3425 = vld [vmem:[#allocation3 + $0xb1] sm:$0xff]
        %v3426 = vld [vmem:[#allocation3 + $0xc1] sm:$0xff]
        %v3427 = vld [vmem:[#allocation3 + $0xc9] sm:$0xff]
        %v3428 = vld [vmem:[#allocation3 + $0xd9] sm:$0xff]
        %v3429 = vld [vmem:[#allocation3 + $0xe1] sm:$0xff]
        %v3430 = vld [vmem:[#allocation3 + $0xf1] sm:$0xff]
        %v3431 = vld [vmem:[#allocation3 + $0xf9] sm:$0xff]
        %v3432 = vld [vmem:[#allocation3 + $0x109] sm:$0xff]
        %v3433 = vld [vmem:[#allocation3 + $0x111] sm:$0xff]
        %v3434 = vld [vmem:[#allocation3 + $0x121] sm:$0xff]
        %v3435 = vld [vmem:[#allocation3 + $0x129] sm:$0xff]
        %v3436 = vld [vmem:[#allocation3 + $0x139] sm:$0xff]
        %v3437 = vld [vmem:[#allocation3 + $0x141] sm:$0xff]
        %v3438 = vld [vmem:[#allocation3 + $0x151] sm:$0xff]
        %v3439 = vld [vmem:[#allocation3 + $0x159] sm:$0xff]
        %v3440 = vld [vmem:[#allocation3 + $0x169] sm:$0xff]
        %v3441 = vld [vmem:[#allocation3 + $0x171] sm:$0xff]
        %v3442 = vpack.c.bf16 %v3411, %v3410
        %v3443 = vpack.c.bf16 %v3413, %v3412
        %v3444 = vpack.c.bf16 %v3415, %v3414
        %v3445 = vpack.c.bf16 %v3417, %v3416
        %v3446 = vpack.c.bf16 %v3419, %v3418
        %v3447 = vpack.c.bf16 %v3421, %v3420
        %v3448 = vpack.c.bf16 %v3423, %v3422
        %v3449 = vpack.c.bf16 %v3425, %v3424
        %v3450 = vpack.c.bf16 %v3427, %v3426
        %v3451 = vpack.c.bf16 %v3429, %v3428
        %v3452 = vpack.c.bf16 %v3431, %v3430
        %v3453 = vpack.c.bf16 %v3433, %v3432
        %v3454 = vpack.c.bf16 %v3435, %v3434
        %v3455 = vpack.c.bf16 %v3437, %v3436
        %v3456 = vpack.c.bf16 %v3439, %v3438
        %v3457 = vpack.c.bf16 %v3441, %v3440
        %s3458 = scalar_lea.vmem [#allocation10], 64
        %v3459 = vld [vmem:[%s3458] sm:$0xf]
        %v3460 = vld [vmem:[%s3458 + $0x4] sm:$0xf]
        %v3461 = vld [vmem:[%s3458 + $0x8] sm:$0xf]
        %v3462 = vld [vmem:[%s3458 + $0xc] sm:$0xf]
        %v3463 = vld [vmem:[%s3458 + $0x10] sm:$0xf]
        %v3464 = vld [vmem:[%s3458 + $0x14] sm:$0xf]
        %v3465 = vld [vmem:[%s3458 + $0x18] sm:$0xf]
        %v3466 = vld [vmem:[%s3458 + $0x1c] sm:$0xf]
        %v3467 = vld [vmem:[%s3458 + $0x20] sm:$0xf]
        %v3468 = vld [vmem:[%s3458 + $0x24] sm:$0xf]
        %v3469 = vld [vmem:[%s3458 + $0x28] sm:$0xf]
        %v3470 = vld [vmem:[%s3458 + $0x2c] sm:$0xf]
        %v3471 = vld [vmem:[%s3458 + $0x30] sm:$0xf]
        %v3472 = vld [vmem:[%s3458 + $0x34] sm:$0xf]
        %v3473 = vld [vmem:[%s3458 + $0x38] sm:$0xf]
        %v3474 = vld [vmem:[%s3458 + $0x3c] sm:$0xf]
        %v3491 = vunpack.c.l.b16 %v3459
        %v3492 = vunpack.c.l.b16 %v3460
        %v3493 = vunpack.c.l.b16 %v3461
        %v3494 = vunpack.c.l.b16 %v3462
        %v3495 = vunpack.c.l.b16 %v3463
        %v3496 = vunpack.c.l.b16 %v3464
        %v3497 = vunpack.c.l.b16 %v3465
        %v3498 = vunpack.c.l.b16 %v3466
        %v3499 = vunpack.c.l.b16 %v3467
        %v3500 = vunpack.c.l.b16 %v3468
        %v3501 = vunpack.c.l.b16 %v3469
        %v3502 = vunpack.c.l.b16 %v3470
        %v3503 = vunpack.c.l.b16 %v3471
        %v3504 = vunpack.c.l.b16 %v3472
        %v3505 = vunpack.c.l.b16 %v3473
        %v3506 = vunpack.c.l.b16 %v3474
        %v3507 = vpack.c.b16 %v3492, %v3491
        %v3508 = vpack.c.b16 %v3494, %v3493
        %v3509 = vpack.c.b16 %v3496, %v3495
        %v3510 = vpack.c.b16 %v3498, %v3497
        %v3511 = vpack.c.b16 %v3500, %v3499
        %v3512 = vpack.c.b16 %v3502, %v3501
        %v3513 = vpack.c.b16 %v3504, %v3503
        %v3514 = vpack.c.b16 %v3506, %v3505
        %3523 = vmatprep.subr.bf16.mxu0 0
        %3524 = vmatpush1.bf16.msra.mxu0 %v3507
        %3525 = vmatprep.subr.bf16.mxu0 0
        %3526 = vmatpush1.bf16.msra.mxu0 %v3508
        %3527 = vmatprep.subr.bf16.mxu0 0
        %3528 = vmatpush1.bf16.msra.mxu0 %v3509
        %3529 = vmatprep.subr.bf16.mxu0 0
        %3530 = vmatpush1.bf16.msra.mxu0 %v3510
        %3531 = vmatprep.subr.bf16.mxu0 0
        %3532 = vmatpush1.bf16.msra.mxu0 %v3511
        %3533 = vmatprep.subr.bf16.mxu0 0
        %3534 = vmatpush1.bf16.msra.mxu0 %v3512
        %3535 = vmatprep.subr.bf16.mxu0 0
        %3536 = vmatpush1.bf16.msra.mxu0 %v3513
        %3537 = vmatprep.subr.bf16.mxu0 0
        %3538 = vmatpush1.bf16.msra.mxu0 %v3514
        %3539 = vmatprep.subr.bf16.mxu0 0
        %3540 = vmatpush1.bf16.msra.mxu0 0
        %3541 = vmatprep.subr.bf16.mxu0 0
        %3542 = vmatpush1.bf16.msra.mxu0 0
        %3543 = vmatprep.subr.bf16.mxu0 0
        %3544 = vmatpush1.bf16.msra.mxu0 0
        %3545 = vmatprep.subr.bf16.mxu0 0
        %3546 = vmatpush1.bf16.msra.mxu0 0
        %3547 = vmatprep.subr.bf16.mxu0 0
        %3548 = vmatpush1.bf16.msra.mxu0 0
        %3549 = vmatprep.subr.bf16.mxu0 0
        %3550 = vmatpush1.bf16.msra.mxu0 0
        %3551 = vmatprep.subr.bf16.mxu0 0
        %3552 = vmatpush1.bf16.msra.mxu0 0
        %3553 = vmatprep.subr.bf16.mxu0 0
        %3554 = vmatpush1.bf16.msra.mxu0 0
        %3555 = vmatprep.mubr.bf16.mxu0 0
        %3556 = vmatmul.mubr.bf16.gmra.mrb[0].mxu0 %v3442
        %v3557 = vpop.f32.mrb[0].mxu0
        %v3558 = vadd.f32 0.0, %v3557
        %v3559 = vpop.f32.mrb[0].mxu0
        %v3560 = vpop.f32.mrb[0].mxu0
        %v3561 = vadd.f32 0.0, %v3560
        %v3562 = vpop.f32.mrb[0].mxu0
        %3563 = vmatprep.mubr.bf16.mxu0 0
        %3564 = vmatmul.mubr.bf16.gmra.mrb[0].mxu0 %v3443
        %v3565 = vpop.f32.mrb[0].mxu0
        %v3566 = vadd.f32 0.0, %v3565
        %v3567 = vpop.f32.mrb[0].mxu0
        %v3568 = vpop.f32.mrb[0].mxu0
        %v3569 = vadd.f32 0.0, %v3568
        %v3570 = vpop.f32.mrb[0].mxu0
        %3571 = vmatprep.mubr.bf16.mxu0 0
        %3572 = vmatmul.mubr.bf16.gmra.mrb[0].mxu0 %v3444
        %v3573 = vpop.f32.mrb[0].mxu0
        %v3574 = vadd.f32 0.0, %v3573
        %v3575 = vpop.f32.mrb[0].mxu0
        %v3576 = vpop.f32.mrb[0].mxu0
        %v3577 = vadd.f32 0.0, %v3576
        %v3578 = vpop.f32.mrb[0].mxu0
        %3579 = vmatprep.mubr.bf16.mxu0 0
        %3580 = vmatmul.mubr.bf16.gmra.mrb[0].mxu0 %v3445
        %v3581 = vpop.f32.mrb[0].mxu0
        %v3582 = vadd.f32 0.0, %v3581
        %v3583 = vpop.f32.mrb[0].mxu0
        %v3584 = vpop.f32.mrb[0].mxu0
        %v3585 = vadd.f32 0.0, %v3584
        %v3586 = vpop.f32.mrb[0].mxu0
        %3587 = vmatprep.mubr.bf16.mxu0 0
        %3588 = vmatmul.mubr.bf16.gmra.mrb[0].mxu0 %v3446
        %v3589 = vpop.f32.mrb[0].mxu0
        %v3590 = vadd.f32 0.0, %v3589
        %v3591 = vpop.f32.mrb[0].mxu0
        %v3592 = vpop.f32.mrb[0].mxu0
        %v3593 = vadd.f32 0.0, %v3592
        %v3594 = vpop.f32.mrb[0].mxu0
        %3595 = vmatprep.mubr.bf16.mxu0 0
        %3596 = vmatmul.mubr.bf16.gmra.mrb[0].mxu0 %v3447
        %v3597 = vpop.f32.mrb[0].mxu0
        %v3598 = vadd.f32 0.0, %v3597
        %v3599 = vpop.f32.mrb[0].mxu0
        %v3600 = vpop.f32.mrb[0].mxu0
        %v3601 = vadd.f32 0.0, %v3600
        %v3602 = vpop.f32.mrb[0].mxu0
        %3603 = vmatprep.mubr.bf16.mxu0 0
        %3604 = vmatmul.mubr.bf16.gmra.mrb[0].mxu0 %v3448
        %v3605 = vpop.f32.mrb[0].mxu0
        %v3606 = vadd.f32 0.0, %v3605
        %v3607 = vpop.f32.mrb[0].mxu0
        %v3608 = vpop.f32.mrb[0].mxu0
        %v3609 = vadd.f32 0.0, %v3608
        %v3610 = vpop.f32.mrb[0].mxu0
        %3611 = vmatprep.mubr.bf16.mxu0 0
        %3612 = vmatmul.mubr.bf16.gmra.mrb[0].mxu0 %v3449
        %v3613 = vpop.f32.mrb[0].mxu0
        %v3614 = vadd.f32 0.0, %v3613
        %v3615 = vpop.f32.mrb[0].mxu0
        %v3616 = vpop.f32.mrb[0].mxu0
        %v3617 = vadd.f32 0.0, %v3616
        %v3618 = vpop.f32.mrb[0].mxu0
        %3619 = vmatprep.mubr.bf16.mxu0 0
        %3620 = vmatmul.mubr.bf16.gmra.mrb[0].mxu0 %v3450
        %v3621 = vpop.f32.mrb[0].mxu0
        %v3622 = vadd.f32 0.0, %v3621
        %v3623 = vpop.f32.mrb[0].mxu0
        %v3624 = vpop.f32.mrb[0].mxu0
        %v3625 = vadd.f32 0.0, %v3624
        %v3626 = vpop.f32.mrb[0].mxu0
        %3627 = vmatprep.mubr.bf16.mxu0 0
        %3628 = vmatmul.mubr.bf16.gmra.mrb[0].mxu0 %v3451
        %v3629 = vpop.f32.mrb[0].mxu0
        %v3630 = vadd.f32 0.0, %v3629
        %v3631 = vpop.f32.mrb[0].mxu0
        %v3632 = vpop.f32.mrb[0].mxu0
        %v3633 = vadd.f32 0.0, %v3632
        %v3634 = vpop.f32.mrb[0].mxu0
        %3635 = vmatprep.mubr.bf16.mxu0 0
        %3636 = vmatmul.mubr.bf16.gmra.mrb[0].mxu0 %v3452
        %v3637 = vpop.f32.mrb[0].mxu0
        %v3638 = vadd.f32 0.0, %v3637
        %v3639 = vpop.f32.mrb[0].mxu0
        %v3640 = vpop.f32.mrb[0].mxu0
        %v3641 = vadd.f32 0.0, %v3640
        %v3642 = vpop.f32.mrb[0].mxu0
        %3643 = vmatprep.mubr.bf16.mxu0 0
        %3644 = vmatmul.mubr.bf16.gmra.mrb[0].mxu0 %v3453
        %v3645 = vpop.f32.mrb[0].mxu0
        %v3646 = vadd.f32 0.0, %v3645
        %v3647 = vpop.f32.mrb[0].mxu0
        %v3648 = vpop.f32.mrb[0].mxu0
        %v3649 = vadd.f32 0.0, %v3648
        %v3650 = vpop.f32.mrb[0].mxu0
        %3651 = vmatprep.mubr.bf16.mxu0 0
        %3652 = vmatmul.mubr.bf16.gmra.mrb[0].mxu0 %v3454
        %v3653 = vpop.f32.mrb[0].mxu0
        %v3654 = vadd.f32 0.0, %v3653
        %v3655 = vpop.f32.mrb[0].mxu0
        %v3656 = vpop.f32.mrb[0].mxu0
        %v3657 = vadd.f32 0.0, %v3656
        %v3658 = vpop.f32.mrb[0].mxu0
        %3659 = vmatprep.mubr.bf16.mxu0 0
        %3660 = vmatmul.mubr.bf16.gmra.mrb[0].mxu0 %v3455
        %v3661 = vpop.f32.mrb[0].mxu0
        %v3662 = vadd.f32 0.0, %v3661
        %v3663 = vpop.f32.mrb[0].mxu0
        %v3664 = vpop.f32.mrb[0].mxu0
        %v3665 = vadd.f32 0.0, %v3664
        %v3666 = vpop.f32.mrb[0].mxu0
        %3667 = vmatprep.mubr.bf16.mxu0 0
        %3668 = vmatmul.mubr.bf16.gmra.mrb[0].mxu0 %v3456
        %v3669 = vpop.f32.mrb[0].mxu0
        %v3670 = vadd.f32 0.0, %v3669
        %v3671 = vpop.f32.mrb[0].mxu0
        %v3672 = vpop.f32.mrb[0].mxu0
        %v3673 = vadd.f32 0.0, %v3672
        %v3674 = vpop.f32.mrb[0].mxu0
        %3675 = vmatprep.mubr.bf16.mxu0 0
        %3676 = vmatmul.mubr.bf16.gmra.mrb[0].mxu0 %v3457
        %v3677 = vpop.f32.mrb[0].mxu0
        %v3678 = vadd.f32 0.0, %v3677
        %v3679 = vpop.f32.mrb[0].mxu0
        %v3680 = vpop.f32.mrb[0].mxu0
        %v3681 = vadd.f32 0.0, %v3680
        %v3682 = vpop.f32.mrb[0].mxu0
        %3683 = vdwg.mxu0
        %v3700 = vunpack.c.l.b16 %v3394
        %v3701 = vunpack.c.l.b16 %v3395
        %v3702 = vunpack.c.l.b16 %v3396
        %v3703 = vunpack.c.l.b16 %v3397
        %v3704 = vunpack.c.l.b16 %v3398
        %v3705 = vunpack.c.l.b16 %v3399
        %v3706 = vunpack.c.l.b16 %v3400
        %v3707 = vunpack.c.l.b16 %v3401
        %v3708 = vunpack.c.l.b16 %v3402
        %v3709 = vunpack.c.l.b16 %v3403
        %v3710 = vunpack.c.l.b16 %v3404
        %v3711 = vunpack.c.l.b16 %v3405
        %v3712 = vunpack.c.l.b16 %v3406
        %v3713 = vunpack.c.l.b16 %v3407
        %v3714 = vunpack.c.l.b16 %v3408
        %v3715 = vunpack.c.l.b16 %v3409
        %v3716 = vpack.c.b16 %v3701, %v3700
        %v3717 = vpack.c.b16 %v3703, %v3702
        %v3718 = vpack.c.b16 %v3705, %v3704
        %v3719 = vpack.c.b16 %v3707, %v3706
        %v3720 = vpack.c.b16 %v3709, %v3708
        %v3721 = vpack.c.b16 %v3711, %v3710
        %v3722 = vpack.c.b16 %v3713, %v3712
        %v3723 = vpack.c.b16 %v3715, %v3714
        %3732 = vmatprep.subr.bf16.mxu0 0
        %3733 = vmatpush1.bf16.msra.mxu0 %v3716
        %3734 = vmatprep.subr.bf16.mxu0 0
        %3735 = vmatpush1.bf16.msra.mxu0 %v3717
        %3736 = vmatprep.subr.bf16.mxu0 0
        %3737 = vmatpush1.bf16.msra.mxu0 %v3718
        %3738 = vmatprep.subr.bf16.mxu0 0
        %3739 = vmatpush1.bf16.msra.mxu0 %v3719
        %3740 = vmatprep.subr.bf16.mxu0 0
        %3741 = vmatpush1.bf16.msra.mxu0 %v3720
        %3742 = vmatprep.subr.bf16.mxu0 0
        %3743 = vmatpush1.bf16.msra.mxu0 %v3721
        %3744 = vmatprep.subr.bf16.mxu0 0
        %3745 = vmatpush1.bf16.msra.mxu0 %v3722
        %3746 = vmatprep.subr.bf16.mxu0 0
        %3747 = vmatpush1.bf16.msra.mxu0 %v3723
        %3748 = vmatprep.subr.bf16.mxu0 0
        %3749 = vmatpush1.bf16.msra.mxu0 0
        %3750 = vmatprep.subr.bf16.mxu0 0
        %3751 = vmatpush1.bf16.msra.mxu0 0
        %3752 = vmatprep.subr.bf16.mxu0 0
        %3753 = vmatpush1.bf16.msra.mxu0 0
        %3754 = vmatprep.subr.bf16.mxu0 0
        %3755 = vmatpush1.bf16.msra.mxu0 0
        %3756 = vmatprep.subr.bf16.mxu0 0
        %3757 = vmatpush1.bf16.msra.mxu0 0
        %3758 = vmatprep.subr.bf16.mxu0 0
        %3759 = vmatpush1.bf16.msra.mxu0 0
        %3760 = vmatprep.subr.bf16.mxu0 0
        %3761 = vmatpush1.bf16.msra.mxu0 0
        %3762 = vmatprep.subr.bf16.mxu0 0
        %3763 = vmatpush1.bf16.msra.mxu0 0
        %3764 = vmatprep.mubr.bf16.mxu0 0
        %3765 = vmatmul.mubr.bf16.gmra.mrb[0].mxu0 %v3378
        %v3766 = vpop.f32.mrb[0].mxu0
        %v3767 = vadd.f32 %v3558, %v3766
        %v3768 = vpop.f32.mrb[0].mxu0
        %v3769 = vpop.f32.mrb[0].mxu0
        %v3770 = vadd.f32 %v3561, %v3769
        %v3771 = vpop.f32.mrb[0].mxu0
        %3772 = vmatprep.mubr.bf16.mxu0 0
        %3773 = vmatmul.mubr.bf16.gmra.mrb[0].mxu0 %v3379
        %v3774 = vpop.f32.mrb[0].mxu0
        %v3775 = vadd.f32 %v3566, %v3774
        %v3776 = vpop.f32.mrb[0].mxu0
        %v3777 = vpop.f32.mrb[0].mxu0
        %v3778 = vadd.f32 %v3569, %v3777
        %v3779 = vpop.f32.mrb[0].mxu0
        %3780 = vmatprep.mubr.bf16.mxu0 0
        %3781 = vmatmul.mubr.bf16.gmra.mrb[0].mxu0 %v3380
        %v3782 = vpop.f32.mrb[0].mxu0
        %v3783 = vadd.f32 %v3574, %v3782
        %v3784 = vpop.f32.mrb[0].mxu0
        %v3785 = vpop.f32.mrb[0].mxu0
        %v3786 = vadd.f32 %v3577, %v3785
        %v3787 = vpop.f32.mrb[0].mxu0
        %3788 = vmatprep.mubr.bf16.mxu0 0
        %3789 = vmatmul.mubr.bf16.gmra.mrb[0].mxu0 %v3381
        %v3790 = vpop.f32.mrb[0].mxu0
        %v3791 = vadd.f32 %v3582, %v3790
        %v3792 = vpop.f32.mrb[0].mxu0
        %v3793 = vpop.f32.mrb[0].mxu0
        %v3794 = vadd.f32 %v3585, %v3793
        %v3795 = vpop.f32.mrb[0].mxu0
        %3796 = vmatprep.mubr.bf16.mxu0 0
        %3797 = vmatmul.mubr.bf16.gmra.mrb[0].mxu0 %v3382
        %v3798 = vpop.f32.mrb[0].mxu0
        %v3799 = vadd.f32 %v3590, %v3798
        %v3800 = vpop.f32.mrb[0].mxu0
        %v3801 = vpop.f32.mrb[0].mxu0
        %v3802 = vadd.f32 %v3593, %v3801
        %v3803 = vpop.f32.mrb[0].mxu0
        %3804 = vmatprep.mubr.bf16.mxu0 0
        %3805 = vmatmul.mubr.bf16.gmra.mrb[0].mxu0 %v3383
        %v3806 = vpop.f32.mrb[0].mxu0
        %v3807 = vadd.f32 %v3598, %v3806
        %v3808 = vpop.f32.mrb[0].mxu0
        %v3809 = vpop.f32.mrb[0].mxu0
        %v3810 = vadd.f32 %v3601, %v3809
        %v3811 = vpop.f32.mrb[0].mxu0
        %3812 = vmatprep.mubr.bf16.mxu0 0
        %3813 = vmatmul.mubr.bf16.gmra.mrb[0].mxu0 %v3384
        %v3814 = vpop.f32.mrb[0].mxu0
        %v3815 = vadd.f32 %v3606, %v3814
        %v3816 = vpop.f32.mrb[0].mxu0
        %v3817 = vpop.f32.mrb[0].mxu0
        %v3818 = vadd.f32 %v3609, %v3817
        %v3819 = vpop.f32.mrb[0].mxu0
        %3820 = vmatprep.mubr.bf16.mxu0 0
        %3821 = vmatmul.mubr.bf16.gmra.mrb[0].mxu0 %v3385
        %v3822 = vpop.f32.mrb[0].mxu0
        %v3823 = vadd.f32 %v3614, %v3822
        %v3824 = vpop.f32.mrb[0].mxu0
        %v3825 = vpop.f32.mrb[0].mxu0
        %v3826 = vadd.f32 %v3617, %v3825
        %v3827 = vpop.f32.mrb[0].mxu0
        %3828 = vmatprep.mubr.bf16.mxu0 0
        %3829 = vmatmul.mubr.bf16.gmra.mrb[0].mxu0 %v3386
        %v3830 = vpop.f32.mrb[0].mxu0
        %v3831 = vadd.f32 %v3622, %v3830
        %v3832 = vpop.f32.mrb[0].mxu0
        %v3833 = vpop.f32.mrb[0].mxu0
        %v3834 = vadd.f32 %v3625, %v3833
        %v3835 = vpop.f32.mrb[0].mxu0
        %3836 = vmatprep.mubr.bf16.mxu0 0
        %3837 = vmatmul.mubr.bf16.gmra.mrb[0].mxu0 %v3387
        %v3838 = vpop.f32.mrb[0].mxu0
        %v3839 = vadd.f32 %v3630, %v3838
        %v3840 = vpop.f32.mrb[0].mxu0
        %v3841 = vpop.f32.mrb[0].mxu0
        %v3842 = vadd.f32 %v3633, %v3841
        %v3843 = vpop.f32.mrb[0].mxu0
        %3844 = vmatprep.mubr.bf16.mxu0 0
        %3845 = vmatmul.mubr.bf16.gmra.mrb[0].mxu0 %v3388
        %v3846 = vpop.f32.mrb[0].mxu0
        %v3847 = vadd.f32 %v3638, %v3846
        %v3848 = vpop.f32.mrb[0].mxu0
        %v3849 = vpop.f32.mrb[0].mxu0
        %v3850 = vadd.f32 %v3641, %v3849
        %v3851 = vpop.f32.mrb[0].mxu0
        %3852 = vmatprep.mubr.bf16.mxu0 0
        %3853 = vmatmul.mubr.bf16.gmra.mrb[0].mxu0 %v3389
        %v3854 = vpop.f32.mrb[0].mxu0
        %v3855 = vadd.f32 %v3646, %v3854
        %v3856 = vpop.f32.mrb[0].mxu0
        %v3857 = vpop.f32.mrb[0].mxu0
        %v3858 = vadd.f32 %v3649, %v3857
        %v3859 = vpop.f32.mrb[0].mxu0
        %3860 = vmatprep.mubr.bf16.mxu0 0
        %3861 = vmatmul.mubr.bf16.gmra.mrb[0].mxu0 %v3390
        %v3862 = vpop.f32.mrb[0].mxu0
        %v3863 = vadd.f32 %v3654, %v3862
        %v3864 = vpop.f32.mrb[0].mxu0
        %v3865 = vpop.f32.mrb[0].mxu0
        %v3866 = vadd.f32 %v3657, %v3865
        %v3867 = vpop.f32.mrb[0].mxu0
        %3868 = vmatprep.mubr.bf16.mxu0 0
        %3869 = vmatmul.mubr.bf16.gmra.mrb[0].mxu0 %v3391
        %v3870 = vpop.f32.mrb[0].mxu0
        %v3871 = vadd.f32 %v3662, %v3870
        %v3872 = vpop.f32.mrb[0].mxu0
        %v3873 = vpop.f32.mrb[0].mxu0
        %v3874 = vadd.f32 %v3665, %v3873
        %v3875 = vpop.f32.mrb[0].mxu0
        %3876 = vmatprep.mubr.bf16.mxu0 0
        %3877 = vmatmul.mubr.bf16.gmra.mrb[0].mxu0 %v3392
        %v3878 = vpop.f32.mrb[0].mxu0
        %v3879 = vadd.f32 %v3670, %v3878
        %v3880 = vpop.f32.mrb[0].mxu0
        %v3881 = vpop.f32.mrb[0].mxu0
        %v3882 = vadd.f32 %v3673, %v3881
        %v3883 = vpop.f32.mrb[0].mxu0
        %3884 = vmatprep.mubr.bf16.mxu0 0
        %3885 = vmatmul.mubr.bf16.gmra.mrb[0].mxu0 %v3393
        %v3886 = vpop.f32.mrb[0].mxu0
        %v3887 = vadd.f32 %v3678, %v3886
        %v3888 = vpop.f32.mrb[0].mxu0
        %v3889 = vpop.f32.mrb[0].mxu0
        %v3890 = vadd.f32 %v3681, %v3889
        %v3891 = vpop.f32.mrb[0].mxu0
        %3892 = vdwg.mxu0
        %v3893 = vld [vmem:[#allocation3 + $0x2] sm:$0xff]
        %v3894 = vld [vmem:[#allocation3 + $0xa] sm:$0xff]
        %v3895 = vld [vmem:[#allocation3 + $0x1a] sm:$0xff]
        %v3896 = vld [vmem:[#allocation3 + $0x22] sm:$0xff]
        %v3897 = vld [vmem:[#allocation3 + $0x32] sm:$0xff]
        %v3898 = vld [vmem:[#allocation3 + $0x3a] sm:$0xff]
        %v3899 = vld [vmem:[#allocation3 + $0x4a] sm:$0xff]
        %v3900 = vld [vmem:[#allocation3 + $0x52] sm:$0xff]
        %v3901 = vld [vmem:[#allocation3 + $0x62] sm:$0xff]
        %v3902 = vld [vmem:[#allocation3 + $0x6a] sm:$0xff]
        %v3903 = vld [vmem:[#allocation3 + $0x7a] sm:$0xff]
        %v3904 = vld [vmem:[#allocation3 + $0x82] sm:$0xff]
        %v3905 = vld [vmem:[#allocation3 + $0x92] sm:$0xff]
        %v3906 = vld [vmem:[#allocation3 + $0x9a] sm:$0xff]
        %v3907 = vld [vmem:[#allocation3 + $0xaa] sm:$0xff]
        %v3908 = vld [vmem:[#allocation3 + $0xb2] sm:$0xff]
        %v3909 = vld [vmem:[#allocation3 + $0xc2] sm:$0xff]
        %v3910 = vld [vmem:[#allocation3 + $0xca] sm:$0xff]
        %v3911 = vld [vmem:[#allocation3 + $0xda] sm:$0xff]
        %v3912 = vld [vmem:[#allocation3 + $0xe2] sm:$0xff]
        %v3913 = vld [vmem:[#allocation3 + $0xf2] sm:$0xff]
        %v3914 = vld [vmem:[#allocation3 + $0xfa] sm:$0xff]
        %v3915 = vld [vmem:[#allocation3 + $0x10a] sm:$0xff]
        %v3916 = vld [vmem:[#allocation3 + $0x112] sm:$0xff]
        %v3917 = vld [vmem:[#allocation3 + $0x122] sm:$0xff]
        %v3918 = vld [vmem:[#allocation3 + $0x12a] sm:$0xff]
        %v3919 = vld [vmem:[#allocation3 + $0x13a] sm:$0xff]
        %v3920 = vld [vmem:[#allocation3 + $0x142] sm:$0xff]
        %v3921 = vld [vmem:[#allocation3 + $0x152] sm:$0xff]
        %v3922 = vld [vmem:[#allocation3 + $0x15a] sm:$0xff]
        %v3923 = vld [vmem:[#allocation3 + $0x16a] sm:$0xff]
        %v3924 = vld [vmem:[#allocation3 + $0x172] sm:$0xff]
        %v3925 = vpack.c.bf16 %v3894, %v3893
        %v3926 = vpack.c.bf16 %v3896, %v3895
        %v3927 = vpack.c.bf16 %v3898, %v3897
        %v3928 = vpack.c.bf16 %v3900, %v3899
        %v3929 = vpack.c.bf16 %v3902, %v3901
        %v3930 = vpack.c.bf16 %v3904, %v3903
        %v3931 = vpack.c.bf16 %v3906, %v3905
        %v3932 = vpack.c.bf16 %v3908, %v3907
        %v3933 = vpack.c.bf16 %v3910, %v3909
        %v3934 = vpack.c.bf16 %v3912, %v3911
        %v3935 = vpack.c.bf16 %v3914, %v3913
        %v3936 = vpack.c.bf16 %v3916, %v3915
        %v3937 = vpack.c.bf16 %v3918, %v3917
        %v3938 = vpack.c.bf16 %v3920, %v3919
        %v3939 = vpack.c.bf16 %v3922, %v3921
        %v3940 = vpack.c.bf16 %v3924, %v3923
        %s3941 = scalar_lea.vmem [#allocation10], 128
        %v3942 = vld [vmem:[%s3941] sm:$0xf]
        %v3943 = vld [vmem:[%s3941 + $0x4] sm:$0xf]
        %v3944 = vld [vmem:[%s3941 + $0x8] sm:$0xf]
        %v3945 = vld [vmem:[%s3941 + $0xc] sm:$0xf]
        %v3946 = vld [vmem:[%s3941 + $0x10] sm:$0xf]
        %v3947 = vld [vmem:[%s3941 + $0x14] sm:$0xf]
        %v3948 = vld [vmem:[%s3941 + $0x18] sm:$0xf]
        %v3949 = vld [vmem:[%s3941 + $0x1c] sm:$0xf]
        %v3950 = vld [vmem:[%s3941 + $0x20] sm:$0xf]
        %v3951 = vld [vmem:[%s3941 + $0x24] sm:$0xf]
        %v3952 = vld [vmem:[%s3941 + $0x28] sm:$0xf]
        %v3953 = vld [vmem:[%s3941 + $0x2c] sm:$0xf]
        %v3954 = vld [vmem:[%s3941 + $0x30] sm:$0xf]
        %v3955 = vld [vmem:[%s3941 + $0x34] sm:$0xf]
        %v3956 = vld [vmem:[%s3941 + $0x38] sm:$0xf]
        %v3957 = vld [vmem:[%s3941 + $0x3c] sm:$0xf]
        %v3974 = vunpack.c.l.b16 %v3942
        %v3975 = vunpack.c.l.b16 %v3943
        %v3976 = vunpack.c.l.b16 %v3944
        %v3977 = vunpack.c.l.b16 %v3945
        %v3978 = vunpack.c.l.b16 %v3946
        %v3979 = vunpack.c.l.b16 %v3947
        %v3980 = vunpack.c.l.b16 %v3948
        %v3981 = vunpack.c.l.b16 %v3949
        %v3982 = vunpack.c.l.b16 %v3950
        %v3983 = vunpack.c.l.b16 %v3951
        %v3984 = vunpack.c.l.b16 %v3952
        %v3985 = vunpack.c.l.b16 %v3953
        %v3986 = vunpack.c.l.b16 %v3954
        %v3987 = vunpack.c.l.b16 %v3955
        %v3988 = vunpack.c.l.b16 %v3956
        %v3989 = vunpack.c.l.b16 %v3957
        %v3990 = vpack.c.b16 %v3975, %v3974
        %v3991 = vpack.c.b16 %v3977, %v3976
        %v3992 = vpack.c.b16 %v3979, %v3978
        %v3993 = vpack.c.b16 %v3981, %v3980
        %v3994 = vpack.c.b16 %v3983, %v3982
        %v3995 = vpack.c.b16 %v3985, %v3984
        %v3996 = vpack.c.b16 %v3987, %v3986
        %v3997 = vpack.c.b16 %v3989, %v3988
        %4006 = vmatprep.subr.bf16.mxu0 0
        %4007 = vmatpush1.bf16.msra.mxu0 %v3990
        %4008 = vmatprep.subr.bf16.mxu0 0
        %4009 = vmatpush1.bf16.msra.mxu0 %v3991
        %4010 = vmatprep.subr.bf16.mxu0 0
        %4011 = vmatpush1.bf16.msra.mxu0 %v3992
        %4012 = vmatprep.subr.bf16.mxu0 0
        %4013 = vmatpush1.bf16.msra.mxu0 %v3993
        %4014 = vmatprep.subr.bf16.mxu0 0
        %4015 = vmatpush1.bf16.msra.mxu0 %v3994
        %4016 = vmatprep.subr.bf16.mxu0 0
        %4017 = vmatpush1.bf16.msra.mxu0 %v3995
        %4018 = vmatprep.subr.bf16.mxu0 0
        %4019 = vmatpush1.bf16.msra.mxu0 %v3996
        %4020 = vmatprep.subr.bf16.mxu0 0
        %4021 = vmatpush1.bf16.msra.mxu0 %v3997
        %4022 = vmatprep.subr.bf16.mxu0 0
        %4023 = vmatpush1.bf16.msra.mxu0 0
        %4024 = vmatprep.subr.bf16.mxu0 0
        %4025 = vmatpush1.bf16.msra.mxu0 0
        %4026 = vmatprep.subr.bf16.mxu0 0
        %4027 = vmatpush1.bf16.msra.mxu0 0
        %4028 = vmatprep.subr.bf16.mxu0 0
        %4029 = vmatpush1.bf16.msra.mxu0 0
        %4030 = vmatprep.subr.bf16.mxu0 0
        %4031 = vmatpush1.bf16.msra.mxu0 0
        %4032 = vmatprep.subr.bf16.mxu0 0
        %4033 = vmatpush1.bf16.msra.mxu0 0
        %4034 = vmatprep.subr.bf16.mxu0 0
        %4035 = vmatpush1.bf16.msra.mxu0 0
        %4036 = vmatprep.subr.bf16.mxu0 0
        %4037 = vmatpush1.bf16.msra.mxu0 0
        %4038 = vmatprep.mubr.bf16.mxu0 0
        %4039 = vmatmul.mubr.bf16.gmra.mrb[0].mxu0 %v3925
        %v4040 = vpop.f32.mrb[0].mxu0
        %v4041 = vadd.f32 0.0, %v4040
        %v4042 = vpop.f32.mrb[0].mxu0
        %v4043 = vpop.f32.mrb[0].mxu0
        %v4044 = vadd.f32 0.0, %v4043
        %v4045 = vpop.f32.mrb[0].mxu0
        %4046 = vmatprep.mubr.bf16.mxu0 0
        %4047 = vmatmul.mubr.bf16.gmra.mrb[0].mxu0 %v3926
        %v4048 = vpop.f32.mrb[0].mxu0
        %v4049 = vadd.f32 0.0, %v4048
        %v4050 = vpop.f32.mrb[0].mxu0
        %v4051 = vpop.f32.mrb[0].mxu0
        %v4052 = vadd.f32 0.0, %v4051
        %v4053 = vpop.f32.mrb[0].mxu0
        %4054 = vmatprep.mubr.bf16.mxu0 0
        %4055 = vmatmul.mubr.bf16.gmra.mrb[0].mxu0 %v3927
        %v4056 = vpop.f32.mrb[0].mxu0
        %v4057 = vadd.f32 0.0, %v4056
        %v4058 = vpop.f32.mrb[0].mxu0
        %v4059 = vpop.f32.mrb[0].mxu0
        %v4060 = vadd.f32 0.0, %v4059
        %v4061 = vpop.f32.mrb[0].mxu0
        %4062 = vmatprep.mubr.bf16.mxu0 0
        %4063 = vmatmul.mubr.bf16.gmra.mrb[0].mxu0 %v3928
        %v4064 = vpop.f32.mrb[0].mxu0
        %v4065 = vadd.f32 0.0, %v4064
        %v4066 = vpop.f32.mrb[0].mxu0
        %v4067 = vpop.f32.mrb[0].mxu0
        %v4068 = vadd.f32 0.0, %v4067
        %v4069 = vpop.f32.mrb[0].mxu0
        %4070 = vmatprep.mubr.bf16.mxu0 0
        %4071 = vmatmul.mubr.bf16.gmra.mrb[0].mxu0 %v3929
        %v4072 = vpop.f32.mrb[0].mxu0
        %v4073 = vadd.f32 0.0, %v4072
        %v4074 = vpop.f32.mrb[0].mxu0
        %v4075 = vpop.f32.mrb[0].mxu0
        %v4076 = vadd.f32 0.0, %v4075
        %v4077 = vpop.f32.mrb[0].mxu0
        %4078 = vmatprep.mubr.bf16.mxu0 0
        %4079 = vmatmul.mubr.bf16.gmra.mrb[0].mxu0 %v3930
        %v4080 = vpop.f32.mrb[0].mxu0
        %v4081 = vadd.f32 0.0, %v4080
        %v4082 = vpop.f32.mrb[0].mxu0
        %v4083 = vpop.f32.mrb[0].mxu0
        %v4084 = vadd.f32 0.0, %v4083
        %v4085 = vpop.f32.mrb[0].mxu0
        %4086 = vmatprep.mubr.bf16.mxu0 0
        %4087 = vmatmul.mubr.bf16.gmra.mrb[0].mxu0 %v3931
        %v4088 = vpop.f32.mrb[0].mxu0
        %v4089 = vadd.f32 0.0, %v4088
        %v4090 = vpop.f32.mrb[0].mxu0
        %v4091 = vpop.f32.mrb[0].mxu0
        %v4092 = vadd.f32 0.0, %v4091
        %v4093 = vpop.f32.mrb[0].mxu0
        %4094 = vmatprep.mubr.bf16.mxu0 0
        %4095 = vmatmul.mubr.bf16.gmra.mrb[0].mxu0 %v3932
        %v4096 = vpop.f32.mrb[0].mxu0
        %v4097 = vadd.f32 0.0, %v4096
        %v4098 = vpop.f32.mrb[0].mxu0
        %v4099 = vpop.f32.mrb[0].mxu0
        %v4100 = vadd.f32 0.0, %v4099
        %v4101 = vpop.f32.mrb[0].mxu0
        %4102 = vmatprep.mubr.bf16.mxu0 0
        %4103 = vmatmul.mubr.bf16.gmra.mrb[0].mxu0 %v3933
        %v4104 = vpop.f32.mrb[0].mxu0
        %v4105 = vadd.f32 0.0, %v4104
        %v4106 = vpop.f32.mrb[0].mxu0
        %v4107 = vpop.f32.mrb[0].mxu0
        %v4108 = vadd.f32 0.0, %v4107
        %v4109 = vpop.f32.mrb[0].mxu0
        %4110 = vmatprep.mubr.bf16.mxu0 0
        %4111 = vmatmul.mubr.bf16.gmra.mrb[0].mxu0 %v3934
        %v4112 = vpop.f32.mrb[0].mxu0
        %v4113 = vadd.f32 0.0, %v4112
        %v4114 = vpop.f32.mrb[0].mxu0
        %v4115 = vpop.f32.mrb[0].mxu0
        %v4116 = vadd.f32 0.0, %v4115
        %v4117 = vpop.f32.mrb[0].mxu0
        %4118 = vmatprep.mubr.bf16.mxu0 0
        %4119 = vmatmul.mubr.bf16.gmra.mrb[0].mxu0 %v3935
        %v4120 = vpop.f32.mrb[0].mxu0
        %v4121 = vadd.f32 0.0, %v4120
        %v4122 = vpop.f32.mrb[0].mxu0
        %v4123 = vpop.f32.mrb[0].mxu0
        %v4124 = vadd.f32 0.0, %v4123
        %v4125 = vpop.f32.mrb[0].mxu0
        %4126 = vmatprep.mubr.bf16.mxu0 0
        %4127 = vmatmul.mubr.bf16.gmra.mrb[0].mxu0 %v3936
        %v4128 = vpop.f32.mrb[0].mxu0
        %v4129 = vadd.f32 0.0, %v4128
        %v4130 = vpop.f32.mrb[0].mxu0
        %v4131 = vpop.f32.mrb[0].mxu0
        %v4132 = vadd.f32 0.0, %v4131
        %v4133 = vpop.f32.mrb[0].mxu0
        %4134 = vmatprep.mubr.bf16.mxu0 0
        %4135 = vmatmul.mubr.bf16.gmra.mrb[0].mxu0 %v3937
        %v4136 = vpop.f32.mrb[0].mxu0
        %v4137 = vadd.f32 0.0, %v4136
        %v4138 = vpop.f32.mrb[0].mxu0
        %v4139 = vpop.f32.mrb[0].mxu0
        %v4140 = vadd.f32 0.0, %v4139
        %v4141 = vpop.f32.mrb[0].mxu0
        %4142 = vmatprep.mubr.bf16.mxu0 0
        %4143 = vmatmul.mubr.bf16.gmra.mrb[0].mxu0 %v3938
        %v4144 = vpop.f32.mrb[0].mxu0
        %v4145 = vadd.f32 0.0, %v4144
        %v4146 = vpop.f32.mrb[0].mxu0
        %v4147 = vpop.f32.mrb[0].mxu0
        %v4148 = vadd.f32 0.0, %v4147
        %v4149 = vpop.f32.mrb[0].mxu0
        %4150 = vmatprep.mubr.bf16.mxu0 0
        %4151 = vmatmul.mubr.bf16.gmra.mrb[0].mxu0 %v3939
        %v4152 = vpop.f32.mrb[0].mxu0
        %v4153 = vadd.f32 0.0, %v4152
        %v4154 = vpop.f32.mrb[0].mxu0
        %v4155 = vpop.f32.mrb[0].mxu0
        %v4156 = vadd.f32 0.0, %v4155
        %v4157 = vpop.f32.mrb[0].mxu0
        %4158 = vmatprep.mubr.bf16.mxu0 0
        %4159 = vmatmul.mubr.bf16.gmra.mrb[0].mxu0 %v3940
        %v4160 = vpop.f32.mrb[0].mxu0
        %v4161 = vadd.f32 0.0, %v4160
        %v4162 = vpop.f32.mrb[0].mxu0
        %v4163 = vpop.f32.mrb[0].mxu0
        %v4164 = vadd.f32 0.0, %v4163
        %v4165 = vpop.f32.mrb[0].mxu0
        %4166 = vdwg.mxu0
        %v4167 = vadd.f32 %v3767, %v4041
        %v4168 = vadd.f32 %v3770, %v4044
        %v4169 = vadd.f32 %v3775, %v4049
        %v4170 = vadd.f32 %v3778, %v4052
        %v4171 = vadd.f32 %v3783, %v4057
        %v4172 = vadd.f32 %v3786, %v4060
        %v4173 = vadd.f32 %v3791, %v4065
        %v4174 = vadd.f32 %v3794, %v4068
        %v4175 = vadd.f32 %v3799, %v4073
        %v4176 = vadd.f32 %v3802, %v4076
        %v4177 = vadd.f32 %v3807, %v4081
        %v4178 = vadd.f32 %v3810, %v4084
        %v4179 = vadd.f32 %v3815, %v4089
        %v4180 = vadd.f32 %v3818, %v4092
        %v4181 = vadd.f32 %v3823, %v4097
        %v4182 = vadd.f32 %v3826, %v4100
        %v4183 = vadd.f32 %v3831, %v4105
        %v4184 = vadd.f32 %v3834, %v4108
        %v4185 = vadd.f32 %v3839, %v4113
        %v4186 = vadd.f32 %v3842, %v4116
        %v4187 = vadd.f32 %v3847, %v4121
        %v4188 = vadd.f32 %v3850, %v4124
        %v4189 = vadd.f32 %v3855, %v4129
        %v4190 = vadd.f32 %v3858, %v4132
        %v4191 = vadd.f32 %v3863, %v4137
        %v4192 = vadd.f32 %v3866, %v4140
        %v4193 = vadd.f32 %v3871, %v4145
        %v4194 = vadd.f32 %v3874, %v4148
        %v4195 = vadd.f32 %v3879, %v4153
        %v4196 = vadd.f32 %v3882, %v4156
        %v4197 = vadd.f32 %v3887, %v4161
        %v4198 = vadd.f32 %v3890, %v4164
        %4199 = vst [vmem:[#allocation4] sm:$0xff] %v4167
        %4200 = vst [vmem:[#allocation4 + $0x8] sm:$0xff] %v4168
        %4201 = vst [vmem:[#allocation4 + $0x10] sm:$0xff] %v4169
        %4202 = vst [vmem:[#allocation4 + $0x18] sm:$0xff] %v4170
        %4203 = vst [vmem:[#allocation4 + $0x20] sm:$0xff] %v4171
        %4204 = vst [vmem:[#allocation4 + $0x28] sm:$0xff] %v4172
        %4205 = vst [vmem:[#allocation4 + $0x30] sm:$0xff] %v4173
        %4206 = vst [vmem:[#allocation4 + $0x38] sm:$0xff] %v4174
        %4207 = vst [vmem:[#allocation4 + $0x40] sm:$0xff] %v4175
        %4208 = vst [vmem:[#allocation4 + $0x48] sm:$0xff] %v4176
        %4209 = vst [vmem:[#allocation4 + $0x50] sm:$0xff] %v4177
        %4210 = vst [vmem:[#allocation4 + $0x58] sm:$0xff] %v4178
        %4211 = vst [vmem:[#allocation4 + $0x60] sm:$0xff] %v4179
        %4212 = vst [vmem:[#allocation4 + $0x68] sm:$0xff] %v4180
        %4213 = vst [vmem:[#allocation4 + $0x70] sm:$0xff] %v4181
        %4214 = vst [vmem:[#allocation4 + $0x78] sm:$0xff] %v4182
        %4215 = vst [vmem:[#allocation4 + $0x80] sm:$0xff] %v4183
        %4216 = vst [vmem:[#allocation4 + $0x88] sm:$0xff] %v4184
        %4217 = vst [vmem:[#allocation4 + $0x90] sm:$0xff] %v4185
        %4218 = vst [vmem:[#allocation4 + $0x98] sm:$0xff] %v4186
        %4219 = vst [vmem:[#allocation4 + $0xa0] sm:$0xff] %v4187
        %4220 = vst [vmem:[#allocation4 + $0xa8] sm:$0xff] %v4188
        %4221 = vst [vmem:[#allocation4 + $0xb0] sm:$0xff] %v4189
        %4222 = vst [vmem:[#allocation4 + $0xb8] sm:$0xff] %v4190
        %4223 = vst [vmem:[#allocation4 + $0xc0] sm:$0xff] %v4191
        %4224 = vst [vmem:[#allocation4 + $0xc8] sm:$0xff] %v4192
        %4225 = vst [vmem:[#allocation4 + $0xd0] sm:$0xff] %v4193
        %4226 = vst [vmem:[#allocation4 + $0xd8] sm:$0xff] %v4194
        %4227 = vst [vmem:[#allocation4 + $0xe0] sm:$0xff] %v4195
        %4228 = vst [vmem:[#allocation4 + $0xe8] sm:$0xff] %v4196
        %4229 = vst [vmem:[#allocation4 + $0xf0] sm:$0xff] %v4197
        %4230 = vst [vmem:[#allocation4 + $0xf8] sm:$0xff] %v4198
        %v4231 = vld [vmem:[%s3313] sm:$0xff]
        %v4232 = vld [vmem:[%s3313 + $0x8] sm:$0xff]
        %v4233 = vld [vmem:[%s3313 + $0x18] sm:$0xff]
        %v4234 = vld [vmem:[%s3313 + $0x20] sm:$0xff]
        %v4235 = vld [vmem:[%s3313 + $0x30] sm:$0xff]
        %v4236 = vld [vmem:[%s3313 + $0x38] sm:$0xff]
        %v4237 = vld [vmem:[%s3313 + $0x48] sm:$0xff]
        %v4238 = vld [vmem:[%s3313 + $0x50] sm:$0xff]
        %v4239 = vld [vmem:[%s3313 + $0x60] sm:$0xff]
        %v4240 = vld [vmem:[%s3313 + $0x68] sm:$0xff]
        %v4241 = vld [vmem:[%s3313 + $0x78] sm:$0xff]
        %v4242 = vld [vmem:[%s3313 + $0x80] sm:$0xff]
        %v4243 = vld [vmem:[%s3313 + $0x90] sm:$0xff]
        %v4244 = vld [vmem:[%s3313 + $0x98] sm:$0xff]
        %v4245 = vld [vmem:[%s3313 + $0xa8] sm:$0xff]
        %v4246 = vld [vmem:[%s3313 + $0xb0] sm:$0xff]
        %v4247 = vld [vmem:[%s3313 + $0xc0] sm:$0xff]
        %v4248 = vld [vmem:[%s3313 + $0xc8] sm:$0xff]
        %v4249 = vld [vmem:[%s3313 + $0xd8] sm:$0xff]
        %v4250 = vld [vmem:[%s3313 + $0xe0] sm:$0xff]
        %v4251 = vld [vmem:[%s3313 + $0xf0] sm:$0xff]
        %v4252 = vld [vmem:[%s3313 + $0xf8] sm:$0xff]
        %v4253 = vld [vmem:[%s3313 + $0x108] sm:$0xff]
        %v4254 = vld [vmem:[%s3313 + $0x110] sm:$0xff]
        %v4255 = vld [vmem:[%s3313 + $0x120] sm:$0xff]
        %v4256 = vld [vmem:[%s3313 + $0x128] sm:$0xff]
        %v4257 = vld [vmem:[%s3313 + $0x138] sm:$0xff]
        %v4258 = vld [vmem:[%s3313 + $0x140] sm:$0xff]
        %v4259 = vld [vmem:[%s3313 + $0x150] sm:$0xff]
        %v4260 = vld [vmem:[%s3313 + $0x158] sm:$0xff]
        %v4261 = vld [vmem:[%s3313 + $0x168] sm:$0xff]
        %v4262 = vld [vmem:[%s3313 + $0x170] sm:$0xff]
        %v4263 = vpack.c.bf16 %v4232, %v4231
        %v4264 = vpack.c.bf16 %v4234, %v4233
        %v4265 = vpack.c.bf16 %v4236, %v4235
        %v4266 = vpack.c.bf16 %v4238, %v4237
        %v4267 = vpack.c.bf16 %v4240, %v4239
        %v4268 = vpack.c.bf16 %v4242, %v4241
        %v4269 = vpack.c.bf16 %v4244, %v4243
        %v4270 = vpack.c.bf16 %v4246, %v4245
        %v4271 = vpack.c.bf16 %v4248, %v4247
        %v4272 = vpack.c.bf16 %v4250, %v4249
        %v4273 = vpack.c.bf16 %v4252, %v4251
        %v4274 = vpack.c.bf16 %v4254, %v4253
        %v4275 = vpack.c.bf16 %v4256, %v4255
        %v4276 = vpack.c.bf16 %v4258, %v4257
        %v4277 = vpack.c.bf16 %v4260, %v4259
        %v4278 = vpack.c.bf16 %v4262, %v4261
        %s4279 = scalar_lea.vmem [#allocation10], 192
        %v4280 = vld [vmem:[%s4279] sm:$0xf]
        %v4281 = vld [vmem:[%s4279 + $0x4] sm:$0xf]
        %v4282 = vld [vmem:[%s4279 + $0x8] sm:$0xf]
        %v4283 = vld [vmem:[%s4279 + $0xc] sm:$0xf]
        %v4284 = vld [vmem:[%s4279 + $0x10] sm:$0xf]
        %v4285 = vld [vmem:[%s4279 + $0x14] sm:$0xf]
        %v4286 = vld [vmem:[%s4279 + $0x18] sm:$0xf]
        %v4287 = vld [vmem:[%s4279 + $0x1c] sm:$0xf]
        %v4288 = vld [vmem:[%s4279 + $0x20] sm:$0xf]
        %v4289 = vld [vmem:[%s4279 + $0x24] sm:$0xf]
        %v4290 = vld [vmem:[%s4279 + $0x28] sm:$0xf]
        %v4291 = vld [vmem:[%s4279 + $0x2c] sm:$0xf]
        %v4292 = vld [vmem:[%s4279 + $0x30] sm:$0xf]
        %v4293 = vld [vmem:[%s4279 + $0x34] sm:$0xf]
        %v4294 = vld [vmem:[%s4279 + $0x38] sm:$0xf]
        %v4295 = vld [vmem:[%s4279 + $0x3c] sm:$0xf]
        %v4296 = vld [vmem:[%s3313 + $0x1] sm:$0xff]
        %v4297 = vld [vmem:[%s3313 + $0x9] sm:$0xff]
        %v4298 = vld [vmem:[%s3313 + $0x19] sm:$0xff]
        %v4299 = vld [vmem:[%s3313 + $0x21] sm:$0xff]
        %v4300 = vld [vmem:[%s3313 + $0x31] sm:$0xff]
        %v4301 = vld [vmem:[%s3313 + $0x39] sm:$0xff]
        %v4302 = vld [vmem:[%s3313 + $0x49] sm:$0xff]
        %v4303 = vld [vmem:[%s3313 + $0x51] sm:$0xff]
        %v4304 = vld [vmem:[%s3313 + $0x61] sm:$0xff]
        %v4305 = vld [vmem:[%s3313 + $0x69] sm:$0xff]
        %v4306 = vld [vmem:[%s3313 + $0x79] sm:$0xff]
        %v4307 = vld [vmem:[%s3313 + $0x81] sm:$0xff]
        %v4308 = vld [vmem:[%s3313 + $0x91] sm:$0xff]
        %v4309 = vld [vmem:[%s3313 + $0x99] sm:$0xff]
        %v4310 = vld [vmem:[%s3313 + $0xa9] sm:$0xff]
        %v4311 = vld [vmem:[%s3313 + $0xb1] sm:$0xff]
        %v4312 = vld [vmem:[%s3313 + $0xc1] sm:$0xff]
        %v4313 = vld [vmem:[%s3313 + $0xc9] sm:$0xff]
        %v4314 = vld [vmem:[%s3313 + $0xd9] sm:$0xff]
        %v4315 = vld [vmem:[%s3313 + $0xe1] sm:$0xff]
        %v4316 = vld [vmem:[%s3313 + $0xf1] sm:$0xff]
        %v4317 = vld [vmem:[%s3313 + $0xf9] sm:$0xff]
        %v4318 = vld [vmem:[%s3313 + $0x109] sm:$0xff]
        %v4319 = vld [vmem:[%s3313 + $0x111] sm:$0xff]
        %v4320 = vld [vmem:[%s3313 + $0x121] sm:$0xff]
        %v4321 = vld [vmem:[%s3313 + $0x129] sm:$0xff]
        %v4322 = vld [vmem:[%s3313 + $0x139] sm:$0xff]
        %v4323 = vld [vmem:[%s3313 + $0x141] sm:$0xff]
        %v4324 = vld [vmem:[%s3313 + $0x151] sm:$0xff]
        %v4325 = vld [vmem:[%s3313 + $0x159] sm:$0xff]
        %v4326 = vld [vmem:[%s3313 + $0x169] sm:$0xff]
        %v4327 = vld [vmem:[%s3313 + $0x171] sm:$0xff]
        %v4328 = vpack.c.bf16 %v4297, %v4296
        %v4329 = vpack.c.bf16 %v4299, %v4298
        %v4330 = vpack.c.bf16 %v4301, %v4300
        %v4331 = vpack.c.bf16 %v4303, %v4302
        %v4332 = vpack.c.bf16 %v4305, %v4304
        %v4333 = vpack.c.bf16 %v4307, %v4306
        %v4334 = vpack.c.bf16 %v4309, %v4308
        %v4335 = vpack.c.bf16 %v4311, %v4310
        %v4336 = vpack.c.bf16 %v4313, %v4312
        %v4337 = vpack.c.bf16 %v4315, %v4314
        %v4338 = vpack.c.bf16 %v4317, %v4316
        %v4339 = vpack.c.bf16 %v4319, %v4318
        %v4340 = vpack.c.bf16 %v4321, %v4320
        %v4341 = vpack.c.bf16 %v4323, %v4322
        %v4342 = vpack.c.bf16 %v4325, %v4324
        %v4343 = vpack.c.bf16 %v4327, %v4326
        %s4344 = scalar_lea.vmem [#allocation10], 256
        %v4345 = vld [vmem:[%s4344] sm:$0xf]
        %v4346 = vld [vmem:[%s4344 + $0x4] sm:$0xf]
        %v4347 = vld [vmem:[%s4344 + $0x8] sm:$0xf]
        %v4348 = vld [vmem:[%s4344 + $0xc] sm:$0xf]
        %v4349 = vld [vmem:[%s4344 + $0x10] sm:$0xf]
        %v4350 = vld [vmem:[%s4344 + $0x14] sm:$0xf]
        %v4351 = vld [vmem:[%s4344 + $0x18] sm:$0xf]
        %v4352 = vld [vmem:[%s4344 + $0x1c] sm:$0xf]
        %v4353 = vld [vmem:[%s4344 + $0x20] sm:$0xf]
        %v4354 = vld [vmem:[%s4344 + $0x24] sm:$0xf]
        %v4355 = vld [vmem:[%s4344 + $0x28] sm:$0xf]
        %v4356 = vld [vmem:[%s4344 + $0x2c] sm:$0xf]
        %v4357 = vld [vmem:[%s4344 + $0x30] sm:$0xf]
        %v4358 = vld [vmem:[%s4344 + $0x34] sm:$0xf]
        %v4359 = vld [vmem:[%s4344 + $0x38] sm:$0xf]
        %v4360 = vld [vmem:[%s4344 + $0x3c] sm:$0xf]
        %v4377 = vunpack.c.l.b16 %v4345
        %v4378 = vunpack.c.l.b16 %v4346
        %v4379 = vunpack.c.l.b16 %v4347
        %v4380 = vunpack.c.l.b16 %v4348
        %v4381 = vunpack.c.l.b16 %v4349
        %v4382 = vunpack.c.l.b16 %v4350
        %v4383 = vunpack.c.l.b16 %v4351
        %v4384 = vunpack.c.l.b16 %v4352
        %v4385 = vunpack.c.l.b16 %v4353
        %v4386 = vunpack.c.l.b16 %v4354
        %v4387 = vunpack.c.l.b16 %v4355
        %v4388 = vunpack.c.l.b16 %v4356
        %v4389 = vunpack.c.l.b16 %v4357
        %v4390 = vunpack.c.l.b16 %v4358
        %v4391 = vunpack.c.l.b16 %v4359
        %v4392 = vunpack.c.l.b16 %v4360
        %v4393 = vpack.c.b16 %v4378, %v4377
        %v4394 = vpack.c.b16 %v4380, %v4379
        %v4395 = vpack.c.b16 %v4382, %v4381
        %v4396 = vpack.c.b16 %v4384, %v4383
        %v4397 = vpack.c.b16 %v4386, %v4385
        %v4398 = vpack.c.b16 %v4388, %v4387
        %v4399 = vpack.c.b16 %v4390, %v4389
        %v4400 = vpack.c.b16 %v4392, %v4391
        %4409 = vmatprep.subr.bf16.mxu0 0
        %4410 = vmatpush1.bf16.msra.mxu0 %v4393
        %4411 = vmatprep.subr.bf16.mxu0 0
        %4412 = vmatpush1.bf16.msra.mxu0 %v4394
        %4413 = vmatprep.subr.bf16.mxu0 0
        %4414 = vmatpush1.bf16.msra.mxu0 %v4395
        %4415 = vmatprep.subr.bf16.mxu0 0
        %4416 = vmatpush1.bf16.msra.mxu0 %v4396
        %4417 = vmatprep.subr.bf16.mxu0 0
        %4418 = vmatpush1.bf16.msra.mxu0 %v4397
        %4419 = vmatprep.subr.bf16.mxu0 0
        %4420 = vmatpush1.bf16.msra.mxu0 %v4398
        %4421 = vmatprep.subr.bf16.mxu0 0
        %4422 = vmatpush1.bf16.msra.mxu0 %v4399
        %4423 = vmatprep.subr.bf16.mxu0 0
        %4424 = vmatpush1.bf16.msra.mxu0 %v4400
        %4425 = vmatprep.subr.bf16.mxu0 0
        %4426 = vmatpush1.bf16.msra.mxu0 0
        %4427 = vmatprep.subr.bf16.mxu0 0
        %4428 = vmatpush1.bf16.msra.mxu0 0
        %4429 = vmatprep.subr.bf16.mxu0 0
        %4430 = vmatpush1.bf16.msra.mxu0 0
        %4431 = vmatprep.subr.bf16.mxu0 0
        %4432 = vmatpush1.bf16.msra.mxu0 0
        %4433 = vmatprep.subr.bf16.mxu0 0
        %4434 = vmatpush1.bf16.msra.mxu0 0
        %4435 = vmatprep.subr.bf16.mxu0 0
        %4436 = vmatpush1.bf16.msra.mxu0 0
        %4437 = vmatprep.subr.bf16.mxu0 0
        %4438 = vmatpush1.bf16.msra.mxu0 0
        %4439 = vmatprep.subr.bf16.mxu0 0
        %4440 = vmatpush1.bf16.msra.mxu0 0
        %4441 = vmatprep.mubr.bf16.mxu0 0
        %4442 = vmatmul.mubr.bf16.gmra.mrb[0].mxu0 %v4328
        %v4443 = vpop.f32.mrb[0].mxu0
        %v4444 = vadd.f32 0.0, %v4443
        %v4445 = vpop.f32.mrb[0].mxu0
        %v4446 = vpop.f32.mrb[0].mxu0
        %v4447 = vadd.f32 0.0, %v4446
        %v4448 = vpop.f32.mrb[0].mxu0
        %4449 = vmatprep.mubr.bf16.mxu0 0
        %4450 = vmatmul.mubr.bf16.gmra.mrb[0].mxu0 %v4329
        %v4451 = vpop.f32.mrb[0].mxu0
        %v4452 = vadd.f32 0.0, %v4451
        %v4453 = vpop.f32.mrb[0].mxu0
        %v4454 = vpop.f32.mrb[0].mxu0
        %v4455 = vadd.f32 0.0, %v4454
        %v4456 = vpop.f32.mrb[0].mxu0
        %4457 = vmatprep.mubr.bf16.mxu0 0
        %4458 = vmatmul.mubr.bf16.gmra.mrb[0].mxu0 %v4330
        %v4459 = vpop.f32.mrb[0].mxu0
        %v4460 = vadd.f32 0.0, %v4459
        %v4461 = vpop.f32.mrb[0].mxu0
        %v4462 = vpop.f32.mrb[0].mxu0
        %v4463 = vadd.f32 0.0, %v4462
        %v4464 = vpop.f32.mrb[0].mxu0
        %4465 = vmatprep.mubr.bf16.mxu0 0
        %4466 = vmatmul.mubr.bf16.gmra.mrb[0].mxu0 %v4331
        %v4467 = vpop.f32.mrb[0].mxu0
        %v4468 = vadd.f32 0.0, %v4467
        %v4469 = vpop.f32.mrb[0].mxu0
        %v4470 = vpop.f32.mrb[0].mxu0
        %v4471 = vadd.f32 0.0, %v4470
        %v4472 = vpop.f32.mrb[0].mxu0
        %4473 = vmatprep.mubr.bf16.mxu0 0
        %4474 = vmatmul.mubr.bf16.gmra.mrb[0].mxu0 %v4332
        %v4475 = vpop.f32.mrb[0].mxu0
        %v4476 = vadd.f32 0.0, %v4475
        %v4477 = vpop.f32.mrb[0].mxu0
        %v4478 = vpop.f32.mrb[0].mxu0
        %v4479 = vadd.f32 0.0, %v4478
        %v4480 = vpop.f32.mrb[0].mxu0
        %4481 = vmatprep.mubr.bf16.mxu0 0
        %4482 = vmatmul.mubr.bf16.gmra.mrb[0].mxu0 %v4333
        %v4483 = vpop.f32.mrb[0].mxu0
        %v4484 = vadd.f32 0.0, %v4483
        %v4485 = vpop.f32.mrb[0].mxu0
        %v4486 = vpop.f32.mrb[0].mxu0
        %v4487 = vadd.f32 0.0, %v4486
        %v4488 = vpop.f32.mrb[0].mxu0
        %4489 = vmatprep.mubr.bf16.mxu0 0
        %4490 = vmatmul.mubr.bf16.gmra.mrb[0].mxu0 %v4334
        %v4491 = vpop.f32.mrb[0].mxu0
        %v4492 = vadd.f32 0.0, %v4491
        %v4493 = vpop.f32.mrb[0].mxu0
        %v4494 = vpop.f32.mrb[0].mxu0
        %v4495 = vadd.f32 0.0, %v4494
        %v4496 = vpop.f32.mrb[0].mxu0
        %4497 = vmatprep.mubr.bf16.mxu0 0
        %4498 = vmatmul.mubr.bf16.gmra.mrb[0].mxu0 %v4335
        %v4499 = vpop.f32.mrb[0].mxu0
        %v4500 = vadd.f32 0.0, %v4499
        %v4501 = vpop.f32.mrb[0].mxu0
        %v4502 = vpop.f32.mrb[0].mxu0
        %v4503 = vadd.f32 0.0, %v4502
        %v4504 = vpop.f32.mrb[0].mxu0
        %4505 = vmatprep.mubr.bf16.mxu0 0
        %4506 = vmatmul.mubr.bf16.gmra.mrb[0].mxu0 %v4336
        %v4507 = vpop.f32.mrb[0].mxu0
        %v4508 = vadd.f32 0.0, %v4507
        %v4509 = vpop.f32.mrb[0].mxu0
        %v4510 = vpop.f32.mrb[0].mxu0
        %v4511 = vadd.f32 0.0, %v4510
        %v4512 = vpop.f32.mrb[0].mxu0
        %4513 = vmatprep.mubr.bf16.mxu0 0
        %4514 = vmatmul.mubr.bf16.gmra.mrb[0].mxu0 %v4337
        %v4515 = vpop.f32.mrb[0].mxu0
        %v4516 = vadd.f32 0.0, %v4515
        %v4517 = vpop.f32.mrb[0].mxu0
        %v4518 = vpop.f32.mrb[0].mxu0
        %v4519 = vadd.f32 0.0, %v4518
        %v4520 = vpop.f32.mrb[0].mxu0
        %4521 = vmatprep.mubr.bf16.mxu0 0
        %4522 = vmatmul.mubr.bf16.gmra.mrb[0].mxu0 %v4338
        %v4523 = vpop.f32.mrb[0].mxu0
        %v4524 = vadd.f32 0.0, %v4523
        %v4525 = vpop.f32.mrb[0].mxu0
        %v4526 = vpop.f32.mrb[0].mxu0
        %v4527 = vadd.f32 0.0, %v4526
        %v4528 = vpop.f32.mrb[0].mxu0
        %4529 = vmatprep.mubr.bf16.mxu0 0
        %4530 = vmatmul.mubr.bf16.gmra.mrb[0].mxu0 %v4339
        %v4531 = vpop.f32.mrb[0].mxu0
        %v4532 = vadd.f32 0.0, %v4531
        %v4533 = vpop.f32.mrb[0].mxu0
        %v4534 = vpop.f32.mrb[0].mxu0
        %v4535 = vadd.f32 0.0, %v4534
        %v4536 = vpop.f32.mrb[0].mxu0
        %4537 = vmatprep.mubr.bf16.mxu0 0
        %4538 = vmatmul.mubr.bf16.gmra.mrb[0].mxu0 %v4340
        %v4539 = vpop.f32.mrb[0].mxu0
        %v4540 = vadd.f32 0.0, %v4539
        %v4541 = vpop.f32.mrb[0].mxu0
        %v4542 = vpop.f32.mrb[0].mxu0
        %v4543 = vadd.f32 0.0, %v4542
        %v4544 = vpop.f32.mrb[0].mxu0
        %4545 = vmatprep.mubr.bf16.mxu0 0
        %4546 = vmatmul.mubr.bf16.gmra.mrb[0].mxu0 %v4341
        %v4547 = vpop.f32.mrb[0].mxu0
        %v4548 = vadd.f32 0.0, %v4547
        %v4549 = vpop.f32.mrb[0].mxu0
        %v4550 = vpop.f32.mrb[0].mxu0
        %v4551 = vadd.f32 0.0, %v4550
        %v4552 = vpop.f32.mrb[0].mxu0
        %4553 = vmatprep.mubr.bf16.mxu0 0
        %4554 = vmatmul.mubr.bf16.gmra.mrb[0].mxu0 %v4342
        %v4555 = vpop.f32.mrb[0].mxu0
        %v4556 = vadd.f32 0.0, %v4555
        %v4557 = vpop.f32.mrb[0].mxu0
        %v4558 = vpop.f32.mrb[0].mxu0
        %v4559 = vadd.f32 0.0, %v4558
        %v4560 = vpop.f32.mrb[0].mxu0
        %4561 = vmatprep.mubr.bf16.mxu0 0
        %4562 = vmatmul.mubr.bf16.gmra.mrb[0].mxu0 %v4343
        %v4563 = vpop.f32.mrb[0].mxu0
        %v4564 = vadd.f32 0.0, %v4563
        %v4565 = vpop.f32.mrb[0].mxu0
        %v4566 = vpop.f32.mrb[0].mxu0
        %v4567 = vadd.f32 0.0, %v4566
        %v4568 = vpop.f32.mrb[0].mxu0
        %4569 = vdwg.mxu0
        %v4586 = vunpack.c.l.b16 %v4280
        %v4587 = vunpack.c.l.b16 %v4281
        %v4588 = vunpack.c.l.b16 %v4282
        %v4589 = vunpack.c.l.b16 %v4283
        %v4590 = vunpack.c.l.b16 %v4284
        %v4591 = vunpack.c.l.b16 %v4285
        %v4592 = vunpack.c.l.b16 %v4286
        %v4593 = vunpack.c.l.b16 %v4287
        %v4594 = vunpack.c.l.b16 %v4288
        %v4595 = vunpack.c.l.b16 %v4289
        %v4596 = vunpack.c.l.b16 %v4290
        %v4597 = vunpack.c.l.b16 %v4291
        %v4598 = vunpack.c.l.b16 %v4292
        %v4599 = vunpack.c.l.b16 %v4293
        %v4600 = vunpack.c.l.b16 %v4294
        %v4601 = vunpack.c.l.b16 %v4295
        %v4602 = vpack.c.b16 %v4587, %v4586
        %v4603 = vpack.c.b16 %v4589, %v4588
        %v4604 = vpack.c.b16 %v4591, %v4590
        %v4605 = vpack.c.b16 %v4593, %v4592
        %v4606 = vpack.c.b16 %v4595, %v4594
        %v4607 = vpack.c.b16 %v4597, %v4596
        %v4608 = vpack.c.b16 %v4599, %v4598
        %v4609 = vpack.c.b16 %v4601, %v4600
        %4618 = vmatprep.subr.bf16.mxu0 0
        %4619 = vmatpush1.bf16.msra.mxu0 %v4602
        %4620 = vmatprep.subr.bf16.mxu0 0
        %4621 = vmatpush1.bf16.msra.mxu0 %v4603
        %4622 = vmatprep.subr.bf16.mxu0 0
        %4623 = vmatpush1.bf16.msra.mxu0 %v4604
        %4624 = vmatprep.subr.bf16.mxu0 0
        %4625 = vmatpush1.bf16.msra.mxu0 %v4605
        %4626 = vmatprep.subr.bf16.mxu0 0
        %4627 = vmatpush1.bf16.msra.mxu0 %v4606
        %4628 = vmatprep.subr.bf16.mxu0 0
        %4629 = vmatpush1.bf16.msra.mxu0 %v4607
        %4630 = vmatprep.subr.bf16.mxu0 0
        %4631 = vmatpush1.bf16.msra.mxu0 %v4608
        %4632 = vmatprep.subr.bf16.mxu0 0
        %4633 = vmatpush1.bf16.msra.mxu0 %v4609
        %4634 = vmatprep.subr.bf16.mxu0 0
        %4635 = vmatpush1.bf16.msra.mxu0 0
        %4636 = vmatprep.subr.bf16.mxu0 0
        %4637 = vmatpush1.bf16.msra.mxu0 0
        %4638 = vmatprep.subr.bf16.mxu0 0
        %4639 = vmatpush1.bf16.msra.mxu0 0
        %4640 = vmatprep.subr.bf16.mxu0 0
        %4641 = vmatpush1.bf16.msra.mxu0 0
        %4642 = vmatprep.subr.bf16.mxu0 0
        %4643 = vmatpush1.bf16.msra.mxu0 0
        %4644 = vmatprep.subr.bf16.mxu0 0
        %4645 = vmatpush1.bf16.msra.mxu0 0
        %4646 = vmatprep.subr.bf16.mxu0 0
        %4647 = vmatpush1.bf16.msra.mxu0 0
        %4648 = vmatprep.subr.bf16.mxu0 0
        %4649 = vmatpush1.bf16.msra.mxu0 0
        %4650 = vmatprep.mubr.bf16.mxu0 0
        %4651 = vmatmul.mubr.bf16.gmra.mrb[0].mxu0 %v4263
        %v4652 = vpop.f32.mrb[0].mxu0
        %v4653 = vadd.f32 %v4444, %v4652
        %v4654 = vpop.f32.mrb[0].mxu0
        %v4655 = vpop.f32.mrb[0].mxu0
        %v4656 = vadd.f32 %v4447, %v4655
        %v4657 = vpop.f32.mrb[0].mxu0
        %4658 = vmatprep.mubr.bf16.mxu0 0
        %4659 = vmatmul.mubr.bf16.gmra.mrb[0].mxu0 %v4264
        %v4660 = vpop.f32.mrb[0].mxu0
        %v4661 = vadd.f32 %v4452, %v4660
        %v4662 = vpop.f32.mrb[0].mxu0
        %v4663 = vpop.f32.mrb[0].mxu0
        %v4664 = vadd.f32 %v4455, %v4663
        %v4665 = vpop.f32.mrb[0].mxu0
        %4666 = vmatprep.mubr.bf16.mxu0 0
        %4667 = vmatmul.mubr.bf16.gmra.mrb[0].mxu0 %v4265
        %v4668 = vpop.f32.mrb[0].mxu0
        %v4669 = vadd.f32 %v4460, %v4668
        %v4670 = vpop.f32.mrb[0].mxu0
        %v4671 = vpop.f32.mrb[0].mxu0
        %v4672 = vadd.f32 %v4463, %v4671
        %v4673 = vpop.f32.mrb[0].mxu0
        %4674 = vmatprep.mubr.bf16.mxu0 0
        %4675 = vmatmul.mubr.bf16.gmra.mrb[0].mxu0 %v4266
        %v4676 = vpop.f32.mrb[0].mxu0
        %v4677 = vadd.f32 %v4468, %v4676
        %v4678 = vpop.f32.mrb[0].mxu0
        %v4679 = vpop.f32.mrb[0].mxu0
        %v4680 = vadd.f32 %v4471, %v4679
        %v4681 = vpop.f32.mrb[0].mxu0
        %4682 = vmatprep.mubr.bf16.mxu0 0
        %4683 = vmatmul.mubr.bf16.gmra.mrb[0].mxu0 %v4267
        %v4684 = vpop.f32.mrb[0].mxu0
        %v4685 = vadd.f32 %v4476, %v4684
        %v4686 = vpop.f32.mrb[0].mxu0
        %v4687 = vpop.f32.mrb[0].mxu0
        %v4688 = vadd.f32 %v4479, %v4687
        %v4689 = vpop.f32.mrb[0].mxu0
        %4690 = vmatprep.mubr.bf16.mxu0 0
        %4691 = vmatmul.mubr.bf16.gmra.mrb[0].mxu0 %v4268
        %v4692 = vpop.f32.mrb[0].mxu0
        %v4693 = vadd.f32 %v4484, %v4692
        %v4694 = vpop.f32.mrb[0].mxu0
        %v4695 = vpop.f32.mrb[0].mxu0
        %v4696 = vadd.f32 %v4487, %v4695
        %v4697 = vpop.f32.mrb[0].mxu0
        %4698 = vmatprep.mubr.bf16.mxu0 0
        %4699 = vmatmul.mubr.bf16.gmra.mrb[0].mxu0 %v4269
        %v4700 = vpop.f32.mrb[0].mxu0
        %v4701 = vadd.f32 %v4492, %v4700
        %v4702 = vpop.f32.mrb[0].mxu0
        %v4703 = vpop.f32.mrb[0].mxu0
        %v4704 = vadd.f32 %v4495, %v4703
        %v4705 = vpop.f32.mrb[0].mxu0
        %4706 = vmatprep.mubr.bf16.mxu0 0
        %4707 = vmatmul.mubr.bf16.gmra.mrb[0].mxu0 %v4270
        %v4708 = vpop.f32.mrb[0].mxu0
        %v4709 = vadd.f32 %v4500, %v4708
        %v4710 = vpop.f32.mrb[0].mxu0
        %v4711 = vpop.f32.mrb[0].mxu0
        %v4712 = vadd.f32 %v4503, %v4711
        %v4713 = vpop.f32.mrb[0].mxu0
        %4714 = vmatprep.mubr.bf16.mxu0 0
        %4715 = vmatmul.mubr.bf16.gmra.mrb[0].mxu0 %v4271
        %v4716 = vpop.f32.mrb[0].mxu0
        %v4717 = vadd.f32 %v4508, %v4716
        %v4718 = vpop.f32.mrb[0].mxu0
        %v4719 = vpop.f32.mrb[0].mxu0
        %v4720 = vadd.f32 %v4511, %v4719
        %v4721 = vpop.f32.mrb[0].mxu0
        %4722 = vmatprep.mubr.bf16.mxu0 0
        %4723 = vmatmul.mubr.bf16.gmra.mrb[0].mxu0 %v4272
        %v4724 = vpop.f32.mrb[0].mxu0
        %v4725 = vadd.f32 %v4516, %v4724
        %v4726 = vpop.f32.mrb[0].mxu0
        %v4727 = vpop.f32.mrb[0].mxu0
        %v4728 = vadd.f32 %v4519, %v4727
        %v4729 = vpop.f32.mrb[0].mxu0
        %4730 = vmatprep.mubr.bf16.mxu0 0
        %4731 = vmatmul.mubr.bf16.gmra.mrb[0].mxu0 %v4273
        %v4732 = vpop.f32.mrb[0].mxu0
        %v4733 = vadd.f32 %v4524, %v4732
        %v4734 = vpop.f32.mrb[0].mxu0
        %v4735 = vpop.f32.mrb[0].mxu0
        %v4736 = vadd.f32 %v4527, %v4735
        %v4737 = vpop.f32.mrb[0].mxu0
        %4738 = vmatprep.mubr.bf16.mxu0 0
        %4739 = vmatmul.mubr.bf16.gmra.mrb[0].mxu0 %v4274
        %v4740 = vpop.f32.mrb[0].mxu0
        %v4741 = vadd.f32 %v4532, %v4740
        %v4742 = vpop.f32.mrb[0].mxu0
        %v4743 = vpop.f32.mrb[0].mxu0
        %v4744 = vadd.f32 %v4535, %v4743
        %v4745 = vpop.f32.mrb[0].mxu0
        %4746 = vmatprep.mubr.bf16.mxu0 0
        %4747 = vmatmul.mubr.bf16.gmra.mrb[0].mxu0 %v4275
        %v4748 = vpop.f32.mrb[0].mxu0
        %v4749 = vadd.f32 %v4540, %v4748
        %v4750 = vpop.f32.mrb[0].mxu0
        %v4751 = vpop.f32.mrb[0].mxu0
        %v4752 = vadd.f32 %v4543, %v4751
        %v4753 = vpop.f32.mrb[0].mxu0
        %4754 = vmatprep.mubr.bf16.mxu0 0
        %4755 = vmatmul.mubr.bf16.gmra.mrb[0].mxu0 %v4276
        %v4756 = vpop.f32.mrb[0].mxu0
        %v4757 = vadd.f32 %v4548, %v4756
        %v4758 = vpop.f32.mrb[0].mxu0
        %v4759 = vpop.f32.mrb[0].mxu0
        %v4760 = vadd.f32 %v4551, %v4759
        %v4761 = vpop.f32.mrb[0].mxu0
        %4762 = vmatprep.mubr.bf16.mxu0 0
        %4763 = vmatmul.mubr.bf16.gmra.mrb[0].mxu0 %v4277
        %v4764 = vpop.f32.mrb[0].mxu0
        %v4765 = vadd.f32 %v4556, %v4764
        %v4766 = vpop.f32.mrb[0].mxu0
        %v4767 = vpop.f32.mrb[0].mxu0
        %v4768 = vadd.f32 %v4559, %v4767
        %v4769 = vpop.f32.mrb[0].mxu0
        %4770 = vmatprep.mubr.bf16.mxu0 0
        %4771 = vmatmul.mubr.bf16.gmra.mrb[0].mxu0 %v4278
        %v4772 = vpop.f32.mrb[0].mxu0
        %v4773 = vadd.f32 %v4564, %v4772
        %v4774 = vpop.f32.mrb[0].mxu0
        %v4775 = vpop.f32.mrb[0].mxu0
        %v4776 = vadd.f32 %v4567, %v4775
        %v4777 = vpop.f32.mrb[0].mxu0
        %4778 = vdwg.mxu0
        %v4779 = vld [vmem:[%s3313 + $0x2] sm:$0xff]
        %v4780 = vld [vmem:[%s3313 + $0xa] sm:$0xff]
        %v4781 = vld [vmem:[%s3313 + $0x1a] sm:$0xff]
        %v4782 = vld [vmem:[%s3313 + $0x22] sm:$0xff]
        %v4783 = vld [vmem:[%s3313 + $0x32] sm:$0xff]
        %v4784 = vld [vmem:[%s3313 + $0x3a] sm:$0xff]
        %v4785 = vld [vmem:[%s3313 + $0x4a] sm:$0xff]
        %v4786 = vld [vmem:[%s3313 + $0x52] sm:$0xff]
        %v4787 = vld [vmem:[%s3313 + $0x62] sm:$0xff]
        %v4788 = vld [vmem:[%s3313 + $0x6a] sm:$0xff]
        %v4789 = vld [vmem:[%s3313 + $0x7a] sm:$0xff]
        %v4790 = vld [vmem:[%s3313 + $0x82] sm:$0xff]
        %v4791 = vld [vmem:[%s3313 + $0x92] sm:$0xff]
        %v4792 = vld [vmem:[%s3313 + $0x9a] sm:$0xff]
        %v4793 = vld [vmem:[%s3313 + $0xaa] sm:$0xff]
        %v4794 = vld [vmem:[%s3313 + $0xb2] sm:$0xff]
        %v4795 = vld [vmem:[%s3313 + $0xc2] sm:$0xff]
        %v4796 = vld [vmem:[%s3313 + $0xca] sm:$0xff]
        %v4797 = vld [vmem:[%s3313 + $0xda] sm:$0xff]
        %v4798 = vld [vmem:[%s3313 + $0xe2] sm:$0xff]
        %v4799 = vld [vmem:[%s3313 + $0xf2] sm:$0xff]
        %v4800 = vld [vmem:[%s3313 + $0xfa] sm:$0xff]
        %v4801 = vld [vmem:[%s3313 + $0x10a] sm:$0xff]
        %v4802 = vld [vmem:[%s3313 + $0x112] sm:$0xff]
        %v4803 = vld [vmem:[%s3313 + $0x122] sm:$0xff]
        %v4804 = vld [vmem:[%s3313 + $0x12a] sm:$0xff]
        %v4805 = vld [vmem:[%s3313 + $0x13a] sm:$0xff]
        %v4806 = vld [vmem:[%s3313 + $0x142] sm:$0xff]
        %v4807 = vld [vmem:[%s3313 + $0x152] sm:$0xff]
        %v4808 = vld [vmem:[%s3313 + $0x15a] sm:$0xff]
        %v4809 = vld [vmem:[%s3313 + $0x16a] sm:$0xff]
        %v4810 = vld [vmem:[%s3313 + $0x172] sm:$0xff]
        %v4811 = vpack.c.bf16 %v4780, %v4779
        %v4812 = vpack.c.bf16 %v4782, %v4781
        %v4813 = vpack.c.bf16 %v4784, %v4783
        %v4814 = vpack.c.bf16 %v4786, %v4785
        %v4815 = vpack.c.bf16 %v4788, %v4787
        %v4816 = vpack.c.bf16 %v4790, %v4789
        %v4817 = vpack.c.bf16 %v4792, %v4791
        %v4818 = vpack.c.bf16 %v4794, %v4793
        %v4819 = vpack.c.bf16 %v4796, %v4795
        %v4820 = vpack.c.bf16 %v4798, %v4797
        %v4821 = vpack.c.bf16 %v4800, %v4799
        %v4822 = vpack.c.bf16 %v4802, %v4801
        %v4823 = vpack.c.bf16 %v4804, %v4803
        %v4824 = vpack.c.bf16 %v4806, %v4805
        %v4825 = vpack.c.bf16 %v4808, %v4807
        %v4826 = vpack.c.bf16 %v4810, %v4809
        %s4827 = scalar_lea.vmem [#allocation10], 320
        %v4828 = vld [vmem:[%s4827] sm:$0xf]
        %v4829 = vld [vmem:[%s4827 + $0x4] sm:$0xf]
        %v4830 = vld [vmem:[%s4827 + $0x8] sm:$0xf]
        %v4831 = vld [vmem:[%s4827 + $0xc] sm:$0xf]
        %v4832 = vld [vmem:[%s4827 + $0x10] sm:$0xf]
        %v4833 = vld [vmem:[%s4827 + $0x14] sm:$0xf]
        %v4834 = vld [vmem:[%s4827 + $0x18] sm:$0xf]
        %v4835 = vld [vmem:[%s4827 + $0x1c] sm:$0xf]
        %v4836 = vld [vmem:[%s4827 + $0x20] sm:$0xf]
        %v4837 = vld [vmem:[%s4827 + $0x24] sm:$0xf]
        %v4838 = vld [vmem:[%s4827 + $0x28] sm:$0xf]
        %v4839 = vld [vmem:[%s4827 + $0x2c] sm:$0xf]
        %v4840 = vld [vmem:[%s4827 + $0x30] sm:$0xf]
        %v4841 = vld [vmem:[%s4827 + $0x34] sm:$0xf]
        %v4842 = vld [vmem:[%s4827 + $0x38] sm:$0xf]
        %v4843 = vld [vmem:[%s4827 + $0x3c] sm:$0xf]
        %v4860 = vunpack.c.l.b16 %v4828
        %v4861 = vunpack.c.l.b16 %v4829
        %v4862 = vunpack.c.l.b16 %v4830
        %v4863 = vunpack.c.l.b16 %v4831
        %v4864 = vunpack.c.l.b16 %v4832
        %v4865 = vunpack.c.l.b16 %v4833
        %v4866 = vunpack.c.l.b16 %v4834
        %v4867 = vunpack.c.l.b16 %v4835
        %v4868 = vunpack.c.l.b16 %v4836
        %v4869 = vunpack.c.l.b16 %v4837
        %v4870 = vunpack.c.l.b16 %v4838
        %v4871 = vunpack.c.l.b16 %v4839
        %v4872 = vunpack.c.l.b16 %v4840
        %v4873 = vunpack.c.l.b16 %v4841
        %v4874 = vunpack.c.l.b16 %v4842
        %v4875 = vunpack.c.l.b16 %v4843
        %v4876 = vpack.c.b16 %v4861, %v4860
        %v4877 = vpack.c.b16 %v4863, %v4862
        %v4878 = vpack.c.b16 %v4865, %v4864
        %v4879 = vpack.c.b16 %v4867, %v4866
        %v4880 = vpack.c.b16 %v4869, %v4868
        %v4881 = vpack.c.b16 %v4871, %v4870
        %v4882 = vpack.c.b16 %v4873, %v4872
        %v4883 = vpack.c.b16 %v4875, %v4874
        %4892 = vmatprep.subr.bf16.mxu0 0
        %4893 = vmatpush1.bf16.msra.mxu0 %v4876
        %4894 = vmatprep.subr.bf16.mxu0 0
        %4895 = vmatpush1.bf16.msra.mxu0 %v4877
        %4896 = vmatprep.subr.bf16.mxu0 0
        %4897 = vmatpush1.bf16.msra.mxu0 %v4878
        %4898 = vmatprep.subr.bf16.mxu0 0
        %4899 = vmatpush1.bf16.msra.mxu0 %v4879
        %4900 = vmatprep.subr.bf16.mxu0 0
        %4901 = vmatpush1.bf16.msra.mxu0 %v4880
        %4902 = vmatprep.subr.bf16.mxu0 0
        %4903 = vmatpush1.bf16.msra.mxu0 %v4881
        %4904 = vmatprep.subr.bf16.mxu0 0
        %4905 = vmatpush1.bf16.msra.mxu0 %v4882
        %4906 = vmatprep.subr.bf16.mxu0 0
        %4907 = vmatpush1.bf16.msra.mxu0 %v4883
        %4908 = vmatprep.subr.bf16.mxu0 0
        %4909 = vmatpush1.bf16.msra.mxu0 0
        %4910 = vmatprep.subr.bf16.mxu0 0
        %4911 = vmatpush1.bf16.msra.mxu0 0
        %4912 = vmatprep.subr.bf16.mxu0 0
        %4913 = vmatpush1.bf16.msra.mxu0 0
        %4914 = vmatprep.subr.bf16.mxu0 0
        %4915 = vmatpush1.bf16.msra.mxu0 0
        %4916 = vmatprep.subr.bf16.mxu0 0
        %4917 = vmatpush1.bf16.msra.mxu0 0
        %4918 = vmatprep.subr.bf16.mxu0 0
        %4919 = vmatpush1.bf16.msra.mxu0 0
        %4920 = vmatprep.subr.bf16.mxu0 0
        %4921 = vmatpush1.bf16.msra.mxu0 0
        %4922 = vmatprep.subr.bf16.mxu0 0
        %4923 = vmatpush1.bf16.msra.mxu0 0
        %4924 = vmatprep.mubr.bf16.mxu0 0
        %4925 = vmatmul.mubr.bf16.gmra.mrb[0].mxu0 %v4811
        %v4926 = vpop.f32.mrb[0].mxu0
        %v4927 = vadd.f32 0.0, %v4926
        %v4928 = vpop.f32.mrb[0].mxu0
        %v4929 = vpop.f32.mrb[0].mxu0
        %v4930 = vadd.f32 0.0, %v4929
        %v4931 = vpop.f32.mrb[0].mxu0
        %4932 = vmatprep.mubr.bf16.mxu0 0
        %4933 = vmatmul.mubr.bf16.gmra.mrb[0].mxu0 %v4812
        %v4934 = vpop.f32.mrb[0].mxu0
        %v4935 = vadd.f32 0.0, %v4934
        %v4936 = vpop.f32.mrb[0].mxu0
        %v4937 = vpop.f32.mrb[0].mxu0
        %v4938 = vadd.f32 0.0, %v4937
        %v4939 = vpop.f32.mrb[0].mxu0
        %4940 = vmatprep.mubr.bf16.mxu0 0
        %4941 = vmatmul.mubr.bf16.gmra.mrb[0].mxu0 %v4813
        %v4942 = vpop.f32.mrb[0].mxu0
        %v4943 = vadd.f32 0.0, %v4942
        %v4944 = vpop.f32.mrb[0].mxu0
        %v4945 = vpop.f32.mrb[0].mxu0
        %v4946 = vadd.f32 0.0, %v4945
        %v4947 = vpop.f32.mrb[0].mxu0
        %4948 = vmatprep.mubr.bf16.mxu0 0
        %4949 = vmatmul.mubr.bf16.gmra.mrb[0].mxu0 %v4814
        %v4950 = vpop.f32.mrb[0].mxu0
        %v4951 = vadd.f32 0.0, %v4950
        %v4952 = vpop.f32.mrb[0].mxu0
        %v4953 = vpop.f32.mrb[0].mxu0
        %v4954 = vadd.f32 0.0, %v4953
        %v4955 = vpop.f32.mrb[0].mxu0
        %4956 = vmatprep.mubr.bf16.mxu0 0
        %4957 = vmatmul.mubr.bf16.gmra.mrb[0].mxu0 %v4815
        %v4958 = vpop.f32.mrb[0].mxu0
        %v4959 = vadd.f32 0.0, %v4958
        %v4960 = vpop.f32.mrb[0].mxu0
        %v4961 = vpop.f32.mrb[0].mxu0
        %v4962 = vadd.f32 0.0, %v4961
        %v4963 = vpop.f32.mrb[0].mxu0
        %4964 = vmatprep.mubr.bf16.mxu0 0
        %4965 = vmatmul.mubr.bf16.gmra.mrb[0].mxu0 %v4816
        %v4966 = vpop.f32.mrb[0].mxu0
        %v4967 = vadd.f32 0.0, %v4966
        %v4968 = vpop.f32.mrb[0].mxu0
        %v4969 = vpop.f32.mrb[0].mxu0
        %v4970 = vadd.f32 0.0, %v4969
        %v4971 = vpop.f32.mrb[0].mxu0
        %4972 = vmatprep.mubr.bf16.mxu0 0
        %4973 = vmatmul.mubr.bf16.gmra.mrb[0].mxu0 %v4817
        %v4974 = vpop.f32.mrb[0].mxu0
        %v4975 = vadd.f32 0.0, %v4974
        %v4976 = vpop.f32.mrb[0].mxu0
        %v4977 = vpop.f32.mrb[0].mxu0
        %v4978 = vadd.f32 0.0, %v4977
        %v4979 = vpop.f32.mrb[0].mxu0
        %4980 = vmatprep.mubr.bf16.mxu0 0
        %4981 = vmatmul.mubr.bf16.gmra.mrb[0].mxu0 %v4818
        %v4982 = vpop.f32.mrb[0].mxu0
        %v4983 = vadd.f32 0.0, %v4982
        %v4984 = vpop.f32.mrb[0].mxu0
        %v4985 = vpop.f32.mrb[0].mxu0
        %v4986 = vadd.f32 0.0, %v4985
        %v4987 = vpop.f32.mrb[0].mxu0
        %4988 = vmatprep.mubr.bf16.mxu0 0
        %4989 = vmatmul.mubr.bf16.gmra.mrb[0].mxu0 %v4819
        %v4990 = vpop.f32.mrb[0].mxu0
        %v4991 = vadd.f32 0.0, %v4990
        %v4992 = vpop.f32.mrb[0].mxu0
        %v4993 = vpop.f32.mrb[0].mxu0
        %v4994 = vadd.f32 0.0, %v4993
        %v4995 = vpop.f32.mrb[0].mxu0
        %4996 = vmatprep.mubr.bf16.mxu0 0
        %4997 = vmatmul.mubr.bf16.gmra.mrb[0].mxu0 %v4820
        %v4998 = vpop.f32.mrb[0].mxu0
        %v4999 = vadd.f32 0.0, %v4998
        %v5000 = vpop.f32.mrb[0].mxu0
        %v5001 = vpop.f32.mrb[0].mxu0
        %v5002 = vadd.f32 0.0, %v5001
        %v5003 = vpop.f32.mrb[0].mxu0
        %5004 = vmatprep.mubr.bf16.mxu0 0
        %5005 = vmatmul.mubr.bf16.gmra.mrb[0].mxu0 %v4821
        %v5006 = vpop.f32.mrb[0].mxu0
        %v5007 = vadd.f32 0.0, %v5006
        %v5008 = vpop.f32.mrb[0].mxu0
        %v5009 = vpop.f32.mrb[0].mxu0
        %v5010 = vadd.f32 0.0, %v5009
        %v5011 = vpop.f32.mrb[0].mxu0
        %5012 = vmatprep.mubr.bf16.mxu0 0
        %5013 = vmatmul.mubr.bf16.gmra.mrb[0].mxu0 %v4822
        %v5014 = vpop.f32.mrb[0].mxu0
        %v5015 = vadd.f32 0.0, %v5014
        %v5016 = vpop.f32.mrb[0].mxu0
        %v5017 = vpop.f32.mrb[0].mxu0
        %v5018 = vadd.f32 0.0, %v5017
        %v5019 = vpop.f32.mrb[0].mxu0
        %5020 = vmatprep.mubr.bf16.mxu0 0
        %5021 = vmatmul.mubr.bf16.gmra.mrb[0].mxu0 %v4823
        %v5022 = vpop.f32.mrb[0].mxu0
        %v5023 = vadd.f32 0.0, %v5022
        %v5024 = vpop.f32.mrb[0].mxu0
        %v5025 = vpop.f32.mrb[0].mxu0
        %v5026 = vadd.f32 0.0, %v5025
        %v5027 = vpop.f32.mrb[0].mxu0
        %5028 = vmatprep.mubr.bf16.mxu0 0
        %5029 = vmatmul.mubr.bf16.gmra.mrb[0].mxu0 %v4824
        %v5030 = vpop.f32.mrb[0].mxu0
        %v5031 = vadd.f32 0.0, %v5030
        %v5032 = vpop.f32.mrb[0].mxu0
        %v5033 = vpop.f32.mrb[0].mxu0
        %v5034 = vadd.f32 0.0, %v5033
        %v5035 = vpop.f32.mrb[0].mxu0
        %5036 = vmatprep.mubr.bf16.mxu0 0
        %5037 = vmatmul.mubr.bf16.gmra.mrb[0].mxu0 %v4825
        %v5038 = vpop.f32.mrb[0].mxu0
        %v5039 = vadd.f32 0.0, %v5038
        %v5040 = vpop.f32.mrb[0].mxu0
        %v5041 = vpop.f32.mrb[0].mxu0
        %v5042 = vadd.f32 0.0, %v5041
        %v5043 = vpop.f32.mrb[0].mxu0
        %5044 = vmatprep.mubr.bf16.mxu0 0
        %5045 = vmatmul.mubr.bf16.gmra.mrb[0].mxu0 %v4826
        %v5046 = vpop.f32.mrb[0].mxu0
        %v5047 = vadd.f32 0.0, %v5046
        %v5048 = vpop.f32.mrb[0].mxu0
        %v5049 = vpop.f32.mrb[0].mxu0
        %v5050 = vadd.f32 0.0, %v5049
        %v5051 = vpop.f32.mrb[0].mxu0
        %5052 = vdwg.mxu0
        %v5053 = vadd.f32 %v4653, %v4927
        %v5054 = vadd.f32 %v4656, %v4930
        %v5055 = vadd.f32 %v4661, %v4935
        %v5056 = vadd.f32 %v4664, %v4938
        %v5057 = vadd.f32 %v4669, %v4943
        %v5058 = vadd.f32 %v4672, %v4946
        %v5059 = vadd.f32 %v4677, %v4951
        %v5060 = vadd.f32 %v4680, %v4954
        %v5061 = vadd.f32 %v4685, %v4959
        %v5062 = vadd.f32 %v4688, %v4962
        %v5063 = vadd.f32 %v4693, %v4967
        %v5064 = vadd.f32 %v4696, %v4970
        %v5065 = vadd.f32 %v4701, %v4975
        %v5066 = vadd.f32 %v4704, %v4978
        %v5067 = vadd.f32 %v4709, %v4983
        %v5068 = vadd.f32 %v4712, %v4986
        %v5069 = vadd.f32 %v4717, %v4991
        %v5070 = vadd.f32 %v4720, %v4994
        %v5071 = vadd.f32 %v4725, %v4999
        %v5072 = vadd.f32 %v4728, %v5002
        %v5073 = vadd.f32 %v4733, %v5007
        %v5074 = vadd.f32 %v4736, %v5010
        %v5075 = vadd.f32 %v4741, %v5015
        %v5076 = vadd.f32 %v4744, %v5018
        %v5077 = vadd.f32 %v4749, %v5023
        %v5078 = vadd.f32 %v4752, %v5026
        %v5079 = vadd.f32 %v4757, %v5031
        %v5080 = vadd.f32 %v4760, %v5034
        %v5081 = vadd.f32 %v4765, %v5039
        %v5082 = vadd.f32 %v4768, %v5042
        %v5083 = vadd.f32 %v4773, %v5047
        %v5084 = vadd.f32 %v4776, %v5050
        %v5085 = vld [vmem:[#allocation4] sm:$0xff]
        %v5086 = vld [vmem:[#allocation4 + $0x8] sm:$0xff]
        %v5087 = vld [vmem:[#allocation4 + $0x10] sm:$0xff]
        %v5088 = vld [vmem:[#allocation4 + $0x18] sm:$0xff]
        %v5089 = vld [vmem:[#allocation4 + $0x20] sm:$0xff]
        %v5090 = vld [vmem:[#allocation4 + $0x28] sm:$0xff]
        %v5091 = vld [vmem:[#allocation4 + $0x30] sm:$0xff]
        %v5092 = vld [vmem:[#allocation4 + $0x38] sm:$0xff]
        %v5093 = vld [vmem:[#allocation4 + $0x40] sm:$0xff]
        %v5094 = vld [vmem:[#allocation4 + $0x48] sm:$0xff]
        %v5095 = vld [vmem:[#allocation4 + $0x50] sm:$0xff]
        %v5096 = vld [vmem:[#allocation4 + $0x58] sm:$0xff]
        %v5097 = vld [vmem:[#allocation4 + $0x60] sm:$0xff]
        %v5098 = vld [vmem:[#allocation4 + $0x68] sm:$0xff]
        %v5099 = vld [vmem:[#allocation4 + $0x70] sm:$0xff]
        %v5100 = vld [vmem:[#allocation4 + $0x78] sm:$0xff]
        %v5101 = vld [vmem:[#allocation4 + $0x80] sm:$0xff]
        %v5102 = vld [vmem:[#allocation4 + $0x88] sm:$0xff]
        %v5103 = vld [vmem:[#allocation4 + $0x90] sm:$0xff]
        %v5104 = vld [vmem:[#allocation4 + $0x98] sm:$0xff]
        %v5105 = vld [vmem:[#allocation4 + $0xa0] sm:$0xff]
        %v5106 = vld [vmem:[#allocation4 + $0xa8] sm:$0xff]
        %v5107 = vld [vmem:[#allocation4 + $0xb0] sm:$0xff]
        %v5108 = vld [vmem:[#allocation4 + $0xb8] sm:$0xff]
        %v5109 = vld [vmem:[#allocation4 + $0xc0] sm:$0xff]
        %v5110 = vld [vmem:[#allocation4 + $0xc8] sm:$0xff]
        %v5111 = vld [vmem:[#allocation4 + $0xd0] sm:$0xff]
        %v5112 = vld [vmem:[#allocation4 + $0xd8] sm:$0xff]
        %v5113 = vld [vmem:[#allocation4 + $0xe0] sm:$0xff]
        %v5114 = vld [vmem:[#allocation4 + $0xe8] sm:$0xff]
        %v5115 = vld [vmem:[#allocation4 + $0xf0] sm:$0xff]
        %v5116 = vld [vmem:[#allocation4 + $0xf8] sm:$0xff]
        %v5117 = vadd.f32 %v5085, %v5053
        %v5118 = vadd.f32 %v5086, %v5054
        %v5119 = vadd.f32 %v5087, %v5055
        %v5120 = vadd.f32 %v5088, %v5056
        %v5121 = vadd.f32 %v5089, %v5057
        %v5122 = vadd.f32 %v5090, %v5058
        %v5123 = vadd.f32 %v5091, %v5059
        %v5124 = vadd.f32 %v5092, %v5060
        %v5125 = vadd.f32 %v5093, %v5061
        %v5126 = vadd.f32 %v5094, %v5062
        %v5127 = vadd.f32 %v5095, %v5063
        %v5128 = vadd.f32 %v5096, %v5064
        %v5129 = vadd.f32 %v5097, %v5065
        %v5130 = vadd.f32 %v5098, %v5066
        %v5131 = vadd.f32 %v5099, %v5067
        %v5132 = vadd.f32 %v5100, %v5068
        %v5133 = vadd.f32 %v5101, %v5069
        %v5134 = vadd.f32 %v5102, %v5070
        %v5135 = vadd.f32 %v5103, %v5071
        %v5136 = vadd.f32 %v5104, %v5072
        %v5137 = vadd.f32 %v5105, %v5073
        %v5138 = vadd.f32 %v5106, %v5074
        %v5139 = vadd.f32 %v5107, %v5075
        %v5140 = vadd.f32 %v5108, %v5076
        %v5141 = vadd.f32 %v5109, %v5077
        %v5142 = vadd.f32 %v5110, %v5078
        %v5143 = vadd.f32 %v5111, %v5079
        %v5144 = vadd.f32 %v5112, %v5080
        %v5145 = vadd.f32 %v5113, %v5081
        %v5146 = vadd.f32 %v5114, %v5082
        %v5147 = vadd.f32 %v5115, %v5083
        %v5148 = vadd.f32 %v5116, %v5084
        %5149 = vst [vmem:[#allocation4] sm:$0xff] %v5117
        %5150 = vst [vmem:[#allocation4 + $0x8] sm:$0xff] %v5118
        %5151 = vst [vmem:[#allocation4 + $0x10] sm:$0xff] %v5119
        %5152 = vst [vmem:[#allocation4 + $0x18] sm:$0xff] %v5120
        %5153 = vst [vmem:[#allocation4 + $0x20] sm:$0xff] %v5121
        %5154 = vst [vmem:[#allocation4 + $0x28] sm:$0xff] %v5122
        %5155 = vst [vmem:[#allocation4 + $0x30] sm:$0xff] %v5123
        %5156 = vst [vmem:[#allocation4 + $0x38] sm:$0xff] %v5124
        %5157 = vst [vmem:[#allocation4 + $0x40] sm:$0xff] %v5125
        %5158 = vst [vmem:[#allocation4 + $0x48] sm:$0xff] %v5126
        %5159 = vst [vmem:[#allocation4 + $0x50] sm:$0xff] %v5127
        %5160 = vst [vmem:[#allocation4 + $0x58] sm:$0xff] %v5128
        %5161 = vst [vmem:[#allocation4 + $0x60] sm:$0xff] %v5129
        %5162 = vst [vmem:[#allocation4 + $0x68] sm:$0xff] %v5130
        %5163 = vst [vmem:[#allocation4 + $0x70] sm:$0xff] %v5131
        %5164 = vst [vmem:[#allocation4 + $0x78] sm:$0xff] %v5132
        %5165 = vst [vmem:[#allocation4 + $0x80] sm:$0xff] %v5133
        %5166 = vst [vmem:[#allocation4 + $0x88] sm:$0xff] %v5134
        %5167 = vst [vmem:[#allocation4 + $0x90] sm:$0xff] %v5135
        %5168 = vst [vmem:[#allocation4 + $0x98] sm:$0xff] %v5136
        %5169 = vst [vmem:[#allocation4 + $0xa0] sm:$0xff] %v5137
        %5170 = vst [vmem:[#allocation4 + $0xa8] sm:$0xff] %v5138
        %5171 = vst [vmem:[#allocation4 + $0xb0] sm:$0xff] %v5139
        %5172 = vst [vmem:[#allocation4 + $0xb8] sm:$0xff] %v5140
        %5173 = vst [vmem:[#allocation4 + $0xc0] sm:$0xff] %v5141
        %5174 = vst [vmem:[#allocation4 + $0xc8] sm:$0xff] %v5142
        %5175 = vst [vmem:[#allocation4 + $0xd0] sm:$0xff] %v5143
        %5176 = vst [vmem:[#allocation4 + $0xd8] sm:$0xff] %v5144
        %5177 = vst [vmem:[#allocation4 + $0xe0] sm:$0xff] %v5145
        %5178 = vst [vmem:[#allocation4 + $0xe8] sm:$0xff] %v5146
        %5179 = vst [vmem:[#allocation4 + $0xf0] sm:$0xff] %v5147
        %5180 = vst [vmem:[#allocation4 + $0xf8] sm:$0xff] %v5148
        %s5181 = scalar_lea.vmem [#allocation3], 48
        %v5182 = vld [vmem:[%s5181] sm:$0xff]
        %v5183 = vld [vmem:[%s5181 + $0x8] sm:$0xff]
        %v5184 = vld [vmem:[%s5181 + $0x18] sm:$0xff]
        %v5185 = vld [vmem:[%s5181 + $0x20] sm:$0xff]
        %v5186 = vld [vmem:[%s5181 + $0x30] sm:$0xff]
        %v5187 = vld [vmem:[%s5181 + $0x38] sm:$0xff]
        %v5188 = vld [vmem:[%s5181 + $0x48] sm:$0xff]
        %v5189 = vld [vmem:[%s5181 + $0x50] sm:$0xff]
        %v5190 = vld [vmem:[%s5181 + $0x60] sm:$0xff]
        %v5191 = vld [vmem:[%s5181 + $0x68] sm:$0xff]
        %v5192 = vld [vmem:[%s5181 + $0x78] sm:$0xff]
        %v5193 = vld [vmem:[%s5181 + $0x80] sm:$0xff]
        %v5194 = vld [vmem:[%s5181 + $0x90] sm:$0xff]
        %v5195 = vld [vmem:[%s5181 + $0x98] sm:$0xff]
        %v5196 = vld [vmem:[%s5181 + $0xa8] sm:$0xff]
        %v5197 = vld [vmem:[%s5181 + $0xb0] sm:$0xff]
        %v5198 = vld [vmem:[%s5181 + $0xc0] sm:$0xff]
        %v5199 = vld [vmem:[%s5181 + $0xc8] sm:$0xff]
        %v5200 = vld [vmem:[%s5181 + $0xd8] sm:$0xff]
        %v5201 = vld [vmem:[%s5181 + $0xe0] sm:$0xff]
        %v5202 = vld [vmem:[%s5181 + $0xf0] sm:$0xff]
        %v5203 = vld [vmem:[%s5181 + $0xf8] sm:$0xff]
        %v5204 = vld [vmem:[%s5181 + $0x108] sm:$0xff]
        %v5205 = vld [vmem:[%s5181 + $0x110] sm:$0xff]
        %v5206 = vld [vmem:[%s5181 + $0x120] sm:$0xff]
        %v5207 = vld [vmem:[%s5181 + $0x128] sm:$0xff]
        %v5208 = vld [vmem:[%s5181 + $0x138] sm:$0xff]
        %v5209 = vld [vmem:[%s5181 + $0x140] sm:$0xff]
        %v5210 = vld [vmem:[%s5181 + $0x150] sm:$0xff]
        %v5211 = vld [vmem:[%s5181 + $0x158] sm:$0xff]
        %v5212 = vld [vmem:[%s5181 + $0x168] sm:$0xff]
        %v5213 = vld [vmem:[%s5181 + $0x170] sm:$0xff]
        %v5214 = vpack.c.bf16 %v5183, %v5182
        %v5215 = vpack.c.bf16 %v5185, %v5184
        %v5216 = vpack.c.bf16 %v5187, %v5186
        %v5217 = vpack.c.bf16 %v5189, %v5188
        %v5218 = vpack.c.bf16 %v5191, %v5190
        %v5219 = vpack.c.bf16 %v5193, %v5192
        %v5220 = vpack.c.bf16 %v5195, %v5194
        %v5221 = vpack.c.bf16 %v5197, %v5196
        %v5222 = vpack.c.bf16 %v5199, %v5198
        %v5223 = vpack.c.bf16 %v5201, %v5200
        %v5224 = vpack.c.bf16 %v5203, %v5202
        %v5225 = vpack.c.bf16 %v5205, %v5204
        %v5226 = vpack.c.bf16 %v5207, %v5206
        %v5227 = vpack.c.bf16 %v5209, %v5208
        %v5228 = vpack.c.bf16 %v5211, %v5210
        %v5229 = vpack.c.bf16 %v5213, %v5212
        %s5230 = scalar_lea.vmem [#allocation10], 384
        %v5231 = vld [vmem:[%s5230] sm:$0xf]
        %v5232 = vld [vmem:[%s5230 + $0x4] sm:$0xf]
        %v5233 = vld [vmem:[%s5230 + $0x8] sm:$0xf]
        %v5234 = vld [vmem:[%s5230 + $0xc] sm:$0xf]
        %v5235 = vld [vmem:[%s5230 + $0x10] sm:$0xf]
        %v5236 = vld [vmem:[%s5230 + $0x14] sm:$0xf]
        %v5237 = vld [vmem:[%s5230 + $0x18] sm:$0xf]
        %v5238 = vld [vmem:[%s5230 + $0x1c] sm:$0xf]
        %v5239 = vld [vmem:[%s5230 + $0x20] sm:$0xf]
        %v5240 = vld [vmem:[%s5230 + $0x24] sm:$0xf]
        %v5241 = vld [vmem:[%s5230 + $0x28] sm:$0xf]
        %v5242 = vld [vmem:[%s5230 + $0x2c] sm:$0xf]
        %v5243 = vld [vmem:[%s5230 + $0x30] sm:$0xf]
        %v5244 = vld [vmem:[%s5230 + $0x34] sm:$0xf]
        %v5245 = vld [vmem:[%s5230 + $0x38] sm:$0xf]
        %v5246 = vld [vmem:[%s5230 + $0x3c] sm:$0xf]
        %v5247 = vld [vmem:[%s5181 + $0x1] sm:$0xff]
        %v5248 = vld [vmem:[%s5181 + $0x9] sm:$0xff]
        %v5249 = vld [vmem:[%s5181 + $0x19] sm:$0xff]
        %v5250 = vld [vmem:[%s5181 + $0x21] sm:$0xff]
        %v5251 = vld [vmem:[%s5181 + $0x31] sm:$0xff]
        %v5252 = vld [vmem:[%s5181 + $0x39] sm:$0xff]
        %v5253 = vld [vmem:[%s5181 + $0x49] sm:$0xff]
        %v5254 = vld [vmem:[%s5181 + $0x51] sm:$0xff]
        %v5255 = vld [vmem:[%s5181 + $0x61] sm:$0xff]
        %v5256 = vld [vmem:[%s5181 + $0x69] sm:$0xff]
        %v5257 = vld [vmem:[%s5181 + $0x79] sm:$0xff]
        %v5258 = vld [vmem:[%s5181 + $0x81] sm:$0xff]
        %v5259 = vld [vmem:[%s5181 + $0x91] sm:$0xff]
        %v5260 = vld [vmem:[%s5181 + $0x99] sm:$0xff]
        %v5261 = vld [vmem:[%s5181 + $0xa9] sm:$0xff]
        %v5262 = vld [vmem:[%s5181 + $0xb1] sm:$0xff]
        %v5263 = vld [vmem:[%s5181 + $0xc1] sm:$0xff]
        %v5264 = vld [vmem:[%s5181 + $0xc9] sm:$0xff]
        %v5265 = vld [vmem:[%s5181 + $0xd9] sm:$0xff]
        %v5266 = vld [vmem:[%s5181 + $0xe1] sm:$0xff]
        %v5267 = vld [vmem:[%s5181 + $0xf1] sm:$0xff]
        %v5268 = vld [vmem:[%s5181 + $0xf9] sm:$0xff]
        %v5269 = vld [vmem:[%s5181 + $0x109] sm:$0xff]
        %v5270 = vld [vmem:[%s5181 + $0x111] sm:$0xff]
        %v5271 = vld [vmem:[%s5181 + $0x121] sm:$0xff]
        %v5272 = vld [vmem:[%s5181 + $0x129] sm:$0xff]
        %v5273 = vld [vmem:[%s5181 + $0x139] sm:$0xff]
        %v5274 = vld [vmem:[%s5181 + $0x141] sm:$0xff]
        %v5275 = vld [vmem:[%s5181 + $0x151] sm:$0xff]
        %v5276 = vld [vmem:[%s5181 + $0x159] sm:$0xff]
        %v5277 = vld [vmem:[%s5181 + $0x169] sm:$0xff]
        %v5278 = vld [vmem:[%s5181 + $0x171] sm:$0xff]
        %v5279 = vpack.c.bf16 %v5248, %v5247
        %v5280 = vpack.c.bf16 %v5250, %v5249
        %v5281 = vpack.c.bf16 %v5252, %v5251
        %v5282 = vpack.c.bf16 %v5254, %v5253
        %v5283 = vpack.c.bf16 %v5256, %v5255
        %v5284 = vpack.c.bf16 %v5258, %v5257
        %v5285 = vpack.c.bf16 %v5260, %v5259
        %v5286 = vpack.c.bf16 %v5262, %v5261
        %v5287 = vpack.c.bf16 %v5264, %v5263
        %v5288 = vpack.c.bf16 %v5266, %v5265
        %v5289 = vpack.c.bf16 %v5268, %v5267
        %v5290 = vpack.c.bf16 %v5270, %v5269
        %v5291 = vpack.c.bf16 %v5272, %v5271
        %v5292 = vpack.c.bf16 %v5274, %v5273
        %v5293 = vpack.c.bf16 %v5276, %v5275
        %v5294 = vpack.c.bf16 %v5278, %v5277
        %s5295 = scalar_lea.vmem [#allocation10], 448
        %v5296 = vld [vmem:[%s5295] sm:$0xf]
        %v5297 = vld [vmem:[%s5295 + $0x4] sm:$0xf]
        %v5298 = vld [vmem:[%s5295 + $0x8] sm:$0xf]
        %v5299 = vld [vmem:[%s5295 + $0xc] sm:$0xf]
        %v5300 = vld [vmem:[%s5295 + $0x10] sm:$0xf]
        %v5301 = vld [vmem:[%s5295 + $0x14] sm:$0xf]
        %v5302 = vld [vmem:[%s5295 + $0x18] sm:$0xf]
        %v5303 = vld [vmem:[%s5295 + $0x1c] sm:$0xf]
        %v5304 = vld [vmem:[%s5295 + $0x20] sm:$0xf]
        %v5305 = vld [vmem:[%s5295 + $0x24] sm:$0xf]
        %v5306 = vld [vmem:[%s5295 + $0x28] sm:$0xf]
        %v5307 = vld [vmem:[%s5295 + $0x2c] sm:$0xf]
        %v5308 = vld [vmem:[%s5295 + $0x30] sm:$0xf]
        %v5309 = vld [vmem:[%s5295 + $0x34] sm:$0xf]
        %v5310 = vld [vmem:[%s5295 + $0x38] sm:$0xf]
        %v5311 = vld [vmem:[%s5295 + $0x3c] sm:$0xf]
        %v5328 = vunpack.c.l.b16 %v5296
        %v5329 = vunpack.c.l.b16 %v5297
        %v5330 = vunpack.c.l.b16 %v5298
        %v5331 = vunpack.c.l.b16 %v5299
        %v5332 = vunpack.c.l.b16 %v5300
        %v5333 = vunpack.c.l.b16 %v5301
        %v5334 = vunpack.c.l.b16 %v5302
        %v5335 = vunpack.c.l.b16 %v5303
        %v5336 = vunpack.c.l.b16 %v5304
        %v5337 = vunpack.c.l.b16 %v5305
        %v5338 = vunpack.c.l.b16 %v5306
        %v5339 = vunpack.c.l.b16 %v5307
        %v5340 = vunpack.c.l.b16 %v5308
        %v5341 = vunpack.c.l.b16 %v5309
        %v5342 = vunpack.c.l.b16 %v5310
        %v5343 = vunpack.c.l.b16 %v5311
        %v5344 = vpack.c.b16 %v5329, %v5328
        %v5345 = vpack.c.b16 %v5331, %v5330
        %v5346 = vpack.c.b16 %v5333, %v5332
        %v5347 = vpack.c.b16 %v5335, %v5334
        %v5348 = vpack.c.b16 %v5337, %v5336
        %v5349 = vpack.c.b16 %v5339, %v5338
        %v5350 = vpack.c.b16 %v5341, %v5340
        %v5351 = vpack.c.b16 %v5343, %v5342
        %5360 = vmatprep.subr.bf16.mxu0 0
        %5361 = vmatpush1.bf16.msra.mxu0 %v5344
        %5362 = vmatprep.subr.bf16.mxu0 0
        %5363 = vmatpush1.bf16.msra.mxu0 %v5345
        %5364 = vmatprep.subr.bf16.mxu0 0
        %5365 = vmatpush1.bf16.msra.mxu0 %v5346
        %5366 = vmatprep.subr.bf16.mxu0 0
        %5367 = vmatpush1.bf16.msra.mxu0 %v5347
        %5368 = vmatprep.subr.bf16.mxu0 0
        %5369 = vmatpush1.bf16.msra.mxu0 %v5348
        %5370 = vmatprep.subr.bf16.mxu0 0
        %5371 = vmatpush1.bf16.msra.mxu0 %v5349
        %5372 = vmatprep.subr.bf16.mxu0 0
        %5373 = vmatpush1.bf16.msra.mxu0 %v5350
        %5374 = vmatprep.subr.bf16.mxu0 0
        %5375 = vmatpush1.bf16.msra.mxu0 %v5351
        %5376 = vmatprep.subr.bf16.mxu0 0
        %5377 = vmatpush1.bf16.msra.mxu0 0
        %5378 = vmatprep.subr.bf16.mxu0 0
        %5379 = vmatpush1.bf16.msra.mxu0 0
        %5380 = vmatprep.subr.bf16.mxu0 0
        %5381 = vmatpush1.bf16.msra.mxu0 0
        %5382 = vmatprep.subr.bf16.mxu0 0
        %5383 = vmatpush1.bf16.msra.mxu0 0
        %5384 = vmatprep.subr.bf16.mxu0 0
        %5385 = vmatpush1.bf16.msra.mxu0 0
        %5386 = vmatprep.subr.bf16.mxu0 0
        %5387 = vmatpush1.bf16.msra.mxu0 0
        %5388 = vmatprep.subr.bf16.mxu0 0
        %5389 = vmatpush1.bf16.msra.mxu0 0
        %5390 = vmatprep.subr.bf16.mxu0 0
        %5391 = vmatpush1.bf16.msra.mxu0 0
        %5392 = vmatprep.mubr.bf16.mxu0 0
        %5393 = vmatmul.mubr.bf16.gmra.mrb[0].mxu0 %v5279
        %v5394 = vpop.f32.mrb[0].mxu0
        %v5395 = vadd.f32 0.0, %v5394
        %v5396 = vpop.f32.mrb[0].mxu0
        %v5397 = vpop.f32.mrb[0].mxu0
        %v5398 = vadd.f32 0.0, %v5397
        %v5399 = vpop.f32.mrb[0].mxu0
        %5400 = vmatprep.mubr.bf16.mxu0 0
        %5401 = vmatmul.mubr.bf16.gmra.mrb[0].mxu0 %v5280
        %v5402 = vpop.f32.mrb[0].mxu0
        %v5403 = vadd.f32 0.0, %v5402
        %v5404 = vpop.f32.mrb[0].mxu0
        %v5405 = vpop.f32.mrb[0].mxu0
        %v5406 = vadd.f32 0.0, %v5405
        %v5407 = vpop.f32.mrb[0].mxu0
        %5408 = vmatprep.mubr.bf16.mxu0 0
        %5409 = vmatmul.mubr.bf16.gmra.mrb[0].mxu0 %v5281
        %v5410 = vpop.f32.mrb[0].mxu0
        %v5411 = vadd.f32 0.0, %v5410
        %v5412 = vpop.f32.mrb[0].mxu0
        %v5413 = vpop.f32.mrb[0].mxu0
        %v5414 = vadd.f32 0.0, %v5413
        %v5415 = vpop.f32.mrb[0].mxu0
        %5416 = vmatprep.mubr.bf16.mxu0 0
        %5417 = vmatmul.mubr.bf16.gmra.mrb[0].mxu0 %v5282
        %v5418 = vpop.f32.mrb[0].mxu0
        %v5419 = vadd.f32 0.0, %v5418
        %v5420 = vpop.f32.mrb[0].mxu0
        %v5421 = vpop.f32.mrb[0].mxu0
        %v5422 = vadd.f32 0.0, %v5421
        %v5423 = vpop.f32.mrb[0].mxu0
        %5424 = vmatprep.mubr.bf16.mxu0 0
        %5425 = vmatmul.mubr.bf16.gmra.mrb[0].mxu0 %v5283
        %v5426 = vpop.f32.mrb[0].mxu0
        %v5427 = vadd.f32 0.0, %v5426
        %v5428 = vpop.f32.mrb[0].mxu0
        %v5429 = vpop.f32.mrb[0].mxu0
        %v5430 = vadd.f32 0.0, %v5429
        %v5431 = vpop.f32.mrb[0].mxu0
        %5432 = vmatprep.mubr.bf16.mxu0 0
        %5433 = vmatmul.mubr.bf16.gmra.mrb[0].mxu0 %v5284
        %v5434 = vpop.f32.mrb[0].mxu0
        %v5435 = vadd.f32 0.0, %v5434
        %v5436 = vpop.f32.mrb[0].mxu0
        %v5437 = vpop.f32.mrb[0].mxu0
        %v5438 = vadd.f32 0.0, %v5437
        %v5439 = vpop.f32.mrb[0].mxu0
        %5440 = vmatprep.mubr.bf16.mxu0 0
        %5441 = vmatmul.mubr.bf16.gmra.mrb[0].mxu0 %v5285
        %v5442 = vpop.f32.mrb[0].mxu0
        %v5443 = vadd.f32 0.0, %v5442
        %v5444 = vpop.f32.mrb[0].mxu0
        %v5445 = vpop.f32.mrb[0].mxu0
        %v5446 = vadd.f32 0.0, %v5445
        %v5447 = vpop.f32.mrb[0].mxu0
        %5448 = vmatprep.mubr.bf16.mxu0 0
        %5449 = vmatmul.mubr.bf16.gmra.mrb[0].mxu0 %v5286
        %v5450 = vpop.f32.mrb[0].mxu0
        %v5451 = vadd.f32 0.0, %v5450
        %v5452 = vpop.f32.mrb[0].mxu0
        %v5453 = vpop.f32.mrb[0].mxu0
        %v5454 = vadd.f32 0.0, %v5453
        %v5455 = vpop.f32.mrb[0].mxu0
        %5456 = vmatprep.mubr.bf16.mxu0 0
        %5457 = vmatmul.mubr.bf16.gmra.mrb[0].mxu0 %v5287
        %v5458 = vpop.f32.mrb[0].mxu0
        %v5459 = vadd.f32 0.0, %v5458
        %v5460 = vpop.f32.mrb[0].mxu0
        %v5461 = vpop.f32.mrb[0].mxu0
        %v5462 = vadd.f32 0.0, %v5461
        %v5463 = vpop.f32.mrb[0].mxu0
        %5464 = vmatprep.mubr.bf16.mxu0 0
        %5465 = vmatmul.mubr.bf16.gmra.mrb[0].mxu0 %v5288
        %v5466 = vpop.f32.mrb[0].mxu0
        %v5467 = vadd.f32 0.0, %v5466
        %v5468 = vpop.f32.mrb[0].mxu0
        %v5469 = vpop.f32.mrb[0].mxu0
        %v5470 = vadd.f32 0.0, %v5469
        %v5471 = vpop.f32.mrb[0].mxu0
        %5472 = vmatprep.mubr.bf16.mxu0 0
        %5473 = vmatmul.mubr.bf16.gmra.mrb[0].mxu0 %v5289
        %v5474 = vpop.f32.mrb[0].mxu0
        %v5475 = vadd.f32 0.0, %v5474
        %v5476 = vpop.f32.mrb[0].mxu0
        %v5477 = vpop.f32.mrb[0].mxu0
        %v5478 = vadd.f32 0.0, %v5477
        %v5479 = vpop.f32.mrb[0].mxu0
        %5480 = vmatprep.mubr.bf16.mxu0 0
        %5481 = vmatmul.mubr.bf16.gmra.mrb[0].mxu0 %v5290
        %v5482 = vpop.f32.mrb[0].mxu0
        %v5483 = vadd.f32 0.0, %v5482
        %v5484 = vpop.f32.mrb[0].mxu0
        %v5485 = vpop.f32.mrb[0].mxu0
        %v5486 = vadd.f32 0.0, %v5485
        %v5487 = vpop.f32.mrb[0].mxu0
        %5488 = vmatprep.mubr.bf16.mxu0 0
        %5489 = vmatmul.mubr.bf16.gmra.mrb[0].mxu0 %v5291
        %v5490 = vpop.f32.mrb[0].mxu0
        %v5491 = vadd.f32 0.0, %v5490
        %v5492 = vpop.f32.mrb[0].mxu0
        %v5493 = vpop.f32.mrb[0].mxu0
        %v5494 = vadd.f32 0.0, %v5493
        %v5495 = vpop.f32.mrb[0].mxu0
        %5496 = vmatprep.mubr.bf16.mxu0 0
        %5497 = vmatmul.mubr.bf16.gmra.mrb[0].mxu0 %v5292
        %v5498 = vpop.f32.mrb[0].mxu0
        %v5499 = vadd.f32 0.0, %v5498
        %v5500 = vpop.f32.mrb[0].mxu0
        %v5501 = vpop.f32.mrb[0].mxu0
        %v5502 = vadd.f32 0.0, %v5501
        %v5503 = vpop.f32.mrb[0].mxu0
        %5504 = vmatprep.mubr.bf16.mxu0 0
        %5505 = vmatmul.mubr.bf16.gmra.mrb[0].mxu0 %v5293
        %v5506 = vpop.f32.mrb[0].mxu0
        %v5507 = vadd.f32 0.0, %v5506
        %v5508 = vpop.f32.mrb[0].mxu0
        %v5509 = vpop.f32.mrb[0].mxu0
        %v5510 = vadd.f32 0.0, %v5509
        %v5511 = vpop.f32.mrb[0].mxu0
        %5512 = vmatprep.mubr.bf16.mxu0 0
        %5513 = vmatmul.mubr.bf16.gmra.mrb[0].mxu0 %v5294
        %v5514 = vpop.f32.mrb[0].mxu0
        %v5515 = vadd.f32 0.0, %v5514
        %v5516 = vpop.f32.mrb[0].mxu0
        %v5517 = vpop.f32.mrb[0].mxu0
        %v5518 = vadd.f32 0.0, %v5517
        %v5519 = vpop.f32.mrb[0].mxu0
        %5520 = vdwg.mxu0
        %v5537 = vunpack.c.l.b16 %v5231
        %v5538 = vunpack.c.l.b16 %v5232
        %v5539 = vunpack.c.l.b16 %v5233
        %v5540 = vunpack.c.l.b16 %v5234
        %v5541 = vunpack.c.l.b16 %v5235
        %v5542 = vunpack.c.l.b16 %v5236
        %v5543 = vunpack.c.l.b16 %v5237
        %v5544 = vunpack.c.l.b16 %v5238
        %v5545 = vunpack.c.l.b16 %v5239
        %v5546 = vunpack.c.l.b16 %v5240
        %v5547 = vunpack.c.l.b16 %v5241
        %v5548 = vunpack.c.l.b16 %v5242
        %v5549 = vunpack.c.l.b16 %v5243
        %v5550 = vunpack.c.l.b16 %v5244
        %v5551 = vunpack.c.l.b16 %v5245
        %v5552 = vunpack.c.l.b16 %v5246
        %v5553 = vpack.c.b16 %v5538, %v5537
        %v5554 = vpack.c.b16 %v5540, %v5539
        %v5555 = vpack.c.b16 %v5542, %v5541
        %v5556 = vpack.c.b16 %v5544, %v5543
        %v5557 = vpack.c.b16 %v5546, %v5545
        %v5558 = vpack.c.b16 %v5548, %v5547
        %v5559 = vpack.c.b16 %v5550, %v5549
        %v5560 = vpack.c.b16 %v5552, %v5551
        %5569 = vmatprep.subr.bf16.mxu0 0
        %5570 = vmatpush1.bf16.msra.mxu0 %v5553
        %5571 = vmatprep.subr.bf16.mxu0 0
        %5572 = vmatpush1.bf16.msra.mxu0 %v5554
        %5573 = vmatprep.subr.bf16.mxu0 0
        %5574 = vmatpush1.bf16.msra.mxu0 %v5555
        %5575 = vmatprep.subr.bf16.mxu0 0
        %5576 = vmatpush1.bf16.msra.mxu0 %v5556
        %5577 = vmatprep.subr.bf16.mxu0 0
        %5578 = vmatpush1.bf16.msra.mxu0 %v5557
        %5579 = vmatprep.subr.bf16.mxu0 0
        %5580 = vmatpush1.bf16.msra.mxu0 %v5558
        %5581 = vmatprep.subr.bf16.mxu0 0
        %5582 = vmatpush1.bf16.msra.mxu0 %v5559
        %5583 = vmatprep.subr.bf16.mxu0 0
        %5584 = vmatpush1.bf16.msra.mxu0 %v5560
        %5585 = vmatprep.subr.bf16.mxu0 0
        %5586 = vmatpush1.bf16.msra.mxu0 0
        %5587 = vmatprep.subr.bf16.mxu0 0
        %5588 = vmatpush1.bf16.msra.mxu0 0
        %5589 = vmatprep.subr.bf16.mxu0 0
        %5590 = vmatpush1.bf16.msra.mxu0 0
        %5591 = vmatprep.subr.bf16.mxu0 0
        %5592 = vmatpush1.bf16.msra.mxu0 0
        %5593 = vmatprep.subr.bf16.mxu0 0
        %5594 = vmatpush1.bf16.msra.mxu0 0
        %5595 = vmatprep.subr.bf16.mxu0 0
        %5596 = vmatpush1.bf16.msra.mxu0 0
        %5597 = vmatprep.subr.bf16.mxu0 0
        %5598 = vmatpush1.bf16.msra.mxu0 0
        %5599 = vmatprep.subr.bf16.mxu0 0
        %5600 = vmatpush1.bf16.msra.mxu0 0
        %5601 = vmatprep.mubr.bf16.mxu0 0
        %5602 = vmatmul.mubr.bf16.gmra.mrb[0].mxu0 %v5214
        %v5603 = vpop.f32.mrb[0].mxu0
        %v5604 = vadd.f32 %v5395, %v5603
        %v5605 = vpop.f32.mrb[0].mxu0
        %v5606 = vpop.f32.mrb[0].mxu0
        %v5607 = vadd.f32 %v5398, %v5606
        %v5608 = vpop.f32.mrb[0].mxu0
        %5609 = vmatprep.mubr.bf16.mxu0 0
        %5610 = vmatmul.mubr.bf16.gmra.mrb[0].mxu0 %v5215
        %v5611 = vpop.f32.mrb[0].mxu0
        %v5612 = vadd.f32 %v5403, %v5611
        %v5613 = vpop.f32.mrb[0].mxu0
        %v5614 = vpop.f32.mrb[0].mxu0
        %v5615 = vadd.f32 %v5406, %v5614
        %v5616 = vpop.f32.mrb[0].mxu0
        %5617 = vmatprep.mubr.bf16.mxu0 0
        %5618 = vmatmul.mubr.bf16.gmra.mrb[0].mxu0 %v5216
        %v5619 = vpop.f32.mrb[0].mxu0
        %v5620 = vadd.f32 %v5411, %v5619
        %v5621 = vpop.f32.mrb[0].mxu0
        %v5622 = vpop.f32.mrb[0].mxu0
        %v5623 = vadd.f32 %v5414, %v5622
        %v5624 = vpop.f32.mrb[0].mxu0
        %5625 = vmatprep.mubr.bf16.mxu0 0
        %5626 = vmatmul.mubr.bf16.gmra.mrb[0].mxu0 %v5217
        %v5627 = vpop.f32.mrb[0].mxu0
        %v5628 = vadd.f32 %v5419, %v5627
        %v5629 = vpop.f32.mrb[0].mxu0
        %v5630 = vpop.f32.mrb[0].mxu0
        %v5631 = vadd.f32 %v5422, %v5630
        %v5632 = vpop.f32.mrb[0].mxu0
        %5633 = vmatprep.mubr.bf16.mxu0 0
        %5634 = vmatmul.mubr.bf16.gmra.mrb[0].mxu0 %v5218
        %v5635 = vpop.f32.mrb[0].mxu0
        %v5636 = vadd.f32 %v5427, %v5635
        %v5637 = vpop.f32.mrb[0].mxu0
        %v5638 = vpop.f32.mrb[0].mxu0
        %v5639 = vadd.f32 %v5430, %v5638
        %v5640 = vpop.f32.mrb[0].mxu0
        %5641 = vmatprep.mubr.bf16.mxu0 0
        %5642 = vmatmul.mubr.bf16.gmra.mrb[0].mxu0 %v5219
        %v5643 = vpop.f32.mrb[0].mxu0
        %v5644 = vadd.f32 %v5435, %v5643
        %v5645 = vpop.f32.mrb[0].mxu0
        %v5646 = vpop.f32.mrb[0].mxu0
        %v5647 = vadd.f32 %v5438, %v5646
        %v5648 = vpop.f32.mrb[0].mxu0
        %5649 = vmatprep.mubr.bf16.mxu0 0
        %5650 = vmatmul.mubr.bf16.gmra.mrb[0].mxu0 %v5220
        %v5651 = vpop.f32.mrb[0].mxu0
        %v5652 = vadd.f32 %v5443, %v5651
        %v5653 = vpop.f32.mrb[0].mxu0
        %v5654 = vpop.f32.mrb[0].mxu0
        %v5655 = vadd.f32 %v5446, %v5654
        %v5656 = vpop.f32.mrb[0].mxu0
        %5657 = vmatprep.mubr.bf16.mxu0 0
        %5658 = vmatmul.mubr.bf16.gmra.mrb[0].mxu0 %v5221
        %v5659 = vpop.f32.mrb[0].mxu0
        %v5660 = vadd.f32 %v5451, %v5659
        %v5661 = vpop.f32.mrb[0].mxu0
        %v5662 = vpop.f32.mrb[0].mxu0
        %v5663 = vadd.f32 %v5454, %v5662
        %v5664 = vpop.f32.mrb[0].mxu0
        %5665 = vmatprep.mubr.bf16.mxu0 0
        %5666 = vmatmul.mubr.bf16.gmra.mrb[0].mxu0 %v5222
        %v5667 = vpop.f32.mrb[0].mxu0
        %v5668 = vadd.f32 %v5459, %v5667
        %v5669 = vpop.f32.mrb[0].mxu0
        %v5670 = vpop.f32.mrb[0].mxu0
        %v5671 = vadd.f32 %v5462, %v5670
        %v5672 = vpop.f32.mrb[0].mxu0
        %5673 = vmatprep.mubr.bf16.mxu0 0
        %5674 = vmatmul.mubr.bf16.gmra.mrb[0].mxu0 %v5223
        %v5675 = vpop.f32.mrb[0].mxu0
        %v5676 = vadd.f32 %v5467, %v5675
        %v5677 = vpop.f32.mrb[0].mxu0
        %v5678 = vpop.f32.mrb[0].mxu0
        %v5679 = vadd.f32 %v5470, %v5678
        %v5680 = vpop.f32.mrb[0].mxu0
        %5681 = vmatprep.mubr.bf16.mxu0 0
        %5682 = vmatmul.mubr.bf16.gmra.mrb[0].mxu0 %v5224
        %v5683 = vpop.f32.mrb[0].mxu0
        %v5684 = vadd.f32 %v5475, %v5683
        %v5685 = vpop.f32.mrb[0].mxu0
        %v5686 = vpop.f32.mrb[0].mxu0
        %v5687 = vadd.f32 %v5478, %v5686
        %v5688 = vpop.f32.mrb[0].mxu0
        %5689 = vmatprep.mubr.bf16.mxu0 0
        %5690 = vmatmul.mubr.bf16.gmra.mrb[0].mxu0 %v5225
        %v5691 = vpop.f32.mrb[0].mxu0
        %v5692 = vadd.f32 %v5483, %v5691
        %v5693 = vpop.f32.mrb[0].mxu0
        %v5694 = vpop.f32.mrb[0].mxu0
        %v5695 = vadd.f32 %v5486, %v5694
        %v5696 = vpop.f32.mrb[0].mxu0
        %5697 = vmatprep.mubr.bf16.mxu0 0
        %5698 = vmatmul.mubr.bf16.gmra.mrb[0].mxu0 %v5226
        %v5699 = vpop.f32.mrb[0].mxu0
        %v5700 = vadd.f32 %v5491, %v5699
        %v5701 = vpop.f32.mrb[0].mxu0
        %v5702 = vpop.f32.mrb[0].mxu0
        %v5703 = vadd.f32 %v5494, %v5702
        %v5704 = vpop.f32.mrb[0].mxu0
        %5705 = vmatprep.mubr.bf16.mxu0 0
        %5706 = vmatmul.mubr.bf16.gmra.mrb[0].mxu0 %v5227
        %v5707 = vpop.f32.mrb[0].mxu0
        %v5708 = vadd.f32 %v5499, %v5707
        %v5709 = vpop.f32.mrb[0].mxu0
        %v5710 = vpop.f32.mrb[0].mxu0
        %v5711 = vadd.f32 %v5502, %v5710
        %v5712 = vpop.f32.mrb[0].mxu0
        %5713 = vmatprep.mubr.bf16.mxu0 0
        %5714 = vmatmul.mubr.bf16.gmra.mrb[0].mxu0 %v5228
        %v5715 = vpop.f32.mrb[0].mxu0
        %v5716 = vadd.f32 %v5507, %v5715
        %v5717 = vpop.f32.mrb[0].mxu0
        %v5718 = vpop.f32.mrb[0].mxu0
        %v5719 = vadd.f32 %v5510, %v5718
        %v5720 = vpop.f32.mrb[0].mxu0
        %5721 = vmatprep.mubr.bf16.mxu0 0
        %5722 = vmatmul.mubr.bf16.gmra.mrb[0].mxu0 %v5229
        %v5723 = vpop.f32.mrb[0].mxu0
        %v5724 = vadd.f32 %v5515, %v5723
        %v5725 = vpop.f32.mrb[0].mxu0
        %v5726 = vpop.f32.mrb[0].mxu0
        %v5727 = vadd.f32 %v5518, %v5726
        %v5728 = vpop.f32.mrb[0].mxu0
        %5729 = vdwg.mxu0
        %v5730 = vld [vmem:[%s5181 + $0x2] sm:$0xff]
        %v5731 = vld [vmem:[%s5181 + $0xa] sm:$0xff]
        %v5732 = vld [vmem:[%s5181 + $0x1a] sm:$0xff]
        %v5733 = vld [vmem:[%s5181 + $0x22] sm:$0xff]
        %v5734 = vld [vmem:[%s5181 + $0x32] sm:$0xff]
        %v5735 = vld [vmem:[%s5181 + $0x3a] sm:$0xff]
        %v5736 = vld [vmem:[%s5181 + $0x4a] sm:$0xff]
        %v5737 = vld [vmem:[%s5181 + $0x52] sm:$0xff]
        %v5738 = vld [vmem:[%s5181 + $0x62] sm:$0xff]
        %v5739 = vld [vmem:[%s5181 + $0x6a] sm:$0xff]
        %v5740 = vld [vmem:[%s5181 + $0x7a] sm:$0xff]
        %v5741 = vld [vmem:[%s5181 + $0x82] sm:$0xff]
        %v5742 = vld [vmem:[%s5181 + $0x92] sm:$0xff]
        %v5743 = vld [vmem:[%s5181 + $0x9a] sm:$0xff]
        %v5744 = vld [vmem:[%s5181 + $0xaa] sm:$0xff]
        %v5745 = vld [vmem:[%s5181 + $0xb2] sm:$0xff]
        %v5746 = vld [vmem:[%s5181 + $0xc2] sm:$0xff]
        %v5747 = vld [vmem:[%s5181 + $0xca] sm:$0xff]
        %v5748 = vld [vmem:[%s5181 + $0xda] sm:$0xff]
        %v5749 = vld [vmem:[%s5181 + $0xe2] sm:$0xff]
        %v5750 = vld [vmem:[%s5181 + $0xf2] sm:$0xff]
        %v5751 = vld [vmem:[%s5181 + $0xfa] sm:$0xff]
        %v5752 = vld [vmem:[%s5181 + $0x10a] sm:$0xff]
        %v5753 = vld [vmem:[%s5181 + $0x112] sm:$0xff]
        %v5754 = vld [vmem:[%s5181 + $0x122] sm:$0xff]
        %v5755 = vld [vmem:[%s5181 + $0x12a] sm:$0xff]
        %v5756 = vld [vmem:[%s5181 + $0x13a] sm:$0xff]
        %v5757 = vld [vmem:[%s5181 + $0x142] sm:$0xff]
        %v5758 = vld [vmem:[%s5181 + $0x152] sm:$0xff]
        %v5759 = vld [vmem:[%s5181 + $0x15a] sm:$0xff]
        %v5760 = vld [vmem:[%s5181 + $0x16a] sm:$0xff]
        %v5761 = vld [vmem:[%s5181 + $0x172] sm:$0xff]
        %v5762 = vpack.c.bf16 %v5731, %v5730
        %v5763 = vpack.c.bf16 %v5733, %v5732
        %v5764 = vpack.c.bf16 %v5735, %v5734
        %v5765 = vpack.c.bf16 %v5737, %v5736
        %v5766 = vpack.c.bf16 %v5739, %v5738
        %v5767 = vpack.c.bf16 %v5741, %v5740
        %v5768 = vpack.c.bf16 %v5743, %v5742
        %v5769 = vpack.c.bf16 %v5745, %v5744
        %v5770 = vpack.c.bf16 %v5747, %v5746
        %v5771 = vpack.c.bf16 %v5749, %v5748
        %v5772 = vpack.c.bf16 %v5751, %v5750
        %v5773 = vpack.c.bf16 %v5753, %v5752
        %v5774 = vpack.c.bf16 %v5755, %v5754
        %v5775 = vpack.c.bf16 %v5757, %v5756
        %v5776 = vpack.c.bf16 %v5759, %v5758
        %v5777 = vpack.c.bf16 %v5761, %v5760
        %s5778 = scalar_lea.vmem [#allocation10], 512
        %v5779 = vld [vmem:[%s5778] sm:$0xf]
        %v5780 = vld [vmem:[%s5778 + $0x4] sm:$0xf]
        %v5781 = vld [vmem:[%s5778 + $0x8] sm:$0xf]
        %v5782 = vld [vmem:[%s5778 + $0xc] sm:$0xf]
        %v5783 = vld [vmem:[%s5778 + $0x10] sm:$0xf]
        %v5784 = vld [vmem:[%s5778 + $0x14] sm:$0xf]
        %v5785 = vld [vmem:[%s5778 + $0x18] sm:$0xf]
        %v5786 = vld [vmem:[%s5778 + $0x1c] sm:$0xf]
        %v5787 = vld [vmem:[%s5778 + $0x20] sm:$0xf]
        %v5788 = vld [vmem:[%s5778 + $0x24] sm:$0xf]
        %v5789 = vld [vmem:[%s5778 + $0x28] sm:$0xf]
        %v5790 = vld [vmem:[%s5778 + $0x2c] sm:$0xf]
        %v5791 = vld [vmem:[%s5778 + $0x30] sm:$0xf]
        %v5792 = vld [vmem:[%s5778 + $0x34] sm:$0xf]
        %v5793 = vld [vmem:[%s5778 + $0x38] sm:$0xf]
        %v5794 = vld [vmem:[%s5778 + $0x3c] sm:$0xf]
        %v5811 = vunpack.c.l.b16 %v5779
        %v5812 = vunpack.c.l.b16 %v5780
        %v5813 = vunpack.c.l.b16 %v5781
        %v5814 = vunpack.c.l.b16 %v5782
        %v5815 = vunpack.c.l.b16 %v5783
        %v5816 = vunpack.c.l.b16 %v5784
        %v5817 = vunpack.c.l.b16 %v5785
        %v5818 = vunpack.c.l.b16 %v5786
        %v5819 = vunpack.c.l.b16 %v5787
        %v5820 = vunpack.c.l.b16 %v5788
        %v5821 = vunpack.c.l.b16 %v5789
        %v5822 = vunpack.c.l.b16 %v5790
        %v5823 = vunpack.c.l.b16 %v5791
        %v5824 = vunpack.c.l.b16 %v5792
        %v5825 = vunpack.c.l.b16 %v5793
        %v5826 = vunpack.c.l.b16 %v5794
        %v5827 = vpack.c.b16 %v5812, %v5811
        %v5828 = vpack.c.b16 %v5814, %v5813
        %v5829 = vpack.c.b16 %v5816, %v5815
        %v5830 = vpack.c.b16 %v5818, %v5817
        %v5831 = vpack.c.b16 %v5820, %v5819
        %v5832 = vpack.c.b16 %v5822, %v5821
        %v5833 = vpack.c.b16 %v5824, %v5823
        %v5834 = vpack.c.b16 %v5826, %v5825
        %5843 = vmatprep.subr.bf16.mxu0 0
        %5844 = vmatpush1.bf16.msra.mxu0 %v5827
        %5845 = vmatprep.subr.bf16.mxu0 0
        %5846 = vmatpush1.bf16.msra.mxu0 %v5828
        %5847 = vmatprep.subr.bf16.mxu0 0
        %5848 = vmatpush1.bf16.msra.mxu0 %v5829
        %5849 = vmatprep.subr.bf16.mxu0 0
        %5850 = vmatpush1.bf16.msra.mxu0 %v5830
        %5851 = vmatprep.subr.bf16.mxu0 0
        %5852 = vmatpush1.bf16.msra.mxu0 %v5831
        %5853 = vmatprep.subr.bf16.mxu0 0
        %5854 = vmatpush1.bf16.msra.mxu0 %v5832
        %5855 = vmatprep.subr.bf16.mxu0 0
        %5856 = vmatpush1.bf16.msra.mxu0 %v5833
        %5857 = vmatprep.subr.bf16.mxu0 0
        %5858 = vmatpush1.bf16.msra.mxu0 %v5834
        %5859 = vmatprep.subr.bf16.mxu0 0
        %5860 = vmatpush1.bf16.msra.mxu0 0
        %5861 = vmatprep.subr.bf16.mxu0 0
        %5862 = vmatpush1.bf16.msra.mxu0 0
        %5863 = vmatprep.subr.bf16.mxu0 0
        %5864 = vmatpush1.bf16.msra.mxu0 0
        %5865 = vmatprep.subr.bf16.mxu0 0
        %5866 = vmatpush1.bf16.msra.mxu0 0
        %5867 = vmatprep.subr.bf16.mxu0 0
        %5868 = vmatpush1.bf16.msra.mxu0 0
        %5869 = vmatprep.subr.bf16.mxu0 0
        %5870 = vmatpush1.bf16.msra.mxu0 0
        %5871 = vmatprep.subr.bf16.mxu0 0
        %5872 = vmatpush1.bf16.msra.mxu0 0
        %5873 = vmatprep.subr.bf16.mxu0 0
        %5874 = vmatpush1.bf16.msra.mxu0 0
        %5875 = vmatprep.mubr.bf16.mxu0 0
        %5876 = vmatmul.mubr.bf16.gmra.mrb[0].mxu0 %v5762
        %v5877 = vpop.f32.mrb[0].mxu0
        %v5878 = vadd.f32 0.0, %v5877
        %v5879 = vpop.f32.mrb[0].mxu0
        %v5880 = vpop.f32.mrb[0].mxu0
        %v5881 = vadd.f32 0.0, %v5880
        %v5882 = vpop.f32.mrb[0].mxu0
        %5883 = vmatprep.mubr.bf16.mxu0 0
        %5884 = vmatmul.mubr.bf16.gmra.mrb[0].mxu0 %v5763
        %v5885 = vpop.f32.mrb[0].mxu0
        %v5886 = vadd.f32 0.0, %v5885
        %v5887 = vpop.f32.mrb[0].mxu0
        %v5888 = vpop.f32.mrb[0].mxu0
        %v5889 = vadd.f32 0.0, %v5888
        %v5890 = vpop.f32.mrb[0].mxu0
        %5891 = vmatprep.mubr.bf16.mxu0 0
        %5892 = vmatmul.mubr.bf16.gmra.mrb[0].mxu0 %v5764
        %v5893 = vpop.f32.mrb[0].mxu0
        %v5894 = vadd.f32 0.0, %v5893
        %v5895 = vpop.f32.mrb[0].mxu0
        %v5896 = vpop.f32.mrb[0].mxu0
        %v5897 = vadd.f32 0.0, %v5896
        %v5898 = vpop.f32.mrb[0].mxu0
        %5899 = vmatprep.mubr.bf16.mxu0 0
        %5900 = vmatmul.mubr.bf16.gmra.mrb[0].mxu0 %v5765
        %v5901 = vpop.f32.mrb[0].mxu0
        %v5902 = vadd.f32 0.0, %v5901
        %v5903 = vpop.f32.mrb[0].mxu0
        %v5904 = vpop.f32.mrb[0].mxu0
        %v5905 = vadd.f32 0.0, %v5904
        %v5906 = vpop.f32.mrb[0].mxu0
        %5907 = vmatprep.mubr.bf16.mxu0 0
        %5908 = vmatmul.mubr.bf16.gmra.mrb[0].mxu0 %v5766
        %v5909 = vpop.f32.mrb[0].mxu0
        %v5910 = vadd.f32 0.0, %v5909
        %v5911 = vpop.f32.mrb[0].mxu0
        %v5912 = vpop.f32.mrb[0].mxu0
        %v5913 = vadd.f32 0.0, %v5912
        %v5914 = vpop.f32.mrb[0].mxu0
        %5915 = vmatprep.mubr.bf16.mxu0 0
        %5916 = vmatmul.mubr.bf16.gmra.mrb[0].mxu0 %v5767
        %v5917 = vpop.f32.mrb[0].mxu0
        %v5918 = vadd.f32 0.0, %v5917
        %v5919 = vpop.f32.mrb[0].mxu0
        %v5920 = vpop.f32.mrb[0].mxu0
        %v5921 = vadd.f32 0.0, %v5920
        %v5922 = vpop.f32.mrb[0].mxu0
        %5923 = vmatprep.mubr.bf16.mxu0 0
        %5924 = vmatmul.mubr.bf16.gmra.mrb[0].mxu0 %v5768
        %v5925 = vpop.f32.mrb[0].mxu0
        %v5926 = vadd.f32 0.0, %v5925
        %v5927 = vpop.f32.mrb[0].mxu0
        %v5928 = vpop.f32.mrb[0].mxu0
        %v5929 = vadd.f32 0.0, %v5928
        %v5930 = vpop.f32.mrb[0].mxu0
        %5931 = vmatprep.mubr.bf16.mxu0 0
        %5932 = vmatmul.mubr.bf16.gmra.mrb[0].mxu0 %v5769
        %v5933 = vpop.f32.mrb[0].mxu0
        %v5934 = vadd.f32 0.0, %v5933
        %v5935 = vpop.f32.mrb[0].mxu0
        %v5936 = vpop.f32.mrb[0].mxu0
        %v5937 = vadd.f32 0.0, %v5936
        %v5938 = vpop.f32.mrb[0].mxu0
        %5939 = vmatprep.mubr.bf16.mxu0 0
        %5940 = vmatmul.mubr.bf16.gmra.mrb[0].mxu0 %v5770
        %v5941 = vpop.f32.mrb[0].mxu0
        %v5942 = vadd.f32 0.0, %v5941
        %v5943 = vpop.f32.mrb[0].mxu0
        %v5944 = vpop.f32.mrb[0].mxu0
        %v5945 = vadd.f32 0.0, %v5944
        %v5946 = vpop.f32.mrb[0].mxu0
        %5947 = vmatprep.mubr.bf16.mxu0 0
        %5948 = vmatmul.mubr.bf16.gmra.mrb[0].mxu0 %v5771
        %v5949 = vpop.f32.mrb[0].mxu0
        %v5950 = vadd.f32 0.0, %v5949
        %v5951 = vpop.f32.mrb[0].mxu0
        %v5952 = vpop.f32.mrb[0].mxu0
        %v5953 = vadd.f32 0.0, %v5952
        %v5954 = vpop.f32.mrb[0].mxu0
        %5955 = vmatprep.mubr.bf16.mxu0 0
        %5956 = vmatmul.mubr.bf16.gmra.mrb[0].mxu0 %v5772
        %v5957 = vpop.f32.mrb[0].mxu0
        %v5958 = vadd.f32 0.0, %v5957
        %v5959 = vpop.f32.mrb[0].mxu0
        %v5960 = vpop.f32.mrb[0].mxu0
        %v5961 = vadd.f32 0.0, %v5960
        %v5962 = vpop.f32.mrb[0].mxu0
        %5963 = vmatprep.mubr.bf16.mxu0 0
        %5964 = vmatmul.mubr.bf16.gmra.mrb[0].mxu0 %v5773
        %v5965 = vpop.f32.mrb[0].mxu0
        %v5966 = vadd.f32 0.0, %v5965
        %v5967 = vpop.f32.mrb[0].mxu0
        %v5968 = vpop.f32.mrb[0].mxu0
        %v5969 = vadd.f32 0.0, %v5968
        %v5970 = vpop.f32.mrb[0].mxu0
        %5971 = vmatprep.mubr.bf16.mxu0 0
        %5972 = vmatmul.mubr.bf16.gmra.mrb[0].mxu0 %v5774
        %v5973 = vpop.f32.mrb[0].mxu0
        %v5974 = vadd.f32 0.0, %v5973
        %v5975 = vpop.f32.mrb[0].mxu0
        %v5976 = vpop.f32.mrb[0].mxu0
        %v5977 = vadd.f32 0.0, %v5976
        %v5978 = vpop.f32.mrb[0].mxu0
        %5979 = vmatprep.mubr.bf16.mxu0 0
        %5980 = vmatmul.mubr.bf16.gmra.mrb[0].mxu0 %v5775
        %v5981 = vpop.f32.mrb[0].mxu0
        %v5982 = vadd.f32 0.0, %v5981
        %v5983 = vpop.f32.mrb[0].mxu0
        %v5984 = vpop.f32.mrb[0].mxu0
        %v5985 = vadd.f32 0.0, %v5984
        %v5986 = vpop.f32.mrb[0].mxu0
        %5987 = vmatprep.mubr.bf16.mxu0 0
        %5988 = vmatmul.mubr.bf16.gmra.mrb[0].mxu0 %v5776
        %v5989 = vpop.f32.mrb[0].mxu0
        %v5990 = vadd.f32 0.0, %v5989
        %v5991 = vpop.f32.mrb[0].mxu0
        %v5992 = vpop.f32.mrb[0].mxu0
        %v5993 = vadd.f32 0.0, %v5992
        %v5994 = vpop.f32.mrb[0].mxu0
        %5995 = vmatprep.mubr.bf16.mxu0 0
        %5996 = vmatmul.mubr.bf16.gmra.mrb[0].mxu0 %v5777
        %v5997 = vpop.f32.mrb[0].mxu0
        %v5998 = vadd.f32 0.0, %v5997
        %v5999 = vpop.f32.mrb[0].mxu0
        %v6000 = vpop.f32.mrb[0].mxu0
        %v6001 = vadd.f32 0.0, %v6000
        %v6002 = vpop.f32.mrb[0].mxu0
        %6003 = vdwg.mxu0
        %v6004 = vadd.f32 %v5604, %v5878
        %v6005 = vadd.f32 %v5607, %v5881
        %v6006 = vadd.f32 %v5612, %v5886
        %v6007 = vadd.f32 %v5615, %v5889
        %v6008 = vadd.f32 %v5620, %v5894
        %v6009 = vadd.f32 %v5623, %v5897
        %v6010 = vadd.f32 %v5628, %v5902
        %v6011 = vadd.f32 %v5631, %v5905
        %v6012 = vadd.f32 %v5636, %v5910
        %v6013 = vadd.f32 %v5639, %v5913
        %v6014 = vadd.f32 %v5644, %v5918
        %v6015 = vadd.f32 %v5647, %v5921
        %v6016 = vadd.f32 %v5652, %v5926
        %v6017 = vadd.f32 %v5655, %v5929
        %v6018 = vadd.f32 %v5660, %v5934
        %v6019 = vadd.f32 %v5663, %v5937
        %v6020 = vadd.f32 %v5668, %v5942
        %v6021 = vadd.f32 %v5671, %v5945
        %v6022 = vadd.f32 %v5676, %v5950
        %v6023 = vadd.f32 %v5679, %v5953
        %v6024 = vadd.f32 %v5684, %v5958
        %v6025 = vadd.f32 %v5687, %v5961
        %v6026 = vadd.f32 %v5692, %v5966
        %v6027 = vadd.f32 %v5695, %v5969
        %v6028 = vadd.f32 %v5700, %v5974
        %v6029 = vadd.f32 %v5703, %v5977
        %v6030 = vadd.f32 %v5708, %v5982
        %v6031 = vadd.f32 %v5711, %v5985
        %v6032 = vadd.f32 %v5716, %v5990
        %v6033 = vadd.f32 %v5719, %v5993
        %v6034 = vadd.f32 %v5724, %v5998
        %v6035 = vadd.f32 %v5727, %v6001
        %v6036 = vld [vmem:[#allocation4] sm:$0xff]
        %v6037 = vld [vmem:[#allocation4 + $0x8] sm:$0xff]
        %v6038 = vld [vmem:[#allocation4 + $0x10] sm:$0xff]
        %v6039 = vld [vmem:[#allocation4 + $0x18] sm:$0xff]
        %v6040 = vld [vmem:[#allocation4 + $0x20] sm:$0xff]
        %v6041 = vld [vmem:[#allocation4 + $0x28] sm:$0xff]
        %v6042 = vld [vmem:[#allocation4 + $0x30] sm:$0xff]
        %v6043 = vld [vmem:[#allocation4 + $0x38] sm:$0xff]
        %v6044 = vld [vmem:[#allocation4 + $0x40] sm:$0xff]
        %v6045 = vld [vmem:[#allocation4 + $0x48] sm:$0xff]
        %v6046 = vld [vmem:[#allocation4 + $0x50] sm:$0xff]
        %v6047 = vld [vmem:[#allocation4 + $0x58] sm:$0xff]
        %v6048 = vld [vmem:[#allocation4 + $0x60] sm:$0xff]
        %v6049 = vld [vmem:[#allocation4 + $0x68] sm:$0xff]
        %v6050 = vld [vmem:[#allocation4 + $0x70] sm:$0xff]
        %v6051 = vld [vmem:[#allocation4 + $0x78] sm:$0xff]
        %v6052 = vld [vmem:[#allocation4 + $0x80] sm:$0xff]
        %v6053 = vld [vmem:[#allocation4 + $0x88] sm:$0xff]
        %v6054 = vld [vmem:[#allocation4 + $0x90] sm:$0xff]
        %v6055 = vld [vmem:[#allocation4 + $0x98] sm:$0xff]
        %v6056 = vld [vmem:[#allocation4 + $0xa0] sm:$0xff]
        %v6057 = vld [vmem:[#allocation4 + $0xa8] sm:$0xff]
        %v6058 = vld [vmem:[#allocation4 + $0xb0] sm:$0xff]
        %v6059 = vld [vmem:[#allocation4 + $0xb8] sm:$0xff]
        %v6060 = vld [vmem:[#allocation4 + $0xc0] sm:$0xff]
        %v6061 = vld [vmem:[#allocation4 + $0xc8] sm:$0xff]
        %v6062 = vld [vmem:[#allocation4 + $0xd0] sm:$0xff]
        %v6063 = vld [vmem:[#allocation4 + $0xd8] sm:$0xff]
        %v6064 = vld [vmem:[#allocation4 + $0xe0] sm:$0xff]
        %v6065 = vld [vmem:[#allocation4 + $0xe8] sm:$0xff]
        %v6066 = vld [vmem:[#allocation4 + $0xf0] sm:$0xff]
        %v6067 = vld [vmem:[#allocation4 + $0xf8] sm:$0xff]
        %v6068 = vadd.f32 %v6036, %v6004
        %v6069 = vadd.f32 %v6037, %v6005
        %v6070 = vadd.f32 %v6038, %v6006
        %v6071 = vadd.f32 %v6039, %v6007
        %v6072 = vadd.f32 %v6040, %v6008
        %v6073 = vadd.f32 %v6041, %v6009
        %v6074 = vadd.f32 %v6042, %v6010
        %v6075 = vadd.f32 %v6043, %v6011
        %v6076 = vadd.f32 %v6044, %v6012
        %v6077 = vadd.f32 %v6045, %v6013
        %v6078 = vadd.f32 %v6046, %v6014
        %v6079 = vadd.f32 %v6047, %v6015
        %v6080 = vadd.f32 %v6048, %v6016
        %v6081 = vadd.f32 %v6049, %v6017
        %v6082 = vadd.f32 %v6050, %v6018
        %v6083 = vadd.f32 %v6051, %v6019
        %v6084 = vadd.f32 %v6052, %v6020
        %v6085 = vadd.f32 %v6053, %v6021
        %v6086 = vadd.f32 %v6054, %v6022
        %v6087 = vadd.f32 %v6055, %v6023
        %v6088 = vadd.f32 %v6056, %v6024
        %v6089 = vadd.f32 %v6057, %v6025
        %v6090 = vadd.f32 %v6058, %v6026
        %v6091 = vadd.f32 %v6059, %v6027
        %v6092 = vadd.f32 %v6060, %v6028
        %v6093 = vadd.f32 %v6061, %v6029
        %v6094 = vadd.f32 %v6062, %v6030
        %v6095 = vadd.f32 %v6063, %v6031
        %v6096 = vadd.f32 %v6064, %v6032
        %v6097 = vadd.f32 %v6065, %v6033
        %v6098 = vadd.f32 %v6066, %v6034
        %v6099 = vadd.f32 %v6067, %v6035
        %6100 = vst [vmem:[#allocation4] sm:$0xff] %v6068
        %6101 = vst [vmem:[#allocation4 + $0x8] sm:$0xff] %v6069
        %6102 = vst [vmem:[#allocation4 + $0x10] sm:$0xff] %v6070
        %6103 = vst [vmem:[#allocation4 + $0x18] sm:$0xff] %v6071
        %6104 = vst [vmem:[#allocation4 + $0x20] sm:$0xff] %v6072
        %6105 = vst [vmem:[#allocation4 + $0x28] sm:$0xff] %v6073
        %6106 = vst [vmem:[#allocation4 + $0x30] sm:$0xff] %v6074
        %6107 = vst [vmem:[#allocation4 + $0x38] sm:$0xff] %v6075
        %6108 = vst [vmem:[#allocation4 + $0x40] sm:$0xff] %v6076
        %6109 = vst [vmem:[#allocation4 + $0x48] sm:$0xff] %v6077
        %6110 = vst [vmem:[#allocation4 + $0x50] sm:$0xff] %v6078
        %6111 = vst [vmem:[#allocation4 + $0x58] sm:$0xff] %v6079
        %6112 = vst [vmem:[#allocation4 + $0x60] sm:$0xff] %v6080
        %6113 = vst [vmem:[#allocation4 + $0x68] sm:$0xff] %v6081
        %6114 = vst [vmem:[#allocation4 + $0x70] sm:$0xff] %v6082
        %6115 = vst [vmem:[#allocation4 + $0x78] sm:$0xff] %v6083
        %6116 = vst [vmem:[#allocation4 + $0x80] sm:$0xff] %v6084
        %6117 = vst [vmem:[#allocation4 + $0x88] sm:$0xff] %v6085
        %6118 = vst [vmem:[#allocation4 + $0x90] sm:$0xff] %v6086
        %6119 = vst [vmem:[#allocation4 + $0x98] sm:$0xff] %v6087
        %6120 = vst [vmem:[#allocation4 + $0xa0] sm:$0xff] %v6088
        %6121 = vst [vmem:[#allocation4 + $0xa8] sm:$0xff] %v6089
        %6122 = vst [vmem:[#allocation4 + $0xb0] sm:$0xff] %v6090
        %6123 = vst [vmem:[#allocation4 + $0xb8] sm:$0xff] %v6091
        %6124 = vst [vmem:[#allocation4 + $0xc0] sm:$0xff] %v6092
        %6125 = vst [vmem:[#allocation4 + $0xc8] sm:$0xff] %v6093
        %6126 = vst [vmem:[#allocation4 + $0xd0] sm:$0xff] %v6094
        %6127 = vst [vmem:[#allocation4 + $0xd8] sm:$0xff] %v6095
        %6128 = vst [vmem:[#allocation4 + $0xe0] sm:$0xff] %v6096
        %6129 = vst [vmem:[#allocation4 + $0xe8] sm:$0xff] %v6097
        %6130 = vst [vmem:[#allocation4 + $0xf0] sm:$0xff] %v6098
        %6131 = vst [vmem:[#allocation4 + $0xf8] sm:$0xff] %v6099
        %v6132 = vld [vmem:[%s4] sm:$0x1]
        %v6133 = vld [vmem:[%s237] sm:$0xff]
        %v6134 = vld [vmem:[%s237 + $0x8] sm:$0xff]
        %v6135 = vld [vmem:[%s237 + $0x10] sm:$0xff]
        %v6136 = vld [vmem:[%s237 + $0x18] sm:$0xff]
        %v6137 = vld [vmem:[%s237 + $0x20] sm:$0xff]
        %v6138 = vld [vmem:[%s237 + $0x28] sm:$0xff]
        %v6139 = vld [vmem:[%s237 + $0x30] sm:$0xff]
        %v6140 = vld [vmem:[%s237 + $0x38] sm:$0xff]
        %v6141 = vld [vmem:[%s237 + $0x40] sm:$0xff]
        %v6142 = vld [vmem:[%s237 + $0x48] sm:$0xff]
        %v6143 = vld [vmem:[%s237 + $0x50] sm:$0xff]
        %v6144 = vld [vmem:[%s237 + $0x58] sm:$0xff]
        %v6145 = vld [vmem:[%s237 + $0x60] sm:$0xff]
        %v6146 = vld [vmem:[%s237 + $0x68] sm:$0xff]
        %v6147 = vld [vmem:[%s237 + $0x70] sm:$0xff]
        %v6148 = vld [vmem:[%s237 + $0x78] sm:$0xff]
        %v6149 = vld [vmem:[%s237 + $0x80] sm:$0xff]
        %v6150 = vld [vmem:[%s237 + $0x88] sm:$0xff]
        %v6151 = vld [vmem:[%s237 + $0x90] sm:$0xff]
        %v6152 = vld [vmem:[%s237 + $0x98] sm:$0xff]
        %v6153 = vld [vmem:[%s237 + $0xa0] sm:$0xff]
        %v6154 = vld [vmem:[%s237 + $0xa8] sm:$0xff]
        %v6155 = vld [vmem:[%s237 + $0xb0] sm:$0xff]
        %v6156 = vld [vmem:[%s237 + $0xb8] sm:$0xff]
        %v6157 = vld [vmem:[%s237 + $0xc0] sm:$0xff]
        %v6158 = vld [vmem:[%s237 + $0xc8] sm:$0xff]
        %v6159 = vld [vmem:[%s237 + $0xd0] sm:$0xff]
        %v6160 = vld [vmem:[%s237 + $0xd8] sm:$0xff]
        %v6161 = vld [vmem:[%s237 + $0xe0] sm:$0xff]
        %v6162 = vld [vmem:[%s237 + $0xe8] sm:$0xff]
        %v6163 = vld [vmem:[%s237 + $0xf0] sm:$0xff]
        %v6164 = vld [vmem:[%s237 + $0xf8] sm:$0xff]
        %v6165 = vld [vmem:[#allocation4] sm:$0xff]
        %v6166 = vld [vmem:[#allocation4 + $0x8] sm:$0xff]
        %v6167 = vld [vmem:[#allocation4 + $0x10] sm:$0xff]
        %v6168 = vld [vmem:[#allocation4 + $0x18] sm:$0xff]
        %v6169 = vld [vmem:[#allocation4 + $0x20] sm:$0xff]
        %v6170 = vld [vmem:[#allocation4 + $0x28] sm:$0xff]
        %v6171 = vld [vmem:[#allocation4 + $0x30] sm:$0xff]
        %v6172 = vld [vmem:[#allocation4 + $0x38] sm:$0xff]
        %v6173 = vld [vmem:[#allocation4 + $0x40] sm:$0xff]
        %v6174 = vld [vmem:[#allocation4 + $0x48] sm:$0xff]
        %v6175 = vld [vmem:[#allocation4 + $0x50] sm:$0xff]
        %v6176 = vld [vmem:[#allocation4 + $0x58] sm:$0xff]
        %v6177 = vld [vmem:[#allocation4 + $0x60] sm:$0xff]
        %v6178 = vld [vmem:[#allocation4 + $0x68] sm:$0xff]
        %v6179 = vld [vmem:[#allocation4 + $0x70] sm:$0xff]
        %v6180 = vld [vmem:[#allocation4 + $0x78] sm:$0xff]
        %v6181 = vld [vmem:[#allocation4 + $0x80] sm:$0xff]
        %v6182 = vld [vmem:[#allocation4 + $0x88] sm:$0xff]
        %v6183 = vld [vmem:[#allocation4 + $0x90] sm:$0xff]
        %v6184 = vld [vmem:[#allocation4 + $0x98] sm:$0xff]
        %v6185 = vld [vmem:[#allocation4 + $0xa0] sm:$0xff]
        %v6186 = vld [vmem:[#allocation4 + $0xa8] sm:$0xff]
        %v6187 = vld [vmem:[#allocation4 + $0xb0] sm:$0xff]
        %v6188 = vld [vmem:[#allocation4 + $0xb8] sm:$0xff]
        %v6189 = vld [vmem:[#allocation4 + $0xc0] sm:$0xff]
        %v6190 = vld [vmem:[#allocation4 + $0xc8] sm:$0xff]
        %v6191 = vld [vmem:[#allocation4 + $0xd0] sm:$0xff]
        %v6192 = vld [vmem:[#allocation4 + $0xd8] sm:$0xff]
        %v6193 = vld [vmem:[#allocation4 + $0xe0] sm:$0xff]
        %v6194 = vld [vmem:[#allocation4 + $0xe8] sm:$0xff]
        %v6195 = vld [vmem:[#allocation4 + $0xf0] sm:$0xff]
        %v6196 = vld [vmem:[#allocation4 + $0xf8] sm:$0xff]
        %v6198 = vlaneseq
        %v6199 = vshrl.u32 %v6198, 7
        %v6200 = vsub.s32 0, %v6199
        %v6201 = vrot.slane %v6132, %v6200
        %v6203 = vadd.f32 %v6165, %v6201
        %v6204 = vadd.f32 %v6166, %v6201
        %v6205 = vadd.f32 %v6167, %v6201
        %v6206 = vadd.f32 %v6168, %v6201
        %v6207 = vadd.f32 %v6169, %v6201
        %v6208 = vadd.f32 %v6170, %v6201
        %v6209 = vadd.f32 %v6171, %v6201
        %v6210 = vadd.f32 %v6172, %v6201
        %v6211 = vadd.f32 %v6173, %v6201
        %v6212 = vadd.f32 %v6174, %v6201
        %v6213 = vadd.f32 %v6175, %v6201
        %v6214 = vadd.f32 %v6176, %v6201
        %v6215 = vadd.f32 %v6177, %v6201
        %v6216 = vadd.f32 %v6178, %v6201
        %v6217 = vadd.f32 %v6179, %v6201
        %v6218 = vadd.f32 %v6180, %v6201
        %v6219 = vadd.f32 %v6181, %v6201
        %v6220 = vadd.f32 %v6182, %v6201
        %v6221 = vadd.f32 %v6183, %v6201
        %v6222 = vadd.f32 %v6184, %v6201
        %v6223 = vadd.f32 %v6185, %v6201
        %v6224 = vadd.f32 %v6186, %v6201
        %v6225 = vadd.f32 %v6187, %v6201
        %v6226 = vadd.f32 %v6188, %v6201
        %v6227 = vadd.f32 %v6189, %v6201
        %v6228 = vadd.f32 %v6190, %v6201
        %v6229 = vadd.f32 %v6191, %v6201
        %v6230 = vadd.f32 %v6192, %v6201
        %v6231 = vadd.f32 %v6193, %v6201
        %v6232 = vadd.f32 %v6194, %v6201
        %v6233 = vadd.f32 %v6195, %v6201
        %v6234 = vadd.f32 %v6196, %v6201
        %v6235 = vadd.f32 %v6203, %v6133
        %v6236 = vadd.f32 %v6204, %v6134
        %v6237 = vadd.f32 %v6205, %v6135
        %v6238 = vadd.f32 %v6206, %v6136
        %v6239 = vadd.f32 %v6207, %v6137
        %v6240 = vadd.f32 %v6208, %v6138
        %v6241 = vadd.f32 %v6209, %v6139
        %v6242 = vadd.f32 %v6210, %v6140
        %v6243 = vadd.f32 %v6211, %v6141
        %v6244 = vadd.f32 %v6212, %v6142
        %v6245 = vadd.f32 %v6213, %v6143
        %v6246 = vadd.f32 %v6214, %v6144
        %v6247 = vadd.f32 %v6215, %v6145
        %v6248 = vadd.f32 %v6216, %v6146
        %v6249 = vadd.f32 %v6217, %v6147
        %v6250 = vadd.f32 %v6218, %v6148
        %v6251 = vadd.f32 %v6219, %v6149
        %v6252 = vadd.f32 %v6220, %v6150
        %v6253 = vadd.f32 %v6221, %v6151
        %v6254 = vadd.f32 %v6222, %v6152
        %v6255 = vadd.f32 %v6223, %v6153
        %v6256 = vadd.f32 %v6224, %v6154
        %v6257 = vadd.f32 %v6225, %v6155
        %v6258 = vadd.f32 %v6226, %v6156
        %v6259 = vadd.f32 %v6227, %v6157
        %v6260 = vadd.f32 %v6228, %v6158
        %v6261 = vadd.f32 %v6229, %v6159
        %v6262 = vadd.f32 %v6230, %v6160
        %v6263 = vadd.f32 %v6231, %v6161
        %v6264 = vadd.f32 %v6232, %v6162
        %v6265 = vadd.f32 %v6233, %v6163
        %v6266 = vadd.f32 %v6234, %v6164
        %v6267 = vmax.f32 %v6235, 0.0
        %v6268 = vmax.f32 %v6236, 0.0
        %v6269 = vmax.f32 %v6237, 0.0
        %v6270 = vmax.f32 %v6238, 0.0
        %v6271 = vmax.f32 %v6239, 0.0
        %v6272 = vmax.f32 %v6240, 0.0
        %v6273 = vmax.f32 %v6241, 0.0
        %v6274 = vmax.f32 %v6242, 0.0
        %v6275 = vmax.f32 %v6243, 0.0
        %v6276 = vmax.f32 %v6244, 0.0
        %v6277 = vmax.f32 %v6245, 0.0
        %v6278 = vmax.f32 %v6246, 0.0
        %v6279 = vmax.f32 %v6247, 0.0
        %v6280 = vmax.f32 %v6248, 0.0
        %v6281 = vmax.f32 %v6249, 0.0
        %v6282 = vmax.f32 %v6250, 0.0
        %v6283 = vmax.f32 %v6251, 0.0
        %v6284 = vmax.f32 %v6252, 0.0
        %v6285 = vmax.f32 %v6253, 0.0
        %v6286 = vmax.f32 %v6254, 0.0
        %v6287 = vmax.f32 %v6255, 0.0
        %v6288 = vmax.f32 %v6256, 0.0
        %v6289 = vmax.f32 %v6257, 0.0
        %v6290 = vmax.f32 %v6258, 0.0
        %v6291 = vmax.f32 %v6259, 0.0
        %v6292 = vmax.f32 %v6260, 0.0
        %v6293 = vmax.f32 %v6261, 0.0
        %v6294 = vmax.f32 %v6262, 0.0
        %v6295 = vmax.f32 %v6263, 0.0
        %v6296 = vmax.f32 %v6264, 0.0
        %v6297 = vmax.f32 %v6265, 0.0
        %v6298 = vmax.f32 %v6266, 0.0
        %6299 = vst [vmem:[%s271] sm:$0xff] %v6267
        %6300 = vst [vmem:[%s271 + $0x8] sm:$0xff] %v6268
        %6301 = vst [vmem:[%s271 + $0x10] sm:$0xff] %v6269
        %6302 = vst [vmem:[%s271 + $0x18] sm:$0xff] %v6270
        %6303 = vst [vmem:[%s271 + $0x20] sm:$0xff] %v6271
        %6304 = vst [vmem:[%s271 + $0x28] sm:$0xff] %v6272
        %6305 = vst [vmem:[%s271 + $0x30] sm:$0xff] %v6273
        %6306 = vst [vmem:[%s271 + $0x38] sm:$0xff] %v6274
        %6307 = vst [vmem:[%s271 + $0x40] sm:$0xff] %v6275
        %6308 = vst [vmem:[%s271 + $0x48] sm:$0xff] %v6276
        %6309 = vst [vmem:[%s271 + $0x50] sm:$0xff] %v6277
        %6310 = vst [vmem:[%s271 + $0x58] sm:$0xff] %v6278
        %6311 = vst [vmem:[%s271 + $0x60] sm:$0xff] %v6279
        %6312 = vst [vmem:[%s271 + $0x68] sm:$0xff] %v6280
        %6313 = vst [vmem:[%s271 + $0x70] sm:$0xff] %v6281
        %6314 = vst [vmem:[%s271 + $0x78] sm:$0xff] %v6282
        %6315 = vst [vmem:[%s271 + $0x80] sm:$0xff] %v6283
        %6316 = vst [vmem:[%s271 + $0x88] sm:$0xff] %v6284
        %6317 = vst [vmem:[%s271 + $0x90] sm:$0xff] %v6285
        %6318 = vst [vmem:[%s271 + $0x98] sm:$0xff] %v6286
        %6319 = vst [vmem:[%s271 + $0xa0] sm:$0xff] %v6287
        %6320 = vst [vmem:[%s271 + $0xa8] sm:$0xff] %v6288
        %6321 = vst [vmem:[%s271 + $0xb0] sm:$0xff] %v6289
        %6322 = vst [vmem:[%s271 + $0xb8] sm:$0xff] %v6290
        %6323 = vst [vmem:[%s271 + $0xc0] sm:$0xff] %v6291
        %6324 = vst [vmem:[%s271 + $0xc8] sm:$0xff] %v6292
        %6325 = vst [vmem:[%s271 + $0xd0] sm:$0xff] %v6293
        %6326 = vst [vmem:[%s271 + $0xd8] sm:$0xff] %v6294
        %6327 = vst [vmem:[%s271 + $0xe0] sm:$0xff] %v6295
        %6328 = vst [vmem:[%s271 + $0xe8] sm:$0xff] %v6296
        %6329 = vst [vmem:[%s271 + $0xf0] sm:$0xff] %v6297
        %6330 = vst [vmem:[%s271 + $0xf8] sm:$0xff] %v6298
        %s6331 = sand.u32 %s141, 1
        %s6332 = scalar_lea.sflag [#allocation7], %s6331
        %s6333 = sand.u32 %s141, 1
        %s6334 = smul.addr %s6333, 256
        %s6335 = scalar_lea.vmem [#allocation11], %s6334
        // Predicated region
        $region53: #{tpu_custom_call.1} parent=39 // pred_check
          %p6336 = pneg %p151
        $region54: #{tpu_custom_call.1} parent=39 // pred_check_branch
          %6338 = sbr.rel (%p6336) target = $region56
        $region55: #{tpu_custom_call.1} parent=39 // pred_region
          %s6340 = ssub.s32 4096, 4096
          %6341 = vsyncadd %s6332, %s6340
          %s6342 = smul.addr %s23, 32
          %s6343 = smul.addr %s6342, 128
          %s6344 = scalar_lea.hbm %s5, %s6343
          %s6345 = sshll.u32 %s6335, 4
          %s6346 = int_to_ptr.vmem [resolvable:$true] %s6345
          %6351 = dma.vmem_to_hbm [thread:$0]  %s6346, 4096, %s6344, %s6332, 128, 128, 8
        $region56: #{tpu_custom_call.1} parent=39 // pred_fallthru
          _
      $region40: #{tpu_custom_call.1} parent=5 // pred_fallthru
        _
      %p6352 = scmp.le.s32.totalorder 2, %s18
      // Predicated region
      $region57: #{tpu_custom_call.1} parent=5 // pred_check
        %p6353 = pneg %p6352
      $region58: #{tpu_custom_call.1} parent=5 // pred_check_branch
        %6355 = sbr.rel (%p6353) target = $region60
      $region59: #{tpu_custom_call.1} parent=5 // pred_region
        %s6356 = ssub.s32 %s18, 2
        // Predicated region
        $region61: #{tpu_custom_call.1} parent=59 // pred_check
          %p6357 = pneg %p157
        $region62: #{tpu_custom_call.1} parent=59 // pred_check_branch
          %6359 = sbr.rel (%p6357) target = $region64
        $region63: #{tpu_custom_call.1} parent=59 // pred_region
          %s6360 = sand.u32 %s142, 1
          %s6361 = scalar_lea.sflag [#allocation7], %s6360
          %s6362 = sand.u32 %s142, 1
          %s6363 = smul.addr %s6362, 256
          %s6364 = scalar_lea.vmem [#allocation11], %s6363
          %6365 = dma.done %s6361, 4096
        $region64: #{tpu_custom_call.1} parent=59 // pred_fallthru
          _
      $region60: #{tpu_custom_call.1} parent=5 // pred_fallthru
        _
    $region6: #{tpu_custom_call.1} parent=1 // loop_footer
      %s22 = sadd.s32 1, %s18
    $region7: #{tpu_custom_call.1} parent=1 // loop_footer_branch
      %17 = sbr.rel target = $region3
    $region8: #{tpu_custom_call.1} parent=1 // loop_exit
      _
    %6366 = vsyncpa [#allocation6], 1
    %s6367 = scalar_lea.sflag [#allocation6], 1
    %6368 = vsyncpa %s6367, 1
    %6369 = vsyncpa [#allocation9], 1
    %6370 = vsyncpa [#allocation7], 1
    %s6371 = scalar_lea.sflag [#allocation7], 1
    %6372 = vsyncpa %s6371, 1

</llo_original>
